<compile_context>
chip_gen: v5e
topology: v5e:2x2
jax: 0.10.0
libtpu: 0.0.40
codegen_flags: <defaults>
</compile_context>

<pallas_src>
import functools
import math

import jax
import jax.numpy as jnp
from jax.experimental import pallas as pl
from jax.experimental.pallas import tpu as pltpu


# ----------------------------------------------------------------- tile planning
def _plan_tiles(n, geo_c, num_splits=2, vmem_tile_bytes=4 << 20):
    """Pick a lane-dense token tile: largest of {4096..128} such that one [geo_c, tile]
    f32 buffer stays under vmem_tile_bytes (keeps double-buffered in+out well inside
    v7x's 64 MiB VMEM) and there are >= num_splits tiles so both v7x TensorCores get
    work in the streaming pass.  N is padded (and masked) instead of a full-N block."""
    n128 = -(-n // 128) * 128
    cap = max(128, (vmem_tile_bytes // (geo_c * 4)) // 128 * 128)
    tile = 128
    for cand in (4096, 2048, 1024, 512, 256):
        if cand <= cap and num_splits * cand <= n128:
            tile = cand
            break
    nt = -(-n // tile)                          # tiles covering the real tokens
    per_split = -(-nt // num_splits)
    n_pad = num_splits * per_split * tile       # tokens streamed by the flash kernel
    return tile, nt, per_split, n_pad


# ------------------------------------------------------- kernel A: text prologue
def _text_prologue_kernel(text_ref, wqkv_sT, bqkv_s, wo_sT, bo_s, wqk_c, bqk_c,
                          ts_ref, qk_ref, *, num_heads):
    f32, bf16 = jnp.float32, jnp.bfloat16
    s_len, text_c = text_ref.shape
    dh = text_c // num_heads
    scale = 1.0 / math.sqrt(dh)

    # ---- text self-attention (S=8 tokens, all tiny)
    t = text_ref[...]
    qkv = jnp.dot(t.astype(bf16), wqkv_sT[...], preferred_element_type=f32) + bqkv_s[...]
    q = qkv[:, :text_c] * scale
    k = qkv[:, text_c:2 * text_c]
    v = qkv[:, 2 * text_c:]
    ts = jnp.zeros((s_len, text_c), f32)
    for h in range(num_heads):
        sl = slice(h * dh, (h + 1) * dh)
        sc = jax.lax.dot_general(q[:, sl].astype(bf16), k[:, sl].astype(bf16),
                                 (((1,), (1,)), ((), ())), preferred_element_type=f32)
        sc = sc - jnp.max(sc, axis=-1, keepdims=True)
        p = jnp.exp(sc)
        p = p / jnp.sum(p, axis=-1, keepdims=True)          # exact division
        ctx = jnp.dot(p.astype(bf16), v[:, sl].astype(bf16), preferred_element_type=f32)
        ts = ts + jnp.dot(ctx.astype(bf16), wo_sT[sl, :], preferred_element_type=f32)
    ts = ts + bo_s[...]
    ts_ref[...] = ts

    # ---- text->voxel cross-attn query side, pre-folded on host through the K-proj:
    # qk[h*S+s, :] = scale * (ts Wq_h^T + bq_h) Wk_h ; the key bias bk is softmax-
    # invariant (identical for every voxel key) and is skipped exactly.
    tsb = ts.astype(bf16)
    for h in range(num_heads):
        qk_ref[h * s_len:(h + 1) * s_len, :] = (
            jnp.dot(tsb, wqk_c[h], preferred_element_type=f32) + bqk_c[h])


# ------------------------------------------------ kernel B: streamed flash softmax
def _flash_stream_kernel(qk_ref, xT_ref, m_ref, l_ref, u_ref, *,
                         tiles_per_split, tile, n_valid):
    f32, bf16 = jnp.float32, jnp.bfloat16
    j = pl.program_id(1)

    @pl.when(j == 0)
    def _init():
        m_ref[...] = jnp.full(m_ref.shape, -1e30, f32)
        l_ref[...] = jnp.zeros(l_ref.shape, f32)
        u_ref[...] = jnp.zeros(u_ref.shape, f32)

    xb = xT_ref[...].astype(bf16)                              # [geo_c, TILE]
    # scores for all (head, text-query) rows at once: NN matmul, contraction on geo_c
    s = jnp.dot(qk_ref[...].astype(bf16), xb, preferred_element_type=f32)   # [H*S, TILE]

    if n_valid is not None:          # static: mask padded key columns exactly
        base = (pl.program_id(0) * tiles_per_split + j) * tile
        col = base + jax.lax.broadcasted_iota(jnp.int32, (1, tile), 1)
        s = jnp.where(col < n_valid, s, -1e30)

    m_prev = m_ref[...]
    m_new = jnp.maximum(m_prev, jnp.max(s, axis=-1, keepdims=True))
    alpha = jnp.exp(m_prev - m_new)
    p = jnp.exp(s - m_new)
    l_ref[...] = alpha * l_ref[...] + jnp.sum(p, axis=-1, keepdims=True)
    # u += p @ x_tokens.  Contraction is over the token (lane) axis of both operands;
    # at geo_c <= 512 this sits well under the tile's DMA time even if Mosaic
    # materializes a relayout for the NT form, so the streaming loop stays HBM-bound.
    u_ref[...] = alpha * u_ref[...] + jax.lax.dot_general(
        p.astype(bf16), xb, (((1,), (1,)), ((), ())), preferred_element_type=f32)
    m_ref[...] = m_new


# ------------------------------------------------------- kernel C: text epilogue
def _text_epilogue_kernel(ts_ref, m_ref, l_ref, u_ref,
                          wvo_c, bvo_c, ln_t_g, ln_t_b, w1T, b1, w2T, b2,
                          wk_vT, bk_v, wv_vT, bv_v, wq_v, bq_v, wo_v,
                          a_ref, c_ref, wov_ref, *, num_heads):
    f32, bf16 = jnp.float32, jnp.bfloat16
    hs, geo_c = a_ref.shape
    s_len = hs // num_heads
    text_c = ts_ref.shape[1]
    dh_v = geo_c // num_heads
    scale_v = 1.0 / math.sqrt(dh_v)

    # ---- exact log-sum-exp combine of the two per-core flash partials
    m0, m1 = m_ref[0:hs, :], m_ref[hs:2 * hs, :]
    l0, l1 = l_ref[0:hs, :], l_ref[hs:2 * hs, :]
    u0, u1 = u_ref[0:hs, :], u_ref[hs:2 * hs, :]
    m = jnp.maximum(m0, m1)
    a0 = jnp.exp(m0 - m)
    a1 = jnp.exp(m1 - m)
    l = a0 * l0 + a1 * l1
    un = (a0 * u0 + a1 * u1) / l           # normalized softmax(qk x) @ x, rows = (head, query)

    # ---- cross-attn value + output projection.  Wv/Wo are folded per head on host
    # (wvo_c), and the value bias is folded exactly (softmax rows sum to 1) into bvo_c.
    ts = ts_ref[...]
    enh = jnp.zeros((s_len, text_c), f32)
    for h in range(num_heads):
        rsl = slice(h * s_len, (h + 1) * s_len)
        enh = enh + jnp.dot(un[rsl, :].astype(bf16), wvo_c[h], preferred_element_type=f32)
    enh = enh + bvo_c[...]

    # ---- residual + LayerNorm (f32 statistics, eps matches PyTorch)
    y = ts + enh
    mu = jnp.mean(y, axis=-1, keepdims=True)
    yc = y - mu
    var = jnp.mean(yc * yc, axis=-1, keepdims=True)
    tfeat = yc * jax.lax.rsqrt(var + 1e-5) * ln_t_g[...] + ln_t_b[...]

    # ---- MLP (256 -> 1024 -> 256); dropouts are eval-time identity
    h1 = jnp.dot(tfeat.astype(bf16), w1T[...], preferred_element_type=f32) + b1[...]
    h1 = jnp.maximum(h1, 0.0)
    tm = jnp.dot(h1.astype(bf16), w2T[...], preferred_element_type=f32) + b2[...]
    tmb = tm.astype(bf16)

    # ---- fold voxel-side K/V through Wq_v / bq_v / Wo_v into tile-invariant operands:
    # for voxel token x_n: scores[:, n] = A @ x_n + c ; attn_out_n = WoV @ softmax + bo_v
    kvox = jnp.dot(tmb, wk_vT[...], preferred_element_type=f32) + bk_v[...]   # [S, geo_c]
    vvox = jnp.dot(tmb, wv_vT[...], preferred_element_type=f32) + bv_v[...]   # [S, geo_c]
    for h in range(num_heads):
        gsl = slice(h * dh_v, (h + 1) * dh_v)
        rsl = slice(h * s_len, (h + 1) * s_len)
        kh = kvox[:, gsl]
        a_ref[rsl, :] = scale_v * jnp.dot(kh.astype(bf16), wq_v[gsl, :],
                                          preferred_element_type=f32)
        c_ref[rsl, :] = scale_v * jnp.sum(kh * bq_v[:, gsl], axis=-1, keepdims=True)
        wov_ref[:, rsl] = jax.lax.dot_general(                 # Wo_h @ v_h^T
            wo_v[:, gsl], vvox[:, gsl].astype(bf16),
            (((1,), (1,)), ((), ())), preferred_element_type=f32)


# --------------------------------------- kernel D: voxel cross-attn + residual + LN
def _voxel_attn_ln_kernel(xT_ref, a_ref, c_ref, wov_ref, bo_v, g_v, b_v, o_ref,
                          *, num_heads):
    f32, bf16 = jnp.float32, jnp.bfloat16
    hs = a_ref.shape[0]
    s_len = hs // num_heads

    xT = xT_ref[...]                        # [geo_c, TILE] f32 (channel-first tile)
    xb = xT.astype(bf16)

    # scores for all (head, text-key) rows at once: one lane-dense NN matmul
    s = jnp.dot(a_ref[...].astype(bf16), xb, preferred_element_type=f32) + c_ref[...]

    # per-head softmax over the S text keys (cheap 8-sublane reductions), then a SINGLE
    # fused output projection WoV @ p (one MXU push, no per-head lane slicing of WoV).
    parts = []
    for h in range(num_heads):
        sh = s[h * s_len:(h + 1) * s_len, :]
        sh = sh - jnp.max(sh, axis=0, keepdims=True)
        ph = jnp.exp(sh)
        ph = ph / jnp.sum(ph, axis=0, keepdims=True)          # exact division
        parts.append(ph)
    p = jnp.concatenate(parts, axis=0).astype(bf16)           # [H*S, TILE]
    attn = jnp.dot(wov_ref[...].astype(bf16), p, preferred_element_type=f32) + bo_v[...]

    # residual + LayerNorm over channels (sublane axis), f32 statistics
    y = xT + attn
    mu = jnp.mean(y, axis=0, keepdims=True)
    yc = y - mu
    var = jnp.mean(yc * yc, axis=0, keepdims=True)
    o_ref[...] = yc * jax.lax.rsqrt(var + 1e-5) * g_v[...] + b_v[...]


# ---------------------------------------------------------------------- parameters
def init_params(key, geo_c, text_c, mlp_hidden=1024, scale=0.02):
    """Parameters in PyTorch convention (Linear: y = x @ W.T + b, W is [out, in])."""
    ks = iter(jax.random.split(key, 32))
    nrm = lambda shape: jax.random.normal(next(ks), shape, jnp.float32) * scale

    def attn(e, kdim, vdim):
        return dict(wq=nrm((e, e)), wk=nrm((e, kdim)), wv=nrm((e, vdim)), wo=nrm((e, e)),
                    bq=nrm((e,)), bk=nrm((e,)), bv=nrm((e,)), bo=nrm((e,)))

    return dict(
        text_self=attn(text_c, text_c, text_c),
        text_cross=attn(text_c, geo_c, geo_c),
        voxel_cross=attn(geo_c, text_c, text_c),
        mlp=dict(w1=nrm((mlp_hidden, text_c)), b1=nrm((mlp_hidden,)),
                 w2=nrm((text_c, mlp_hidden)), b2=nrm((text_c,))),
        text_ln=dict(gamma=jnp.ones((text_c,), jnp.float32),
                     beta=jnp.zeros((text_c,), jnp.float32)),
        voxel_ln=dict(gamma=jnp.ones((geo_c,), jnp.float32),
                      beta=jnp.zeros((geo_c,), jnp.float32)),
    )


def pack_params(p, num_heads=4):
    """One-time host-side repack: pre-transpose matmul operands (bf16), and pre-fold the
    text-cross Q->K and V->O projections per head in f32 (removes per-head matmuls and
    lane slicing from the kernels)."""
    f32, bf16 = jnp.float32, jnp.bfloat16
    T = lambda w: jnp.asarray(w, f32).T.astype(bf16)
    K = lambda w: jnp.asarray(w, f32).astype(bf16)
    row = lambda b: jnp.asarray(b, f32).reshape(1, -1)
    col = lambda b: jnp.asarray(b, f32).reshape(-1, 1)
    ts, tc, vc, m = p["text_self"], p["text_cross"], p["voxel_cross"], p["mlp"]

    text_c = ts["wq"].shape[0]
    dh_t = text_c // num_heads
    scale_t = 1.0 / math.sqrt(dh_t)

    wq_cT = jnp.asarray(tc["wq"], f32).T          # [text_c, text_c]
    wk_c = jnp.asarray(tc["wk"], f32)             # [text_c, geo_c]
    wv_cT = jnp.asarray(tc["wv"], f32).T          # [geo_c, text_c]
    wo_cT = jnp.asarray(tc["wo"], f32).T          # [text_c, text_c]
    bq_c = jnp.asarray(tc["bq"], f32)
    wqk, bqk, wvo = [], [], []
    for h in range(num_heads):
        sl = slice(h * dh_t, (h + 1) * dh_t)
        wqk.append(scale_t * (wq_cT[:, sl] @ wk_c[sl, :]))      # [text_c, geo_c]
        bqk.append(scale_t * (bq_c[sl] @ wk_c[sl, :]))          # [geo_c]
        wvo.append(wv_cT[:, sl] @ wo_cT[sl, :])                 # [geo_c, text_c]
    wqk_c = jnp.stack(wqk).astype(bf16)                         # [H, text_c, geo_c]
    bqk_c = jnp.stack(bqk)[:, None, :].astype(f32)              # [H, 1, geo_c]
    wvo_c = jnp.stack(wvo).astype(bf16)                         # [H, geo_c, text_c]
    bvo_c = row(jnp.asarray(tc["bv"], f32) @ wo_cT + jnp.asarray(tc["bo"], f32))

    return dict(
        w_qkv_sT=jnp.concatenate([jnp.asarray(ts["wq"], f32).T,
                                  jnp.asarray(ts["wk"], f32).T,
                                  jnp.asarray(ts["wv"], f32).T], axis=1).astype(bf16),
        b_qkv_s=row(jnp.concatenate([ts["bq"], ts["bk"], ts["bv"]])),
        wo_sT=T(ts["wo"]), bo_s=row(ts["bo"]),
        wqk_c=wqk_c, bqk_c=bqk_c, wvo_c=wvo_c, bvo_c=bvo_c,
        ln_t_g=row(p["text_ln"]["gamma"]), ln_t_b=row(p["text_ln"]["beta"]),
        w1T=T(m["w1"]), b1=row(m["b1"]),
        w2T=T(m["w2"]), b2=row(m["b2"]),
        wk_vT=T(vc["wk"]), bk_v=row(vc["bk"]),
        wv_vT=T(vc["wv"]), bv_v=row(vc["bv"]),
        wq_v=K(vc["wq"]), bq_v=row(vc["bq"]),
        wo_v=K(vc["wo"]),
        bo_v=col(vc["bo"]),
        ln_v_g=col(p["voxel_ln"]["gamma"]), ln_v_b=col(p["voxel_ln"]["beta"]),
    )


# ------------------------------------------------------------------------ forward
def dual_cross_attention_forward(x, text, kp, num_heads=4):
    """x: [1, C_geo, H, W, Z]   text: [1, S, 256]  ->  [1, C_geo, H, W, Z]"""
    bs, geo_c, h, w, z = x.shape
    assert bs == 1, "module assumes batch size 1 (matches the reference)"
    n = h * w * z
    s_len, text_c = text.shape[1], text.shape[2]
    hs = num_heads * s_len

    # [1,C,H,W,Z] -> [C, N]: FREE reshape (channel-first kept -> lane-dense token tiles,
    # no HBM transpose on entry or exit).
    xT = x.reshape(geo_c, n)
    t = text[0]

    tile, nt, per_split, n_pad = _plan_tiles(n, geo_c, num_splits=2)
    if n_pad != n:
        xT = jnp.pad(xT, ((0, 0), (0, n_pad - n)))      # zero pad; keys masked in kernel B
    n_valid = None if n_pad == n else n
    vmem_cap = pltpu.CompilerParams  # alias for brevity below

    # ---- A) text prologue (tiny, no grid): self-attn + folded cross-attn query side
    ts_feat, qk = pl.pallas_call(
        functools.partial(_text_prologue_kernel, num_heads=num_heads),
        out_shape=(jax.ShapeDtypeStruct((s_len, text_c), jnp.float32),
                   jax.ShapeDtypeStruct((hs, geo_c), jnp.float32)),
    )(t, kp["w_qkv_sT"], kp["b_qkv_s"], kp["wo_sT"], kp["bo_s"], kp["wqk_c"], kp["bqk_c"])

    # ---- B) flash stream over voxel tokens, split across 2 cores ("parallel" axis)
    m_part, l_part, u_part = pl.pallas_call(
        functools.partial(_flash_stream_kernel, tiles_per_split=per_split,
                          tile=tile, n_valid=n_valid),
        out_shape=(jax.ShapeDtypeStruct((2 * hs, 1), jnp.float32),
                   jax.ShapeDtypeStruct((2 * hs, 1), jnp.float32),
                   jax.ShapeDtypeStruct((2 * hs, geo_c), jnp.float32)),
        grid=(2, per_split),
        in_specs=[pl.BlockSpec((hs, geo_c), lambda c, j: (0, 0)),
                  pl.BlockSpec((geo_c, tile), lambda c, j: (0, c * per_split + j))],
        out_specs=(pl.BlockSpec((hs, 1), lambda c, j: (c, 0)),
                   pl.BlockSpec((hs, 1), lambda c, j: (c, 0)),
                   pl.BlockSpec((hs, geo_c), lambda c, j: (c, 0))),
        compiler_params=vmem_cap(dimension_semantics=("parallel", "arbitrary"),
                                 vmem_limit_bytes=32 * 1024 * 1024),
    )(qk, xT)

    # ---- C) text epilogue (tiny, no grid): combine + LN + MLP + voxel-side fold
    a_fold, c_fold, wov = pl.pallas_call(
        functools.partial(_text_epilogue_kernel, num_heads=num_heads),
        out_shape=(jax.ShapeDtypeStruct((hs, geo_c), jnp.float32),
                   jax.ShapeDtypeStruct((hs, 1), jnp.float32),
                   jax.ShapeDtypeStruct((geo_c, hs), jnp.float32)),
    )(ts_feat, m_part, l_part, u_part,
      kp["wvo_c"], kp["bvo_c"], kp["ln_t_g"], kp["ln_t_b"],
      kp["w1T"], kp["b1"], kp["w2T"], kp["b2"],
      kp["wk_vT"], kp["bk_v"], kp["wv_vT"], kp["bv_v"],
      kp["wq_v"], kp["bq_v"], kp["wo_v"])

    # ---- D) voxel cross-attn + residual + LayerNorm, tiled over tokens ("parallel")
    # TODO(synk): x could be stored bf16 in HBM to halve traffic on v5e (kept f32 for parity).
    n_out = nt * tile
    yT = pl.pallas_call(
        functools.partial(_voxel_attn_ln_kernel, num_heads=num_heads),
        out_shape=jax.ShapeDtypeStruct((geo_c, n_out), jnp.float32),
        grid=(nt,),
        in_specs=[pl.BlockSpec((geo_c, tile), lambda i: (0, i)),
                  pl.BlockSpec((hs, geo_c), lambda i: (0, 0)),
                  pl.BlockSpec((hs, 1), lambda i: (0, 0)),
                  pl.BlockSpec((geo_c, hs), lambda i: (0, 0)),
                  pl.BlockSpec((geo_c, 1), lambda i: (0, 0)),
                  pl.BlockSpec((geo_c, 1), lambda i: (0, 0)),
                  pl.BlockSpec((geo_c, 1), lambda i: (0, 0))],
        out_specs=pl.BlockSpec((geo_c, tile), lambda i: (0, i)),
        compiler_params=vmem_cap(dimension_semantics=("parallel",),
                                 vmem_limit_bytes=32 * 1024 * 1024),
    )(xT, a_fold, c_fold, wov, kp["bo_v"], kp["ln_v_g"], kp["ln_v_b"])

    if n_out != n:
        yT = yT[:, :n]
    return yT.reshape(bs, geo_c, h, w, z)     # free reshape back to channel-first


# ------------------------------------------------------------- pure-JAX reference
def reference_forward(x, text, p, num_heads=4):
    """Straightforward f32 re-implementation of the PyTorch module (eval mode)."""
    bs, c, h, w, z = x.shape
    n = h * w * z
    xt = x.reshape(bs, c, n).transpose(0, 2, 1)[0]      # [N, C] token-major
    t = text[0]

    def mha(q_in, k_in, v_in, a, nh):
        e = a["wq"].shape[0]
        dh = e // nh
        q = q_in @ a["wq"].T + a["bq"]
        k = k_in @ a["wk"].T + a["bk"]
        v = v_in @ a["wv"].T + a["bv"]
        outs = []
        for hh in range(nh):
            sl = slice(hh * dh, (hh + 1) * dh)
            sc = (q[:, sl] @ k[:, sl].T) / math.sqrt(dh)
            pp = jax.nn.softmax(sc, axis=-1)
            outs.append(pp @ v[:, sl])
        return jnp.concatenate(outs, axis=-1) @ a["wo"].T + a["bo"]

    def ln(y, g, b):
        mu = jnp.mean(y, axis=-1, keepdims=True)
        var = jnp.mean((y - mu) ** 2, axis=-1, keepdims=True)
        return (y - mu) / jnp.sqrt(var + 1e-5) * g + b

    tsa = mha(t, t, t, p["text_self"], num_heads)
    enh = mha(tsa, xt, xt, p["text_cross"], num_heads)
    tfeat = ln(tsa + enh, p["text_ln"]["gamma"], p["text_ln"]["beta"])
    m = p["mlp"]
    tm = jnp.maximum(tfeat @ m["w1"].T + m["b1"], 0.0) @ m["w2"].T + m["b2"]
    voxa = mha(xt, tm, tm, p["voxel_cross"], num_heads)
    y = ln(xt + voxa, p["voxel_ln"]["gamma"], p["voxel_ln"]["beta"])
    return y.T.reshape(bs, c, h, w, z)


# ----------------------------------------------------------------------------- main
if __name__ == "__main__":
    GEO_C, TEXT_C, NUM_HEADS = 64, 256, 4
    H, W, Z = 8, 8, 32          # N = 2048 voxel tokens
    SEQ = 8

    root = jax.random.PRNGKey(0)
    k_x, k_t, k_p = jax.random.split(root, 3)
    x = jax.random.normal(k_x, (1, GEO_C, H, W, Z), jnp.float32)
    text = jax.random.normal(k_t, (1, SEQ, TEXT_C), jnp.float32)

    params = init_params(k_p, GEO_C, TEXT_C)
    kparams = pack_params(params, NUM_HEADS)     # one-time pre-transpose / pre-fold

    fwd = jax.jit(dual_cross_attention_forward, static_argnums=(3,))
    out = jax.block_until_ready(fwd(x, text, kparams, NUM_HEADS))

    ref = reference_forward(x, text, params, NUM_HEADS)
    err = float(jnp.max(jnp.abs(out - ref)))

    assert out.shape == (1, GEO_C, H, W, Z)
    assert bool(jnp.all(jnp.isfinite(out)))
    assert err < 5e-2, f"parity check failed: max abs err {err}"
    print("KERNEL_OK")
</pallas_src>

<mosaic_0001>
module attributes {stable_mosaic.version = 11 : i64} {
  func.func @_text_prologue_kernel(%arg0: memref<8x256xf32, #tpu.memory_space<vmem>>, %arg1: memref<256x768xbf16, #tpu.memory_space<vmem>>, %arg2: memref<1x768xf32, #tpu.memory_space<vmem>>, %arg3: memref<256x256xbf16, #tpu.memory_space<vmem>>, %arg4: memref<1x256xf32, #tpu.memory_space<vmem>>, %arg5: memref<4x256x64xbf16, #tpu.memory_space<vmem>>, %arg6: memref<4x1x64xf32, #tpu.memory_space<vmem>>, %arg7: memref<8x256xf32, #tpu.memory_space<vmem>>, %arg8: memref<32x64xf32, #tpu.memory_space<vmem>>) attributes {dimension_semantics = [], scalar_prefetch = 0 : i64, scratch_operands = 0 : i64, tpu.core_type = #tpu.core_type<tc>} {
    %c0 = arith.constant 0 : index
    %c0_0 = arith.constant 0 : index
    %0 = vector.load %arg0[%c0, %c0_0] : memref<8x256xf32, #tpu.memory_space<vmem>>, vector<8x256xf32>
    %1 = arith.truncf %0 : vector<8x256xf32> to vector<8x256xbf16>
    %c0_1 = arith.constant 0 : index
    %c0_2 = arith.constant 0 : index
    %2 = vector.load %arg1[%c0_1, %c0_2] : memref<256x768xbf16, #tpu.memory_space<vmem>>, vector<256x768xbf16>
    %cst = arith.constant dense<0.000000e+00> : vector<8x768xf32>
    %3 = tpu.matmul %1, %2, %cst {dimension_numbers = #tpu.dot_dimension_numbers<[1], [0], [0], [1], [0, 0, 1, 1], [], []>} : vector<8x256xbf16>, vector<256x768xbf16>, vector<8x768xf32> -> vector<8x768xf32>
    %c0_3 = arith.constant 0 : index
    %c0_4 = arith.constant 0 : index
    %4 = vector.load %arg2[%c0_3, %c0_4] : memref<1x768xf32, #tpu.memory_space<vmem>>, vector<1x768xf32>
    %5 = vector.broadcast %4 : vector<1x768xf32> to vector<8x768xf32>
    %6 = arith.addf %3, %5 : vector<8x768xf32>
    %7 = vector.extract_strided_slice %6 {offsets = [0, 0], sizes = [8, 256], strides = [1, 1]} : vector<8x768xf32> to vector<8x256xf32>
    %cst_5 = arith.constant 1.250000e-01 : f32
    %8 = vector.broadcast %cst_5 : f32 to vector<8x256xf32>
    %9 = arith.mulf %7, %8 : vector<8x256xf32>
    %10 = vector.extract_strided_slice %6 {offsets = [0, 256], sizes = [8, 256], strides = [1, 1]} : vector<8x768xf32> to vector<8x256xf32>
    %11 = vector.extract_strided_slice %6 {offsets = [0, 512], sizes = [8, 256], strides = [1, 1]} : vector<8x768xf32> to vector<8x256xf32>
    %cst_6 = arith.constant 0.000000e+00 : f32
    %12 = vector.broadcast %cst_6 : f32 to vector<8x256xf32>
    %13 = vector.extract_strided_slice %9 {offsets = [0, 0], sizes = [8, 64], strides = [1, 1]} : vector<8x256xf32> to vector<8x64xf32>
    %14 = arith.truncf %13 : vector<8x64xf32> to vector<8x64xbf16>
    %15 = vector.extract_strided_slice %10 {offsets = [0, 0], sizes = [8, 64], strides = [1, 1]} : vector<8x256xf32> to vector<8x64xf32>
    %16 = arith.truncf %15 : vector<8x64xf32> to vector<8x64xbf16>
    %cst_7 = arith.constant dense<0.000000e+00> : vector<8x8xf32>
    %17 = tpu.matmul %14, %16, %cst_7 {dimension_numbers = #tpu.dot_dimension_numbers<[1], [1], [0], [0], [0, 0, 1, 0], [], []>} : vector<8x64xbf16>, vector<8x64xbf16>, vector<8x8xf32> -> vector<8x8xf32>
    %cst_8 = arith.constant dense<0xFF800000> : vector<8xf32>
    %18 = vector.multi_reduction <maximumf>, %17, %cst_8 [1] : vector<8x8xf32> to vector<8xf32>
    %19 = vector.shape_cast %18 : vector<8xf32> to vector<8x1xf32>
    %20 = vector.broadcast %19 : vector<8x1xf32> to vector<8x8xf32>
    %21 = arith.subf %17, %20 : vector<8x8xf32>
    %22 = math.exp %21 : vector<8x8xf32>
    %cst_9 = arith.constant dense<0.000000e+00> : vector<8xf32>
    %23 = vector.multi_reduction <add>, %22, %cst_9 [1] : vector<8x8xf32> to vector<8xf32>
    %24 = vector.shape_cast %23 : vector<8xf32> to vector<8x1xf32>
    %25 = vector.broadcast %24 : vector<8x1xf32> to vector<8x8xf32>
    %26 = arith.divf %22, %25 : vector<8x8xf32>
    %27 = arith.truncf %26 : vector<8x8xf32> to vector<8x8xbf16>
    %28 = vector.extract_strided_slice %11 {offsets = [0, 0], sizes = [8, 64], strides = [1, 1]} : vector<8x256xf32> to vector<8x64xf32>
    %29 = arith.truncf %28 : vector<8x64xf32> to vector<8x64xbf16>
    %cst_10 = arith.constant dense<0.000000e+00> : vector<8x64xf32>
    %30 = tpu.matmul %27, %29, %cst_10 {dimension_numbers = #tpu.dot_dimension_numbers<[1], [0], [0], [1], [0, 0, 1, 1], [], []>} : vector<8x8xbf16>, vector<8x64xbf16>, vector<8x64xf32> -> vector<8x64xf32>
    %31 = arith.truncf %30 : vector<8x64xf32> to vector<8x64xbf16>
    %c0_11 = arith.constant 0 : index
    %c0_12 = arith.constant 0 : index
    %32 = vector.load %arg3[%c0_11, %c0_12] : memref<256x256xbf16, #tpu.memory_space<vmem>>, vector<64x256xbf16>
    %cst_13 = arith.constant dense<0.000000e+00> : vector<8x256xf32>
    %33 = tpu.matmul %31, %32, %cst_13 {dimension_numbers = #tpu.dot_dimension_numbers<[1], [0], [0], [1], [0, 0, 1, 1], [], []>} : vector<8x64xbf16>, vector<64x256xbf16>, vector<8x256xf32> -> vector<8x256xf32>
    %34 = arith.addf %12, %33 : vector<8x256xf32>
    %35 = vector.extract_strided_slice %9 {offsets = [0, 64], sizes = [8, 64], strides = [1, 1]} : vector<8x256xf32> to vector<8x64xf32>
    %36 = arith.truncf %35 : vector<8x64xf32> to vector<8x64xbf16>
    %37 = vector.extract_strided_slice %10 {offsets = [0, 64], sizes = [8, 64], strides = [1, 1]} : vector<8x256xf32> to vector<8x64xf32>
    %38 = arith.truncf %37 : vector<8x64xf32> to vector<8x64xbf16>
    %cst_14 = arith.constant dense<0.000000e+00> : vector<8x8xf32>
    %39 = tpu.matmul %36, %38, %cst_14 {dimension_numbers = #tpu.dot_dimension_numbers<[1], [1], [0], [0], [0, 0, 1, 0], [], []>} : vector<8x64xbf16>, vector<8x64xbf16>, vector<8x8xf32> -> vector<8x8xf32>
    %cst_15 = arith.constant dense<0xFF800000> : vector<8xf32>
    %40 = vector.multi_reduction <maximumf>, %39, %cst_15 [1] : vector<8x8xf32> to vector<8xf32>
    %41 = vector.shape_cast %40 : vector<8xf32> to vector<8x1xf32>
    %42 = vector.broadcast %41 : vector<8x1xf32> to vector<8x8xf32>
    %43 = arith.subf %39, %42 : vector<8x8xf32>
    %44 = math.exp %43 : vector<8x8xf32>
    %cst_16 = arith.constant dense<0.000000e+00> : vector<8xf32>
    %45 = vector.multi_reduction <add>, %44, %cst_16 [1] : vector<8x8xf32> to vector<8xf32>
    %46 = vector.shape_cast %45 : vector<8xf32> to vector<8x1xf32>
    %47 = vector.broadcast %46 : vector<8x1xf32> to vector<8x8xf32>
    %48 = arith.divf %44, %47 : vector<8x8xf32>
    %49 = arith.truncf %48 : vector<8x8xf32> to vector<8x8xbf16>
    %50 = vector.extract_strided_slice %11 {offsets = [0, 64], sizes = [8, 64], strides = [1, 1]} : vector<8x256xf32> to vector<8x64xf32>
    %51 = arith.truncf %50 : vector<8x64xf32> to vector<8x64xbf16>
    %cst_17 = arith.constant dense<0.000000e+00> : vector<8x64xf32>
    %52 = tpu.matmul %49, %51, %cst_17 {dimension_numbers = #tpu.dot_dimension_numbers<[1], [0], [0], [1], [0, 0, 1, 1], [], []>} : vector<8x8xbf16>, vector<8x64xbf16>, vector<8x64xf32> -> vector<8x64xf32>
    %53 = arith.truncf %52 : vector<8x64xf32> to vector<8x64xbf16>
    %c64 = arith.constant 64 : index
    %c0_18 = arith.constant 0 : index
    %54 = vector.load %arg3[%c64, %c0_18] : memref<256x256xbf16, #tpu.memory_space<vmem>>, vector<64x256xbf16>
    %cst_19 = arith.constant dense<0.000000e+00> : vector<8x256xf32>
    %55 = tpu.matmul %53, %54, %cst_19 {dimension_numbers = #tpu.dot_dimension_numbers<[1], [0], [0], [1], [0, 0, 1, 1], [], []>} : vector<8x64xbf16>, vector<64x256xbf16>, vector<8x256xf32> -> vector<8x256xf32>
    %56 = arith.addf %34, %55 : vector<8x256xf32>
    %57 = vector.extract_strided_slice %9 {offsets = [0, 128], sizes = [8, 64], strides = [1, 1]} : vector<8x256xf32> to vector<8x64xf32>
    %58 = arith.truncf %57 : vector<8x64xf32> to vector<8x64xbf16>
    %59 = vector.extract_strided_slice %10 {offsets = [0, 128], sizes = [8, 64], strides = [1, 1]} : vector<8x256xf32> to vector<8x64xf32>
    %60 = arith.truncf %59 : vector<8x64xf32> to vector<8x64xbf16>
    %cst_20 = arith.constant dense<0.000000e+00> : vector<8x8xf32>
    %61 = tpu.matmul %58, %60, %cst_20 {dimension_numbers = #tpu.dot_dimension_numbers<[1], [1], [0], [0], [0, 0, 1, 0], [], []>} : vector<8x64xbf16>, vector<8x64xbf16>, vector<8x8xf32> -> vector<8x8xf32>
    %cst_21 = arith.constant dense<0xFF800000> : vector<8xf32>
    %62 = vector.multi_reduction <maximumf>, %61, %cst_21 [1] : vector<8x8xf32> to vector<8xf32>
    %63 = vector.shape_cast %62 : vector<8xf32> to vector<8x1xf32>
    %64 = vector.broadcast %63 : vector<8x1xf32> to vector<8x8xf32>
    %65 = arith.subf %61, %64 : vector<8x8xf32>
    %66 = math.exp %65 : vector<8x8xf32>
    %cst_22 = arith.constant dense<0.000000e+00> : vector<8xf32>
    %67 = vector.multi_reduction <add>, %66, %cst_22 [1] : vector<8x8xf32> to vector<8xf32>
    %68 = vector.shape_cast %67 : vector<8xf32> to vector<8x1xf32>
    %69 = vector.broadcast %68 : vector<8x1xf32> to vector<8x8xf32>
    %70 = arith.divf %66, %69 : vector<8x8xf32>
    %71 = arith.truncf %70 : vector<8x8xf32> to vector<8x8xbf16>
    %72 = vector.extract_strided_slice %11 {offsets = [0, 128], sizes = [8, 64], strides = [1, 1]} : vector<8x256xf32> to vector<8x64xf32>
    %73 = arith.truncf %72 : vector<8x64xf32> to vector<8x64xbf16>
    %cst_23 = arith.constant dense<0.000000e+00> : vector<8x64xf32>
    %74 = tpu.matmul %71, %73, %cst_23 {dimension_numbers = #tpu.dot_dimension_numbers<[1], [0], [0], [1], [0, 0, 1, 1], [], []>} : vector<8x8xbf16>, vector<8x64xbf16>, vector<8x64xf32> -> vector<8x64xf32>
    %75 = arith.truncf %74 : vector<8x64xf32> to vector<8x64xbf16>
    %c128 = arith.constant 128 : index
    %c0_24 = arith.constant 0 : index
    %76 = vector.load %arg3[%c128, %c0_24] : memref<256x256xbf16, #tpu.memory_space<vmem>>, vector<64x256xbf16>
    %cst_25 = arith.constant dense<0.000000e+00> : vector<8x256xf32>
    %77 = tpu.matmul %75, %76, %cst_25 {dimension_numbers = #tpu.dot_dimension_numbers<[1], [0], [0], [1], [0, 0, 1, 1], [], []>} : vector<8x64xbf16>, vector<64x256xbf16>, vector<8x256xf32> -> vector<8x256xf32>
    %78 = arith.addf %56, %77 : vector<8x256xf32>
    %79 = vector.extract_strided_slice %9 {offsets = [0, 192], sizes = [8, 64], strides = [1, 1]} : vector<8x256xf32> to vector<8x64xf32>
    %80 = arith.truncf %79 : vector<8x64xf32> to vector<8x64xbf16>
    %81 = vector.extract_strided_slice %10 {offsets = [0, 192], sizes = [8, 64], strides = [1, 1]} : vector<8x256xf32> to vector<8x64xf32>
    %82 = arith.truncf %81 : vector<8x64xf32> to vector<8x64xbf16>
    %cst_26 = arith.constant dense<0.000000e+00> : vector<8x8xf32>
    %83 = tpu.matmul %80, %82, %cst_26 {dimension_numbers = #tpu.dot_dimension_numbers<[1], [1], [0], [0], [0, 0, 1, 0], [], []>} : vector<8x64xbf16>, vector<8x64xbf16>, vector<8x8xf32> -> vector<8x8xf32>
    %cst_27 = arith.constant dense<0xFF800000> : vector<8xf32>
    %84 = vector.multi_reduction <maximumf>, %83, %cst_27 [1] : vector<8x8xf32> to vector<8xf32>
    %85 = vector.shape_cast %84 : vector<8xf32> to vector<8x1xf32>
    %86 = vector.broadcast %85 : vector<8x1xf32> to vector<8x8xf32>
    %87 = arith.subf %83, %86 : vector<8x8xf32>
    %88 = math.exp %87 : vector<8x8xf32>
    %cst_28 = arith.constant dense<0.000000e+00> : vector<8xf32>
    %89 = vector.multi_reduction <add>, %88, %cst_28 [1] : vector<8x8xf32> to vector<8xf32>
    %90 = vector.shape_cast %89 : vector<8xf32> to vector<8x1xf32>
    %91 = vector.broadcast %90 : vector<8x1xf32> to vector<8x8xf32>
    %92 = arith.divf %88, %91 : vector<8x8xf32>
    %93 = arith.truncf %92 : vector<8x8xf32> to vector<8x8xbf16>
    %94 = vector.extract_strided_slice %11 {offsets = [0, 192], sizes = [8, 64], strides = [1, 1]} : vector<8x256xf32> to vector<8x64xf32>
    %95 = arith.truncf %94 : vector<8x64xf32> to vector<8x64xbf16>
    %cst_29 = arith.constant dense<0.000000e+00> : vector<8x64xf32>
    %96 = tpu.matmul %93, %95, %cst_29 {dimension_numbers = #tpu.dot_dimension_numbers<[1], [0], [0], [1], [0, 0, 1, 1], [], []>} : vector<8x8xbf16>, vector<8x64xbf16>, vector<8x64xf32> -> vector<8x64xf32>
    %97 = arith.truncf %96 : vector<8x64xf32> to vector<8x64xbf16>
    %c192 = arith.constant 192 : index
    %c0_30 = arith.constant 0 : index
    %98 = vector.load %arg3[%c192, %c0_30] : memref<256x256xbf16, #tpu.memory_space<vmem>>, vector<64x256xbf16>
    %cst_31 = arith.constant dense<0.000000e+00> : vector<8x256xf32>
    %99 = tpu.matmul %97, %98, %cst_31 {dimension_numbers = #tpu.dot_dimension_numbers<[1], [0], [0], [1], [0, 0, 1, 1], [], []>} : vector<8x64xbf16>, vector<64x256xbf16>, vector<8x256xf32> -> vector<8x256xf32>
    %100 = arith.addf %78, %99 : vector<8x256xf32>
    %c0_32 = arith.constant 0 : index
    %c0_33 = arith.constant 0 : index
    %101 = vector.load %arg4[%c0_32, %c0_33] : memref<1x256xf32, #tpu.memory_space<vmem>>, vector<1x256xf32>
    %102 = vector.broadcast %101 : vector<1x256xf32> to vector<8x256xf32>
    %103 = arith.addf %100, %102 : vector<8x256xf32>
    %c0_34 = arith.constant 0 : index
    %c0_35 = arith.constant 0 : index
    %104 = vector.load %arg7[%c0_34, %c0_35] : memref<8x256xf32, #tpu.memory_space<vmem>>, vector<8x256xf32>
    tpu.vector_store %arg7[%c0_34, %c0_35], %103 {strides = array<i32>} : memref<8x256xf32, #tpu.memory_space<vmem>>, vector<8x256xf32>,
    %105 = arith.truncf %103 : vector<8x256xf32> to vector<8x256xbf16>
    %c0_36 = arith.constant 0 : index
    %c0_37 = arith.constant 0 : index
    %c0_38 = arith.constant 0 : index
    %106 = vector.load %arg5[%c0_36, %c0_37, %c0_38] : memref<4x256x64xbf16, #tpu.memory_space<vmem>>, vector<1x256x64xbf16>
    %107 = vector.shape_cast %106 : vector<1x256x64xbf16> to vector<256x64xbf16>
    %cst_39 = arith.constant dense<0.000000e+00> : vector<8x64xf32>
    %108 = tpu.matmul %105, %107, %cst_39 {dimension_numbers = #tpu.dot_dimension_numbers<[1], [0], [0], [1], [0, 0, 1, 1], [], []>} : vector<8x256xbf16>, vector<256x64xbf16>, vector<8x64xf32> -> vector<8x64xf32>
    %c0_40 = arith.constant 0 : index
    %c0_41 = arith.constant 0 : index
    %c0_42 = arith.constant 0 : index
    %109 = vector.load %arg6[%c0_40, %c0_41, %c0_42] : memref<4x1x64xf32, #tpu.memory_space<vmem>>, vector<1x1x64xf32>
    %110 = vector.shape_cast %109 : vector<1x1x64xf32> to vector<1x64xf32>
    %111 = vector.broadcast %110 : vector<1x64xf32> to vector<8x64xf32>
    %112 = arith.addf %108, %111 : vector<8x64xf32>
    %c0_43 = arith.constant 0 : index
    %c0_44 = arith.constant 0 : index
    %113 = vector.load %arg8[%c0_43, %c0_44] : memref<32x64xf32, #tpu.memory_space<vmem>>, vector<8x64xf32>
    tpu.vector_store %arg8[%c0_43, %c0_44], %112 {strides = array<i32>} : memref<32x64xf32, #tpu.memory_space<vmem>>, vector<8x64xf32>,
    %c1 = arith.constant 1 : index
    %c0_45 = arith.constant 0 : index
    %c0_46 = arith.constant 0 : index
    %114 = vector.load %arg5[%c1, %c0_45, %c0_46] : memref<4x256x64xbf16, #tpu.memory_space<vmem>>, vector<1x256x64xbf16>
    %115 = vector.shape_cast %114 : vector<1x256x64xbf16> to vector<256x64xbf16>
    %cst_47 = arith.constant dense<0.000000e+00> : vector<8x64xf32>
    %116 = tpu.matmul %105, %115, %cst_47 {dimension_numbers = #tpu.dot_dimension_numbers<[1], [0], [0], [1], [0, 0, 1, 1], [], []>} : vector<8x256xbf16>, vector<256x64xbf16>, vector<8x64xf32> -> vector<8x64xf32>
    %c1_48 = arith.constant 1 : index
    %c0_49 = arith.constant 0 : index
    %c0_50 = arith.constant 0 : index
    %117 = vector.load %arg6[%c1_48, %c0_49, %c0_50] : memref<4x1x64xf32, #tpu.memory_space<vmem>>, vector<1x1x64xf32>
    %118 = vector.shape_cast %117 : vector<1x1x64xf32> to vector<1x64xf32>
    %119 = vector.broadcast %118 : vector<1x64xf32> to vector<8x64xf32>
    %120 = arith.addf %116, %119 : vector<8x64xf32>
    %c8 = arith.constant 8 : index
    %c0_51 = arith.constant 0 : index
    %121 = vector.load %arg8[%c8, %c0_51] : memref<32x64xf32, #tpu.memory_space<vmem>>, vector<8x64xf32>
    tpu.vector_store %arg8[%c8, %c0_51], %120 {strides = array<i32>} : memref<32x64xf32, #tpu.memory_space<vmem>>, vector<8x64xf32>,
    %c2 = arith.constant 2 : index
    %c0_52 = arith.constant 0 : index
    %c0_53 = arith.constant 0 : index
    %122 = vector.load %arg5[%c2, %c0_52, %c0_53] : memref<4x256x64xbf16, #tpu.memory_space<vmem>>, vector<1x256x64xbf16>
    %123 = vector.shape_cast %122 : vector<1x256x64xbf16> to vector<256x64xbf16>
    %cst_54 = arith.constant dense<0.000000e+00> : vector<8x64xf32>
    %124 = tpu.matmul %105, %123, %cst_54 {dimension_numbers = #tpu.dot_dimension_numbers<[1], [0], [0], [1], [0, 0, 1, 1], [], []>} : vector<8x256xbf16>, vector<256x64xbf16>, vector<8x64xf32> -> vector<8x64xf32>
    %c2_55 = arith.constant 2 : index
    %c0_56 = arith.constant 0 : index
    %c0_57 = arith.constant 0 : index
    %125 = vector.load %arg6[%c2_55, %c0_56, %c0_57] : memref<4x1x64xf32, #tpu.memory_space<vmem>>, vector<1x1x64xf32>
    %126 = vector.shape_cast %125 : vector<1x1x64xf32> to vector<1x64xf32>
    %127 = vector.broadcast %126 : vector<1x64xf32> to vector<8x64xf32>
    %128 = arith.addf %124, %127 : vector<8x64xf32>
    %c16 = arith.constant 16 : index
    %c0_58 = arith.constant 0 : index
    %129 = vector.load %arg8[%c16, %c0_58] : memref<32x64xf32, #tpu.memory_space<vmem>>, vector<8x64xf32>
    tpu.vector_store %arg8[%c16, %c0_58], %128 {strides = array<i32>} : memref<32x64xf32, #tpu.memory_space<vmem>>, vector<8x64xf32>,
    %c3 = arith.constant 3 : index
    %c0_59 = arith.constant 0 : index
    %c0_60 = arith.constant 0 : index
    %130 = vector.load %arg5[%c3, %c0_59, %c0_60] : memref<4x256x64xbf16, #tpu.memory_space<vmem>>, vector<1x256x64xbf16>
    %131 = vector.shape_cast %130 : vector<1x256x64xbf16> to vector<256x64xbf16>
    %cst_61 = arith.constant dense<0.000000e+00> : vector<8x64xf32>
    %132 = tpu.matmul %105, %131, %cst_61 {dimension_numbers = #tpu.dot_dimension_numbers<[1], [0], [0], [1], [0, 0, 1, 1], [], []>} : vector<8x256xbf16>, vector<256x64xbf16>, vector<8x64xf32> -> vector<8x64xf32>
    %c3_62 = arith.constant 3 : index
    %c0_63 = arith.constant 0 : index
    %c0_64 = arith.constant 0 : index
    %133 = vector.load %arg6[%c3_62, %c0_63, %c0_64] : memref<4x1x64xf32, #tpu.memory_space<vmem>>, vector<1x1x64xf32>
    %134 = vector.shape_cast %133 : vector<1x1x64xf32> to vector<1x64xf32>
    %135 = vector.broadcast %134 : vector<1x64xf32> to vector<8x64xf32>
    %136 = arith.addf %132, %135 : vector<8x64xf32>
    %c24 = arith.constant 24 : index
    %c0_65 = arith.constant 0 : index
    %137 = vector.load %arg8[%c24, %c0_65] : memref<32x64xf32, #tpu.memory_space<vmem>>, vector<8x64xf32>
    tpu.vector_store %arg8[%c24, %c0_65], %136 {strides = array<i32>} : memref<32x64xf32, #tpu.memory_space<vmem>>, vector<8x64xf32>,
    return
  }
}

module attributes {stable_mosaic.version = 11 : i64} {
  func.func @_flash_stream_kernel(%arg0: i32, %arg1: i32, %arg2: memref<32x64xf32, #tpu.memory_space<vmem>>, %arg3: memref<64x1024xf32, #tpu.memory_space<vmem>>, %arg4: memref<32x1xf32, #tpu.memory_space<vmem>>, %arg5: memref<32x1xf32, #tpu.memory_space<vmem>>, %arg6: memref<32x64xf32, #tpu.memory_space<vmem>>) attributes {dimension_semantics = [#tpu.dimension_semantics<parallel>, #tpu.dimension_semantics<arbitrary>], iteration_bounds = array<i64: 2, 1>, scalar_prefetch = 0 : i64, scratch_operands = 0 : i64, tpu.core_type = #tpu.core_type<tc>, window_params = [{pipeline_mode = #tpu.pipeline_mode<synchronous>, transform_indices = @transform_0, window_bounds = array<i64: 32, 64>}, {transform_indices = @transform_1, window_bounds = array<i64: 64, 1024>}, {transform_indices = @transform_2, window_bounds = array<i64: 32, 1>}, {transform_indices = @transform_3, window_bounds = array<i64: 32, 1>}, {transform_indices = @transform_4, window_bounds = array<i64: 32, 64>}]} {
    %c0_i32 = arith.constant 0 : i32
    %0 = arith.cmpi eq, %arg1, %c0_i32 : i32
    %1 = arith.extui %0 : i1 to i32
    %c0_i32_0 = arith.constant 0 : i32
    %2 = arith.cmpi ne, %1, %c0_i32_0 : i32
    scf.if %2 {
      %cst_19 = arith.constant -1.000000e+30 : f32
      %31 = vector.broadcast %cst_19 : f32 to vector<32x1xf32>
      %c0_20 = arith.constant 0 : index
      %c0_21 = arith.constant 0 : index
      %32 = vector.load %arg4[%c0_20, %c0_21] : memref<32x1xf32, #tpu.memory_space<vmem>>, vector<32x1xf32>
      tpu.vector_store %arg4[%c0_20, %c0_21], %31 {strides = array<i32>} : memref<32x1xf32, #tpu.memory_space<vmem>>, vector<32x1xf32>,
      %cst_22 = arith.constant 0.000000e+00 : f32
      %33 = vector.broadcast %cst_22 : f32 to vector<32x1xf32>
      %c0_23 = arith.constant 0 : index
      %c0_24 = arith.constant 0 : index
      %34 = vector.load %arg5[%c0_23, %c0_24] : memref<32x1xf32, #tpu.memory_space<vmem>>, vector<32x1xf32>
      tpu.vector_store %arg5[%c0_23, %c0_24], %33 {strides = array<i32>} : memref<32x1xf32, #tpu.memory_space<vmem>>, vector<32x1xf32>,
      %cst_25 = arith.constant 0.000000e+00 : f32
      %35 = vector.broadcast %cst_25 : f32 to vector<32x64xf32>
      %c0_26 = arith.constant 0 : index
      %c0_27 = arith.constant 0 : index
      %36 = vector.load %arg6[%c0_26, %c0_27] : memref<32x64xf32, #tpu.memory_space<vmem>>, vector<32x64xf32>
      tpu.vector_store %arg6[%c0_26, %c0_27], %35 {strides = array<i32>} : memref<32x64xf32, #tpu.memory_space<vmem>>, vector<32x64xf32>,
    } else {
    }
    %c0 = arith.constant 0 : index
    %c0_1 = arith.constant 0 : index
    %3 = vector.load %arg3[%c0, %c0_1] : memref<64x1024xf32, #tpu.memory_space<vmem>>, vector<64x1024xf32>
    %4 = arith.truncf %3 : vector<64x1024xf32> to vector<64x1024xbf16>
    %c0_2 = arith.constant 0 : index
    %c0_3 = arith.constant 0 : index
    %5 = vector.load %arg2[%c0_2, %c0_3] : memref<32x64xf32, #tpu.memory_space<vmem>>, vector<32x64xf32>
    %6 = arith.truncf %5 : vector<32x64xf32> to vector<32x64xbf16>
    %cst = arith.constant dense<0.000000e+00> : vector<32x1024xf32>
    %7 = tpu.matmul %6, %4, %cst {dimension_numbers = #tpu.dot_dimension_numbers<[1], [0], [0], [1], [0, 0, 1, 1], [], []>} : vector<32x64xbf16>, vector<64x1024xbf16>, vector<32x1024xf32> -> vector<32x1024xf32>
    %c0_4 = arith.constant 0 : index
    %c0_5 = arith.constant 0 : index
    %8 = vector.load %arg4[%c0_4, %c0_5] : memref<32x1xf32, #tpu.memory_space<vmem>>, vector<32x1xf32>
    %cst_6 = arith.constant dense<0xFF800000> : vector<32xf32>
    %9 = vector.multi_reduction <maximumf>, %7, %cst_6 [1] : vector<32x1024xf32> to vector<32xf32>
    %10 = vector.shape_cast %9 : vector<32xf32> to vector<32x1xf32>
    %11 = arith.maximumf %8, %10 : vector<32x1xf32>
    %12 = arith.subf %8, %11 : vector<32x1xf32>
    %13 = math.exp %12 : vector<32x1xf32>
    %14 = vector.broadcast %11 : vector<32x1xf32> to vector<32x1024xf32>
    %15 = arith.subf %7, %14 : vector<32x1024xf32>
    %16 = math.exp %15 : vector<32x1024xf32>
    %c0_7 = arith.constant 0 : index
    %c0_8 = arith.constant 0 : index
    %17 = vector.load %arg5[%c0_7, %c0_8] : memref<32x1xf32, #tpu.memory_space<vmem>>, vector<32x1xf32>
    %18 = arith.mulf %13, %17 : vector<32x1xf32>
    %cst_9 = arith.constant dense<0.000000e+00> : vector<32xf32>
    %19 = vector.multi_reduction <add>, %16, %cst_9 [1] : vector<32x1024xf32> to vector<32xf32>
    %20 = vector.shape_cast %19 : vector<32xf32> to vector<32x1xf32>
    %21 = arith.addf %18, %20 : vector<32x1xf32>
    %c0_10 = arith.constant 0 : index
    %c0_11 = arith.constant 0 : index
    %22 = vector.load %arg5[%c0_10, %c0_11] : memref<32x1xf32, #tpu.memory_space<vmem>>, vector<32x1xf32>
    tpu.vector_store %arg5[%c0_10, %c0_11], %21 {strides = array<i32>} : memref<32x1xf32, #tpu.memory_space<vmem>>, vector<32x1xf32>,
    %c0_12 = arith.constant 0 : index
    %c0_13 = arith.constant 0 : index
    %23 = vector.load %arg6[%c0_12, %c0_13] : memref<32x64xf32, #tpu.memory_space<vmem>>, vector<32x64xf32>
    %24 = vector.broadcast %13 : vector<32x1xf32> to vector<32x64xf32>
    %25 = arith.mulf %24, %23 : vector<32x64xf32>
    %26 = arith.truncf %16 : vector<32x1024xf32> to vector<32x1024xbf16>
    %cst_14 = arith.constant dense<0.000000e+00> : vector<32x64xf32>
    %27 = tpu.matmul %26, %4, %cst_14 {dimension_numbers = #tpu.dot_dimension_numbers<[1], [1], [0], [0], [0, 0, 1, 0], [], []>} : vector<32x1024xbf16>, vector<64x1024xbf16>, vector<32x64xf32> -> vector<32x64xf32>
    %28 = arith.addf %25, %27 : vector<32x64xf32>
    %c0_15 = arith.constant 0 : index
    %c0_16 = arith.constant 0 : index
    %29 = vector.load %arg6[%c0_15, %c0_16] : memref<32x64xf32, #tpu.memory_space<vmem>>, vector<32x64xf32>
    tpu.vector_store %arg6[%c0_15, %c0_16], %28 {strides = array<i32>} : memref<32x64xf32, #tpu.memory_space<vmem>>, vector<32x64xf32>,
    %c0_17 = arith.constant 0 : index
    %c0_18 = arith.constant 0 : index
    %30 = vector.load %arg4[%c0_17, %c0_18] : memref<32x1xf32, #tpu.memory_space<vmem>>, vector<32x1xf32>
    tpu.vector_store %arg4[%c0_17, %c0_18], %11 {strides = array<i32>} : memref<32x1xf32, #tpu.memory_space<vmem>>, vector<32x1xf32>,
    return
  }
  func.func @transform_0(%arg0: i32, %arg1: i32) -> (i32, i32) {
    %c0_i32 = arith.constant 0 : i32
    %c0_i32_0 = arith.constant 0 : i32
    %c0_i32_1 = arith.constant 0 : i32
    return %c0_i32, %c0_i32_0 : i32, i32
  }
  func.func @transform_1(%arg0: i32, %arg1: i32) -> (i32, i32) {
    %c1_i32 = arith.constant 1 : i32
    %0 = arith.muli %arg0, %c1_i32 : i32
    %1 = arith.addi %0, %arg1 : i32
    %c0_i32 = arith.constant 0 : i32
    %c0_i32_0 = arith.constant 0 : i32
    return %c0_i32, %1 : i32, i32
  }
  func.func @transform_2(%arg0: i32, %arg1: i32) -> (i32, i32) {
    %c0_i32 = arith.constant 0 : i32
    %c0_i32_0 = arith.constant 0 : i32
    return %arg0, %c0_i32 : i32, i32
  }
  func.func @transform_3(%arg0: i32, %arg1: i32) -> (i32, i32) {
    %c0_i32 = arith.constant 0 : i32
    %c0_i32_0 = arith.constant 0 : i32
    return %arg0, %c0_i32 : i32, i32
  }
  func.func @transform_4(%arg0: i32, %arg1: i32) -> (i32, i32) {
    %c0_i32 = arith.constant 0 : i32
    %c0_i32_0 = arith.constant 0 : i32
    return %arg0, %c0_i32 : i32, i32
  }
}

module attributes {stable_mosaic.version = 11 : i64} {
  func.func @_text_epilogue_kernel(%arg0: memref<8x256xf32, #tpu.memory_space<vmem>>, %arg1: memref<64x1xf32, #tpu.memory_space<vmem>>, %arg2: memref<64x1xf32, #tpu.memory_space<vmem>>, %arg3: memref<64x64xf32, #tpu.memory_space<vmem>>, %arg4: memref<4x64x256xbf16, #tpu.memory_space<vmem>>, %arg5: memref<1x256xf32, #tpu.memory_space<vmem>>, %arg6: memref<1x256xf32, #tpu.memory_space<vmem>>, %arg7: memref<1x256xf32, #tpu.memory_space<vmem>>, %arg8: memref<256x1024xbf16, #tpu.memory_space<vmem>>, %arg9: memref<1x1024xf32, #tpu.memory_space<vmem>>, %arg10: memref<1024x256xbf16, #tpu.memory_space<vmem>>, %arg11: memref<1x256xf32, #tpu.memory_space<vmem>>, %arg12: memref<256x64xbf16, #tpu.memory_space<vmem>>, %arg13: memref<1x64xf32, #tpu.memory_space<vmem>>, %arg14: memref<256x64xbf16, #tpu.memory_space<vmem>>, %arg15: memref<1x64xf32, #tpu.memory_space<vmem>>, %arg16: memref<64x64xbf16, #tpu.memory_space<vmem>>, %arg17: memref<1x64xf32, #tpu.memory_space<vmem>>, %arg18: memref<64x64xbf16, #tpu.memory_space<vmem>>, %arg19: memref<32x64xf32, #tpu.memory_space<vmem>>, %arg20: memref<32x1xf32, #tpu.memory_space<vmem>>, %arg21: memref<64x32xf32, #tpu.memory_space<vmem>>) attributes {dimension_semantics = [], scalar_prefetch = 0 : i64, scratch_operands = 0 : i64, tpu.core_type = #tpu.core_type<tc>} {
    %c0 = arith.constant 0 : index
    %c0_0 = arith.constant 0 : index
    %0 = vector.load %arg1[%c0, %c0_0] : memref<64x1xf32, #tpu.memory_space<vmem>>, vector<32x1xf32>
    %c32 = arith.constant 32 : index
    %c0_1 = arith.constant 0 : index
    %1 = vector.load %arg1[%c32, %c0_1] : memref<64x1xf32, #tpu.memory_space<vmem>>, vector<32x1xf32>
    %c0_2 = arith.constant 0 : index
    %c0_3 = arith.constant 0 : index
    %2 = vector.load %arg2[%c0_2, %c0_3] : memref<64x1xf32, #tpu.memory_space<vmem>>, vector<32x1xf32>
    %c32_4 = arith.constant 32 : index
    %c0_5 = arith.constant 0 : index
    %3 = vector.load %arg2[%c32_4, %c0_5] : memref<64x1xf32, #tpu.memory_space<vmem>>, vector<32x1xf32>
    %c0_6 = arith.constant 0 : index
    %c0_7 = arith.constant 0 : index
    %4 = vector.load %arg3[%c0_6, %c0_7] : memref<64x64xf32, #tpu.memory_space<vmem>>, vector<32x64xf32>
    %c32_8 = arith.constant 32 : index
    %c0_9 = arith.constant 0 : index
    %5 = vector.load %arg3[%c32_8, %c0_9] : memref<64x64xf32, #tpu.memory_space<vmem>>, vector<32x64xf32>
    %6 = arith.maximumf %0, %1 : vector<32x1xf32>
    %7 = arith.subf %0, %6 : vector<32x1xf32>
    %8 = math.exp %7 : vector<32x1xf32>
    %9 = arith.subf %1, %6 : vector<32x1xf32>
    %10 = math.exp %9 : vector<32x1xf32>
    %11 = arith.mulf %8, %2 : vector<32x1xf32>
    %12 = arith.mulf %10, %3 : vector<32x1xf32>
    %13 = arith.addf %11, %12 : vector<32x1xf32>
    %14 = vector.broadcast %8 : vector<32x1xf32> to vector<32x64xf32>
    %15 = arith.mulf %14, %4 : vector<32x64xf32>
    %16 = vector.broadcast %10 : vector<32x1xf32> to vector<32x64xf32>
    %17 = arith.mulf %16, %5 : vector<32x64xf32>
    %18 = arith.addf %15, %17 : vector<32x64xf32>
    %19 = vector.broadcast %13 : vector<32x1xf32> to vector<32x64xf32>
    %20 = arith.divf %18, %19 : vector<32x64xf32>
    %c0_10 = arith.constant 0 : index
    %c0_11 = arith.constant 0 : index
    %21 = vector.load %arg0[%c0_10, %c0_11] : memref<8x256xf32, #tpu.memory_space<vmem>>, vector<8x256xf32>
    %cst = arith.constant 0.000000e+00 : f32
    %22 = vector.broadcast %cst : f32 to vector<8x256xf32>
    %23 = vector.extract_strided_slice %20 {offsets = [0, 0], sizes = [8, 64], strides = [1, 1]} : vector<32x64xf32> to vector<8x64xf32>
    %24 = arith.truncf %23 : vector<8x64xf32> to vector<8x64xbf16>
    %c0_12 = arith.constant 0 : index
    %c0_13 = arith.constant 0 : index
    %c0_14 = arith.constant 0 : index
    %25 = vector.load %arg4[%c0_12, %c0_13, %c0_14] : memref<4x64x256xbf16, #tpu.memory_space<vmem>>, vector<1x64x256xbf16>
    %26 = vector.shape_cast %25 : vector<1x64x256xbf16> to vector<64x256xbf16>
    %cst_15 = arith.constant dense<0.000000e+00> : vector<8x256xf32>
    %27 = tpu.matmul %24, %26, %cst_15 {dimension_numbers = #tpu.dot_dimension_numbers<[1], [0], [0], [1], [0, 0, 1, 1], [], []>} : vector<8x64xbf16>, vector<64x256xbf16>, vector<8x256xf32> -> vector<8x256xf32>
    %28 = arith.addf %22, %27 : vector<8x256xf32>
    %29 = vector.extract_strided_slice %20 {offsets = [8, 0], sizes = [8, 64], strides = [1, 1]} : vector<32x64xf32> to vector<8x64xf32>
    %30 = arith.truncf %29 : vector<8x64xf32> to vector<8x64xbf16>
    %c1 = arith.constant 1 : index
    %c0_16 = arith.constant 0 : index
    %c0_17 = arith.constant 0 : index
    %31 = vector.load %arg4[%c1, %c0_16, %c0_17] : memref<4x64x256xbf16, #tpu.memory_space<vmem>>, vector<1x64x256xbf16>
    %32 = vector.shape_cast %31 : vector<1x64x256xbf16> to vector<64x256xbf16>
    %cst_18 = arith.constant dense<0.000000e+00> : vector<8x256xf32>
    %33 = tpu.matmul %30, %32, %cst_18 {dimension_numbers = #tpu.dot_dimension_numbers<[1], [0], [0], [1], [0, 0, 1, 1], [], []>} : vector<8x64xbf16>, vector<64x256xbf16>, vector<8x256xf32> -> vector<8x256xf32>
    %34 = arith.addf %28, %33 : vector<8x256xf32>
    %35 = vector.extract_strided_slice %20 {offsets = [16, 0], sizes = [8, 64], strides = [1, 1]} : vector<32x64xf32> to vector<8x64xf32>
    %36 = arith.truncf %35 : vector<8x64xf32> to vector<8x64xbf16>
    %c2 = arith.constant 2 : index
    %c0_19 = arith.constant 0 : index
    %c0_20 = arith.constant 0 : index
    %37 = vector.load %arg4[%c2, %c0_19, %c0_20] : memref<4x64x256xbf16, #tpu.memory_space<vmem>>, vector<1x64x256xbf16>
    %38 = vector.shape_cast %37 : vector<1x64x256xbf16> to vector<64x256xbf16>
    %cst_21 = arith.constant dense<0.000000e+00> : vector<8x256xf32>
    %39 = tpu.matmul %36, %38, %cst_21 {dimension_numbers = #tpu.dot_dimension_numbers<[1], [0], [0], [1], [0, 0, 1, 1], [], []>} : vector<8x64xbf16>, vector<64x256xbf16>, vector<8x256xf32> -> vector<8x256xf32>
    %40 = arith.addf %34, %39 : vector<8x256xf32>
    %41 = vector.extract_strided_slice %20 {offsets = [24, 0], sizes = [8, 64], strides = [1, 1]} : vector<32x64xf32> to vector<8x64xf32>
    %42 = arith.truncf %41 : vector<8x64xf32> to vector<8x64xbf16>
    %c3 = arith.constant 3 : index
    %c0_22 = arith.constant 0 : index
    %c0_23 = arith.constant 0 : index
    %43 = vector.load %arg4[%c3, %c0_22, %c0_23] : memref<4x64x256xbf16, #tpu.memory_space<vmem>>, vector<1x64x256xbf16>
    %44 = vector.shape_cast %43 : vector<1x64x256xbf16> to vector<64x256xbf16>
    %cst_24 = arith.constant dense<0.000000e+00> : vector<8x256xf32>
    %45 = tpu.matmul %42, %44, %cst_24 {dimension_numbers = #tpu.dot_dimension_numbers<[1], [0], [0], [1], [0, 0, 1, 1], [], []>} : vector<8x64xbf16>, vector<64x256xbf16>, vector<8x256xf32> -> vector<8x256xf32>
    %46 = arith.addf %40, %45 : vector<8x256xf32>
    %c0_25 = arith.constant 0 : index
    %c0_26 = arith.constant 0 : index
    %47 = vector.load %arg5[%c0_25, %c0_26] : memref<1x256xf32, #tpu.memory_space<vmem>>, vector<1x256xf32>
    %48 = vector.broadcast %47 : vector<1x256xf32> to vector<8x256xf32>
    %49 = arith.addf %46, %48 : vector<8x256xf32>
    %50 = arith.addf %21, %49 : vector<8x256xf32>
    %cst_27 = arith.constant dense<0.000000e+00> : vector<8xf32>
    %51 = vector.multi_reduction <add>, %50, %cst_27 [1] : vector<8x256xf32> to vector<8xf32>
    %52 = vector.shape_cast %51 : vector<8xf32> to vector<8x1xf32>
    %cst_28 = arith.constant 2.560000e+02 : f32
    %53 = vector.broadcast %cst_28 : f32 to vector<8x1xf32>
    %54 = arith.divf %52, %53 : vector<8x1xf32>
    %55 = vector.broadcast %54 : vector<8x1xf32> to vector<8x256xf32>
    %56 = arith.subf %50, %55 : vector<8x256xf32>
    %57 = arith.mulf %56, %56 : vector<8x256xf32>
    %cst_29 = arith.constant dense<0.000000e+00> : vector<8xf32>
    %58 = vector.multi_reduction <add>, %57, %cst_29 [1] : vector<8x256xf32> to vector<8xf32>
    %59 = vector.shape_cast %58 : vector<8xf32> to vector<8x1xf32>
    %cst_30 = arith.constant 2.560000e+02 : f32
    %60 = vector.broadcast %cst_30 : f32 to vector<8x1xf32>
    %61 = arith.divf %59, %60 : vector<8x1xf32>
    %cst_31 = arith.constant 9.99999974E-6 : f32
    %62 = vector.broadcast %cst_31 : f32 to vector<8x1xf32>
    %63 = arith.addf %61, %62 : vector<8x1xf32>
    %64 = math.rsqrt %63 : vector<8x1xf32>
    %65 = vector.broadcast %64 : vector<8x1xf32> to vector<8x256xf32>
    %66 = arith.mulf %56, %65 : vector<8x256xf32>
    %c0_32 = arith.constant 0 : index
    %c0_33 = arith.constant 0 : index
    %67 = vector.load %arg6[%c0_32, %c0_33] : memref<1x256xf32, #tpu.memory_space<vmem>>, vector<1x256xf32>
    %68 = vector.broadcast %67 : vector<1x256xf32> to vector<8x256xf32>
    %69 = arith.mulf %66, %68 : vector<8x256xf32>
    %c0_34 = arith.constant 0 : index
    %c0_35 = arith.constant 0 : index
    %70 = vector.load %arg7[%c0_34, %c0_35] : memref<1x256xf32, #tpu.memory_space<vmem>>, vector<1x256xf32>
    %71 = vector.broadcast %70 : vector<1x256xf32> to vector<8x256xf32>
    %72 = arith.addf %69, %71 : vector<8x256xf32>
    %73 = arith.truncf %72 : vector<8x256xf32> to vector<8x256xbf16>
    %c0_36 = arith.constant 0 : index
    %c0_37 = arith.constant 0 : index
    %74 = vector.load %arg8[%c0_36, %c0_37] : memref<256x1024xbf16, #tpu.memory_space<vmem>>, vector<256x1024xbf16>
    %cst_38 = arith.constant dense<0.000000e+00> : vector<8x1024xf32>
    %75 = tpu.matmul %73, %74, %cst_38 {dimension_numbers = #tpu.dot_dimension_numbers<[1], [0], [0], [1], [0, 0, 1, 1], [], []>} : vector<8x256xbf16>, vector<256x1024xbf16>, vector<8x1024xf32> -> vector<8x1024xf32>
    %c0_39 = arith.constant 0 : index
    %c0_40 = arith.constant 0 : index
    %76 = vector.load %arg9[%c0_39, %c0_40] : memref<1x1024xf32, #tpu.memory_space<vmem>>, vector<1x1024xf32>
    %77 = vector.broadcast %76 : vector<1x1024xf32> to vector<8x1024xf32>
    %78 = arith.addf %75, %77 : vector<8x1024xf32>
    %cst_41 = arith.constant 0.000000e+00 : f32
    %79 = vector.broadcast %cst_41 : f32 to vector<8x1024xf32>
    %80 = arith.maximumf %78, %79 : vector<8x1024xf32>
    %81 = arith.truncf %80 : vector<8x1024xf32> to vector<8x1024xbf16>
    %c0_42 = arith.constant 0 : index
    %c0_43 = arith.constant 0 : index
    %82 = vector.load %arg10[%c0_42, %c0_43] : memref<1024x256xbf16, #tpu.memory_space<vmem>>, vector<1024x256xbf16>
    %cst_44 = arith.constant dense<0.000000e+00> : vector<8x256xf32>
    %83 = tpu.matmul %81, %82, %cst_44 {dimension_numbers = #tpu.dot_dimension_numbers<[1], [0], [0], [1], [0, 0, 1, 1], [], []>} : vector<8x1024xbf16>, vector<1024x256xbf16>, vector<8x256xf32> -> vector<8x256xf32>
    %c0_45 = arith.constant 0 : index
    %c0_46 = arith.constant 0 : index
    %84 = vector.load %arg11[%c0_45, %c0_46] : memref<1x256xf32, #tpu.memory_space<vmem>>, vector<1x256xf32>
    %85 = vector.broadcast %84 : vector<1x256xf32> to vector<8x256xf32>
    %86 = arith.addf %83, %85 : vector<8x256xf32>
    %87 = arith.truncf %86 : vector<8x256xf32> to vector<8x256xbf16>
    %c0_47 = arith.constant 0 : index
    %c0_48 = arith.constant 0 : index
    %88 = vector.load %arg12[%c0_47, %c0_48] : memref<256x64xbf16, #tpu.memory_space<vmem>>, vector<256x64xbf16>
    %cst_49 = arith.constant dense<0.000000e+00> : vector<8x64xf32>
    %89 = tpu.matmul %87, %88, %cst_49 {dimension_numbers = #tpu.dot_dimension_numbers<[1], [0], [0], [1], [0, 0, 1, 1], [], []>} : vector<8x256xbf16>, vector<256x64xbf16>, vector<8x64xf32> -> vector<8x64xf32>
    %c0_50 = arith.constant 0 : index
    %c0_51 = arith.constant 0 : index
    %90 = vector.load %arg13[%c0_50, %c0_51] : memref<1x64xf32, #tpu.memory_space<vmem>>, vector<1x64xf32>
    %91 = vector.broadcast %90 : vector<1x64xf32> to vector<8x64xf32>
    %92 = arith.addf %89, %91 : vector<8x64xf32>
    %c0_52 = arith.constant 0 : index
    %c0_53 = arith.constant 0 : index
    %93 = vector.load %arg14[%c0_52, %c0_53] : memref<256x64xbf16, #tpu.memory_space<vmem>>, vector<256x64xbf16>
    %cst_54 = arith.constant dense<0.000000e+00> : vector<8x64xf32>
    %94 = tpu.matmul %87, %93, %cst_54 {dimension_numbers = #tpu.dot_dimension_numbers<[1], [0], [0], [1], [0, 0, 1, 1], [], []>} : vector<8x256xbf16>, vector<256x64xbf16>, vector<8x64xf32> -> vector<8x64xf32>
    %c0_55 = arith.constant 0 : index
    %c0_56 = arith.constant 0 : index
    %95 = vector.load %arg15[%c0_55, %c0_56] : memref<1x64xf32, #tpu.memory_space<vmem>>, vector<1x64xf32>
    %96 = vector.broadcast %95 : vector<1x64xf32> to vector<8x64xf32>
    %97 = arith.addf %94, %96 : vector<8x64xf32>
    %98 = vector.extract_strided_slice %92 {offsets = [0, 0], sizes = [8, 16], strides = [1, 1]} : vector<8x64xf32> to vector<8x16xf32>
    %99 = arith.truncf %98 : vector<8x16xf32> to vector<8x16xbf16>
    %c0_57 = arith.constant 0 : index
    %c0_58 = arith.constant 0 : index
    %100 = vector.load %arg16[%c0_57, %c0_58] : memref<64x64xbf16, #tpu.memory_space<vmem>>, vector<16x64xbf16>
    %cst_59 = arith.constant dense<0.000000e+00> : vector<8x64xf32>
    %101 = tpu.matmul %99, %100, %cst_59 {dimension_numbers = #tpu.dot_dimension_numbers<[1], [0], [0], [1], [0, 0, 1, 1], [], []>} : vector<8x16xbf16>, vector<16x64xbf16>, vector<8x64xf32> -> vector<8x64xf32>
    %cst_60 = arith.constant 2.500000e-01 : f32
    %102 = vector.broadcast %cst_60 : f32 to vector<8x64xf32>
    %103 = arith.mulf %102, %101 : vector<8x64xf32>
    %c0_61 = arith.constant 0 : index
    %c0_62 = arith.constant 0 : index
    %104 = vector.load %arg19[%c0_61, %c0_62] : memref<32x64xf32, #tpu.memory_space<vmem>>, vector<8x64xf32>
    tpu.vector_store %arg19[%c0_61, %c0_62], %103 {strides = array<i32>} : memref<32x64xf32, #tpu.memory_space<vmem>>, vector<8x64xf32>,
    %c0_63 = arith.constant 0 : index
    %c0_64 = arith.constant 0 : index
    %105 = vector.load %arg17[%c0_63, %c0_64] : memref<1x64xf32, #tpu.memory_space<vmem>>, vector<1x16xf32>
    %106 = vector.broadcast %105 : vector<1x16xf32> to vector<8x16xf32>
    %107 = arith.mulf %98, %106 : vector<8x16xf32>
    %cst_65 = arith.constant dense<0.000000e+00> : vector<8xf32>
    %108 = vector.multi_reduction <add>, %107, %cst_65 [1] : vector<8x16xf32> to vector<8xf32>
    %109 = vector.shape_cast %108 : vector<8xf32> to vector<8x1xf32>
    %cst_66 = arith.constant 2.500000e-01 : f32
    %110 = vector.broadcast %cst_66 : f32 to vector<8x1xf32>
    %111 = arith.mulf %110, %109 : vector<8x1xf32>
    %c0_67 = arith.constant 0 : index
    %c0_68 = arith.constant 0 : index
    %112 = vector.load %arg20[%c0_67, %c0_68] : memref<32x1xf32, #tpu.memory_space<vmem>>, vector<8x1xf32>
    tpu.vector_store %arg20[%c0_67, %c0_68], %111 {strides = array<i32>} : memref<32x1xf32, #tpu.memory_space<vmem>>, vector<8x1xf32>,
    %c0_69 = arith.constant 0 : index
    %c0_70 = arith.constant 0 : index
    %113 = vector.load %arg18[%c0_69, %c0_70] : memref<64x64xbf16, #tpu.memory_space<vmem>>, vector<64x16xbf16>
    %114 = vector.extract_strided_slice %97 {offsets = [0, 0], sizes = [8, 16], strides = [1, 1]} : vector<8x64xf32> to vector<8x16xf32>
    %115 = arith.truncf %114 : vector<8x16xf32> to vector<8x16xbf16>
    %cst_71 = arith.constant dense<0.000000e+00> : vector<64x8xf32>
    %116 = tpu.matmul %113, %115, %cst_71 {dimension_numbers = #tpu.dot_dimension_numbers<[1], [1], [0], [0], [0, 0, 1, 0], [], []>} : vector<64x16xbf16>, vector<8x16xbf16>, vector<64x8xf32> -> vector<64x8xf32>
    %c0_72 = arith.constant 0 : index
    %c0_73 = arith.constant 0 : index
    %117 = vector.load %arg21[%c0_72, %c0_73] : memref<64x32xf32, #tpu.memory_space<vmem>>, vector<64x8xf32>
    tpu.vector_store %arg21[%c0_72, %c0_73], %116 {strides = array<i32>} : memref<64x32xf32, #tpu.memory_space<vmem>>, vector<64x8xf32>,
    %118 = vector.extract_strided_slice %92 {offsets = [0, 16], sizes = [8, 16], strides = [1, 1]} : vector<8x64xf32> to vector<8x16xf32>
    %119 = arith.truncf %118 : vector<8x16xf32> to vector<8x16xbf16>
    %c16 = arith.constant 16 : index
    %c0_74 = arith.constant 0 : index
    %120 = vector.load %arg16[%c16, %c0_74] : memref<64x64xbf16, #tpu.memory_space<vmem>>, vector<16x64xbf16>
    %cst_75 = arith.constant dense<0.000000e+00> : vector<8x64xf32>
    %121 = tpu.matmul %119, %120, %cst_75 {dimension_numbers = #tpu.dot_dimension_numbers<[1], [0], [0], [1], [0, 0, 1, 1], [], []>} : vector<8x16xbf16>, vector<16x64xbf16>, vector<8x64xf32> -> vector<8x64xf32>
    %cst_76 = arith.constant 2.500000e-01 : f32
    %122 = vector.broadcast %cst_76 : f32 to vector<8x64xf32>
    %123 = arith.mulf %122, %121 : vector<8x64xf32>
    %c8 = arith.constant 8 : index
    %c0_77 = arith.constant 0 : index
    %124 = vector.load %arg19[%c8, %c0_77] : memref<32x64xf32, #tpu.memory_space<vmem>>, vector<8x64xf32>
    tpu.vector_store %arg19[%c8, %c0_77], %123 {strides = array<i32>} : memref<32x64xf32, #tpu.memory_space<vmem>>, vector<8x64xf32>,
    %c0_78 = arith.constant 0 : index
    %c16_79 = arith.constant 16 : index
    %125 = vector.load %arg17[%c0_78, %c16_79] : memref<1x64xf32, #tpu.memory_space<vmem>>, vector<1x16xf32>
    %126 = vector.broadcast %125 : vector<1x16xf32> to vector<8x16xf32>
    %127 = arith.mulf %118, %126 : vector<8x16xf32>
    %cst_80 = arith.constant dense<0.000000e+00> : vector<8xf32>
    %128 = vector.multi_reduction <add>, %127, %cst_80 [1] : vector<8x16xf32> to vector<8xf32>
    %129 = vector.shape_cast %128 : vector<8xf32> to vector<8x1xf32>
    %cst_81 = arith.constant 2.500000e-01 : f32
    %130 = vector.broadcast %cst_81 : f32 to vector<8x1xf32>
    %131 = arith.mulf %130, %129 : vector<8x1xf32>
    %c8_82 = arith.constant 8 : index
    %c0_83 = arith.constant 0 : index
    %132 = vector.load %arg20[%c8_82, %c0_83] : memref<32x1xf32, #tpu.memory_space<vmem>>, vector<8x1xf32>
    tpu.vector_store %arg20[%c8_82, %c0_83], %131 {strides = array<i32>} : memref<32x1xf32, #tpu.memory_space<vmem>>, vector<8x1xf32>,
    %c0_84 = arith.constant 0 : index
    %c16_85 = arith.constant 16 : index
    %133 = vector.load %arg18[%c0_84, %c16_85] : memref<64x64xbf16, #tpu.memory_space<vmem>>, vector<64x16xbf16>
    %134 = vector.extract_strided_slice %97 {offsets = [0, 16], sizes = [8, 16], strides = [1, 1]} : vector<8x64xf32> to vector<8x16xf32>
    %135 = arith.truncf %134 : vector<8x16xf32> to vector<8x16xbf16>
    %cst_86 = arith.constant dense<0.000000e+00> : vector<64x8xf32>
    %136 = tpu.matmul %133, %135, %cst_86 {dimension_numbers = #tpu.dot_dimension_numbers<[1], [1], [0], [0], [0, 0, 1, 0], [], []>} : vector<64x16xbf16>, vector<8x16xbf16>, vector<64x8xf32> -> vector<64x8xf32>
    %c0_87 = arith.constant 0 : index
    %c8_88 = arith.constant 8 : index
    %137 = vector.load %arg21[%c0_87, %c8_88] : memref<64x32xf32, #tpu.memory_space<vmem>>, vector<64x8xf32>
    tpu.vector_store %arg21[%c0_87, %c8_88], %136 {strides = array<i32>} : memref<64x32xf32, #tpu.memory_space<vmem>>, vector<64x8xf32>,
    %138 = vector.extract_strided_slice %92 {offsets = [0, 32], sizes = [8, 16], strides = [1, 1]} : vector<8x64xf32> to vector<8x16xf32>
    %139 = arith.truncf %138 : vector<8x16xf32> to vector<8x16xbf16>
    %c32_89 = arith.constant 32 : index
    %c0_90 = arith.constant 0 : index
    %140 = vector.load %arg16[%c32_89, %c0_90] : memref<64x64xbf16, #tpu.memory_space<vmem>>, vector<16x64xbf16>
    %cst_91 = arith.constant dense<0.000000e+00> : vector<8x64xf32>
    %141 = tpu.matmul %139, %140, %cst_91 {dimension_numbers = #tpu.dot_dimension_numbers<[1], [0], [0], [1], [0, 0, 1, 1], [], []>} : vector<8x16xbf16>, vector<16x64xbf16>, vector<8x64xf32> -> vector<8x64xf32>
    %cst_92 = arith.constant 2.500000e-01 : f32
    %142 = vector.broadcast %cst_92 : f32 to vector<8x64xf32>
    %143 = arith.mulf %142, %141 : vector<8x64xf32>
    %c16_93 = arith.constant 16 : index
    %c0_94 = arith.constant 0 : index
    %144 = vector.load %arg19[%c16_93, %c0_94] : memref<32x64xf32, #tpu.memory_space<vmem>>, vector<8x64xf32>
    tpu.vector_store %arg19[%c16_93, %c0_94], %143 {strides = array<i32>} : memref<32x64xf32, #tpu.memory_space<vmem>>, vector<8x64xf32>,
    %c0_95 = arith.constant 0 : index
    %c32_96 = arith.constant 32 : index
    %145 = vector.load %arg17[%c0_95, %c32_96] : memref<1x64xf32, #tpu.memory_space<vmem>>, vector<1x16xf32>
    %146 = vector.broadcast %145 : vector<1x16xf32> to vector<8x16xf32>
    %147 = arith.mulf %138, %146 : vector<8x16xf32>
    %cst_97 = arith.constant dense<0.000000e+00> : vector<8xf32>
    %148 = vector.multi_reduction <add>, %147, %cst_97 [1] : vector<8x16xf32> to vector<8xf32>
    %149 = vector.shape_cast %148 : vector<8xf32> to vector<8x1xf32>
    %cst_98 = arith.constant 2.500000e-01 : f32
    %150 = vector.broadcast %cst_98 : f32 to vector<8x1xf32>
    %151 = arith.mulf %150, %149 : vector<8x1xf32>
    %c16_99 = arith.constant 16 : index
    %c0_100 = arith.constant 0 : index
    %152 = vector.load %arg20[%c16_99, %c0_100] : memref<32x1xf32, #tpu.memory_space<vmem>>, vector<8x1xf32>
    tpu.vector_store %arg20[%c16_99, %c0_100], %151 {strides = array<i32>} : memref<32x1xf32, #tpu.memory_space<vmem>>, vector<8x1xf32>,
    %c0_101 = arith.constant 0 : index
    %c32_102 = arith.constant 32 : index
    %153 = vector.load %arg18[%c0_101, %c32_102] : memref<64x64xbf16, #tpu.memory_space<vmem>>, vector<64x16xbf16>
    %154 = vector.extract_strided_slice %97 {offsets = [0, 32], sizes = [8, 16], strides = [1, 1]} : vector<8x64xf32> to vector<8x16xf32>
    %155 = arith.truncf %154 : vector<8x16xf32> to vector<8x16xbf16>
    %cst_103 = arith.constant dense<0.000000e+00> : vector<64x8xf32>
    %156 = tpu.matmul %153, %155, %cst_103 {dimension_numbers = #tpu.dot_dimension_numbers<[1], [1], [0], [0], [0, 0, 1, 0], [], []>} : vector<64x16xbf16>, vector<8x16xbf16>, vector<64x8xf32> -> vector<64x8xf32>
    %c0_104 = arith.constant 0 : index
    %c16_105 = arith.constant 16 : index
    %157 = vector.load %arg21[%c0_104, %c16_105] : memref<64x32xf32, #tpu.memory_space<vmem>>, vector<64x8xf32>
    tpu.vector_store %arg21[%c0_104, %c16_105], %156 {strides = array<i32>} : memref<64x32xf32, #tpu.memory_space<vmem>>, vector<64x8xf32>,
    %158 = vector.extract_strided_slice %92 {offsets = [0, 48], sizes = [8, 16], strides = [1, 1]} : vector<8x64xf32> to vector<8x16xf32>
    %159 = arith.truncf %158 : vector<8x16xf32> to vector<8x16xbf16>
    %c48 = arith.constant 48 : index
    %c0_106 = arith.constant 0 : index
    %160 = vector.load %arg16[%c48, %c0_106] : memref<64x64xbf16, #tpu.memory_space<vmem>>, vector<16x64xbf16>
    %cst_107 = arith.constant dense<0.000000e+00> : vector<8x64xf32>
    %161 = tpu.matmul %159, %160, %cst_107 {dimension_numbers = #tpu.dot_dimension_numbers<[1], [0], [0], [1], [0, 0, 1, 1], [], []>} : vector<8x16xbf16>, vector<16x64xbf16>, vector<8x64xf32> -> vector<8x64xf32>
    %cst_108 = arith.constant 2.500000e-01 : f32
    %162 = vector.broadcast %cst_108 : f32 to vector<8x64xf32>
    %163 = arith.mulf %162, %161 : vector<8x64xf32>
    %c24 = arith.constant 24 : index
    %c0_109 = arith.constant 0 : index
    %164 = vector.load %arg19[%c24, %c0_109] : memref<32x64xf32, #tpu.memory_space<vmem>>, vector<8x64xf32>
    tpu.vector_store %arg19[%c24, %c0_109], %163 {strides = array<i32>} : memref<32x64xf32, #tpu.memory_space<vmem>>, vector<8x64xf32>,
    %c0_110 = arith.constant 0 : index
    %c48_111 = arith.constant 48 : index
    %165 = vector.load %arg17[%c0_110, %c48_111] : memref<1x64xf32, #tpu.memory_space<vmem>>, vector<1x16xf32>
    %166 = vector.broadcast %165 : vector<1x16xf32> to vector<8x16xf32>
    %167 = arith.mulf %158, %166 : vector<8x16xf32>
    %cst_112 = arith.constant dense<0.000000e+00> : vector<8xf32>
    %168 = vector.multi_reduction <add>, %167, %cst_112 [1] : vector<8x16xf32> to vector<8xf32>
    %169 = vector.shape_cast %168 : vector<8xf32> to vector<8x1xf32>
    %cst_113 = arith.constant 2.500000e-01 : f32
    %170 = vector.broadcast %cst_113 : f32 to vector<8x1xf32>
    %171 = arith.mulf %170, %169 : vector<8x1xf32>
    %c24_114 = arith.constant 24 : index
    %c0_115 = arith.constant 0 : index
    %172 = vector.load %arg20[%c24_114, %c0_115] : memref<32x1xf32, #tpu.memory_space<vmem>>, vector<8x1xf32>
    tpu.vector_store %arg20[%c24_114, %c0_115], %171 {strides = array<i32>} : memref<32x1xf32, #tpu.memory_space<vmem>>, vector<8x1xf32>,
    %c0_116 = arith.constant 0 : index
    %c48_117 = arith.constant 48 : index
    %173 = vector.load %arg18[%c0_116, %c48_117] : memref<64x64xbf16, #tpu.memory_space<vmem>>, vector<64x16xbf16>
    %174 = vector.extract_strided_slice %97 {offsets = [0, 48], sizes = [8, 16], strides = [1, 1]} : vector<8x64xf32> to vector<8x16xf32>
    %175 = arith.truncf %174 : vector<8x16xf32> to vector<8x16xbf16>
    %cst_118 = arith.constant dense<0.000000e+00> : vector<64x8xf32>
    %176 = tpu.matmul %173, %175, %cst_118 {dimension_numbers = #tpu.dot_dimension_numbers<[1], [1], [0], [0], [0, 0, 1, 0], [], []>} : vector<64x16xbf16>, vector<8x16xbf16>, vector<64x8xf32> -> vector<64x8xf32>
    %c0_119 = arith.constant 0 : index
    %c24_120 = arith.constant 24 : index
    %177 = vector.load %arg21[%c0_119, %c24_120] : memref<64x32xf32, #tpu.memory_space<vmem>>, vector<64x8xf32>
    tpu.vector_store %arg21[%c0_119, %c24_120], %176 {strides = array<i32>} : memref<64x32xf32, #tpu.memory_space<vmem>>, vector<64x8xf32>,
    return
  }
}

module attributes {stable_mosaic.version = 11 : i64} {
  func.func @_voxel_attn_ln_kernel(%arg0: i32, %arg1: memref<64x1024xf32, #tpu.memory_space<vmem>>, %arg2: memref<32x64xf32, #tpu.memory_space<vmem>>, %arg3: memref<32x1xf32, #tpu.memory_space<vmem>>, %arg4: memref<64x32xf32, #tpu.memory_space<vmem>>, %arg5: memref<64x1xf32, #tpu.memory_space<vmem>>, %arg6: memref<64x1xf32, #tpu.memory_space<vmem>>, %arg7: memref<64x1xf32, #tpu.memory_space<vmem>>, %arg8: memref<64x1024xf32, #tpu.memory_space<vmem>>) attributes {dimension_semantics = [#tpu.dimension_semantics<parallel>], iteration_bounds = array<i64: 2>, scalar_prefetch = 0 : i64, scratch_operands = 0 : i64, tpu.core_type = #tpu.core_type<tc>, window_params = [{transform_indices = @transform_0, window_bounds = array<i64: 64, 1024>}, {pipeline_mode = #tpu.pipeline_mode<synchronous>, transform_indices = @transform_1, window_bounds = array<i64: 32, 64>}, {pipeline_mode = #tpu.pipeline_mode<synchronous>, transform_indices = @transform_2, window_bounds = array<i64: 32, 1>}, {pipeline_mode = #tpu.pipeline_mode<synchronous>, transform_indices = @transform_3, window_bounds = array<i64: 64, 32>}, {pipeline_mode = #tpu.pipeline_mode<synchronous>, transform_indices = @transform_4, window_bounds = array<i64: 64, 1>}, {pipeline_mode = #tpu.pipeline_mode<synchronous>, transform_indices = @transform_5, window_bounds = array<i64: 64, 1>}, {pipeline_mode = #tpu.pipeline_mode<synchronous>, transform_indices = @transform_6, window_bounds = array<i64: 64, 1>}, {transform_indices = @transform_7, window_bounds = array<i64: 64, 1024>}]} {
    %c0 = arith.constant 0 : index
    %c0_0 = arith.constant 0 : index
    %0 = vector.load %arg1[%c0, %c0_0] : memref<64x1024xf32, #tpu.memory_space<vmem>>, vector<64x1024xf32>
    %1 = arith.truncf %0 : vector<64x1024xf32> to vector<64x1024xbf16>
    %c0_1 = arith.constant 0 : index
    %c0_2 = arith.constant 0 : index
    %2 = vector.load %arg2[%c0_1, %c0_2] : memref<32x64xf32, #tpu.memory_space<vmem>>, vector<32x64xf32>
    %3 = arith.truncf %2 : vector<32x64xf32> to vector<32x64xbf16>
    %cst = arith.constant dense<0.000000e+00> : vector<32x1024xf32>
    %4 = tpu.matmul %3, %1, %cst {dimension_numbers = #tpu.dot_dimension_numbers<[1], [0], [0], [1], [0, 0, 1, 1], [], []>} : vector<32x64xbf16>, vector<64x1024xbf16>, vector<32x1024xf32> -> vector<32x1024xf32>
    %c0_3 = arith.constant 0 : index
    %c0_4 = arith.constant 0 : index
    %5 = vector.load %arg3[%c0_3, %c0_4] : memref<32x1xf32, #tpu.memory_space<vmem>>, vector<32x1xf32>
    %6 = vector.broadcast %5 : vector<32x1xf32> to vector<32x1024xf32>
    %7 = arith.addf %4, %6 : vector<32x1024xf32>
    %8 = vector.extract_strided_slice %7 {offsets = [0, 0], sizes = [8, 1024], strides = [1, 1]} : vector<32x1024xf32> to vector<8x1024xf32>
    %cst_5 = arith.constant dense<0xFF800000> : vector<1024xf32>
    %9 = vector.multi_reduction <maximumf>, %8, %cst_5 [0] : vector<8x1024xf32> to vector<1024xf32>
    %10 = vector.shape_cast %9 : vector<1024xf32> to vector<1x1024xf32>
    %11 = vector.broadcast %10 : vector<1x1024xf32> to vector<8x1024xf32>
    %12 = arith.subf %8, %11 : vector<8x1024xf32>
    %13 = math.exp %12 : vector<8x1024xf32>
    %cst_6 = arith.constant dense<0.000000e+00> : vector<1024xf32>
    %14 = vector.multi_reduction <add>, %13, %cst_6 [0] : vector<8x1024xf32> to vector<1024xf32>
    %15 = vector.shape_cast %14 : vector<1024xf32> to vector<1x1024xf32>
    %16 = vector.broadcast %15 : vector<1x1024xf32> to vector<8x1024xf32>
    %17 = arith.divf %13, %16 : vector<8x1024xf32>
    %18 = vector.extract_strided_slice %7 {offsets = [8, 0], sizes = [8, 1024], strides = [1, 1]} : vector<32x1024xf32> to vector<8x1024xf32>
    %cst_7 = arith.constant dense<0xFF800000> : vector<1024xf32>
    %19 = vector.multi_reduction <maximumf>, %18, %cst_7 [0] : vector<8x1024xf32> to vector<1024xf32>
    %20 = vector.shape_cast %19 : vector<1024xf32> to vector<1x1024xf32>
    %21 = vector.broadcast %20 : vector<1x1024xf32> to vector<8x1024xf32>
    %22 = arith.subf %18, %21 : vector<8x1024xf32>
    %23 = math.exp %22 : vector<8x1024xf32>
    %cst_8 = arith.constant dense<0.000000e+00> : vector<1024xf32>
    %24 = vector.multi_reduction <add>, %23, %cst_8 [0] : vector<8x1024xf32> to vector<1024xf32>
    %25 = vector.shape_cast %24 : vector<1024xf32> to vector<1x1024xf32>
    %26 = vector.broadcast %25 : vector<1x1024xf32> to vector<8x1024xf32>
    %27 = arith.divf %23, %26 : vector<8x1024xf32>
    %28 = vector.extract_strided_slice %7 {offsets = [16, 0], sizes = [8, 1024], strides = [1, 1]} : vector<32x1024xf32> to vector<8x1024xf32>
    %cst_9 = arith.constant dense<0xFF800000> : vector<1024xf32>
    %29 = vector.multi_reduction <maximumf>, %28, %cst_9 [0] : vector<8x1024xf32> to vector<1024xf32>
    %30 = vector.shape_cast %29 : vector<1024xf32> to vector<1x1024xf32>
    %31 = vector.broadcast %30 : vector<1x1024xf32> to vector<8x1024xf32>
    %32 = arith.subf %28, %31 : vector<8x1024xf32>
    %33 = math.exp %32 : vector<8x1024xf32>
    %cst_10 = arith.constant dense<0.000000e+00> : vector<1024xf32>
    %34 = vector.multi_reduction <add>, %33, %cst_10 [0] : vector<8x1024xf32> to vector<1024xf32>
    %35 = vector.shape_cast %34 : vector<1024xf32> to vector<1x1024xf32>
    %36 = vector.broadcast %35 : vector<1x1024xf32> to vector<8x1024xf32>
    %37 = arith.divf %33, %36 : vector<8x1024xf32>
    %38 = vector.extract_strided_slice %7 {offsets = [24, 0], sizes = [8, 1024], strides = [1, 1]} : vector<32x1024xf32> to vector<8x1024xf32>
    %cst_11 = arith.constant dense<0xFF800000> : vector<1024xf32>
    %39 = vector.multi_reduction <maximumf>, %38, %cst_11 [0] : vector<8x1024xf32> to vector<1024xf32>
    %40 = vector.shape_cast %39 : vector<1024xf32> to vector<1x1024xf32>
    %41 = vector.broadcast %40 : vector<1x1024xf32> to vector<8x1024xf32>
    %42 = arith.subf %38, %41 : vector<8x1024xf32>
    %43 = math.exp %42 : vector<8x1024xf32>
    %cst_12 = arith.constant dense<0.000000e+00> : vector<1024xf32>
    %44 = vector.multi_reduction <add>, %43, %cst_12 [0] : vector<8x1024xf32> to vector<1024xf32>
    %45 = vector.shape_cast %44 : vector<1024xf32> to vector<1x1024xf32>
    %46 = vector.broadcast %45 : vector<1x1024xf32> to vector<8x1024xf32>
    %47 = arith.divf %43, %46 : vector<8x1024xf32>
    %48 = tpu.concatenate %17, %27, %37, %47 in 0 : vector<8x1024xf32>, vector<8x1024xf32>, vector<8x1024xf32>, vector<8x1024xf32> -> vector<32x1024xf32>
    %49 = arith.truncf %48 : vector<32x1024xf32> to vector<32x1024xbf16>
    %c0_13 = arith.constant 0 : index
    %c0_14 = arith.constant 0 : index
    %50 = vector.load %arg4[%c0_13, %c0_14] : memref<64x32xf32, #tpu.memory_space<vmem>>, vector<64x32xf32>
    %51 = arith.truncf %50 : vector<64x32xf32> to vector<64x32xbf16>
    %cst_15 = arith.constant dense<0.000000e+00> : vector<64x1024xf32>
    %52 = tpu.matmul %51, %49, %cst_15 {dimension_numbers = #tpu.dot_dimension_numbers<[1], [0], [0], [1], [0, 0, 1, 1], [], []>} : vector<64x32xbf16>, vector<32x1024xbf16>, vector<64x1024xf32> -> vector<64x1024xf32>
    %c0_16 = arith.constant 0 : index
    %c0_17 = arith.constant 0 : index
    %53 = vector.load %arg5[%c0_16, %c0_17] : memref<64x1xf32, #tpu.memory_space<vmem>>, vector<64x1xf32>
    %54 = vector.broadcast %53 : vector<64x1xf32> to vector<64x1024xf32>
    %55 = arith.addf %52, %54 : vector<64x1024xf32>
    %56 = arith.addf %0, %55 : vector<64x1024xf32>
    %cst_18 = arith.constant dense<0.000000e+00> : vector<1024xf32>
    %57 = vector.multi_reduction <add>, %56, %cst_18 [0] : vector<64x1024xf32> to vector<1024xf32>
    %58 = vector.shape_cast %57 : vector<1024xf32> to vector<1x1024xf32>
    %cst_19 = arith.constant 6.400000e+01 : f32
    %59 = vector.broadcast %cst_19 : f32 to vector<1x1024xf32>
    %60 = arith.divf %58, %59 : vector<1x1024xf32>
    %61 = vector.broadcast %60 : vector<1x1024xf32> to vector<64x1024xf32>
    %62 = arith.subf %56, %61 : vector<64x1024xf32>
    %63 = arith.mulf %62, %62 : vector<64x1024xf32>
    %cst_20 = arith.constant dense<0.000000e+00> : vector<1024xf32>
    %64 = vector.multi_reduction <add>, %63, %cst_20 [0] : vector<64x1024xf32> to vector<1024xf32>
    %65 = vector.shape_cast %64 : vector<1024xf32> to vector<1x1024xf32>
    %cst_21 = arith.constant 6.400000e+01 : f32
    %66 = vector.broadcast %cst_21 : f32 to vector<1x1024xf32>
    %67 = arith.divf %65, %66 : vector<1x1024xf32>
    %cst_22 = arith.constant 9.99999974E-6 : f32
    %68 = vector.broadcast %cst_22 : f32 to vector<1x1024xf32>
    %69 = arith.addf %67, %68 : vector<1x1024xf32>
    %70 = math.rsqrt %69 : vector<1x1024xf32>
    %71 = vector.broadcast %70 : vector<1x1024xf32> to vector<64x1024xf32>
    %72 = arith.mulf %62, %71 : vector<64x1024xf32>
    %c0_23 = arith.constant 0 : index
    %c0_24 = arith.constant 0 : index
    %73 = vector.load %arg6[%c0_23, %c0_24] : memref<64x1xf32, #tpu.memory_space<vmem>>, vector<64x1xf32>
    %74 = vector.broadcast %73 : vector<64x1xf32> to vector<64x1024xf32>
    %75 = arith.mulf %72, %74 : vector<64x1024xf32>
    %c0_25 = arith.constant 0 : index
    %c0_26 = arith.constant 0 : index
    %76 = vector.load %arg7[%c0_25, %c0_26] : memref<64x1xf32, #tpu.memory_space<vmem>>, vector<64x1xf32>
    %77 = vector.broadcast %76 : vector<64x1xf32> to vector<64x1024xf32>
    %78 = arith.addf %75, %77 : vector<64x1024xf32>
    %c0_27 = arith.constant 0 : index
    %c0_28 = arith.constant 0 : index
    %79 = vector.load %arg8[%c0_27, %c0_28] : memref<64x1024xf32, #tpu.memory_space<vmem>>, vector<64x1024xf32>
    tpu.vector_store %arg8[%c0_27, %c0_28], %78 {strides = array<i32>} : memref<64x1024xf32, #tpu.memory_space<vmem>>, vector<64x1024xf32>,
    return
  }
  func.func @transform_0(%arg0: i32) -> (i32, i32) {
    %c0_i32 = arith.constant 0 : i32
    %c0_i32_0 = arith.constant 0 : i32
    return %c0_i32, %arg0 : i32, i32
  }
  func.func @transform_1(%arg0: i32) -> (i32, i32) {
    %c0_i32 = arith.constant 0 : i32
    %c0_i32_0 = arith.constant 0 : i32
    %c0_i32_1 = arith.constant 0 : i32
    return %c0_i32, %c0_i32_0 : i32, i32
  }
  func.func @transform_2(%arg0: i32) -> (i32, i32) {
    %c0_i32 = arith.constant 0 : i32
    %c0_i32_0 = arith.constant 0 : i32
    %c0_i32_1 = arith.constant 0 : i32
    return %c0_i32, %c0_i32_0 : i32, i32
  }
  func.func @transform_3(%arg0: i32) -> (i32, i32) {
    %c0_i32 = arith.constant 0 : i32
    %c0_i32_0 = arith.constant 0 : i32
    %c0_i32_1 = arith.constant 0 : i32
    return %c0_i32, %c0_i32_0 : i32, i32
  }
  func.func @transform_4(%arg0: i32) -> (i32, i32) {
    %c0_i32 = arith.constant 0 : i32
    %c0_i32_0 = arith.constant 0 : i32
    %c0_i32_1 = arith.constant 0 : i32
    return %c0_i32, %c0_i32_0 : i32, i32
  }
  func.func @transform_5(%arg0: i32) -> (i32, i32) {
    %c0_i32 = arith.constant 0 : i32
    %c0_i32_0 = arith.constant 0 : i32
    %c0_i32_1 = arith.constant 0 : i32
    return %c0_i32, %c0_i32_0 : i32, i32
  }
  func.func @transform_6(%arg0: i32) -> (i32, i32) {
    %c0_i32 = arith.constant 0 : i32
    %c0_i32_0 = arith.constant 0 : i32
    %c0_i32_1 = arith.constant 0 : i32
    return %c0_i32, %c0_i32_0 : i32, i32
  }
  func.func @transform_7(%arg0: i32) -> (i32, i32) {
    %c0_i32 = arith.constant 0 : i32
    %c0_i32_0 = arith.constant 0 : i32
    return %c0_i32, %arg0 : i32, i32
  }
}

</mosaic_0001>

<llo_original>
// kernel: dual_cross_attention_forward.5
$region0: #{dual_cross_attention_forward.5}
  #allocation0 [shape = 'u32[]', space=smem, size = 0x4, offset = 0x4, fixed_abs, tag = 'smem constant byte address 0x4 - core index']
  #allocation1 [shape = 'u32[72,128]{1,0:T(1,128)}', space=vmem, size = 0x9000, scoped, tag = 'internal scratch']
  %s0 = inlined_call_operand.vmem [shape: f32[32,64], index: 0, kind: input, shape index: {}]
  %s1 = inlined_call_operand.vmem [shape: f32[64,2048], index: 1, kind: input, shape index: {}]
  %s2 = inlined_call_operand.vmem [shape: f32[64,1], index: 2, kind: output, shape index: {0}]
  %s3 = inlined_call_operand.vmem [shape: f32[64,1], index: 3, kind: output, shape index: {1}]
  %s4 = inlined_call_operand.vmem [shape: f32[64,64], index: 4, kind: output, shape index: {2}]
  %5 = xla_tuple %s2, %s3, %s4
  %s6 = sld [smem:[#allocation0]]
  $region84: #{dual_cross_attention_forward.5} parent=0
    _
  %s8 = ssub.s32 1, %s6
  %s9 = scalar_select 0, %s8, %s6
  $region1: #{dual_cross_attention_forward.5} parent=0
    #allocation2 [shape = 'u8[524288]{0}', space=vmem, size = 0x80000, scoped, tag = 'input window, operand 1']
    loop: start=0, step=1, limit=4
    $region2: #{dual_cross_attention_forward.5} parent=1 // loop_pre_header
      _
    $region3: #{dual_cross_attention_forward.5} parent=1 // loop_header
      %s11 = sphi 0, %s15
      %p12 = scmp.ge.s32.totalorder %s11, 4
      %s18 = sphi 0, %s30
      %s19 = sphi 0, %s26
      %s20 = sphi 0, %s18
      %s21 = sphi 0, %s19
      %s22 = sphi 0, %s20
      %s23 = sphi 0, %s21
      %s31 = sphi 0, %s31
      %s33 = sphi 0, %s31
      %s34 = sphi 0, %s33
      %s48 = sphi 0, %s34
      %s56 = sphi 0, %s58
      %s59 = sphi 0, %s56
      %s60 = sphi 0, %s59
      %s76 = sphi 0, %s60
      %s82 = sphi 0, %s84
      %s85 = sphi 0, %s82
      %s86 = sphi 0, %s85
      %s102 = sphi 0, %s86
      %s108 = sphi 0, %s110
      %s111 = sphi 0, %s108
      %s112 = sphi 0, %s111
      %s128 = sphi 0, %s112
      %s134 = sphi 0, %s136
      %s137 = sphi 0, %s134
      %s138 = sphi 0, %s137
      %s154 = sphi 0, %s138
    $region4: #{dual_cross_attention_forward.5} parent=1 // loop_header_branch
      %14 = sbr.rel (%p12) target = $region8
    $region5: #{dual_cross_attention_forward.5} parent=1 // loop_body
      %s16 = ssub.s32 %s11, 1
      %s17 = ssub.s32 %s11, 2
      %s24 = sadd.s32 1, %s19
      %p25 = scmp.ge.s32.totalorder %s24, 1
      %s26 = scalar_select %p25, 0, %s24
      %s27 = sadd.s32 1, %s18
      %s28 = scalar_select %p25, %s27, %s18
      %p29 = scmp.ge.s32.totalorder %s28, 2
      %s30 = scalar_select %p29, 0, %s28
      %s32 = sadd.s32 %s31, 1
      %p35 = scmp.eq.s32.totalorder %s11, 1
      %p36 = scmp.ne.s32.totalorder %s31, %s33
      %p37 = scmp.eq.s32.totalorder %s11, 0
      %p38 = por %p36, %p37
      %p39 = scmp.ne.s32.totalorder %s31, %s33
      %p40 = scmp.eq.s32.totalorder %s16, 1
      %p41 = por %p39, %p40
      %p42 = scmp.ne.s32.totalorder %s33, %s34
      %p43 = scmp.eq.s32.totalorder %s16, 0
      %p44 = por %p42, %p43
      %p45 = scmp.ne.s32.totalorder %s33, %s34
      %p46 = scmp.eq.s32.totalorder %s17, 1
      %p47 = por %p45, %p46
      %p49 = scmp.ne.s32.totalorder %s34, %s48
      %p50 = scmp.eq.s32.totalorder %s17, 0
      %p51 = por %p49, %p50
      %s52 = sadd.s32 %s18, %s19
      %s53 = sadd.s32 %s30, %s26
      %s54 = ssub.s32 %s52, %s53
      %p55 = scmp.eq.s32.totalorder %s54, 0
      %s57 = sadd.s32 %s56, 1
      %s58 = scalar_select %p55, %s56, %s57
      %p61 = pneg %p55
      %p62 = scmp.eq.s32.totalorder %s11, 1
      %p63 = por %p61, %p62
      %p64 = scmp.ne.s32.totalorder %s56, %s59
      %p65 = scmp.eq.s32.totalorder %s11, 0
      %p66 = por %p64, %p65
      %p67 = scmp.ne.s32.totalorder %s56, %s59
      %p68 = scmp.eq.s32.totalorder %s16, 1
      %p69 = por %p67, %p68
      %p70 = scmp.ne.s32.totalorder %s59, %s60
      %p71 = scmp.eq.s32.totalorder %s16, 0
      %p72 = por %p70, %p71
      %p73 = scmp.ne.s32.totalorder %s59, %s60
      %p74 = scmp.eq.s32.totalorder %s17, 1
      %p75 = por %p73, %p74
      %p77 = scmp.ne.s32.totalorder %s60, %s76
      %p78 = scmp.eq.s32.totalorder %s17, 0
      %p79 = por %p77, %p78
      %s80 = ssub.s32 %s18, %s30
      %p81 = scmp.eq.s32.totalorder %s80, 0
      %s83 = sadd.s32 %s82, 1
      %s84 = scalar_select %p81, %s82, %s83
      %p87 = pneg %p81
      %p88 = scmp.eq.s32.totalorder %s11, 1
      %p89 = por %p87, %p88
      %p90 = scmp.ne.s32.totalorder %s82, %s85
      %p91 = scmp.eq.s32.totalorder %s11, 0
      %p92 = por %p90, %p91
      %p93 = scmp.ne.s32.totalorder %s82, %s85
      %p94 = scmp.eq.s32.totalorder %s16, 1
      %p95 = por %p93, %p94
      %p96 = scmp.ne.s32.totalorder %s85, %s86
      %p97 = scmp.eq.s32.totalorder %s16, 0
      %p98 = por %p96, %p97
      %p99 = scmp.ne.s32.totalorder %s85, %s86
      %p100 = scmp.eq.s32.totalorder %s17, 1
      %p101 = por %p99, %p100
      %p103 = scmp.ne.s32.totalorder %s86, %s102
      %p104 = scmp.eq.s32.totalorder %s17, 0
      %p105 = por %p103, %p104
      %s106 = ssub.s32 %s18, %s30
      %p107 = scmp.eq.s32.totalorder %s106, 0
      %s109 = sadd.s32 %s108, 1
      %s110 = scalar_select %p107, %s108, %s109
      %p113 = pneg %p107
      %p114 = scmp.eq.s32.totalorder %s11, 1
      %p115 = por %p113, %p114
      %p116 = scmp.ne.s32.totalorder %s108, %s111
      %p117 = scmp.eq.s32.totalorder %s11, 0
      %p118 = por %p116, %p117
      %p119 = scmp.ne.s32.totalorder %s108, %s111
      %p120 = scmp.eq.s32.totalorder %s16, 1
      %p121 = por %p119, %p120
      %p122 = scmp.ne.s32.totalorder %s111, %s112
      %p123 = scmp.eq.s32.totalorder %s16, 0
      %p124 = por %p122, %p123
      %p125 = scmp.ne.s32.totalorder %s111, %s112
      %p126 = scmp.eq.s32.totalorder %s17, 1
      %p127 = por %p125, %p126
      %p129 = scmp.ne.s32.totalorder %s112, %s128
      %p130 = scmp.eq.s32.totalorder %s17, 0
      %p131 = por %p129, %p130
      %s132 = ssub.s32 %s18, %s30
      %p133 = scmp.eq.s32.totalorder %s132, 0
      %s135 = sadd.s32 %s134, 1
      %s136 = scalar_select %p133, %s134, %s135
      %p139 = pneg %p133
      %p140 = scmp.eq.s32.totalorder %s11, 1
      %p141 = por %p139, %p140
      %p142 = scmp.ne.s32.totalorder %s134, %s137
      %p143 = scmp.eq.s32.totalorder %s11, 0
      %p144 = por %p142, %p143
      %p145 = scmp.ne.s32.totalorder %s134, %s137
      %p146 = scmp.eq.s32.totalorder %s16, 1
      %p147 = por %p145, %p146
      %p148 = scmp.ne.s32.totalorder %s137, %s138
      %p149 = scmp.eq.s32.totalorder %s16, 0
      %p150 = por %p148, %p149
      %p151 = scmp.ne.s32.totalorder %s137, %s138
      %p152 = scmp.eq.s32.totalorder %s17, 1
      %p153 = por %p151, %p152
      %p155 = scmp.ne.s32.totalorder %s138, %s154
      %p156 = scmp.eq.s32.totalorder %s17, 0
      %p157 = por %p155, %p156
      %p158 = scmp.le.s32.totalorder 1, %s11
      %p159 = scmp.lt.s32.totalorder %s11, 3
      %p160 = pnand %p158, %p159
      %p161 = pneg %p160
      // Predicated region
      $region9: #{dual_cross_attention_forward.5} parent=5 // pred_check
        _
      $region10: #{dual_cross_attention_forward.5} parent=5 // pred_check_branch
        %163 = sbr.rel (%p160) target = $region12
      $region11: #{dual_cross_attention_forward.5} parent=5 // pred_region
        %s164 = ssub.s32 %s11, 1
        // Predicated region
        $region13: #{dual_cross_attention_forward.5} parent=11 // pred_check
          %p165 = pneg %p44
        $region14: #{dual_cross_attention_forward.5} parent=11 // pred_check_branch
          %167 = sbr.rel (%p165) target = $region16
        $region15: #{dual_cross_attention_forward.5} parent=11 // pred_region
          _
        $region16: #{dual_cross_attention_forward.5} parent=11 // pred_fallthru
          _
      $region12: #{dual_cross_attention_forward.5} parent=5 // pred_fallthru
        _
      %p168 = scmp.lt.s32.totalorder %s11, 2
      // Predicated region
      $region17: #{dual_cross_attention_forward.5} parent=5 // pred_check
        %p169 = pneg %p168
      $region18: #{dual_cross_attention_forward.5} parent=5 // pred_check_branch
        %171 = sbr.rel (%p169) target = $region20
      $region19: #{dual_cross_attention_forward.5} parent=5 // pred_region
        // Predicated region
        $region21: #{dual_cross_attention_forward.5} parent=19 // pred_check
          %p172 = pneg %p66
        $region22: #{dual_cross_attention_forward.5} parent=19 // pred_check_branch
          %174 = sbr.rel (%p172) target = $region24
        $region23: #{dual_cross_attention_forward.5} parent=19 // pred_region
          %s175 = sand.u32 %s56, 1
          %s176 = sand.u32 %s56, 1
          %s177 = smul.addr %s176, 512
          %s178 = scalar_lea.vmem [#allocation2], %s177
          %s179 = sadd.s32 %s18, %s19
          %s180 = smul.u32 8, %s179
          %s181 = smul.addr %s180, 8
          %s182 = scalar_lea.vmem %s1, %s181
          // Predicated region
          $region25: #{dual_cross_attention_forward.5} parent=23 // pred_check
            _
          $region26: #{dual_cross_attention_forward.5} parent=23 // pred_check_branch
            %184 = sbr.rel (0) target = $region28
          $region27: #{dual_cross_attention_forward.5} parent=23 // pred_region
            // Predicated region
            $region29: #{dual_cross_attention_forward.5} parent=27 // pred_check
              _
            $region30: #{dual_cross_attention_forward.5} parent=27 // pred_check_branch
              %186 = sbr.rel (0) target = $region32
            $region31: #{dual_cross_attention_forward.5} parent=27 // pred_region
              loop: start=0, step=1, limit=1
              $region33: #{dual_cross_attention_forward.5} parent=31 // loop_pre_header
                _
              $region34: #{dual_cross_attention_forward.5} parent=31 // loop_header
                %s188 = sphi 0, %s192
                %p189 = scmp.ge.s32.totalorder %s188, 1
                %s193 = sphi %s182, %s182
                %s194 = sphi %s178, %s178
              $region35: #{dual_cross_attention_forward.5} parent=31 // loop_header_branch
                %191 = sbr.rel (%p189) target = $region39
              $region36: #{dual_cross_attention_forward.5} parent=31 // loop_body
                %v195 = vld [vmem:[%s193] sm:$0xff]
                %196 = vst [vmem:[%s194] sm:$0xff] %v195
                %v197 = vld [vmem:[%s193 + $0x8] sm:$0xff]
                %198 = vst [vmem:[%s194 + $0x8] sm:$0xff] %v197
                %v199 = vld [vmem:[%s193 + $0x10] sm:$0xff]
                %200 = vst [vmem:[%s194 + $0x10] sm:$0xff] %v199
                %v201 = vld [vmem:[%s193 + $0x18] sm:$0xff]
                %202 = vst [vmem:[%s194 + $0x18] sm:$0xff] %v201
                %v203 = vld [vmem:[%s193 + $0x20] sm:$0xff]
                %204 = vst [vmem:[%s194 + $0x20] sm:$0xff] %v203
                %v205 = vld [vmem:[%s193 + $0x28] sm:$0xff]
                %206 = vst [vmem:[%s194 + $0x28] sm:$0xff] %v205
                %v207 = vld [vmem:[%s193 + $0x30] sm:$0xff]
                %208 = vst [vmem:[%s194 + $0x30] sm:$0xff] %v207
                %v209 = vld [vmem:[%s193 + $0x38] sm:$0xff]
                %210 = vst [vmem:[%s194 + $0x38] sm:$0xff] %v209
                %v211 = vld [vmem:[%s193 + $0x80] sm:$0xff]
                %212 = vst [vmem:[%s194 + $0x40] sm:$0xff] %v211
                %v213 = vld [vmem:[%s193 + $0x88] sm:$0xff]
                %214 = vst [vmem:[%s194 + $0x48] sm:$0xff] %v213
                %v215 = vld [vmem:[%s193 + $0x90] sm:$0xff]
                %216 = vst [vmem:[%s194 + $0x50] sm:$0xff] %v215
                %v217 = vld [vmem:[%s193 + $0x98] sm:$0xff]
                %218 = vst [vmem:[%s194 + $0x58] sm:$0xff] %v217
                %v219 = vld [vmem:[%s193 + $0xa0] sm:$0xff]
                %220 = vst [vmem:[%s194 + $0x60] sm:$0xff] %v219
                %v221 = vld [vmem:[%s193 + $0xa8] sm:$0xff]
                %222 = vst [vmem:[%s194 + $0x68] sm:$0xff] %v221
                %v223 = vld [vmem:[%s193 + $0xb0] sm:$0xff]
                %224 = vst [vmem:[%s194 + $0x70] sm:$0xff] %v223
                %v225 = vld [vmem:[%s193 + $0xb8] sm:$0xff]
                %226 = vst [vmem:[%s194 + $0x78] sm:$0xff] %v225
                %v227 = vld [vmem:[%s193 + $0x100] sm:$0xff]
                %228 = vst [vmem:[%s194 + $0x80] sm:$0xff] %v227
                %v229 = vld [vmem:[%s193 + $0x108] sm:$0xff]
                %230 = vst [vmem:[%s194 + $0x88] sm:$0xff] %v229
                %v231 = vld [vmem:[%s193 + $0x110] sm:$0xff]
                %232 = vst [vmem:[%s194 + $0x90] sm:$0xff] %v231
                %v233 = vld [vmem:[%s193 + $0x118] sm:$0xff]
                %234 = vst [vmem:[%s194 + $0x98] sm:$0xff] %v233
                %v235 = vld [vmem:[%s193 + $0x120] sm:$0xff]
                %236 = vst [vmem:[%s194 + $0xa0] sm:$0xff] %v235
                %v237 = vld [vmem:[%s193 + $0x128] sm:$0xff]
                %238 = vst [vmem:[%s194 + $0xa8] sm:$0xff] %v237
                %v239 = vld [vmem:[%s193 + $0x130] sm:$0xff]
                %240 = vst [vmem:[%s194 + $0xb0] sm:$0xff] %v239
                %v241 = vld [vmem:[%s193 + $0x138] sm:$0xff]
                %242 = vst [vmem:[%s194 + $0xb8] sm:$0xff] %v241
                %v243 = vld [vmem:[%s193 + $0x180] sm:$0xff]
                %244 = vst [vmem:[%s194 + $0xc0] sm:$0xff] %v243
                %v245 = vld [vmem:[%s193 + $0x188] sm:$0xff]
                %246 = vst [vmem:[%s194 + $0xc8] sm:$0xff] %v245
                %v247 = vld [vmem:[%s193 + $0x190] sm:$0xff]
                %248 = vst [vmem:[%s194 + $0xd0] sm:$0xff] %v247
                %v249 = vld [vmem:[%s193 + $0x198] sm:$0xff]
                %250 = vst [vmem:[%s194 + $0xd8] sm:$0xff] %v249
                %v251 = vld [vmem:[%s193 + $0x1a0] sm:$0xff]
                %252 = vst [vmem:[%s194 + $0xe0] sm:$0xff] %v251
                %v253 = vld [vmem:[%s193 + $0x1a8] sm:$0xff]
                %254 = vst [vmem:[%s194 + $0xe8] sm:$0xff] %v253
                %v255 = vld [vmem:[%s193 + $0x1b0] sm:$0xff]
                %256 = vst [vmem:[%s194 + $0xf0] sm:$0xff] %v255
                %v257 = vld [vmem:[%s193 + $0x1b8] sm:$0xff]
                %258 = vst [vmem:[%s194 + $0xf8] sm:$0xff] %v257
                %v259 = vld [vmem:[%s193 + $0x200] sm:$0xff]
                %260 = vst [vmem:[%s194 + $0x100] sm:$0xff] %v259
                %v261 = vld [vmem:[%s193 + $0x208] sm:$0xff]
                %262 = vst [vmem:[%s194 + $0x108] sm:$0xff] %v261
                %v263 = vld [vmem:[%s193 + $0x210] sm:$0xff]
                %264 = vst [vmem:[%s194 + $0x110] sm:$0xff] %v263
                %v265 = vld [vmem:[%s193 + $0x218] sm:$0xff]
                %266 = vst [vmem:[%s194 + $0x118] sm:$0xff] %v265
                %v267 = vld [vmem:[%s193 + $0x220] sm:$0xff]
                %268 = vst [vmem:[%s194 + $0x120] sm:$0xff] %v267
                %v269 = vld [vmem:[%s193 + $0x228] sm:$0xff]
                %270 = vst [vmem:[%s194 + $0x128] sm:$0xff] %v269
                %v271 = vld [vmem:[%s193 + $0x230] sm:$0xff]
                %272 = vst [vmem:[%s194 + $0x130] sm:$0xff] %v271
                %v273 = vld [vmem:[%s193 + $0x238] sm:$0xff]
                %274 = vst [vmem:[%s194 + $0x138] sm:$0xff] %v273
                %v275 = vld [vmem:[%s193 + $0x280] sm:$0xff]
                %276 = vst [vmem:[%s194 + $0x140] sm:$0xff] %v275
                %v277 = vld [vmem:[%s193 + $0x288] sm:$0xff]
                %278 = vst [vmem:[%s194 + $0x148] sm:$0xff] %v277
                %v279 = vld [vmem:[%s193 + $0x290] sm:$0xff]
                %280 = vst [vmem:[%s194 + $0x150] sm:$0xff] %v279
                %v281 = vld [vmem:[%s193 + $0x298] sm:$0xff]
                %282 = vst [vmem:[%s194 + $0x158] sm:$0xff] %v281
                %v283 = vld [vmem:[%s193 + $0x2a0] sm:$0xff]
                %284 = vst [vmem:[%s194 + $0x160] sm:$0xff] %v283
                %v285 = vld [vmem:[%s193 + $0x2a8] sm:$0xff]
                %286 = vst [vmem:[%s194 + $0x168] sm:$0xff] %v285
                %v287 = vld [vmem:[%s193 + $0x2b0] sm:$0xff]
                %288 = vst [vmem:[%s194 + $0x170] sm:$0xff] %v287
                %v289 = vld [vmem:[%s193 + $0x2b8] sm:$0xff]
                %290 = vst [vmem:[%s194 + $0x178] sm:$0xff] %v289
                %v291 = vld [vmem:[%s193 + $0x300] sm:$0xff]
                %292 = vst [vmem:[%s194 + $0x180] sm:$0xff] %v291
                %v293 = vld [vmem:[%s193 + $0x308] sm:$0xff]
                %294 = vst [vmem:[%s194 + $0x188] sm:$0xff] %v293
                %v295 = vld [vmem:[%s193 + $0x310] sm:$0xff]
                %296 = vst [vmem:[%s194 + $0x190] sm:$0xff] %v295
                %v297 = vld [vmem:[%s193 + $0x318] sm:$0xff]
                %298 = vst [vmem:[%s194 + $0x198] sm:$0xff] %v297
                %v299 = vld [vmem:[%s193 + $0x320] sm:$0xff]
                %300 = vst [vmem:[%s194 + $0x1a0] sm:$0xff] %v299
                %v301 = vld [vmem:[%s193 + $0x328] sm:$0xff]
                %302 = vst [vmem:[%s194 + $0x1a8] sm:$0xff] %v301
                %v303 = vld [vmem:[%s193 + $0x330] sm:$0xff]
                %304 = vst [vmem:[%s194 + $0x1b0] sm:$0xff] %v303
                %v305 = vld [vmem:[%s193 + $0x338] sm:$0xff]
                %306 = vst [vmem:[%s194 + $0x1b8] sm:$0xff] %v305
                %v307 = vld [vmem:[%s193 + $0x380] sm:$0xff]
                %308 = vst [vmem:[%s194 + $0x1c0] sm:$0xff] %v307
                %v309 = vld [vmem:[%s193 + $0x388] sm:$0xff]
                %310 = vst [vmem:[%s194 + $0x1c8] sm:$0xff] %v309
                %v311 = vld [vmem:[%s193 + $0x390] sm:$0xff]
                %312 = vst [vmem:[%s194 + $0x1d0] sm:$0xff] %v311
                %v313 = vld [vmem:[%s193 + $0x398] sm:$0xff]
                %314 = vst [vmem:[%s194 + $0x1d8] sm:$0xff] %v313
                %v315 = vld [vmem:[%s193 + $0x3a0] sm:$0xff]
                %316 = vst [vmem:[%s194 + $0x1e0] sm:$0xff] %v315
                %v317 = vld [vmem:[%s193 + $0x3a8] sm:$0xff]
                %318 = vst [vmem:[%s194 + $0x1e8] sm:$0xff] %v317
                %v319 = vld [vmem:[%s193 + $0x3b0] sm:$0xff]
                %320 = vst [vmem:[%s194 + $0x1f0] sm:$0xff] %v319
                %v321 = vld [vmem:[%s193 + $0x3b8] sm:$0xff]
                %322 = vst [vmem:[%s194 + $0x1f8] sm:$0xff] %v321
              $region37: #{dual_cross_attention_forward.5} parent=31 // loop_footer
                %s192 = sadd.s32 1, %s188
              $region38: #{dual_cross_attention_forward.5} parent=31 // loop_footer_branch
                %187 = sbr.rel target = $region34
              $region39: #{dual_cross_attention_forward.5} parent=31 // loop_exit
                _
            $region32: #{dual_cross_attention_forward.5} parent=27 // pred_fallthru
              _
            // Predicated region
            $region40: #{dual_cross_attention_forward.5} parent=27 // pred_check
              _
            $region41: #{dual_cross_attention_forward.5} parent=27 // pred_check_branch
              %324 = sbr.rel target = $region43
            $region42: #{dual_cross_attention_forward.5} parent=27 // pred_region
              _
            $region43: #{dual_cross_attention_forward.5} parent=27 // pred_fallthru
              _
          $region28: #{dual_cross_attention_forward.5} parent=23 // pred_fallthru
            _
          %325 = vnop
        $region24: #{dual_cross_attention_forward.5} parent=19 // pred_fallthru
          _
      $region20: #{dual_cross_attention_forward.5} parent=5 // pred_fallthru
        _
      %p326 = scmp.le.s32.totalorder 1, %s11
      %p327 = scmp.lt.s32.totalorder %s11, 3
      %p328 = pnand %p326, %p327
      %p329 = pneg %p328
      // Predicated region
      $region44: #{dual_cross_attention_forward.5} parent=5 // pred_check
        _
      $region45: #{dual_cross_attention_forward.5} parent=5 // pred_check_branch
        %331 = sbr.rel (%p328) target = $region47
      $region46: #{dual_cross_attention_forward.5} parent=5 // pred_region
        %s332 = ssub.s32 %s11, 1
        %s333 = sand.u32 %s59, 1
        %s334 = sand.u32 %s59, 1
        %s335 = smul.addr %s334, 512
        %s336 = scalar_lea.vmem [#allocation2], %s335
        // Predicated region
        $region48: #{dual_cross_attention_forward.5} parent=46 // pred_check
          %p337 = pneg %p72
        $region49: #{dual_cross_attention_forward.5} parent=46 // pred_check_branch
          %339 = sbr.rel (%p337) target = $region51
        $region50: #{dual_cross_attention_forward.5} parent=46 // pred_region
          _
        $region51: #{dual_cross_attention_forward.5} parent=46 // pred_fallthru
          _
        %p340 = pneg %p44
        %p341 = pneg %p41
        %s342 = sand.u32 %s59, 1
        %s343 = sand.u32 %s59, 1
        %s344 = smul.addr %s343, 512
        %s345 = scalar_lea.vmem [#allocation2], %s344
        %p346 = pneg %p72
        %p347 = pneg %p69
        %p348 = pneg %p98
        %p349 = pneg %p95
        %s350 = smul.u32 4, %s20
        %p351 = scmp.lt.s32.totalorder %s350, 7
        %s352 = scalar_select %p351, %s350, 7
        %s353 = smul.addr %s352, 8
        %s354 = scalar_lea.vmem %s2, %s353
        %p355 = pneg %p124
        %p356 = pneg %p121
        %s357 = smul.u32 4, %s20
        %p358 = scmp.lt.s32.totalorder %s357, 7
        %s359 = scalar_select %p358, %s357, 7
        %s360 = smul.addr %s359, 8
        %s361 = scalar_lea.vmem %s3, %s360
        %p362 = pneg %p150
        %p363 = pneg %p147
        %s364 = smul.u32 4, %s20
        %p365 = scmp.lt.s32.totalorder %s364, 7
        %s366 = scalar_select %p365, %s364, 7
        %s367 = smul.addr %s366, 8
        %s368 = scalar_lea.vmem %s4, %s367
        %s369 = sadd.s32 %s20, %s21
        %s370 = smul.u32 8, %s369
        %s371 = smul.u32 4, %s20
        %p372 = scmp.lt.s32.totalorder %s371, 7
        %s373 = scalar_select %p372, %s371, 7
        %s374 = smul.addr %s373, 8
        %s375 = scalar_lea.vmem %s2, %s374
        %s376 = smul.u32 4, %s20
        %s377 = smul.u32 4, %s20
        %p378 = scmp.lt.s32.totalorder %s377, 7
        %s379 = scalar_select %p378, %s377, 7
        %s380 = smul.addr %s379, 8
        %s381 = scalar_lea.vmem %s3, %s380
        %s382 = smul.u32 4, %s20
        %s383 = smul.u32 4, %s20
        %p384 = scmp.lt.s32.totalorder %s383, 7
        %s385 = scalar_select %p384, %s383, 7
        %s386 = smul.addr %s385, 8
        %s387 = scalar_lea.vmem %s4, %s386
        %s388 = smul.u32 4, %s20
        %p390 = scmp.eq.s32.totalorder %s21, 0
        // Predicated region
        $region52: #{dual_cross_attention_forward.5} parent=46 // pred_check
          %p391 = pneg %p390
        $region53: #{dual_cross_attention_forward.5} parent=46 // pred_check_branch
          %393 = sbr.rel (%p391) target = $region55
        $region54: #{dual_cross_attention_forward.5} parent=46 // pred_region
          %vm394 = vcmask 7168
          %395 = vst.msk [vmem:[%s375] sm:$0xff] %vm394, -1e+30
          %396 = vst.msk [vmem:[%s375 + $0x8] sm:$0xff] %vm394, -1e+30
          %397 = vst.msk [vmem:[%s375 + $0x10] sm:$0xff] %vm394, -1e+30
          %398 = vst.msk [vmem:[%s375 + $0x18] sm:$0xff] %vm394, -1e+30
          %399 = vst.msk [vmem:[%s381] sm:$0xff] %vm394, 0.0
          %400 = vst.msk [vmem:[%s381 + $0x8] sm:$0xff] %vm394, 0.0
          %401 = vst.msk [vmem:[%s381 + $0x10] sm:$0xff] %vm394, 0.0
          %402 = vst.msk [vmem:[%s381 + $0x18] sm:$0xff] %vm394, 0.0
          %vm403 = vcmask 523264
          %404 = vst.msk [vmem:[%s387] sm:$0xff] %vm403, 0.0
          %405 = vst.msk [vmem:[%s387 + $0x8] sm:$0xff] %vm403, 0.0
          %406 = vst.msk [vmem:[%s387 + $0x10] sm:$0xff] %vm403, 0.0
          %407 = vst.msk [vmem:[%s387 + $0x18] sm:$0xff] %vm403, 0.0
        $region55: #{dual_cross_attention_forward.5} parent=46 // pred_fallthru
          _
        %v408 = vld [vmem:[%s336] sm:$0xff]
        %v409 = vld [vmem:[%s336 + $0x8] sm:$0xff]
        %v410 = vld [vmem:[%s336 + $0x10] sm:$0xff]
        %v411 = vld [vmem:[%s336 + $0x18] sm:$0xff]
        %v412 = vld [vmem:[%s336 + $0x20] sm:$0xff]
        %v413 = vld [vmem:[%s336 + $0x28] sm:$0xff]
        %v414 = vld [vmem:[%s336 + $0x30] sm:$0xff]
        %v415 = vld [vmem:[%s336 + $0x38] sm:$0xff]
        %v416 = vld [vmem:[%s336 + $0x40] sm:$0xff]
        %v417 = vld [vmem:[%s336 + $0x48] sm:$0xff]
        %v418 = vld [vmem:[%s336 + $0x50] sm:$0xff]
        %v419 = vld [vmem:[%s336 + $0x58] sm:$0xff]
        %v420 = vld [vmem:[%s336 + $0x60] sm:$0xff]
        %v421 = vld [vmem:[%s336 + $0x68] sm:$0xff]
        %v422 = vld [vmem:[%s336 + $0x70] sm:$0xff]
        %v423 = vld [vmem:[%s336 + $0x78] sm:$0xff]
        %v424 = vld [vmem:[%s336 + $0x80] sm:$0xff]
        %v425 = vld [vmem:[%s336 + $0x88] sm:$0xff]
        %v426 = vld [vmem:[%s336 + $0x90] sm:$0xff]
        %v427 = vld [vmem:[%s336 + $0x98] sm:$0xff]
        %v428 = vld [vmem:[%s336 + $0xa0] sm:$0xff]
        %v429 = vld [vmem:[%s336 + $0xa8] sm:$0xff]
        %v430 = vld [vmem:[%s336 + $0xb0] sm:$0xff]
        %v431 = vld [vmem:[%s336 + $0xb8] sm:$0xff]
        %v432 = vld [vmem:[%s336 + $0xc0] sm:$0xff]
        %v433 = vld [vmem:[%s336 + $0xc8] sm:$0xff]
        %v434 = vld [vmem:[%s336 + $0xd0] sm:$0xff]
        %v435 = vld [vmem:[%s336 + $0xd8] sm:$0xff]
        %v436 = vld [vmem:[%s336 + $0xe0] sm:$0xff]
        %v437 = vld [vmem:[%s336 + $0xe8] sm:$0xff]
        %v438 = vld [vmem:[%s336 + $0xf0] sm:$0xff]
        %v439 = vld [vmem:[%s336 + $0xf8] sm:$0xff]
        %v440 = vld [vmem:[%s336 + $0x100] sm:$0xff]
        %v441 = vld [vmem:[%s336 + $0x108] sm:$0xff]
        %v442 = vld [vmem:[%s336 + $0x110] sm:$0xff]
        %v443 = vld [vmem:[%s336 + $0x118] sm:$0xff]
        %v444 = vld [vmem:[%s336 + $0x120] sm:$0xff]
        %v445 = vld [vmem:[%s336 + $0x128] sm:$0xff]
        %v446 = vld [vmem:[%s336 + $0x130] sm:$0xff]
        %v447 = vld [vmem:[%s336 + $0x138] sm:$0xff]
        %v448 = vld [vmem:[%s336 + $0x140] sm:$0xff]
        %v449 = vld [vmem:[%s336 + $0x148] sm:$0xff]
        %v450 = vld [vmem:[%s336 + $0x150] sm:$0xff]
        %v451 = vld [vmem:[%s336 + $0x158] sm:$0xff]
        %v452 = vld [vmem:[%s336 + $0x160] sm:$0xff]
        %v453 = vld [vmem:[%s336 + $0x168] sm:$0xff]
        %v454 = vld [vmem:[%s336 + $0x170] sm:$0xff]
        %v455 = vld [vmem:[%s336 + $0x178] sm:$0xff]
        %v456 = vld [vmem:[%s336 + $0x180] sm:$0xff]
        %v457 = vld [vmem:[%s336 + $0x188] sm:$0xff]
        %v458 = vld [vmem:[%s336 + $0x190] sm:$0xff]
        %v459 = vld [vmem:[%s336 + $0x198] sm:$0xff]
        %v460 = vld [vmem:[%s336 + $0x1a0] sm:$0xff]
        %v461 = vld [vmem:[%s336 + $0x1a8] sm:$0xff]
        %v462 = vld [vmem:[%s336 + $0x1b0] sm:$0xff]
        %v463 = vld [vmem:[%s336 + $0x1b8] sm:$0xff]
        %v464 = vld [vmem:[%s336 + $0x1c0] sm:$0xff]
        %v465 = vld [vmem:[%s336 + $0x1c8] sm:$0xff]
        %v466 = vld [vmem:[%s336 + $0x1d0] sm:$0xff]
        %v467 = vld [vmem:[%s336 + $0x1d8] sm:$0xff]
        %v468 = vld [vmem:[%s336 + $0x1e0] sm:$0xff]
        %v469 = vld [vmem:[%s336 + $0x1e8] sm:$0xff]
        %v470 = vld [vmem:[%s336 + $0x1f0] sm:$0xff]
        %v471 = vld [vmem:[%s336 + $0x1f8] sm:$0xff]
        %v472 = vpack.c.bf16 %v416, %v408
        %v473 = vpack.c.bf16 %v417, %v409
        %v474 = vpack.c.bf16 %v418, %v410
        %v475 = vpack.c.bf16 %v419, %v411
        %v476 = vpack.c.bf16 %v420, %v412
        %v477 = vpack.c.bf16 %v421, %v413
        %v478 = vpack.c.bf16 %v422, %v414
        %v479 = vpack.c.bf16 %v423, %v415
        %v480 = vpack.c.bf16 %v432, %v424
        %v481 = vpack.c.bf16 %v433, %v425
        %v482 = vpack.c.bf16 %v434, %v426
        %v483 = vpack.c.bf16 %v435, %v427
        %v484 = vpack.c.bf16 %v436, %v428
        %v485 = vpack.c.bf16 %v437, %v429
        %v486 = vpack.c.bf16 %v438, %v430
        %v487 = vpack.c.bf16 %v439, %v431
        %v488 = vpack.c.bf16 %v448, %v440
        %v489 = vpack.c.bf16 %v449, %v441
        %v490 = vpack.c.bf16 %v450, %v442
        %v491 = vpack.c.bf16 %v451, %v443
        %v492 = vpack.c.bf16 %v452, %v444
        %v493 = vpack.c.bf16 %v453, %v445
        %v494 = vpack.c.bf16 %v454, %v446
        %v495 = vpack.c.bf16 %v455, %v447
        %v496 = vpack.c.bf16 %v464, %v456
        %v497 = vpack.c.bf16 %v465, %v457
        %v498 = vpack.c.bf16 %v466, %v458
        %v499 = vpack.c.bf16 %v467, %v459
        %v500 = vpack.c.bf16 %v468, %v460
        %v501 = vpack.c.bf16 %v469, %v461
        %v502 = vpack.c.bf16 %v470, %v462
        %v503 = vpack.c.bf16 %v471, %v463
        %v504 = vld [vmem:[%s0] sm:$0xff]
        %v505 = vld [vmem:[%s0 + $0x8] sm:$0xff]
        %v506 = vld [vmem:[%s0 + $0x10] sm:$0xff]
        %v507 = vld [vmem:[%s0 + $0x18] sm:$0xff]
        %v508 = vpack.c.bf16 %v505, %v504
        %v509 = vpack.c.bf16 %v507, %v506
        %vm510 = vcmask 523264
        %v512 = vsel %vm510, %v508, 0
        %v515 = vsel %vm510, %v509, 0
        %517 = vmatpush.bf16.msra.mxu0 0
        %518 = vmatpush.bf16.msra.mxu0 0
        %519 = vmatpush.bf16.msra.mxu0 0
        %520 = vmatpush.bf16.msra.mxu0 0
        %521 = vmatpush.bf16.msra.mxu0 %v496
        %522 = vmatpush.bf16.msra.mxu0 %v488
        %523 = vmatpush.bf16.msra.mxu0 %v480
        %524 = vmatpush.bf16.msra.mxu0 %v472
        %525 = vmatmul.bf16.gmra.mxu0 %v512
        %v526 = vpop.f32.mrf.mxu0
        %v527 = vadd.f32 0.0, %v526
        %v528 = vpop.f32.mrf.mxu0
        %v529 = vadd.f32 0.0, %v528
        %530 = vmatmul.bf16.gmra.mxu0 %v515
        %v531 = vpop.f32.mrf.mxu0
        %v532 = vadd.f32 0.0, %v531
        %v533 = vpop.f32.mrf.mxu0
        %v534 = vadd.f32 0.0, %v533
        %535 = vdwg.mxu0
        %536 = vmatpush.bf16.msra.mxu0 0
        %537 = vmatpush.bf16.msra.mxu0 0
        %538 = vmatpush.bf16.msra.mxu0 0
        %539 = vmatpush.bf16.msra.mxu0 0
        %540 = vmatpush.bf16.msra.mxu0 %v497
        %541 = vmatpush.bf16.msra.mxu0 %v489
        %542 = vmatpush.bf16.msra.mxu0 %v481
        %543 = vmatpush.bf16.msra.mxu0 %v473
        %544 = vmatmul.bf16.gmra.mxu0 %v512
        %v545 = vpop.f32.mrf.mxu0
        %v546 = vadd.f32 0.0, %v545
        %v547 = vpop.f32.mrf.mxu0
        %v548 = vadd.f32 0.0, %v547
        %549 = vmatmul.bf16.gmra.mxu0 %v515
        %v550 = vpop.f32.mrf.mxu0
        %v551 = vadd.f32 0.0, %v550
        %v552 = vpop.f32.mrf.mxu0
        %v553 = vadd.f32 0.0, %v552
        %554 = vdwg.mxu0
        %555 = vmatpush.bf16.msra.mxu0 0
        %556 = vmatpush.bf16.msra.mxu0 0
        %557 = vmatpush.bf16.msra.mxu0 0
        %558 = vmatpush.bf16.msra.mxu0 0
        %559 = vmatpush.bf16.msra.mxu0 %v498
        %560 = vmatpush.bf16.msra.mxu0 %v490
        %561 = vmatpush.bf16.msra.mxu0 %v482
        %562 = vmatpush.bf16.msra.mxu0 %v474
        %563 = vmatmul.bf16.gmra.mxu0 %v512
        %v564 = vpop.f32.mrf.mxu0
        %v565 = vadd.f32 0.0, %v564
        %v566 = vpop.f32.mrf.mxu0
        %v567 = vadd.f32 0.0, %v566
        %568 = vmatmul.bf16.gmra.mxu0 %v515
        %v569 = vpop.f32.mrf.mxu0
        %v570 = vadd.f32 0.0, %v569
        %v571 = vpop.f32.mrf.mxu0
        %v572 = vadd.f32 0.0, %v571
        %573 = vdwg.mxu0
        %574 = vmatpush.bf16.msra.mxu0 0
        %575 = vmatpush.bf16.msra.mxu0 0
        %576 = vmatpush.bf16.msra.mxu0 0
        %577 = vmatpush.bf16.msra.mxu0 0
        %578 = vmatpush.bf16.msra.mxu0 %v499
        %579 = vmatpush.bf16.msra.mxu0 %v491
        %580 = vmatpush.bf16.msra.mxu0 %v483
        %581 = vmatpush.bf16.msra.mxu0 %v475
        %582 = vmatmul.bf16.gmra.mxu0 %v512
        %v583 = vpop.f32.mrf.mxu0
        %v584 = vadd.f32 0.0, %v583
        %v585 = vpop.f32.mrf.mxu0
        %v586 = vadd.f32 0.0, %v585
        %587 = vmatmul.bf16.gmra.mxu0 %v515
        %v588 = vpop.f32.mrf.mxu0
        %v589 = vadd.f32 0.0, %v588
        %v590 = vpop.f32.mrf.mxu0
        %v591 = vadd.f32 0.0, %v590
        %592 = vdwg.mxu0
        %593 = vmatpush.bf16.msra.mxu0 0
        %594 = vmatpush.bf16.msra.mxu0 0
        %595 = vmatpush.bf16.msra.mxu0 0
        %596 = vmatpush.bf16.msra.mxu0 0
        %597 = vmatpush.bf16.msra.mxu0 %v500
        %598 = vmatpush.bf16.msra.mxu0 %v492
        %599 = vmatpush.bf16.msra.mxu0 %v484
        %600 = vmatpush.bf16.msra.mxu0 %v476
        %601 = vmatmul.bf16.gmra.mxu0 %v512
        %v602 = vpop.f32.mrf.mxu0
        %v603 = vadd.f32 0.0, %v602
        %v604 = vpop.f32.mrf.mxu0
        %v605 = vadd.f32 0.0, %v604
        %606 = vmatmul.bf16.gmra.mxu0 %v515
        %v607 = vpop.f32.mrf.mxu0
        %v608 = vadd.f32 0.0, %v607
        %v609 = vpop.f32.mrf.mxu0
        %v610 = vadd.f32 0.0, %v609
        %611 = vdwg.mxu0
        %612 = vmatpush.bf16.msra.mxu0 0
        %613 = vmatpush.bf16.msra.mxu0 0
        %614 = vmatpush.bf16.msra.mxu0 0
        %615 = vmatpush.bf16.msra.mxu0 0
        %616 = vmatpush.bf16.msra.mxu0 %v501
        %617 = vmatpush.bf16.msra.mxu0 %v493
        %618 = vmatpush.bf16.msra.mxu0 %v485
        %619 = vmatpush.bf16.msra.mxu0 %v477
        %620 = vmatmul.bf16.gmra.mxu0 %v512
        %v621 = vpop.f32.mrf.mxu0
        %v622 = vadd.f32 0.0, %v621
        %v623 = vpop.f32.mrf.mxu0
        %v624 = vadd.f32 0.0, %v623
        %625 = vmatmul.bf16.gmra.mxu0 %v515
        %v626 = vpop.f32.mrf.mxu0
        %v627 = vadd.f32 0.0, %v626
        %v628 = vpop.f32.mrf.mxu0
        %v629 = vadd.f32 0.0, %v628
        %630 = vdwg.mxu0
        %631 = vmatpush.bf16.msra.mxu0 0
        %632 = vmatpush.bf16.msra.mxu0 0
        %633 = vmatpush.bf16.msra.mxu0 0
        %634 = vmatpush.bf16.msra.mxu0 0
        %635 = vmatpush.bf16.msra.mxu0 %v502
        %636 = vmatpush.bf16.msra.mxu0 %v494
        %637 = vmatpush.bf16.msra.mxu0 %v486
        %638 = vmatpush.bf16.msra.mxu0 %v478
        %639 = vmatmul.bf16.gmra.mxu0 %v512
        %v640 = vpop.f32.mrf.mxu0
        %v641 = vadd.f32 0.0, %v640
        %v642 = vpop.f32.mrf.mxu0
        %v643 = vadd.f32 0.0, %v642
        %644 = vmatmul.bf16.gmra.mxu0 %v515
        %v645 = vpop.f32.mrf.mxu0
        %v646 = vadd.f32 0.0, %v645
        %v647 = vpop.f32.mrf.mxu0
        %v648 = vadd.f32 0.0, %v647
        %649 = vdwg.mxu0
        %650 = vmatpush.bf16.msra.mxu0 0
        %651 = vmatpush.bf16.msra.mxu0 0
        %652 = vmatpush.bf16.msra.mxu0 0
        %653 = vmatpush.bf16.msra.mxu0 0
        %654 = vmatpush.bf16.msra.mxu0 %v503
        %655 = vmatpush.bf16.msra.mxu0 %v495
        %656 = vmatpush.bf16.msra.mxu0 %v487
        %657 = vmatpush.bf16.msra.mxu0 %v479
        %658 = vmatmul.bf16.gmra.mxu0 %v512
        %v659 = vpop.f32.mrf.mxu0
        %v660 = vadd.f32 0.0, %v659
        %v661 = vpop.f32.mrf.mxu0
        %v662 = vadd.f32 0.0, %v661
        %663 = vmatmul.bf16.gmra.mxu0 %v515
        %v664 = vpop.f32.mrf.mxu0
        %v665 = vadd.f32 0.0, %v664
        %v666 = vpop.f32.mrf.mxu0
        %v667 = vadd.f32 0.0, %v666
        %668 = vdwg.mxu0
        %v669 = vld [vmem:[%s375] sm:$0xff]
        %v670 = vld [vmem:[%s375 + $0x8] sm:$0xff]
        %v671 = vld [vmem:[%s375 + $0x10] sm:$0xff]
        %v672 = vld [vmem:[%s375 + $0x18] sm:$0xff]
        %v673 = vmax.f32 %v527, %v546
        %v674 = vmax.f32 %v673, %v565
        %v675 = vmax.f32 %v674, %v584
        %v676 = vmax.f32 %v675, %v603
        %v677 = vmax.f32 %v676, %v622
        %v678 = vmax.f32 %v677, %v641
        %v679 = vmax.f32 %v678, %v660
        %680 = vmax.xlane.f32.xlu0 %v679
        %v681 = vpop.xlane.xlu0 %680
        %v682 = vmax.f32 %v529, %v548
        %v683 = vmax.f32 %v682, %v567
        %v684 = vmax.f32 %v683, %v586
        %v685 = vmax.f32 %v684, %v605
        %v686 = vmax.f32 %v685, %v624
        %v687 = vmax.f32 %v686, %v643
        %v688 = vmax.f32 %v687, %v662
        %689 = vmax.xlane.f32.xlu0 %v688
        %v690 = vpop.xlane.xlu0 %689
        %v691 = vmax.f32 %v532, %v551
        %v692 = vmax.f32 %v691, %v570
        %v693 = vmax.f32 %v692, %v589
        %v694 = vmax.f32 %v693, %v608
        %v695 = vmax.f32 %v694, %v627
        %v696 = vmax.f32 %v695, %v646
        %v697 = vmax.f32 %v696, %v665
        %698 = vmax.xlane.f32.xlu0 %v697
        %v699 = vpop.xlane.xlu0 %698
        %v700 = vmax.f32 %v534, %v553
        %v701 = vmax.f32 %v700, %v572
        %v702 = vmax.f32 %v701, %v591
        %v703 = vmax.f32 %v702, %v610
        %v704 = vmax.f32 %v703, %v629
        %v705 = vmax.f32 %v704, %v648
        %v706 = vmax.f32 %v705, %v667
        %707 = vmax.xlane.f32.xlu0 %v706
        %v708 = vpop.xlane.xlu0 %707
        %v709 = vmax.f32 %v669, %v681
        %v710 = vmax.f32 %v670, %v690
        %v711 = vmax.f32 %v671, %v699
        %v712 = vmax.f32 %v672, %v708
        %v713 = vsub.f32 %v669, %v709
        %v714 = vsub.f32 %v670, %v710
        %v715 = vsub.f32 %v671, %v711
        %v716 = vsub.f32 %v672, %v712
        %v717 = vmul.f32 %v713, 1.442695
        %v718 = vpow.pop %v717
        %v719 = vmul.f32 %v714, 1.442695
        %v720 = vpow.pop %v719
        %v721 = vmul.f32 %v715, 1.442695
        %v722 = vpow.pop %v721
        %v723 = vmul.f32 %v716, 1.442695
        %v724 = vpow.pop %v723
        %726 = vset.pattern.permute.xlu0 0
        %727 = vperm.xlu0 %726, %v709
        %v728 = vpop.permute.xlu0 %727
        %731 = vset.pattern.permute.xlu0 0
        %732 = vperm.xlu0 %731, %v710
        %v733 = vpop.permute.xlu0 %732
        %736 = vset.pattern.permute.xlu0 0
        %737 = vperm.xlu0 %736, %v711
        %v738 = vpop.permute.xlu0 %737
        %741 = vset.pattern.permute.xlu0 0
        %742 = vperm.xlu0 %741, %v712
        %v743 = vpop.permute.xlu0 %742
        %v745 = vsub.f32 %v527, %v728
        %v746 = vsub.f32 %v546, %v728
        %v747 = vsub.f32 %v565, %v728
        %v748 = vsub.f32 %v584, %v728
        %v749 = vsub.f32 %v603, %v728
        %v750 = vsub.f32 %v622, %v728
        %v751 = vsub.f32 %v641, %v728
        %v752 = vsub.f32 %v660, %v728
        %v753 = vsub.f32 %v529, %v733
        %v754 = vsub.f32 %v548, %v733
        %v755 = vsub.f32 %v567, %v733
        %v756 = vsub.f32 %v586, %v733
        %v757 = vsub.f32 %v605, %v733
        %v758 = vsub.f32 %v624, %v733
        %v759 = vsub.f32 %v643, %v733
        %v760 = vsub.f32 %v662, %v733
        %v761 = vsub.f32 %v532, %v738
        %v762 = vsub.f32 %v551, %v738
        %v763 = vsub.f32 %v570, %v738
        %v764 = vsub.f32 %v589, %v738
        %v765 = vsub.f32 %v608, %v738
        %v766 = vsub.f32 %v627, %v738
        %v767 = vsub.f32 %v646, %v738
        %v768 = vsub.f32 %v665, %v738
        %v769 = vsub.f32 %v534, %v743
        %v770 = vsub.f32 %v553, %v743
        %v771 = vsub.f32 %v572, %v743
        %v772 = vsub.f32 %v591, %v743
        %v773 = vsub.f32 %v610, %v743
        %v774 = vsub.f32 %v629, %v743
        %v775 = vsub.f32 %v648, %v743
        %v776 = vsub.f32 %v667, %v743
        %v777 = vmul.f32 %v745, 1.442695
        %v778 = vpow.pop %v777
        %v779 = vmul.f32 %v746, 1.442695
        %v780 = vpow.pop %v779
        %v781 = vmul.f32 %v747, 1.442695
        %v782 = vpow.pop %v781
        %v783 = vmul.f32 %v748, 1.442695
        %v784 = vpow.pop %v783
        %v785 = vmul.f32 %v749, 1.442695
        %v786 = vpow.pop %v785
        %v787 = vmul.f32 %v750, 1.442695
        %v788 = vpow.pop %v787
        %v789 = vmul.f32 %v751, 1.442695
        %v790 = vpow.pop %v789
        %v791 = vmul.f32 %v752, 1.442695
        %v792 = vpow.pop %v791
        %v793 = vmul.f32 %v753, 1.442695
        %v794 = vpow.pop %v793
        %v795 = vmul.f32 %v754, 1.442695
        %v796 = vpow.pop %v795
        %v797 = vmul.f32 %v755, 1.442695
        %v798 = vpow.pop %v797
        %v799 = vmul.f32 %v756, 1.442695
        %v800 = vpow.pop %v799
        %v801 = vmul.f32 %v757, 1.442695
        %v802 = vpow.pop %v801
        %v803 = vmul.f32 %v758, 1.442695
        %v804 = vpow.pop %v803
        %v805 = vmul.f32 %v759, 1.442695
        %v806 = vpow.pop %v805
        %v807 = vmul.f32 %v760, 1.442695
        %v808 = vpow.pop %v807
        %v809 = vmul.f32 %v761, 1.442695
        %v810 = vpow.pop %v809
        %v811 = vmul.f32 %v762, 1.442695
        %v812 = vpow.pop %v811
        %v813 = vmul.f32 %v763, 1.442695
        %v814 = vpow.pop %v813
        %v815 = vmul.f32 %v764, 1.442695
        %v816 = vpow.pop %v815
        %v817 = vmul.f32 %v765, 1.442695
        %v818 = vpow.pop %v817
        %v819 = vmul.f32 %v766, 1.442695
        %v820 = vpow.pop %v819
        %v821 = vmul.f32 %v767, 1.442695
        %v822 = vpow.pop %v821
        %v823 = vmul.f32 %v768, 1.442695
        %v824 = vpow.pop %v823
        %v825 = vmul.f32 %v769, 1.442695
        %v826 = vpow.pop %v825
        %v827 = vmul.f32 %v770, 1.442695
        %v828 = vpow.pop %v827
        %v829 = vmul.f32 %v771, 1.442695
        %v830 = vpow.pop %v829
        %v831 = vmul.f32 %v772, 1.442695
        %v832 = vpow.pop %v831
        %v833 = vmul.f32 %v773, 1.442695
        %v834 = vpow.pop %v833
        %v835 = vmul.f32 %v774, 1.442695
        %v836 = vpow.pop %v835
        %v837 = vmul.f32 %v775, 1.442695
        %v838 = vpow.pop %v837
        %v839 = vmul.f32 %v776, 1.442695
        %v840 = vpow.pop %v839
        %v841 = vld [vmem:[%s381] sm:$0xff]
        %v842 = vld [vmem:[%s381 + $0x8] sm:$0xff]
        %v843 = vld [vmem:[%s381 + $0x10] sm:$0xff]
        %v844 = vld [vmem:[%s381 + $0x18] sm:$0xff]
        %v845 = vmul.f32 %v718, %v841
        %v846 = vmul.f32 %v720, %v842
        %v847 = vmul.f32 %v722, %v843
        %v848 = vmul.f32 %v724, %v844
        %v849 = vadd.f32 %v778, %v780
        %v850 = vadd.f32 %v849, %v782
        %v851 = vadd.f32 %v850, %v784
        %v852 = vadd.f32 %v851, %v786
        %v853 = vadd.f32 %v852, %v788
        %v854 = vadd.f32 %v853, %v790
        %v855 = vadd.f32 %v854, %v792
        %856 = vadd.xlane.f32.xlu0 %v855
        %v857 = vpop.xlane.xlu0 %856
        %v858 = vadd.f32 %v794, %v796
        %v859 = vadd.f32 %v858, %v798
        %v860 = vadd.f32 %v859, %v800
        %v861 = vadd.f32 %v860, %v802
        %v862 = vadd.f32 %v861, %v804
        %v863 = vadd.f32 %v862, %v806
        %v864 = vadd.f32 %v863, %v808
        %865 = vadd.xlane.f32.xlu0 %v864
        %v866 = vpop.xlane.xlu0 %865
        %v867 = vadd.f32 %v810, %v812
        %v868 = vadd.f32 %v867, %v814
        %v869 = vadd.f32 %v868, %v816
        %v870 = vadd.f32 %v869, %v818
        %v871 = vadd.f32 %v870, %v820
        %v872 = vadd.f32 %v871, %v822
        %v873 = vadd.f32 %v872, %v824
        %874 = vadd.xlane.f32.xlu0 %v873
        %v875 = vpop.xlane.xlu0 %874
        %v876 = vadd.f32 %v826, %v828
        %v877 = vadd.f32 %v876, %v830
        %v878 = vadd.f32 %v877, %v832
        %v879 = vadd.f32 %v878, %v834
        %v880 = vadd.f32 %v879, %v836
        %v881 = vadd.f32 %v880, %v838
        %v882 = vadd.f32 %v881, %v840
        %883 = vadd.xlane.f32.xlu0 %v882
        %v884 = vpop.xlane.xlu0 %883
        %v885 = vadd.f32 %v845, %v857
        %v886 = vadd.f32 %v846, %v866
        %v887 = vadd.f32 %v847, %v875
        %v888 = vadd.f32 %v848, %v884
        %vm889 = vcmask 7168
        %890 = vst.msk [vmem:[%s381] sm:$0xff] %vm889, %v885
        %891 = vst.msk [vmem:[%s381 + $0x8] sm:$0xff] %vm889, %v886
        %892 = vst.msk [vmem:[%s381 + $0x10] sm:$0xff] %vm889, %v887
        %893 = vst.msk [vmem:[%s381 + $0x18] sm:$0xff] %vm889, %v888
        %v894 = vld [vmem:[%s387] sm:$0xff]
        %v895 = vld [vmem:[%s387 + $0x8] sm:$0xff]
        %v896 = vld [vmem:[%s387 + $0x10] sm:$0xff]
        %v897 = vld [vmem:[%s387 + $0x18] sm:$0xff]
        %899 = vset.pattern.permute.xlu0 0
        %900 = vperm.xlu0 %899, %v718
        %v901 = vpop.permute.xlu0 %900
        %904 = vset.pattern.permute.xlu0 0
        %905 = vperm.xlu0 %904, %v720
        %v906 = vpop.permute.xlu0 %905
        %909 = vset.pattern.permute.xlu0 0
        %910 = vperm.xlu0 %909, %v722
        %v911 = vpop.permute.xlu0 %910
        %914 = vset.pattern.permute.xlu0 0
        %915 = vperm.xlu0 %914, %v724
        %v916 = vpop.permute.xlu0 %915
        %v918 = vmul.f32 %v901, %v894
        %v919 = vmul.f32 %v906, %v895
        %v920 = vmul.f32 %v911, %v896
        %v921 = vmul.f32 %v916, %v897
        %v922 = vpack.c.bf16 %v794, %v778
        %v923 = vpack.c.bf16 %v796, %v780
        %v924 = vpack.c.bf16 %v798, %v782
        %v925 = vpack.c.bf16 %v800, %v784
        %v926 = vpack.c.bf16 %v802, %v786
        %v927 = vpack.c.bf16 %v804, %v788
        %v928 = vpack.c.bf16 %v806, %v790
        %v929 = vpack.c.bf16 %v808, %v792
        %v930 = vpack.c.bf16 %v826, %v810
        %v931 = vpack.c.bf16 %v828, %v812
        %v932 = vpack.c.bf16 %v830, %v814
        %v933 = vpack.c.bf16 %v832, %v816
        %v934 = vpack.c.bf16 %v834, %v818
        %v935 = vpack.c.bf16 %v836, %v820
        %v936 = vpack.c.bf16 %v838, %v822
        %v937 = vpack.c.bf16 %v840, %v824
        %938 = vmatpush.bf16.xpose.msra.mxu0 0
        %939 = vmatpush.bf16.xpose.msra.mxu0 0
        %940 = vmatpush.bf16.xpose.msra.mxu0 0
        %941 = vmatpush.bf16.xpose.msra.mxu0 0
        %942 = vmatpush.bf16.xpose.msra.mxu0 %v496
        %943 = vmatpush.bf16.xpose.msra.mxu0 %v488
        %944 = vmatpush.bf16.xpose.msra.mxu0 %v480
        %945 = vmatpush.bf16.xpose.msra.mxu0 %v472
        %946 = vmatmul.bf16.gmra.mxu0 %v922
        %v947 = vpop.f32.mrf.mxu0
        %v948 = vadd.f32 0.0, %v947
        %v949 = vpop.f32.mrf.mxu0
        %v950 = vadd.f32 0.0, %v949
        %951 = vmatmul.bf16.gmra.mxu0 %v930
        %v952 = vpop.f32.mrf.mxu0
        %v953 = vadd.f32 0.0, %v952
        %v954 = vpop.f32.mrf.mxu0
        %v955 = vadd.f32 0.0, %v954
        %956 = vdwg.mxu0
        %957 = vmatpush.bf16.xpose.msra.mxu0 0
        %958 = vmatpush.bf16.xpose.msra.mxu0 0
        %959 = vmatpush.bf16.xpose.msra.mxu0 0
        %960 = vmatpush.bf16.xpose.msra.mxu0 0
        %961 = vmatpush.bf16.xpose.msra.mxu0 %v497
        %962 = vmatpush.bf16.xpose.msra.mxu0 %v489
        %963 = vmatpush.bf16.xpose.msra.mxu0 %v481
        %964 = vmatpush.bf16.xpose.msra.mxu0 %v473
        %965 = vmatmul.bf16.gmra.mxu0 %v923
        %v966 = vpop.f32.mrf.mxu0
        %v967 = vadd.f32 %v948, %v966
        %v968 = vpop.f32.mrf.mxu0
        %v969 = vadd.f32 %v950, %v968
        %970 = vmatmul.bf16.gmra.mxu0 %v931
        %v971 = vpop.f32.mrf.mxu0
        %v972 = vadd.f32 %v953, %v971
        %v973 = vpop.f32.mrf.mxu0
        %v974 = vadd.f32 %v955, %v973
        %975 = vdwg.mxu0
        %976 = vmatpush.bf16.xpose.msra.mxu0 0
        %977 = vmatpush.bf16.xpose.msra.mxu0 0
        %978 = vmatpush.bf16.xpose.msra.mxu0 0
        %979 = vmatpush.bf16.xpose.msra.mxu0 0
        %980 = vmatpush.bf16.xpose.msra.mxu0 %v498
        %981 = vmatpush.bf16.xpose.msra.mxu0 %v490
        %982 = vmatpush.bf16.xpose.msra.mxu0 %v482
        %983 = vmatpush.bf16.xpose.msra.mxu0 %v474
        %984 = vmatmul.bf16.gmra.mxu0 %v924
        %v985 = vpop.f32.mrf.mxu0
        %v986 = vadd.f32 %v967, %v985
        %v987 = vpop.f32.mrf.mxu0
        %v988 = vadd.f32 %v969, %v987
        %989 = vmatmul.bf16.gmra.mxu0 %v932
        %v990 = vpop.f32.mrf.mxu0
        %v991 = vadd.f32 %v972, %v990
        %v992 = vpop.f32.mrf.mxu0
        %v993 = vadd.f32 %v974, %v992
        %994 = vdwg.mxu0
        %995 = vmatpush.bf16.xpose.msra.mxu0 0
        %996 = vmatpush.bf16.xpose.msra.mxu0 0
        %997 = vmatpush.bf16.xpose.msra.mxu0 0
        %998 = vmatpush.bf16.xpose.msra.mxu0 0
        %999 = vmatpush.bf16.xpose.msra.mxu0 %v499
        %1000 = vmatpush.bf16.xpose.msra.mxu0 %v491
        %1001 = vmatpush.bf16.xpose.msra.mxu0 %v483
        %1002 = vmatpush.bf16.xpose.msra.mxu0 %v475
        %1003 = vmatmul.bf16.gmra.mxu0 %v925
        %v1004 = vpop.f32.mrf.mxu0
        %v1005 = vadd.f32 %v986, %v1004
        %v1006 = vpop.f32.mrf.mxu0
        %v1007 = vadd.f32 %v988, %v1006
        %1008 = vmatmul.bf16.gmra.mxu0 %v933
        %v1009 = vpop.f32.mrf.mxu0
        %v1010 = vadd.f32 %v991, %v1009
        %v1011 = vpop.f32.mrf.mxu0
        %v1012 = vadd.f32 %v993, %v1011
        %1013 = vdwg.mxu0
        %1014 = vmatpush.bf16.xpose.msra.mxu0 0
        %1015 = vmatpush.bf16.xpose.msra.mxu0 0
        %1016 = vmatpush.bf16.xpose.msra.mxu0 0
        %1017 = vmatpush.bf16.xpose.msra.mxu0 0
        %1018 = vmatpush.bf16.xpose.msra.mxu0 %v500
        %1019 = vmatpush.bf16.xpose.msra.mxu0 %v492
        %1020 = vmatpush.bf16.xpose.msra.mxu0 %v484
        %1021 = vmatpush.bf16.xpose.msra.mxu0 %v476
        %1022 = vmatmul.bf16.gmra.mxu0 %v926
        %v1023 = vpop.f32.mrf.mxu0
        %v1024 = vadd.f32 %v1005, %v1023
        %v1025 = vpop.f32.mrf.mxu0
        %v1026 = vadd.f32 %v1007, %v1025
        %1027 = vmatmul.bf16.gmra.mxu0 %v934
        %v1028 = vpop.f32.mrf.mxu0
        %v1029 = vadd.f32 %v1010, %v1028
        %v1030 = vpop.f32.mrf.mxu0
        %v1031 = vadd.f32 %v1012, %v1030
        %1032 = vdwg.mxu0
        %1033 = vmatpush.bf16.xpose.msra.mxu0 0
        %1034 = vmatpush.bf16.xpose.msra.mxu0 0
        %1035 = vmatpush.bf16.xpose.msra.mxu0 0
        %1036 = vmatpush.bf16.xpose.msra.mxu0 0
        %1037 = vmatpush.bf16.xpose.msra.mxu0 %v501
        %1038 = vmatpush.bf16.xpose.msra.mxu0 %v493
        %1039 = vmatpush.bf16.xpose.msra.mxu0 %v485
        %1040 = vmatpush.bf16.xpose.msra.mxu0 %v477
        %1041 = vmatmul.bf16.gmra.mxu0 %v927
        %v1042 = vpop.f32.mrf.mxu0
        %v1043 = vadd.f32 %v1024, %v1042
        %v1044 = vpop.f32.mrf.mxu0
        %v1045 = vadd.f32 %v1026, %v1044
        %1046 = vmatmul.bf16.gmra.mxu0 %v935
        %v1047 = vpop.f32.mrf.mxu0
        %v1048 = vadd.f32 %v1029, %v1047
        %v1049 = vpop.f32.mrf.mxu0
        %v1050 = vadd.f32 %v1031, %v1049
        %1051 = vdwg.mxu0
        %1052 = vmatpush.bf16.xpose.msra.mxu0 0
        %1053 = vmatpush.bf16.xpose.msra.mxu0 0
        %1054 = vmatpush.bf16.xpose.msra.mxu0 0
        %1055 = vmatpush.bf16.xpose.msra.mxu0 0
        %1056 = vmatpush.bf16.xpose.msra.mxu0 %v502
        %1057 = vmatpush.bf16.xpose.msra.mxu0 %v494
        %1058 = vmatpush.bf16.xpose.msra.mxu0 %v486
        %1059 = vmatpush.bf16.xpose.msra.mxu0 %v478
        %1060 = vmatmul.bf16.gmra.mxu0 %v928
        %v1061 = vpop.f32.mrf.mxu0
        %v1062 = vadd.f32 %v1043, %v1061
        %v1063 = vpop.f32.mrf.mxu0
        %v1064 = vadd.f32 %v1045, %v1063
        %1065 = vmatmul.bf16.gmra.mxu0 %v936
        %v1066 = vpop.f32.mrf.mxu0
        %v1067 = vadd.f32 %v1048, %v1066
        %v1068 = vpop.f32.mrf.mxu0
        %v1069 = vadd.f32 %v1050, %v1068
        %1070 = vdwg.mxu0
        %1071 = vmatpush.bf16.xpose.msra.mxu0 0
        %1072 = vmatpush.bf16.xpose.msra.mxu0 0
        %1073 = vmatpush.bf16.xpose.msra.mxu0 0
        %1074 = vmatpush.bf16.xpose.msra.mxu0 0
        %1075 = vmatpush.bf16.xpose.msra.mxu0 %v503
        %1076 = vmatpush.bf16.xpose.msra.mxu0 %v495
        %1077 = vmatpush.bf16.xpose.msra.mxu0 %v487
        %1078 = vmatpush.bf16.xpose.msra.mxu0 %v479
        %1079 = vmatmul.bf16.gmra.mxu0 %v929
        %v1080 = vpop.f32.mrf.mxu0
        %v1081 = vadd.f32 %v1062, %v1080
        %v1082 = vpop.f32.mrf.mxu0
        %v1083 = vadd.f32 %v1064, %v1082
        %1084 = vmatmul.bf16.gmra.mxu0 %v937
        %v1085 = vpop.f32.mrf.mxu0
        %v1086 = vadd.f32 %v1067, %v1085
        %v1087 = vpop.f32.mrf.mxu0
        %v1088 = vadd.f32 %v1069, %v1087
        %1089 = vdwg.mxu0
        %v1090 = vadd.f32 %v918, %v1081
        %v1091 = vadd.f32 %v919, %v1083
        %v1092 = vadd.f32 %v920, %v1086
        %v1093 = vadd.f32 %v921, %v1088
        %1094 = vst.msk [vmem:[%s387] sm:$0xff] %vm510, %v1090
        %1095 = vst.msk [vmem:[%s387 + $0x8] sm:$0xff] %vm510, %v1091
        %1096 = vst.msk [vmem:[%s387 + $0x10] sm:$0xff] %vm510, %v1092
        %1097 = vst.msk [vmem:[%s387 + $0x18] sm:$0xff] %vm510, %v1093
        %1098 = vst.msk [vmem:[%s375] sm:$0xff] %vm889, %v709
        %1099 = vst.msk [vmem:[%s375 + $0x8] sm:$0xff] %vm889, %v710
        %1100 = vst.msk [vmem:[%s375 + $0x10] sm:$0xff] %vm889, %v711
        %1101 = vst.msk [vmem:[%s375 + $0x18] sm:$0xff] %vm889, %v712
        %s1102 = smul.u32 4, %s20
        %p1103 = scmp.lt.s32.totalorder %s1102, 7
        %s1104 = scalar_select %p1103, %s1102, 7
        %s1105 = smul.addr %s1104, 8
        %s1106 = scalar_lea.vmem %s2, %s1105
        %s1107 = smul.u32 4, %s20
        %p1108 = scmp.lt.s32.totalorder %s1107, 7
        %s1109 = scalar_select %p1108, %s1107, 7
        %s1110 = smul.addr %s1109, 8
        %s1111 = scalar_lea.vmem %s3, %s1110
        %s1112 = smul.u32 4, %s20
        %p1113 = scmp.lt.s32.totalorder %s1112, 7
        %s1114 = scalar_select %p1113, %s1112, 7
        %s1115 = smul.addr %s1114, 8
        %s1116 = scalar_lea.vmem %s4, %s1115
        // Predicated region
        $region56: #{dual_cross_attention_forward.5} parent=46 // pred_check
          %p1117 = pneg %p95
        $region57: #{dual_cross_attention_forward.5} parent=46 // pred_check_branch
          %1119 = sbr.rel (%p1117) target = $region59
        $region58: #{dual_cross_attention_forward.5} parent=46 // pred_region
          %s1120 = smul.u32 4, %s20
        $region59: #{dual_cross_attention_forward.5} parent=46 // pred_fallthru
          _
        // Predicated region
        $region60: #{dual_cross_attention_forward.5} parent=46 // pred_check
          %p1121 = pneg %p121
        $region61: #{dual_cross_attention_forward.5} parent=46 // pred_check_branch
          %1123 = sbr.rel (%p1121) target = $region63
        $region62: #{dual_cross_attention_forward.5} parent=46 // pred_region
          %s1124 = smul.u32 4, %s20
        $region63: #{dual_cross_attention_forward.5} parent=46 // pred_fallthru
          _
        // Predicated region
        $region64: #{dual_cross_attention_forward.5} parent=46 // pred_check
          %p1125 = pneg %p147
        $region65: #{dual_cross_attention_forward.5} parent=46 // pred_check_branch
          %1127 = sbr.rel (%p1125) target = $region67
        $region66: #{dual_cross_attention_forward.5} parent=46 // pred_region
          %s1128 = smul.u32 4, %s20
        $region67: #{dual_cross_attention_forward.5} parent=46 // pred_fallthru
          _
      $region47: #{dual_cross_attention_forward.5} parent=5 // pred_fallthru
        _
      %p1129 = scmp.le.s32.totalorder 2, %s11
      // Predicated region
      $region68: #{dual_cross_attention_forward.5} parent=5 // pred_check
        %p1130 = pneg %p1129
      $region69: #{dual_cross_attention_forward.5} parent=5 // pred_check_branch
        %1132 = sbr.rel (%p1130) target = $region71
      $region70: #{dual_cross_attention_forward.5} parent=5 // pred_region
        %s1133 = ssub.s32 %s11, 2
        // Predicated region
        $region72: #{dual_cross_attention_forward.5} parent=70 // pred_check
          %p1134 = pneg %p101
        $region73: #{dual_cross_attention_forward.5} parent=70 // pred_check_branch
          %1136 = sbr.rel (%p1134) target = $region75
        $region74: #{dual_cross_attention_forward.5} parent=70 // pred_region
          %s1137 = smul.u32 4, %s22
          %p1138 = scmp.lt.s32.totalorder %s1137, 7
          %s1139 = scalar_select %p1138, %s1137, 7
          %s1140 = smul.addr %s1139, 8
          %s1141 = scalar_lea.vmem %s2, %s1140
        $region75: #{dual_cross_attention_forward.5} parent=70 // pred_fallthru
          _
        // Predicated region
        $region76: #{dual_cross_attention_forward.5} parent=70 // pred_check
          %p1142 = pneg %p127
        $region77: #{dual_cross_attention_forward.5} parent=70 // pred_check_branch
          %1144 = sbr.rel (%p1142) target = $region79
        $region78: #{dual_cross_attention_forward.5} parent=70 // pred_region
          %s1145 = smul.u32 4, %s22
          %p1146 = scmp.lt.s32.totalorder %s1145, 7
          %s1147 = scalar_select %p1146, %s1145, 7
          %s1148 = smul.addr %s1147, 8
          %s1149 = scalar_lea.vmem %s3, %s1148
        $region79: #{dual_cross_attention_forward.5} parent=70 // pred_fallthru
          _
        // Predicated region
        $region80: #{dual_cross_attention_forward.5} parent=70 // pred_check
          %p1150 = pneg %p153
        $region81: #{dual_cross_attention_forward.5} parent=70 // pred_check_branch
          %1152 = sbr.rel (%p1150) target = $region83
        $region82: #{dual_cross_attention_forward.5} parent=70 // pred_region
          %s1153 = smul.u32 4, %s22
          %p1154 = scmp.lt.s32.totalorder %s1153, 7
          %s1155 = scalar_select %p1154, %s1153, 7
          %s1156 = smul.addr %s1155, 8
          %s1157 = scalar_lea.vmem %s4, %s1156
        $region83: #{dual_cross_attention_forward.5} parent=70 // pred_fallthru
          _
      $region71: #{dual_cross_attention_forward.5} parent=5 // pred_fallthru
        _
    $region6: #{dual_cross_attention_forward.5} parent=1 // loop_footer
      %s15 = sadd.s32 1, %s11
    $region7: #{dual_cross_attention_forward.5} parent=1 // loop_footer_branch
      %10 = sbr.rel target = $region3
    $region8: #{dual_cross_attention_forward.5} parent=1 // loop_exit
      _

// kernel: dual_cross_attention_forward.4
$region0: #{dual_cross_attention_forward.4}
  #allocation0 [shape = 'u32[]', space=smem, size = 0x4, offset = 0x4, fixed_abs, tag = 'smem constant byte address 0x4 - core index']
  #allocation1 [shape = 'u32[72,128]{1,0:T(1,128)}', space=vmem, size = 0x9000, scoped, tag = 'internal scratch']
  %s0 = inlined_call_operand.vmem [shape: f32[8,256], index: 0, kind: input, shape index: {}]
  %s1 = inlined_call_operand.vmem [shape: bf16[256,768], index: 1, kind: input, shape index: {}]
  %s2 = inlined_call_operand.vmem [shape: f32[1,768], index: 2, kind: input, shape index: {}]
  %s3 = inlined_call_operand.hbm [shape: bf16[256,256], index: 3, kind: input, shape index: {}]
  %s4 = inlined_call_operand.vmem [shape: f32[1,256], index: 4, kind: input, shape index: {}]
  %s5 = inlined_call_operand.vmem [shape: bf16[4,256,64], index: 5, kind: input, shape index: {}]
  %s6 = inlined_call_operand.vmem [shape: f32[4,1,64], index: 6, kind: input, shape index: {}]
  %s7 = inlined_call_operand.vmem [shape: f32[8,256], index: 7, kind: output, shape index: {0}]
  %s8 = inlined_call_operand.vmem [shape: f32[32,64], index: 8, kind: output, shape index: {1}]
  %9 = xla_tuple %s7, %s8
  %s10 = sld [smem:[#allocation0]]
  $region50: #{dual_cross_attention_forward.4} parent=0
    _
  %s12 = ssub.s32 1, %s10
  %s13 = scalar_select 0, %s12, %s10
  $region1: #{dual_cross_attention_forward.4} parent=0
    #allocation2 [shape = 'u8[131072]{0}', space=vmem, size = 0x20000, scoped, tag = 'input window, operand 3, single buffered']
    #allocation3 [shape = 's32[1]{0}', space=sflag, size = 0x4, scoped, tag = 'scoped memory for dual_cross_attention_forward.4']
    %14 = vsyncpa [#allocation3], 0
    // Predicated region
    $region2: #{dual_cross_attention_forward.4} parent=1 // pred_check
      _
    $region3: #{dual_cross_attention_forward.4} parent=1 // pred_check_branch
      %16 = sbr.rel (0) target = $region5
    $region4: #{dual_cross_attention_forward.4} parent=1 // pred_region
      _
    $region5: #{dual_cross_attention_forward.4} parent=1 // pred_fallthru
      _
    // Predicated region
    $region6: #{dual_cross_attention_forward.4} parent=1 // pred_check
      _
    $region7: #{dual_cross_attention_forward.4} parent=1 // pred_check_branch
      %18 = sbr.rel (0) target = $region9
    $region8: #{dual_cross_attention_forward.4} parent=1 // pred_region
      _
    $region9: #{dual_cross_attention_forward.4} parent=1 // pred_fallthru
      _
    // Predicated region
    $region10: #{dual_cross_attention_forward.4} parent=1 // pred_check
      _
    $region11: #{dual_cross_attention_forward.4} parent=1 // pred_check_branch
      %20 = sbr.rel (0) target = $region13
    $region12: #{dual_cross_attention_forward.4} parent=1 // pred_region
      _
    $region13: #{dual_cross_attention_forward.4} parent=1 // pred_fallthru
      _
    // Predicated region
    $region14: #{dual_cross_attention_forward.4} parent=1 // pred_check
      _
    $region15: #{dual_cross_attention_forward.4} parent=1 // pred_check_branch
      %22 = sbr.rel (0) target = $region17
    $region16: #{dual_cross_attention_forward.4} parent=1 // pred_region
      %24 = vsyncadd [#allocation3], 0
      %s25 = sshll.u32 %s3, 4
      %s26 = int_to_ptr.hbm [resolvable:$true] %s25
      %s27 = sshll.u32 [#allocation2], 4
      %s28 = int_to_ptr.vmem [resolvable:$true] %s27
      %33 = dma.hbm_to_vmem [thread:$0]  %s26, 4096, %s28, [#allocation3], 128, 128, 8
    $region17: #{dual_cross_attention_forward.4} parent=1 // pred_fallthru
      _
    // Predicated region
    $region18: #{dual_cross_attention_forward.4} parent=1 // pred_check
      _
    $region19: #{dual_cross_attention_forward.4} parent=1 // pred_check_branch
      %35 = sbr.rel (0) target = $region21
    $region20: #{dual_cross_attention_forward.4} parent=1 // pred_region
      _
    $region21: #{dual_cross_attention_forward.4} parent=1 // pred_fallthru
      _
    // Predicated region
    $region22: #{dual_cross_attention_forward.4} parent=1 // pred_check
      _
    $region23: #{dual_cross_attention_forward.4} parent=1 // pred_check_branch
      %37 = sbr.rel (0) target = $region25
    $region24: #{dual_cross_attention_forward.4} parent=1 // pred_region
      _
    $region25: #{dual_cross_attention_forward.4} parent=1 // pred_fallthru
      _
    // Predicated region
    $region26: #{dual_cross_attention_forward.4} parent=1 // pred_check
      _
    $region27: #{dual_cross_attention_forward.4} parent=1 // pred_check_branch
      %39 = sbr.rel (0) target = $region29
    $region28: #{dual_cross_attention_forward.4} parent=1 // pred_region
      _
    $region29: #{dual_cross_attention_forward.4} parent=1 // pred_fallthru
      _
    // Predicated region
    $region30: #{dual_cross_attention_forward.4} parent=1 // pred_check
      _
    $region31: #{dual_cross_attention_forward.4} parent=1 // pred_check_branch
      %41 = sbr.rel (0) target = $region33
    $region32: #{dual_cross_attention_forward.4} parent=1 // pred_region
      %43 = dma.done [#allocation3], 4096
    $region33: #{dual_cross_attention_forward.4} parent=1 // pred_fallthru
      _
    %v45 = vld [vmem:[%s0] sm:$0xff]
    %v46 = vld [vmem:[%s0 + $0x8] sm:$0xff]
    %v47 = vpack.c.bf16 %v45, %v45
    %v48 = vpack.c.bf16 %v46, %v46
    %v49 = vld [vmem:[%s1] sm:$0xff]
    %v50 = vld [vmem:[%s1 + $0x8] sm:$0xff]
    %v51 = vld [vmem:[%s1 + $0x10] sm:$0xff]
    %v52 = vld [vmem:[%s1 + $0x18] sm:$0xff]
    %v53 = vld [vmem:[%s1 + $0x20] sm:$0xff]
    %v54 = vld [vmem:[%s1 + $0x28] sm:$0xff]
    %v55 = vld [vmem:[%s1 + $0x30] sm:$0xff]
    %v56 = vld [vmem:[%s1 + $0x38] sm:$0xff]
    %v57 = vld [vmem:[%s1 + $0x40] sm:$0xff]
    %v58 = vld [vmem:[%s1 + $0x48] sm:$0xff]
    %v59 = vld [vmem:[%s1 + $0x50] sm:$0xff]
    %v60 = vld [vmem:[%s1 + $0x58] sm:$0xff]
    %v61 = vld [vmem:[%s1 + $0x60] sm:$0xff]
    %v62 = vld [vmem:[%s1 + $0x68] sm:$0xff]
    %v63 = vld [vmem:[%s1 + $0x70] sm:$0xff]
    %v64 = vld [vmem:[%s1 + $0x78] sm:$0xff]
    %v65 = vld [vmem:[%s1 + $0x80] sm:$0xff]
    %v66 = vld [vmem:[%s1 + $0x88] sm:$0xff]
    %v67 = vld [vmem:[%s1 + $0x90] sm:$0xff]
    %v68 = vld [vmem:[%s1 + $0x98] sm:$0xff]
    %v69 = vld [vmem:[%s1 + $0xa0] sm:$0xff]
    %v70 = vld [vmem:[%s1 + $0xa8] sm:$0xff]
    %v71 = vld [vmem:[%s1 + $0xb0] sm:$0xff]
    %v72 = vld [vmem:[%s1 + $0xb8] sm:$0xff]
    %v73 = vld [vmem:[%s1 + $0xc0] sm:$0xff]
    %v74 = vld [vmem:[%s1 + $0xc8] sm:$0xff]
    %v75 = vld [vmem:[%s1 + $0xd0] sm:$0xff]
    %v76 = vld [vmem:[%s1 + $0xd8] sm:$0xff]
    %v77 = vld [vmem:[%s1 + $0xe0] sm:$0xff]
    %v78 = vld [vmem:[%s1 + $0xe8] sm:$0xff]
    %v79 = vld [vmem:[%s1 + $0xf0] sm:$0xff]
    %v80 = vld [vmem:[%s1 + $0xf8] sm:$0xff]
    %v81 = vld [vmem:[%s1 + $0x100] sm:$0xff]
    %v82 = vld [vmem:[%s1 + $0x108] sm:$0xff]
    %v83 = vld [vmem:[%s1 + $0x110] sm:$0xff]
    %v84 = vld [vmem:[%s1 + $0x118] sm:$0xff]
    %v85 = vld [vmem:[%s1 + $0x120] sm:$0xff]
    %v86 = vld [vmem:[%s1 + $0x128] sm:$0xff]
    %v87 = vld [vmem:[%s1 + $0x130] sm:$0xff]
    %v88 = vld [vmem:[%s1 + $0x138] sm:$0xff]
    %v89 = vld [vmem:[%s1 + $0x140] sm:$0xff]
    %v90 = vld [vmem:[%s1 + $0x148] sm:$0xff]
    %v91 = vld [vmem:[%s1 + $0x150] sm:$0xff]
    %v92 = vld [vmem:[%s1 + $0x158] sm:$0xff]
    %v93 = vld [vmem:[%s1 + $0x160] sm:$0xff]
    %v94 = vld [vmem:[%s1 + $0x168] sm:$0xff]
    %v95 = vld [vmem:[%s1 + $0x170] sm:$0xff]
    %v96 = vld [vmem:[%s1 + $0x178] sm:$0xff]
    %v97 = vld [vmem:[%s1 + $0x180] sm:$0xff]
    %v98 = vld [vmem:[%s1 + $0x188] sm:$0xff]
    %v99 = vld [vmem:[%s1 + $0x190] sm:$0xff]
    %v100 = vld [vmem:[%s1 + $0x198] sm:$0xff]
    %v101 = vld [vmem:[%s1 + $0x1a0] sm:$0xff]
    %v102 = vld [vmem:[%s1 + $0x1a8] sm:$0xff]
    %v103 = vld [vmem:[%s1 + $0x1b0] sm:$0xff]
    %v104 = vld [vmem:[%s1 + $0x1b8] sm:$0xff]
    %v105 = vld [vmem:[%s1 + $0x1c0] sm:$0xff]
    %v106 = vld [vmem:[%s1 + $0x1c8] sm:$0xff]
    %v107 = vld [vmem:[%s1 + $0x1d0] sm:$0xff]
    %v108 = vld [vmem:[%s1 + $0x1d8] sm:$0xff]
    %v109 = vld [vmem:[%s1 + $0x1e0] sm:$0xff]
    %v110 = vld [vmem:[%s1 + $0x1e8] sm:$0xff]
    %v111 = vld [vmem:[%s1 + $0x1f0] sm:$0xff]
    %v112 = vld [vmem:[%s1 + $0x1f8] sm:$0xff]
    %v113 = vld [vmem:[%s1 + $0x200] sm:$0xff]
    %v114 = vld [vmem:[%s1 + $0x208] sm:$0xff]
    %v115 = vld [vmem:[%s1 + $0x210] sm:$0xff]
    %v116 = vld [vmem:[%s1 + $0x218] sm:$0xff]
    %v117 = vld [vmem:[%s1 + $0x220] sm:$0xff]
    %v118 = vld [vmem:[%s1 + $0x228] sm:$0xff]
    %v119 = vld [vmem:[%s1 + $0x230] sm:$0xff]
    %v120 = vld [vmem:[%s1 + $0x238] sm:$0xff]
    %v121 = vld [vmem:[%s1 + $0x240] sm:$0xff]
    %v122 = vld [vmem:[%s1 + $0x248] sm:$0xff]
    %v123 = vld [vmem:[%s1 + $0x250] sm:$0xff]
    %v124 = vld [vmem:[%s1 + $0x258] sm:$0xff]
    %v125 = vld [vmem:[%s1 + $0x260] sm:$0xff]
    %v126 = vld [vmem:[%s1 + $0x268] sm:$0xff]
    %v127 = vld [vmem:[%s1 + $0x270] sm:$0xff]
    %v128 = vld [vmem:[%s1 + $0x278] sm:$0xff]
    %v129 = vld [vmem:[%s1 + $0x280] sm:$0xff]
    %v130 = vld [vmem:[%s1 + $0x288] sm:$0xff]
    %v131 = vld [vmem:[%s1 + $0x290] sm:$0xff]
    %v132 = vld [vmem:[%s1 + $0x298] sm:$0xff]
    %v133 = vld [vmem:[%s1 + $0x2a0] sm:$0xff]
    %v134 = vld [vmem:[%s1 + $0x2a8] sm:$0xff]
    %v135 = vld [vmem:[%s1 + $0x2b0] sm:$0xff]
    %v136 = vld [vmem:[%s1 + $0x2b8] sm:$0xff]
    %v137 = vld [vmem:[%s1 + $0x2c0] sm:$0xff]
    %v138 = vld [vmem:[%s1 + $0x2c8] sm:$0xff]
    %v139 = vld [vmem:[%s1 + $0x2d0] sm:$0xff]
    %v140 = vld [vmem:[%s1 + $0x2d8] sm:$0xff]
    %v141 = vld [vmem:[%s1 + $0x2e0] sm:$0xff]
    %v142 = vld [vmem:[%s1 + $0x2e8] sm:$0xff]
    %v143 = vld [vmem:[%s1 + $0x2f0] sm:$0xff]
    %v144 = vld [vmem:[%s1 + $0x2f8] sm:$0xff]
    %v145 = vld [vmem:[%s2] sm:$0x3f]
    %v147 = vperm.slane %v145, 0
    %v148 = vperm.slane %v145, 1
    %v149 = vperm.slane %v145, 2
    %v150 = vperm.slane %v145, 3
    %v151 = vperm.slane %v145, 4
    %v152 = vperm.slane %v145, 5
    %v255 = vunpack.c.l.b16 %v49
    %v256 = vunpack.c.h.b16 %v49
    %v257 = vunpack.c.l.b16 %v50
    %v258 = vunpack.c.h.b16 %v50
    %v259 = vunpack.c.l.b16 %v51
    %v260 = vunpack.c.h.b16 %v51
    %v261 = vunpack.c.l.b16 %v52
    %v262 = vunpack.c.h.b16 %v52
    %v263 = vunpack.c.l.b16 %v53
    %v264 = vunpack.c.h.b16 %v53
    %v265 = vunpack.c.l.b16 %v54
    %v266 = vunpack.c.h.b16 %v54
    %v267 = vunpack.c.l.b16 %v55
    %v268 = vunpack.c.h.b16 %v55
    %v269 = vunpack.c.l.b16 %v56
    %v270 = vunpack.c.h.b16 %v56
    %v271 = vunpack.c.l.b16 %v57
    %v272 = vunpack.c.h.b16 %v57
    %v273 = vunpack.c.l.b16 %v58
    %v274 = vunpack.c.h.b16 %v58
    %v275 = vunpack.c.l.b16 %v59
    %v276 = vunpack.c.h.b16 %v59
    %v277 = vunpack.c.l.b16 %v60
    %v278 = vunpack.c.h.b16 %v60
    %v279 = vunpack.c.l.b16 %v61
    %v280 = vunpack.c.h.b16 %v61
    %v281 = vunpack.c.l.b16 %v62
    %v282 = vunpack.c.h.b16 %v62
    %v283 = vunpack.c.l.b16 %v63
    %v284 = vunpack.c.h.b16 %v63
    %v285 = vunpack.c.l.b16 %v64
    %v286 = vunpack.c.h.b16 %v64
    %v287 = vunpack.c.l.b16 %v65
    %v288 = vunpack.c.h.b16 %v65
    %v289 = vunpack.c.l.b16 %v66
    %v290 = vunpack.c.h.b16 %v66
    %v291 = vunpack.c.l.b16 %v67
    %v292 = vunpack.c.h.b16 %v67
    %v293 = vunpack.c.l.b16 %v68
    %v294 = vunpack.c.h.b16 %v68
    %v295 = vunpack.c.l.b16 %v69
    %v296 = vunpack.c.h.b16 %v69
    %v297 = vunpack.c.l.b16 %v70
    %v298 = vunpack.c.h.b16 %v70
    %v299 = vunpack.c.l.b16 %v71
    %v300 = vunpack.c.h.b16 %v71
    %v301 = vunpack.c.l.b16 %v72
    %v302 = vunpack.c.h.b16 %v72
    %v303 = vunpack.c.l.b16 %v73
    %v304 = vunpack.c.h.b16 %v73
    %v305 = vunpack.c.l.b16 %v74
    %v306 = vunpack.c.h.b16 %v74
    %v307 = vunpack.c.l.b16 %v75
    %v308 = vunpack.c.h.b16 %v75
    %v309 = vunpack.c.l.b16 %v76
    %v310 = vunpack.c.h.b16 %v76
    %v311 = vunpack.c.l.b16 %v77
    %v312 = vunpack.c.h.b16 %v77
    %v313 = vunpack.c.l.b16 %v78
    %v314 = vunpack.c.h.b16 %v78
    %v315 = vunpack.c.l.b16 %v79
    %v316 = vunpack.c.h.b16 %v79
    %v317 = vunpack.c.l.b16 %v80
    %v318 = vunpack.c.h.b16 %v80
    %v319 = vunpack.c.l.b16 %v81
    %v320 = vunpack.c.h.b16 %v81
    %v321 = vunpack.c.l.b16 %v82
    %v322 = vunpack.c.h.b16 %v82
    %v323 = vunpack.c.l.b16 %v83
    %v324 = vunpack.c.h.b16 %v83
    %v325 = vunpack.c.l.b16 %v84
    %v326 = vunpack.c.h.b16 %v84
    %v327 = vunpack.c.l.b16 %v85
    %v328 = vunpack.c.h.b16 %v85
    %v329 = vunpack.c.l.b16 %v86
    %v330 = vunpack.c.h.b16 %v86
    %v331 = vunpack.c.l.b16 %v87
    %v332 = vunpack.c.h.b16 %v87
    %v333 = vunpack.c.l.b16 %v88
    %v334 = vunpack.c.h.b16 %v88
    %v335 = vunpack.c.l.b16 %v89
    %v336 = vunpack.c.h.b16 %v89
    %v337 = vunpack.c.l.b16 %v90
    %v338 = vunpack.c.h.b16 %v90
    %v339 = vunpack.c.l.b16 %v91
    %v340 = vunpack.c.h.b16 %v91
    %v341 = vunpack.c.l.b16 %v92
    %v342 = vunpack.c.h.b16 %v92
    %v343 = vunpack.c.l.b16 %v93
    %v344 = vunpack.c.h.b16 %v93
    %v345 = vunpack.c.l.b16 %v94
    %v346 = vunpack.c.h.b16 %v94
    %v347 = vunpack.c.l.b16 %v95
    %v348 = vunpack.c.h.b16 %v95
    %v349 = vunpack.c.l.b16 %v96
    %v350 = vunpack.c.h.b16 %v96
    %v351 = vunpack.c.l.b16 %v97
    %v352 = vunpack.c.h.b16 %v97
    %v353 = vunpack.c.l.b16 %v98
    %v354 = vunpack.c.h.b16 %v98
    %v355 = vunpack.c.l.b16 %v99
    %v356 = vunpack.c.h.b16 %v99
    %v357 = vunpack.c.l.b16 %v100
    %v358 = vunpack.c.h.b16 %v100
    %v359 = vunpack.c.l.b16 %v101
    %v360 = vunpack.c.h.b16 %v101
    %v361 = vunpack.c.l.b16 %v102
    %v362 = vunpack.c.h.b16 %v102
    %v363 = vunpack.c.l.b16 %v103
    %v364 = vunpack.c.h.b16 %v103
    %v365 = vunpack.c.l.b16 %v104
    %v366 = vunpack.c.h.b16 %v104
    %v367 = vunpack.c.l.b16 %v105
    %v368 = vunpack.c.h.b16 %v105
    %v369 = vunpack.c.l.b16 %v106
    %v370 = vunpack.c.h.b16 %v106
    %v371 = vunpack.c.l.b16 %v107
    %v372 = vunpack.c.h.b16 %v107
    %v373 = vunpack.c.l.b16 %v108
    %v374 = vunpack.c.h.b16 %v108
    %v375 = vunpack.c.l.b16 %v109
    %v376 = vunpack.c.h.b16 %v109
    %v377 = vunpack.c.l.b16 %v110
    %v378 = vunpack.c.h.b16 %v110
    %v379 = vunpack.c.l.b16 %v111
    %v380 = vunpack.c.h.b16 %v111
    %v381 = vunpack.c.l.b16 %v112
    %v382 = vunpack.c.h.b16 %v112
    %v383 = vunpack.c.l.b16 %v113
    %v384 = vunpack.c.h.b16 %v113
    %v385 = vunpack.c.l.b16 %v114
    %v386 = vunpack.c.h.b16 %v114
    %v387 = vunpack.c.l.b16 %v115
    %v388 = vunpack.c.h.b16 %v115
    %v389 = vunpack.c.l.b16 %v116
    %v390 = vunpack.c.h.b16 %v116
    %v391 = vunpack.c.l.b16 %v117
    %v392 = vunpack.c.h.b16 %v117
    %v393 = vunpack.c.l.b16 %v118
    %v394 = vunpack.c.h.b16 %v118
    %v395 = vunpack.c.l.b16 %v119
    %v396 = vunpack.c.h.b16 %v119
    %v397 = vunpack.c.l.b16 %v120
    %v398 = vunpack.c.h.b16 %v120
    %v399 = vunpack.c.l.b16 %v121
    %v400 = vunpack.c.h.b16 %v121
    %v401 = vunpack.c.l.b16 %v122
    %v402 = vunpack.c.h.b16 %v122
    %v403 = vunpack.c.l.b16 %v123
    %v404 = vunpack.c.h.b16 %v123
    %v405 = vunpack.c.l.b16 %v124
    %v406 = vunpack.c.h.b16 %v124
    %v407 = vunpack.c.l.b16 %v125
    %v408 = vunpack.c.h.b16 %v125
    %v409 = vunpack.c.l.b16 %v126
    %v410 = vunpack.c.h.b16 %v126
    %v411 = vunpack.c.l.b16 %v127
    %v412 = vunpack.c.h.b16 %v127
    %v413 = vunpack.c.l.b16 %v128
    %v414 = vunpack.c.h.b16 %v128
    %v415 = vunpack.c.l.b16 %v129
    %v416 = vunpack.c.h.b16 %v129
    %v417 = vunpack.c.l.b16 %v130
    %v418 = vunpack.c.h.b16 %v130
    %v419 = vunpack.c.l.b16 %v131
    %v420 = vunpack.c.h.b16 %v131
    %v421 = vunpack.c.l.b16 %v132
    %v422 = vunpack.c.h.b16 %v132
    %v423 = vunpack.c.l.b16 %v133
    %v424 = vunpack.c.h.b16 %v133
    %v425 = vunpack.c.l.b16 %v134
    %v426 = vunpack.c.h.b16 %v134
    %v427 = vunpack.c.l.b16 %v135
    %v428 = vunpack.c.h.b16 %v135
    %v429 = vunpack.c.l.b16 %v136
    %v430 = vunpack.c.h.b16 %v136
    %v431 = vunpack.c.l.b16 %v137
    %v432 = vunpack.c.h.b16 %v137
    %v433 = vunpack.c.l.b16 %v138
    %v434 = vunpack.c.h.b16 %v138
    %v435 = vunpack.c.l.b16 %v139
    %v436 = vunpack.c.h.b16 %v139
    %v437 = vunpack.c.l.b16 %v140
    %v438 = vunpack.c.h.b16 %v140
    %v439 = vunpack.c.l.b16 %v141
    %v440 = vunpack.c.h.b16 %v141
    %v441 = vunpack.c.l.b16 %v142
    %v442 = vunpack.c.h.b16 %v142
    %v443 = vunpack.c.l.b16 %v143
    %v444 = vunpack.c.h.b16 %v143
    %v445 = vunpack.c.l.b16 %v144
    %v446 = vunpack.c.h.b16 %v144
    %v447 = vpack.c.b16 %v261, %v255
    %v448 = vpack.c.b16 %v262, %v256
    %v449 = vpack.c.b16 %v263, %v257
    %v450 = vpack.c.b16 %v264, %v258
    %v451 = vpack.c.b16 %v265, %v259
    %v452 = vpack.c.b16 %v266, %v260
    %v453 = vpack.c.b16 %v273, %v267
    %v454 = vpack.c.b16 %v274, %v268
    %v455 = vpack.c.b16 %v275, %v269
    %v456 = vpack.c.b16 %v276, %v270
    %v457 = vpack.c.b16 %v277, %v271
    %v458 = vpack.c.b16 %v278, %v272
    %v459 = vpack.c.b16 %v285, %v279
    %v460 = vpack.c.b16 %v286, %v280
    %v461 = vpack.c.b16 %v287, %v281
    %v462 = vpack.c.b16 %v288, %v282
    %v463 = vpack.c.b16 %v289, %v283
    %v464 = vpack.c.b16 %v290, %v284
    %v465 = vpack.c.b16 %v297, %v291
    %v466 = vpack.c.b16 %v298, %v292
    %v467 = vpack.c.b16 %v299, %v293
    %v468 = vpack.c.b16 %v300, %v294
    %v469 = vpack.c.b16 %v301, %v295
    %v470 = vpack.c.b16 %v302, %v296
    %v471 = vpack.c.b16 %v309, %v303
    %v472 = vpack.c.b16 %v310, %v304
    %v473 = vpack.c.b16 %v311, %v305
    %v474 = vpack.c.b16 %v312, %v306
    %v475 = vpack.c.b16 %v313, %v307
    %v476 = vpack.c.b16 %v314, %v308
    %v477 = vpack.c.b16 %v321, %v315
    %v478 = vpack.c.b16 %v322, %v316
    %v479 = vpack.c.b16 %v323, %v317
    %v480 = vpack.c.b16 %v324, %v318
    %v481 = vpack.c.b16 %v325, %v319
    %v482 = vpack.c.b16 %v326, %v320
    %v483 = vpack.c.b16 %v333, %v327
    %v484 = vpack.c.b16 %v334, %v328
    %v485 = vpack.c.b16 %v335, %v329
    %v486 = vpack.c.b16 %v336, %v330
    %v487 = vpack.c.b16 %v337, %v331
    %v488 = vpack.c.b16 %v338, %v332
    %v489 = vpack.c.b16 %v345, %v339
    %v490 = vpack.c.b16 %v346, %v340
    %v491 = vpack.c.b16 %v347, %v341
    %v492 = vpack.c.b16 %v348, %v342
    %v493 = vpack.c.b16 %v349, %v343
    %v494 = vpack.c.b16 %v350, %v344
    %v495 = vpack.c.b16 %v357, %v351
    %v496 = vpack.c.b16 %v358, %v352
    %v497 = vpack.c.b16 %v359, %v353
    %v498 = vpack.c.b16 %v360, %v354
    %v499 = vpack.c.b16 %v361, %v355
    %v500 = vpack.c.b16 %v362, %v356
    %v501 = vpack.c.b16 %v369, %v363
    %v502 = vpack.c.b16 %v370, %v364
    %v503 = vpack.c.b16 %v371, %v365
    %v504 = vpack.c.b16 %v372, %v366
    %v505 = vpack.c.b16 %v373, %v367
    %v506 = vpack.c.b16 %v374, %v368
    %v507 = vpack.c.b16 %v381, %v375
    %v508 = vpack.c.b16 %v382, %v376
    %v509 = vpack.c.b16 %v383, %v377
    %v510 = vpack.c.b16 %v384, %v378
    %v511 = vpack.c.b16 %v385, %v379
    %v512 = vpack.c.b16 %v386, %v380
    %v513 = vpack.c.b16 %v393, %v387
    %v514 = vpack.c.b16 %v394, %v388
    %v515 = vpack.c.b16 %v395, %v389
    %v516 = vpack.c.b16 %v396, %v390
    %v517 = vpack.c.b16 %v397, %v391
    %v518 = vpack.c.b16 %v398, %v392
    %v519 = vpack.c.b16 %v405, %v399
    %v520 = vpack.c.b16 %v406, %v400
    %v521 = vpack.c.b16 %v407, %v401
    %v522 = vpack.c.b16 %v408, %v402
    %v523 = vpack.c.b16 %v409, %v403
    %v524 = vpack.c.b16 %v410, %v404
    %v525 = vpack.c.b16 %v417, %v411
    %v526 = vpack.c.b16 %v418, %v412
    %v527 = vpack.c.b16 %v419, %v413
    %v528 = vpack.c.b16 %v420, %v414
    %v529 = vpack.c.b16 %v421, %v415
    %v530 = vpack.c.b16 %v422, %v416
    %v531 = vpack.c.b16 %v429, %v423
    %v532 = vpack.c.b16 %v430, %v424
    %v533 = vpack.c.b16 %v431, %v425
    %v534 = vpack.c.b16 %v432, %v426
    %v535 = vpack.c.b16 %v433, %v427
    %v536 = vpack.c.b16 %v434, %v428
    %v537 = vpack.c.b16 %v441, %v435
    %v538 = vpack.c.b16 %v442, %v436
    %v539 = vpack.c.b16 %v443, %v437
    %v540 = vpack.c.b16 %v444, %v438
    %v541 = vpack.c.b16 %v445, %v439
    %v542 = vpack.c.b16 %v446, %v440
    %639 = vmatpush.bf16.msra.mxu0 %v489
    %640 = vmatpush.bf16.msra.mxu0 %v483
    %641 = vmatpush.bf16.msra.mxu0 %v477
    %642 = vmatpush.bf16.msra.mxu0 %v471
    %643 = vmatpush.bf16.msra.mxu0 %v465
    %644 = vmatpush.bf16.msra.mxu0 %v459
    %645 = vmatpush.bf16.msra.mxu0 %v453
    %646 = vmatpush.bf16.msra.mxu0 %v447
    %647 = vmatmul.bf16.gmra.mxu0 %v47
    %v648 = vpop.f32.mrf.mxu0
    %v649 = vadd.f32 %v147, %v648
    %v650 = vpop.f32.mrf.mxu0
    %651 = vdwg.mxu0
    %652 = vmatpush.bf16.msra.mxu0 %v537
    %653 = vmatpush.bf16.msra.mxu0 %v531
    %654 = vmatpush.bf16.msra.mxu0 %v525
    %655 = vmatpush.bf16.msra.mxu0 %v519
    %656 = vmatpush.bf16.msra.mxu0 %v513
    %657 = vmatpush.bf16.msra.mxu0 %v507
    %658 = vmatpush.bf16.msra.mxu0 %v501
    %659 = vmatpush.bf16.msra.mxu0 %v495
    %660 = vmatmul.bf16.gmra.mxu0 %v48
    %v661 = vpop.f32.mrf.mxu0
    %v662 = vadd.f32 %v649, %v661
    %v663 = vpop.f32.mrf.mxu0
    %664 = vdwg.mxu0
    %665 = vmatpush.bf16.msra.mxu0 %v490
    %666 = vmatpush.bf16.msra.mxu0 %v484
    %667 = vmatpush.bf16.msra.mxu0 %v478
    %668 = vmatpush.bf16.msra.mxu0 %v472
    %669 = vmatpush.bf16.msra.mxu0 %v466
    %670 = vmatpush.bf16.msra.mxu0 %v460
    %671 = vmatpush.bf16.msra.mxu0 %v454
    %672 = vmatpush.bf16.msra.mxu0 %v448
    %673 = vmatmul.bf16.gmra.mxu0 %v47
    %v674 = vpop.f32.mrf.mxu0
    %v675 = vadd.f32 %v148, %v674
    %v676 = vpop.f32.mrf.mxu0
    %677 = vdwg.mxu0
    %678 = vmatpush.bf16.msra.mxu0 %v538
    %679 = vmatpush.bf16.msra.mxu0 %v532
    %680 = vmatpush.bf16.msra.mxu0 %v526
    %681 = vmatpush.bf16.msra.mxu0 %v520
    %682 = vmatpush.bf16.msra.mxu0 %v514
    %683 = vmatpush.bf16.msra.mxu0 %v508
    %684 = vmatpush.bf16.msra.mxu0 %v502
    %685 = vmatpush.bf16.msra.mxu0 %v496
    %686 = vmatmul.bf16.gmra.mxu0 %v48
    %v687 = vpop.f32.mrf.mxu0
    %v688 = vadd.f32 %v675, %v687
    %v689 = vpop.f32.mrf.mxu0
    %690 = vdwg.mxu0
    %691 = vmatpush.bf16.msra.mxu0 %v491
    %692 = vmatpush.bf16.msra.mxu0 %v485
    %693 = vmatpush.bf16.msra.mxu0 %v479
    %694 = vmatpush.bf16.msra.mxu0 %v473
    %695 = vmatpush.bf16.msra.mxu0 %v467
    %696 = vmatpush.bf16.msra.mxu0 %v461
    %697 = vmatpush.bf16.msra.mxu0 %v455
    %698 = vmatpush.bf16.msra.mxu0 %v449
    %699 = vmatmul.bf16.gmra.mxu0 %v47
    %v700 = vpop.f32.mrf.mxu0
    %v701 = vadd.f32 %v149, %v700
    %v702 = vpop.f32.mrf.mxu0
    %703 = vdwg.mxu0
    %704 = vmatpush.bf16.msra.mxu0 %v539
    %705 = vmatpush.bf16.msra.mxu0 %v533
    %706 = vmatpush.bf16.msra.mxu0 %v527
    %707 = vmatpush.bf16.msra.mxu0 %v521
    %708 = vmatpush.bf16.msra.mxu0 %v515
    %709 = vmatpush.bf16.msra.mxu0 %v509
    %710 = vmatpush.bf16.msra.mxu0 %v503
    %711 = vmatpush.bf16.msra.mxu0 %v497
    %712 = vmatmul.bf16.gmra.mxu0 %v48
    %v713 = vpop.f32.mrf.mxu0
    %v714 = vadd.f32 %v701, %v713
    %v715 = vpop.f32.mrf.mxu0
    %716 = vdwg.mxu0
    %717 = vmatpush.bf16.msra.mxu0 %v492
    %718 = vmatpush.bf16.msra.mxu0 %v486
    %719 = vmatpush.bf16.msra.mxu0 %v480
    %720 = vmatpush.bf16.msra.mxu0 %v474
    %721 = vmatpush.bf16.msra.mxu0 %v468
    %722 = vmatpush.bf16.msra.mxu0 %v462
    %723 = vmatpush.bf16.msra.mxu0 %v456
    %724 = vmatpush.bf16.msra.mxu0 %v450
    %725 = vmatmul.bf16.gmra.mxu0 %v47
    %v726 = vpop.f32.mrf.mxu0
    %v727 = vadd.f32 %v150, %v726
    %v728 = vpop.f32.mrf.mxu0
    %729 = vdwg.mxu0
    %730 = vmatpush.bf16.msra.mxu0 %v540
    %731 = vmatpush.bf16.msra.mxu0 %v534
    %732 = vmatpush.bf16.msra.mxu0 %v528
    %733 = vmatpush.bf16.msra.mxu0 %v522
    %734 = vmatpush.bf16.msra.mxu0 %v516
    %735 = vmatpush.bf16.msra.mxu0 %v510
    %736 = vmatpush.bf16.msra.mxu0 %v504
    %737 = vmatpush.bf16.msra.mxu0 %v498
    %738 = vmatmul.bf16.gmra.mxu0 %v48
    %v739 = vpop.f32.mrf.mxu0
    %v740 = vadd.f32 %v727, %v739
    %v741 = vpop.f32.mrf.mxu0
    %742 = vdwg.mxu0
    %743 = vmatpush.bf16.msra.mxu0 %v493
    %744 = vmatpush.bf16.msra.mxu0 %v487
    %745 = vmatpush.bf16.msra.mxu0 %v481
    %746 = vmatpush.bf16.msra.mxu0 %v475
    %747 = vmatpush.bf16.msra.mxu0 %v469
    %748 = vmatpush.bf16.msra.mxu0 %v463
    %749 = vmatpush.bf16.msra.mxu0 %v457
    %750 = vmatpush.bf16.msra.mxu0 %v451
    %751 = vmatmul.bf16.gmra.mxu0 %v47
    %v752 = vpop.f32.mrf.mxu0
    %v753 = vadd.f32 %v151, %v752
    %v754 = vpop.f32.mrf.mxu0
    %755 = vdwg.mxu0
    %756 = vmatpush.bf16.msra.mxu0 %v541
    %757 = vmatpush.bf16.msra.mxu0 %v535
    %758 = vmatpush.bf16.msra.mxu0 %v529
    %759 = vmatpush.bf16.msra.mxu0 %v523
    %760 = vmatpush.bf16.msra.mxu0 %v517
    %761 = vmatpush.bf16.msra.mxu0 %v511
    %762 = vmatpush.bf16.msra.mxu0 %v505
    %763 = vmatpush.bf16.msra.mxu0 %v499
    %764 = vmatmul.bf16.gmra.mxu0 %v48
    %v765 = vpop.f32.mrf.mxu0
    %v766 = vadd.f32 %v753, %v765
    %v767 = vpop.f32.mrf.mxu0
    %768 = vdwg.mxu0
    %769 = vmatpush.bf16.msra.mxu0 %v494
    %770 = vmatpush.bf16.msra.mxu0 %v488
    %771 = vmatpush.bf16.msra.mxu0 %v482
    %772 = vmatpush.bf16.msra.mxu0 %v476
    %773 = vmatpush.bf16.msra.mxu0 %v470
    %774 = vmatpush.bf16.msra.mxu0 %v464
    %775 = vmatpush.bf16.msra.mxu0 %v458
    %776 = vmatpush.bf16.msra.mxu0 %v452
    %777 = vmatmul.bf16.gmra.mxu0 %v47
    %v778 = vpop.f32.mrf.mxu0
    %v779 = vadd.f32 %v152, %v778
    %v780 = vpop.f32.mrf.mxu0
    %781 = vdwg.mxu0
    %782 = vmatpush.bf16.msra.mxu0 %v542
    %783 = vmatpush.bf16.msra.mxu0 %v536
    %784 = vmatpush.bf16.msra.mxu0 %v530
    %785 = vmatpush.bf16.msra.mxu0 %v524
    %786 = vmatpush.bf16.msra.mxu0 %v518
    %787 = vmatpush.bf16.msra.mxu0 %v512
    %788 = vmatpush.bf16.msra.mxu0 %v506
    %789 = vmatpush.bf16.msra.mxu0 %v500
    %790 = vmatmul.bf16.gmra.mxu0 %v48
    %v791 = vpop.f32.mrf.mxu0
    %v792 = vadd.f32 %v779, %v791
    %v793 = vpop.f32.mrf.mxu0
    %794 = vdwg.mxu0
    %v795 = vmul.f32 %v662, 0.125
    %v796 = vmul.f32 %v688, 0.125
    %v797 = vpack.c.bf16 %v795, %v795
    %v798 = vpack.c.bf16 %v714, %v714
    %vm799 = vcmask 523264
    %v801 = vsel %vm799, %v797, 0
    %v804 = vsel %vm799, %v798, 0
    %806 = vmatpush.bf16.xpose.msra.mxu0 0
    %807 = vmatpush.bf16.xpose.msra.mxu0 0
    %808 = vmatpush.bf16.xpose.msra.mxu0 0
    %809 = vmatpush.bf16.xpose.msra.mxu0 0
    %810 = vmatpush.bf16.xpose.msra.mxu0 0
    %811 = vmatpush.bf16.xpose.msra.mxu0 0
    %812 = vmatpush.bf16.xpose.msra.mxu0 0
    %813 = vmatpush.bf16.xpose.msra.mxu0 %v804
    %814 = vmatmul.bf16.gmra.mxu0 %v801
    %v815 = vpop.f32.mrf.mxu0
    %v816 = vadd.f32 0.0, %v815
    %v817 = vpop.f32.mrf.mxu0
    %818 = vdwg.mxu0
    %vm819 = vcmask 64512
    %v820 = vsel %vm819, %v816, -inf
    %821 = vmax.xlane.f32.xlu0 %v820
    %v822 = vpop.xlane.xlu0 %821
    %v823 = vsub.f32 %v816, %v822
    %v824 = vmul.f32 %v823, 1.442695
    %v825 = vpow.pop %v824
    %v826 = vsel %vm819, %v825, 0.0
    %827 = vadd.xlane.f32.xlu0 %v826
    %v828 = vpop.xlane.xlu0 %827
    %v829 = vrcp.pop %v828
    %v830 = vmul.f32 %v828, %v829
    %v831 = vsub.f32 1.0, %v830
    %v832 = vmul.f32 %v829, %v831
    %v833 = vadd.f32 %v829, %v832
    %vm834 = vweird.f32 %v828
    %vm835 = vweird.f32 %v829
    %vm836 = vmor %vm834, %vm835
    %v837 = vsel %vm836, %v829, %v833
    %v838 = vand.u32 2147483647, %v828
    %vm839 = vcmp.eq.f32.partialorder %v838, 8.507059e+37
    %v840 = vand.u32 %v828, 2147483648
    %v841 = vor.u32 1.1754944e-38, %v840
    %v842 = vsel %vm839, %v841, %v837
    %v843 = vmul.f32 %v825, %v842
    %v844 = vpack.c.bf16 %v843, %v843
    %v845 = vpack.c.bf16 %v766, %v766
    %v847 = vsel %vm819, %v844, 0
    %vm849 = vcmask 1043456
    %v851 = vsel %vm849, %v845, 0
    %853 = vmatpush.bf16.msra.mxu0 0
    %854 = vmatpush.bf16.msra.mxu0 0
    %855 = vmatpush.bf16.msra.mxu0 0
    %856 = vmatpush.bf16.msra.mxu0 0
    %857 = vmatpush.bf16.msra.mxu0 0
    %858 = vmatpush.bf16.msra.mxu0 0
    %859 = vmatpush.bf16.msra.mxu0 0
    %860 = vmatpush.bf16.msra.mxu0 %v851
    %861 = vmatmul.bf16.gmra.mxu0 %v847
    %v862 = vpop.f32.mrf.mxu0
    %v863 = vadd.f32 0.0, %v862
    %v864 = vpop.f32.mrf.mxu0
    %865 = vdwg.mxu0
    %v866 = vpack.c.bf16 %v863, %v863
    %v867 = vld [vmem:[#allocation2] sm:$0xff]
    %v868 = vld [vmem:[#allocation2 + $0x8] sm:$0xff]
    %v869 = vld [vmem:[#allocation2 + $0x10] sm:$0xff]
    %v870 = vld [vmem:[#allocation2 + $0x18] sm:$0xff]
    %v871 = vld [vmem:[#allocation2 + $0x20] sm:$0xff]
    %v872 = vld [vmem:[#allocation2 + $0x28] sm:$0xff]
    %v873 = vld [vmem:[#allocation2 + $0x30] sm:$0xff]
    %v874 = vld [vmem:[#allocation2 + $0x38] sm:$0xff]
    %876 = vrot.lane.b32.xlu0 %v797, 64
    %v877 = vpop.permute.xlu0 %876
    %879 = vrot.lane.b32.xlu0 %v798, 64
    %v880 = vpop.permute.xlu0 %879
    %v882 = vsel %vm799, %v877, 0
    %v885 = vsel %vm799, %v880, 0
    %887 = vmatpush.bf16.xpose.msra.mxu0 0
    %888 = vmatpush.bf16.xpose.msra.mxu0 0
    %889 = vmatpush.bf16.xpose.msra.mxu0 0
    %890 = vmatpush.bf16.xpose.msra.mxu0 0
    %891 = vmatpush.bf16.xpose.msra.mxu0 0
    %892 = vmatpush.bf16.xpose.msra.mxu0 0
    %893 = vmatpush.bf16.xpose.msra.mxu0 0
    %894 = vmatpush.bf16.xpose.msra.mxu0 %v885
    %895 = vmatmul.bf16.gmra.mxu0 %v882
    %v896 = vpop.f32.mrf.mxu0
    %v897 = vadd.f32 0.0, %v896
    %v898 = vpop.f32.mrf.mxu0
    %899 = vdwg.mxu0
    %v900 = vsel %vm819, %v897, -inf
    %901 = vmax.xlane.f32.xlu0 %v900
    %v902 = vpop.xlane.xlu0 %901
    %v903 = vsub.f32 %v897, %v902
    %v904 = vmul.f32 %v903, 1.442695
    %v905 = vpow.pop %v904
    %v906 = vsel %vm819, %v905, 0.0
    %907 = vadd.xlane.f32.xlu0 %v906
    %v908 = vpop.xlane.xlu0 %907
    %v909 = vrcp.pop %v908
    %v910 = vmul.f32 %v908, %v909
    %v911 = vsub.f32 1.0, %v910
    %v912 = vmul.f32 %v909, %v911
    %v913 = vadd.f32 %v909, %v912
    %vm914 = vweird.f32 %v908
    %vm915 = vweird.f32 %v909
    %vm916 = vmor %vm914, %vm915
    %v917 = vsel %vm916, %v909, %v913
    %v918 = vand.u32 2147483647, %v908
    %vm919 = vcmp.eq.f32.partialorder %v918, 8.507059e+37
    %v920 = vand.u32 %v908, 2147483648
    %v921 = vor.u32 1.1754944e-38, %v920
    %v922 = vsel %vm919, %v921, %v917
    %v923 = vmul.f32 %v905, %v922
    %v924 = vpack.c.bf16 %v923, %v923
    %926 = vrot.lane.b32.xlu0 %v845, 64
    %v927 = vpop.permute.xlu0 %926
    %v929 = vsel %vm819, %v924, 0
    %v932 = vsel %vm849, %v927, 0
    %934 = vmatpush.bf16.msra.mxu0 0
    %935 = vmatpush.bf16.msra.mxu0 0
    %936 = vmatpush.bf16.msra.mxu0 0
    %937 = vmatpush.bf16.msra.mxu0 0
    %938 = vmatpush.bf16.msra.mxu0 0
    %939 = vmatpush.bf16.msra.mxu0 0
    %940 = vmatpush.bf16.msra.mxu0 0
    %941 = vmatpush.bf16.msra.mxu0 %v932
    %942 = vmatmul.bf16.gmra.mxu0 %v929
    %v943 = vpop.f32.mrf.mxu0
    %v944 = vadd.f32 0.0, %v943
    %v945 = vpop.f32.mrf.mxu0
    %946 = vdwg.mxu0
    %v947 = vpack.c.bf16 %v944, %v944
    %v948 = vld [vmem:[#allocation2 + $0x40] sm:$0xff]
    %v949 = vld [vmem:[#allocation2 + $0x48] sm:$0xff]
    %v950 = vld [vmem:[#allocation2 + $0x50] sm:$0xff]
    %v951 = vld [vmem:[#allocation2 + $0x58] sm:$0xff]
    %v952 = vld [vmem:[#allocation2 + $0x60] sm:$0xff]
    %v953 = vld [vmem:[#allocation2 + $0x68] sm:$0xff]
    %v954 = vld [vmem:[#allocation2 + $0x70] sm:$0xff]
    %v955 = vld [vmem:[#allocation2 + $0x78] sm:$0xff]
    %v964 = vunpack.c.l.b16 %v948
    %v965 = vunpack.c.h.b16 %v948
    %v966 = vunpack.c.l.b16 %v949
    %v967 = vunpack.c.h.b16 %v949
    %v968 = vunpack.c.l.b16 %v950
    %v969 = vunpack.c.h.b16 %v950
    %v970 = vunpack.c.l.b16 %v951
    %v971 = vunpack.c.h.b16 %v951
    %v972 = vunpack.c.l.b16 %v952
    %v973 = vunpack.c.h.b16 %v952
    %v974 = vunpack.c.l.b16 %v953
    %v975 = vunpack.c.h.b16 %v953
    %v976 = vunpack.c.l.b16 %v954
    %v977 = vunpack.c.h.b16 %v954
    %v978 = vunpack.c.l.b16 %v955
    %v979 = vunpack.c.h.b16 %v955
    %v980 = vpack.c.b16 %v966, %v964
    %v981 = vpack.c.b16 %v967, %v965
    %v982 = vpack.c.b16 %v970, %v968
    %v983 = vpack.c.b16 %v971, %v969
    %v984 = vpack.c.b16 %v974, %v972
    %v985 = vpack.c.b16 %v975, %v973
    %v986 = vpack.c.b16 %v978, %v976
    %v987 = vpack.c.b16 %v979, %v977
    %v997 = vsel %vm799, %v947, 0
    %999 = vmatpush.bf16.msra.mxu0 0
    %1000 = vmatpush.bf16.msra.mxu0 0
    %1001 = vmatpush.bf16.msra.mxu0 0
    %1002 = vmatpush.bf16.msra.mxu0 0
    %1003 = vmatpush.bf16.msra.mxu0 %v986
    %1004 = vmatpush.bf16.msra.mxu0 %v984
    %1005 = vmatpush.bf16.msra.mxu0 %v982
    %1006 = vmatpush.bf16.msra.mxu0 %v980
    %1007 = vmatmul.bf16.gmra.mxu0 %v997
    %v1008 = vpop.f32.mrf.mxu0
    %v1009 = vadd.f32 0.0, %v1008
    %v1010 = vpop.f32.mrf.mxu0
    %1011 = vdwg.mxu0
    %1012 = vmatpush.bf16.msra.mxu0 0
    %1013 = vmatpush.bf16.msra.mxu0 0
    %1014 = vmatpush.bf16.msra.mxu0 0
    %1015 = vmatpush.bf16.msra.mxu0 0
    %1016 = vmatpush.bf16.msra.mxu0 %v987
    %1017 = vmatpush.bf16.msra.mxu0 %v985
    %1018 = vmatpush.bf16.msra.mxu0 %v983
    %1019 = vmatpush.bf16.msra.mxu0 %v981
    %1020 = vmatmul.bf16.gmra.mxu0 %v997
    %v1021 = vpop.f32.mrf.mxu0
    %v1022 = vadd.f32 0.0, %v1021
    %v1023 = vpop.f32.mrf.mxu0
    %1024 = vdwg.mxu0
    %v1033 = vunpack.c.l.b16 %v867
    %v1034 = vunpack.c.h.b16 %v867
    %v1035 = vunpack.c.l.b16 %v868
    %v1036 = vunpack.c.h.b16 %v868
    %v1037 = vunpack.c.l.b16 %v869
    %v1038 = vunpack.c.h.b16 %v869
    %v1039 = vunpack.c.l.b16 %v870
    %v1040 = vunpack.c.h.b16 %v870
    %v1041 = vunpack.c.l.b16 %v871
    %v1042 = vunpack.c.h.b16 %v871
    %v1043 = vunpack.c.l.b16 %v872
    %v1044 = vunpack.c.h.b16 %v872
    %v1045 = vunpack.c.l.b16 %v873
    %v1046 = vunpack.c.h.b16 %v873
    %v1047 = vunpack.c.l.b16 %v874
    %v1048 = vunpack.c.h.b16 %v874
    %v1049 = vpack.c.b16 %v1035, %v1033
    %v1050 = vpack.c.b16 %v1036, %v1034
    %v1051 = vpack.c.b16 %v1039, %v1037
    %v1052 = vpack.c.b16 %v1040, %v1038
    %v1053 = vpack.c.b16 %v1043, %v1041
    %v1054 = vpack.c.b16 %v1044, %v1042
    %v1055 = vpack.c.b16 %v1047, %v1045
    %v1056 = vpack.c.b16 %v1048, %v1046
    %v1066 = vsel %vm799, %v866, 0
    %1068 = vmatpush.bf16.msra.mxu0 0
    %1069 = vmatpush.bf16.msra.mxu0 0
    %1070 = vmatpush.bf16.msra.mxu0 0
    %1071 = vmatpush.bf16.msra.mxu0 0
    %1072 = vmatpush.bf16.msra.mxu0 %v1055
    %1073 = vmatpush.bf16.msra.mxu0 %v1053
    %1074 = vmatpush.bf16.msra.mxu0 %v1051
    %1075 = vmatpush.bf16.msra.mxu0 %v1049
    %1076 = vmatmul.bf16.gmra.mxu0 %v1066
    %v1077 = vpop.f32.mrf.mxu0
    %v1078 = vadd.f32 %v1009, %v1077
    %v1079 = vpop.f32.mrf.mxu0
    %1080 = vdwg.mxu0
    %1081 = vmatpush.bf16.msra.mxu0 0
    %1082 = vmatpush.bf16.msra.mxu0 0
    %1083 = vmatpush.bf16.msra.mxu0 0
    %1084 = vmatpush.bf16.msra.mxu0 0
    %1085 = vmatpush.bf16.msra.mxu0 %v1056
    %1086 = vmatpush.bf16.msra.mxu0 %v1054
    %1087 = vmatpush.bf16.msra.mxu0 %v1052
    %1088 = vmatpush.bf16.msra.mxu0 %v1050
    %1089 = vmatmul.bf16.gmra.mxu0 %v1066
    %v1090 = vpop.f32.mrf.mxu0
    %v1091 = vadd.f32 %v1022, %v1090
    %v1092 = vpop.f32.mrf.mxu0
    %1093 = vdwg.mxu0
    %v1094 = vpack.c.bf16 %v796, %v796
    %v1095 = vpack.c.bf16 %v740, %v740
    %v1097 = vsel %vm799, %v1094, 0
    %v1100 = vsel %vm799, %v1095, 0
    %1102 = vmatpush.bf16.xpose.msra.mxu0 0
    %1103 = vmatpush.bf16.xpose.msra.mxu0 0
    %1104 = vmatpush.bf16.xpose.msra.mxu0 0
    %1105 = vmatpush.bf16.xpose.msra.mxu0 0
    %1106 = vmatpush.bf16.xpose.msra.mxu0 0
    %1107 = vmatpush.bf16.xpose.msra.mxu0 0
    %1108 = vmatpush.bf16.xpose.msra.mxu0 0
    %1109 = vmatpush.bf16.xpose.msra.mxu0 %v1100
    %1110 = vmatmul.bf16.gmra.mxu0 %v1097
    %v1111 = vpop.f32.mrf.mxu0
    %v1112 = vadd.f32 0.0, %v1111
    %v1113 = vpop.f32.mrf.mxu0
    %1114 = vdwg.mxu0
    %v1115 = vsel %vm819, %v1112, -inf
    %1116 = vmax.xlane.f32.xlu0 %v1115
    %v1117 = vpop.xlane.xlu0 %1116
    %v1118 = vsub.f32 %v1112, %v1117
    %v1119 = vmul.f32 %v1118, 1.442695
    %v1120 = vpow.pop %v1119
    %v1121 = vsel %vm819, %v1120, 0.0
    %1122 = vadd.xlane.f32.xlu0 %v1121
    %v1123 = vpop.xlane.xlu0 %1122
    %v1124 = vrcp.pop %v1123
    %v1125 = vmul.f32 %v1123, %v1124
    %v1126 = vsub.f32 1.0, %v1125
    %v1127 = vmul.f32 %v1124, %v1126
    %v1128 = vadd.f32 %v1124, %v1127
    %vm1129 = vweird.f32 %v1123
    %vm1130 = vweird.f32 %v1124
    %vm1131 = vmor %vm1129, %vm1130
    %v1132 = vsel %vm1131, %v1124, %v1128
    %v1133 = vand.u32 2147483647, %v1123
    %vm1134 = vcmp.eq.f32.partialorder %v1133, 8.507059e+37
    %v1135 = vand.u32 %v1123, 2147483648
    %v1136 = vor.u32 1.1754944e-38, %v1135
    %v1137 = vsel %vm1134, %v1136, %v1132
    %v1138 = vmul.f32 %v1120, %v1137
    %v1139 = vpack.c.bf16 %v1138, %v1138
    %v1140 = vpack.c.bf16 %v792, %v792
    %v1142 = vsel %vm819, %v1139, 0
    %v1145 = vsel %vm849, %v1140, 0
    %1147 = vmatpush.bf16.msra.mxu0 0
    %1148 = vmatpush.bf16.msra.mxu0 0
    %1149 = vmatpush.bf16.msra.mxu0 0
    %1150 = vmatpush.bf16.msra.mxu0 0
    %1151 = vmatpush.bf16.msra.mxu0 0
    %1152 = vmatpush.bf16.msra.mxu0 0
    %1153 = vmatpush.bf16.msra.mxu0 0
    %1154 = vmatpush.bf16.msra.mxu0 %v1145
    %1155 = vmatmul.bf16.gmra.mxu0 %v1142
    %v1156 = vpop.f32.mrf.mxu0
    %v1157 = vadd.f32 0.0, %v1156
    %v1158 = vpop.f32.mrf.mxu0
    %1159 = vdwg.mxu0
    %v1160 = vpack.c.bf16 %v1157, %v1157
    %v1161 = vld [vmem:[#allocation2 + $0x80] sm:$0xff]
    %v1162 = vld [vmem:[#allocation2 + $0x88] sm:$0xff]
    %v1163 = vld [vmem:[#allocation2 + $0x90] sm:$0xff]
    %v1164 = vld [vmem:[#allocation2 + $0x98] sm:$0xff]
    %v1165 = vld [vmem:[#allocation2 + $0xa0] sm:$0xff]
    %v1166 = vld [vmem:[#allocation2 + $0xa8] sm:$0xff]
    %v1167 = vld [vmem:[#allocation2 + $0xb0] sm:$0xff]
    %v1168 = vld [vmem:[#allocation2 + $0xb8] sm:$0xff]
    %v1177 = vunpack.c.l.b16 %v1161
    %v1178 = vunpack.c.h.b16 %v1161
    %v1179 = vunpack.c.l.b16 %v1162
    %v1180 = vunpack.c.h.b16 %v1162
    %v1181 = vunpack.c.l.b16 %v1163
    %v1182 = vunpack.c.h.b16 %v1163
    %v1183 = vunpack.c.l.b16 %v1164
    %v1184 = vunpack.c.h.b16 %v1164
    %v1185 = vunpack.c.l.b16 %v1165
    %v1186 = vunpack.c.h.b16 %v1165
    %v1187 = vunpack.c.l.b16 %v1166
    %v1188 = vunpack.c.h.b16 %v1166
    %v1189 = vunpack.c.l.b16 %v1167
    %v1190 = vunpack.c.h.b16 %v1167
    %v1191 = vunpack.c.l.b16 %v1168
    %v1192 = vunpack.c.h.b16 %v1168
    %v1193 = vpack.c.b16 %v1179, %v1177
    %v1194 = vpack.c.b16 %v1180, %v1178
    %v1195 = vpack.c.b16 %v1183, %v1181
    %v1196 = vpack.c.b16 %v1184, %v1182
    %v1197 = vpack.c.b16 %v1187, %v1185
    %v1198 = vpack.c.b16 %v1188, %v1186
    %v1199 = vpack.c.b16 %v1191, %v1189
    %v1200 = vpack.c.b16 %v1192, %v1190
    %v1210 = vsel %vm799, %v1160, 0
    %1212 = vmatpush.bf16.msra.mxu0 0
    %1213 = vmatpush.bf16.msra.mxu0 0
    %1214 = vmatpush.bf16.msra.mxu0 0
    %1215 = vmatpush.bf16.msra.mxu0 0
    %1216 = vmatpush.bf16.msra.mxu0 %v1199
    %1217 = vmatpush.bf16.msra.mxu0 %v1197
    %1218 = vmatpush.bf16.msra.mxu0 %v1195
    %1219 = vmatpush.bf16.msra.mxu0 %v1193
    %1220 = vmatmul.bf16.gmra.mxu0 %v1210
    %v1221 = vpop.f32.mrf.mxu0
    %v1222 = vadd.f32 0.0, %v1221
    %v1223 = vpop.f32.mrf.mxu0
    %1224 = vdwg.mxu0
    %1225 = vmatpush.bf16.msra.mxu0 0
    %1226 = vmatpush.bf16.msra.mxu0 0
    %1227 = vmatpush.bf16.msra.mxu0 0
    %1228 = vmatpush.bf16.msra.mxu0 0
    %1229 = vmatpush.bf16.msra.mxu0 %v1200
    %1230 = vmatpush.bf16.msra.mxu0 %v1198
    %1231 = vmatpush.bf16.msra.mxu0 %v1196
    %1232 = vmatpush.bf16.msra.mxu0 %v1194
    %1233 = vmatmul.bf16.gmra.mxu0 %v1210
    %v1234 = vpop.f32.mrf.mxu0
    %v1235 = vadd.f32 0.0, %v1234
    %v1236 = vpop.f32.mrf.mxu0
    %1237 = vdwg.mxu0
    %v1238 = vadd.f32 %v1078, %v1222
    %v1239 = vadd.f32 %v1091, %v1235
    %1241 = vrot.lane.b32.xlu0 %v1094, 64
    %v1242 = vpop.permute.xlu0 %1241
    %1244 = vrot.lane.b32.xlu0 %v1095, 64
    %v1245 = vpop.permute.xlu0 %1244
    %v1247 = vsel %vm799, %v1242, 0
    %v1250 = vsel %vm799, %v1245, 0
    %1252 = vmatpush.bf16.xpose.msra.mxu0 0
    %1253 = vmatpush.bf16.xpose.msra.mxu0 0
    %1254 = vmatpush.bf16.xpose.msra.mxu0 0
    %1255 = vmatpush.bf16.xpose.msra.mxu0 0
    %1256 = vmatpush.bf16.xpose.msra.mxu0 0
    %1257 = vmatpush.bf16.xpose.msra.mxu0 0
    %1258 = vmatpush.bf16.xpose.msra.mxu0 0
    %1259 = vmatpush.bf16.xpose.msra.mxu0 %v1250
    %1260 = vmatmul.bf16.gmra.mxu0 %v1247
    %v1261 = vpop.f32.mrf.mxu0
    %v1262 = vadd.f32 0.0, %v1261
    %v1263 = vpop.f32.mrf.mxu0
    %1264 = vdwg.mxu0
    %v1265 = vsel %vm819, %v1262, -inf
    %1266 = vmax.xlane.f32.xlu0 %v1265
    %v1267 = vpop.xlane.xlu0 %1266
    %v1268 = vsub.f32 %v1262, %v1267
    %v1269 = vmul.f32 %v1268, 1.442695
    %v1270 = vpow.pop %v1269
    %v1271 = vsel %vm819, %v1270, 0.0
    %1272 = vadd.xlane.f32.xlu0 %v1271
    %v1273 = vpop.xlane.xlu0 %1272
    %v1274 = vrcp.pop %v1273
    %v1275 = vmul.f32 %v1273, %v1274
    %v1276 = vsub.f32 1.0, %v1275
    %v1277 = vmul.f32 %v1274, %v1276
    %v1278 = vadd.f32 %v1274, %v1277
    %vm1279 = vweird.f32 %v1273
    %vm1280 = vweird.f32 %v1274
    %vm1281 = vmor %vm1279, %vm1280
    %v1282 = vsel %vm1281, %v1274, %v1278
    %v1283 = vand.u32 2147483647, %v1273
    %vm1284 = vcmp.eq.f32.partialorder %v1283, 8.507059e+37
    %v1285 = vand.u32 %v1273, 2147483648
    %v1286 = vor.u32 1.1754944e-38, %v1285
    %v1287 = vsel %vm1284, %v1286, %v1282
    %v1288 = vmul.f32 %v1270, %v1287
    %v1289 = vpack.c.bf16 %v1288, %v1288
    %1291 = vrot.lane.b32.xlu0 %v1140, 64
    %v1292 = vpop.permute.xlu0 %1291
    %v1294 = vsel %vm819, %v1289, 0
    %v1297 = vsel %vm849, %v1292, 0
    %1299 = vmatpush.bf16.msra.mxu0 0
    %1300 = vmatpush.bf16.msra.mxu0 0
    %1301 = vmatpush.bf16.msra.mxu0 0
    %1302 = vmatpush.bf16.msra.mxu0 0
    %1303 = vmatpush.bf16.msra.mxu0 0
    %1304 = vmatpush.bf16.msra.mxu0 0
    %1305 = vmatpush.bf16.msra.mxu0 0
    %1306 = vmatpush.bf16.msra.mxu0 %v1297
    %1307 = vmatmul.bf16.gmra.mxu0 %v1294
    %v1308 = vpop.f32.mrf.mxu0
    %v1309 = vadd.f32 0.0, %v1308
    %v1310 = vpop.f32.mrf.mxu0
    %1311 = vdwg.mxu0
    %v1312 = vpack.c.bf16 %v1309, %v1309
    %v1313 = vld [vmem:[#allocation2 + $0xc0] sm:$0xff]
    %v1314 = vld [vmem:[#allocation2 + $0xc8] sm:$0xff]
    %v1315 = vld [vmem:[#allocation2 + $0xd0] sm:$0xff]
    %v1316 = vld [vmem:[#allocation2 + $0xd8] sm:$0xff]
    %v1317 = vld [vmem:[#allocation2 + $0xe0] sm:$0xff]
    %v1318 = vld [vmem:[#allocation2 + $0xe8] sm:$0xff]
    %v1319 = vld [vmem:[#allocation2 + $0xf0] sm:$0xff]
    %v1320 = vld [vmem:[#allocation2 + $0xf8] sm:$0xff]
    %v1329 = vunpack.c.l.b16 %v1313
    %v1330 = vunpack.c.h.b16 %v1313
    %v1331 = vunpack.c.l.b16 %v1314
    %v1332 = vunpack.c.h.b16 %v1314
    %v1333 = vunpack.c.l.b16 %v1315
    %v1334 = vunpack.c.h.b16 %v1315
    %v1335 = vunpack.c.l.b16 %v1316
    %v1336 = vunpack.c.h.b16 %v1316
    %v1337 = vunpack.c.l.b16 %v1317
    %v1338 = vunpack.c.h.b16 %v1317
    %v1339 = vunpack.c.l.b16 %v1318
    %v1340 = vunpack.c.h.b16 %v1318
    %v1341 = vunpack.c.l.b16 %v1319
    %v1342 = vunpack.c.h.b16 %v1319
    %v1343 = vunpack.c.l.b16 %v1320
    %v1344 = vunpack.c.h.b16 %v1320
    %v1345 = vpack.c.b16 %v1331, %v1329
    %v1346 = vpack.c.b16 %v1332, %v1330
    %v1347 = vpack.c.b16 %v1335, %v1333
    %v1348 = vpack.c.b16 %v1336, %v1334
    %v1349 = vpack.c.b16 %v1339, %v1337
    %v1350 = vpack.c.b16 %v1340, %v1338
    %v1351 = vpack.c.b16 %v1343, %v1341
    %v1352 = vpack.c.b16 %v1344, %v1342
    %v1362 = vsel %vm799, %v1312, 0
    %1364 = vmatpush.bf16.msra.mxu0 0
    %1365 = vmatpush.bf16.msra.mxu0 0
    %1366 = vmatpush.bf16.msra.mxu0 0
    %1367 = vmatpush.bf16.msra.mxu0 0
    %1368 = vmatpush.bf16.msra.mxu0 %v1351
    %1369 = vmatpush.bf16.msra.mxu0 %v1349
    %1370 = vmatpush.bf16.msra.mxu0 %v1347
    %1371 = vmatpush.bf16.msra.mxu0 %v1345
    %1372 = vmatmul.bf16.gmra.mxu0 %v1362
    %v1373 = vpop.f32.mrf.mxu0
    %v1374 = vadd.f32 0.0, %v1373
    %v1375 = vpop.f32.mrf.mxu0
    %1376 = vdwg.mxu0
    %1377 = vmatpush.bf16.msra.mxu0 0
    %1378 = vmatpush.bf16.msra.mxu0 0
    %1379 = vmatpush.bf16.msra.mxu0 0
    %1380 = vmatpush.bf16.msra.mxu0 0
    %1381 = vmatpush.bf16.msra.mxu0 %v1352
    %1382 = vmatpush.bf16.msra.mxu0 %v1350
    %1383 = vmatpush.bf16.msra.mxu0 %v1348
    %1384 = vmatpush.bf16.msra.mxu0 %v1346
    %1385 = vmatmul.bf16.gmra.mxu0 %v1362
    %v1386 = vpop.f32.mrf.mxu0
    %v1387 = vadd.f32 0.0, %v1386
    %v1388 = vpop.f32.mrf.mxu0
    %1389 = vdwg.mxu0
    %v1390 = vadd.f32 %v1238, %v1374
    %v1391 = vadd.f32 %v1239, %v1387
    %v1392 = vld [vmem:[%s4] sm:$0x3]
    %v1394 = vperm.slane %v1392, 0
    %v1395 = vperm.slane %v1392, 1
    %v1398 = vadd.f32 %v1390, %v1394
    %v1399 = vadd.f32 %v1391, %v1395
    %1400 = vst [vmem:[%s7] sm:$0xff] %v1398
    %1401 = vst [vmem:[%s7 + $0x8] sm:$0xff] %v1399
    %v1402 = vpack.c.bf16 %v1398, %v1398
    %v1403 = vpack.c.bf16 %v1399, %v1399
    %v1404 = vld [vmem:[%s5] sm:$0xf]
    %v1405 = vld [vmem:[%s5 + $0x4] sm:$0xf]
    %v1406 = vld [vmem:[%s5 + $0x8] sm:$0xf]
    %v1407 = vld [vmem:[%s5 + $0xc] sm:$0xf]
    %v1408 = vld [vmem:[%s5 + $0x10] sm:$0xf]
    %v1409 = vld [vmem:[%s5 + $0x14] sm:$0xf]
    %v1410 = vld [vmem:[%s5 + $0x18] sm:$0xf]
    %v1411 = vld [vmem:[%s5 + $0x1c] sm:$0xf]
    %v1412 = vld [vmem:[%s5 + $0x20] sm:$0xf]
    %v1413 = vld [vmem:[%s5 + $0x24] sm:$0xf]
    %v1414 = vld [vmem:[%s5 + $0x28] sm:$0xf]
    %v1415 = vld [vmem:[%s5 + $0x2c] sm:$0xf]
    %v1416 = vld [vmem:[%s5 + $0x30] sm:$0xf]
    %v1417 = vld [vmem:[%s5 + $0x34] sm:$0xf]
    %v1418 = vld [vmem:[%s5 + $0x38] sm:$0xf]
    %v1419 = vld [vmem:[%s5 + $0x3c] sm:$0xf]
    %v1420 = vld [vmem:[%s5 + $0x40] sm:$0xf]
    %v1421 = vld [vmem:[%s5 + $0x44] sm:$0xf]
    %v1422 = vld [vmem:[%s5 + $0x48] sm:$0xf]
    %v1423 = vld [vmem:[%s5 + $0x4c] sm:$0xf]
    %v1424 = vld [vmem:[%s5 + $0x50] sm:$0xf]
    %v1425 = vld [vmem:[%s5 + $0x54] sm:$0xf]
    %v1426 = vld [vmem:[%s5 + $0x58] sm:$0xf]
    %v1427 = vld [vmem:[%s5 + $0x5c] sm:$0xf]
    %v1428 = vld [vmem:[%s5 + $0x60] sm:$0xf]
    %v1429 = vld [vmem:[%s5 + $0x64] sm:$0xf]
    %v1430 = vld [vmem:[%s5 + $0x68] sm:$0xf]
    %v1431 = vld [vmem:[%s5 + $0x6c] sm:$0xf]
    %v1432 = vld [vmem:[%s5 + $0x70] sm:$0xf]
    %v1433 = vld [vmem:[%s5 + $0x74] sm:$0xf]
    %v1434 = vld [vmem:[%s5 + $0x78] sm:$0xf]
    %v1435 = vld [vmem:[%s5 + $0x7c] sm:$0xf]
    %v1436 = vld [vmem:[%s6] sm:$0x1]
    %v1438 = vperm.slane %v1436, 0
    %v1472 = vunpack.c.l.b16 %v1404
    %v1473 = vunpack.c.l.b16 %v1405
    %v1474 = vunpack.c.l.b16 %v1406
    %v1475 = vunpack.c.l.b16 %v1407
    %v1476 = vunpack.c.l.b16 %v1408
    %v1477 = vunpack.c.l.b16 %v1409
    %v1478 = vunpack.c.l.b16 %v1410
    %v1479 = vunpack.c.l.b16 %v1411
    %v1480 = vunpack.c.l.b16 %v1412
    %v1481 = vunpack.c.l.b16 %v1413
    %v1482 = vunpack.c.l.b16 %v1414
    %v1483 = vunpack.c.l.b16 %v1415
    %v1484 = vunpack.c.l.b16 %v1416
    %v1485 = vunpack.c.l.b16 %v1417
    %v1486 = vunpack.c.l.b16 %v1418
    %v1487 = vunpack.c.l.b16 %v1419
    %v1488 = vunpack.c.l.b16 %v1420
    %v1489 = vunpack.c.l.b16 %v1421
    %v1490 = vunpack.c.l.b16 %v1422
    %v1491 = vunpack.c.l.b16 %v1423
    %v1492 = vunpack.c.l.b16 %v1424
    %v1493 = vunpack.c.l.b16 %v1425
    %v1494 = vunpack.c.l.b16 %v1426
    %v1495 = vunpack.c.l.b16 %v1427
    %v1496 = vunpack.c.l.b16 %v1428
    %v1497 = vunpack.c.l.b16 %v1429
    %v1498 = vunpack.c.l.b16 %v1430
    %v1499 = vunpack.c.l.b16 %v1431
    %v1500 = vunpack.c.l.b16 %v1432
    %v1501 = vunpack.c.l.b16 %v1433
    %v1502 = vunpack.c.l.b16 %v1434
    %v1503 = vunpack.c.l.b16 %v1435
    %v1504 = vpack.c.b16 %v1473, %v1472
    %v1505 = vpack.c.b16 %v1475, %v1474
    %v1506 = vpack.c.b16 %v1477, %v1476
    %v1507 = vpack.c.b16 %v1479, %v1478
    %v1508 = vpack.c.b16 %v1481, %v1480
    %v1509 = vpack.c.b16 %v1483, %v1482
    %v1510 = vpack.c.b16 %v1485, %v1484
    %v1511 = vpack.c.b16 %v1487, %v1486
    %v1512 = vpack.c.b16 %v1489, %v1488
    %v1513 = vpack.c.b16 %v1491, %v1490
    %v1514 = vpack.c.b16 %v1493, %v1492
    %v1515 = vpack.c.b16 %v1495, %v1494
    %v1516 = vpack.c.b16 %v1497, %v1496
    %v1517 = vpack.c.b16 %v1499, %v1498
    %v1518 = vpack.c.b16 %v1501, %v1500
    %v1519 = vpack.c.b16 %v1503, %v1502
    %1536 = vmatpush.bf16.msra.mxu0 %v1511
    %1537 = vmatpush.bf16.msra.mxu0 %v1510
    %1538 = vmatpush.bf16.msra.mxu0 %v1509
    %1539 = vmatpush.bf16.msra.mxu0 %v1508
    %1540 = vmatpush.bf16.msra.mxu0 %v1507
    %1541 = vmatpush.bf16.msra.mxu0 %v1506
    %1542 = vmatpush.bf16.msra.mxu0 %v1505
    %1543 = vmatpush.bf16.msra.mxu0 %v1504
    %1544 = vmatmul.bf16.gmra.mxu0 %v1402
    %v1545 = vpop.f32.mrf.mxu0
    %v1546 = vadd.f32 %v1438, %v1545
    %v1547 = vpop.f32.mrf.mxu0
    %1548 = vdwg.mxu0
    %1549 = vmatpush.bf16.msra.mxu0 %v1519
    %1550 = vmatpush.bf16.msra.mxu0 %v1518
    %1551 = vmatpush.bf16.msra.mxu0 %v1517
    %1552 = vmatpush.bf16.msra.mxu0 %v1516
    %1553 = vmatpush.bf16.msra.mxu0 %v1515
    %1554 = vmatpush.bf16.msra.mxu0 %v1514
    %1555 = vmatpush.bf16.msra.mxu0 %v1513
    %1556 = vmatpush.bf16.msra.mxu0 %v1512
    %1557 = vmatmul.bf16.gmra.mxu0 %v1403
    %v1558 = vpop.f32.mrf.mxu0
    %v1559 = vadd.f32 %v1546, %v1558
    %v1560 = vpop.f32.mrf.mxu0
    %1561 = vdwg.mxu0
    %1562 = vst.msk [vmem:[%s8] sm:$0xff] %vm799, %v1559
    %s1563 = scalar_lea.vmem %s5, 128
    %v1564 = vld [vmem:[%s1563] sm:$0xf]
    %v1565 = vld [vmem:[%s1563 + $0x4] sm:$0xf]
    %v1566 = vld [vmem:[%s1563 + $0x8] sm:$0xf]
    %v1567 = vld [vmem:[%s1563 + $0xc] sm:$0xf]
    %v1568 = vld [vmem:[%s1563 + $0x10] sm:$0xf]
    %v1569 = vld [vmem:[%s1563 + $0x14] sm:$0xf]
    %v1570 = vld [vmem:[%s1563 + $0x18] sm:$0xf]
    %v1571 = vld [vmem:[%s1563 + $0x1c] sm:$0xf]
    %v1572 = vld [vmem:[%s1563 + $0x20] sm:$0xf]
    %v1573 = vld [vmem:[%s1563 + $0x24] sm:$0xf]
    %v1574 = vld [vmem:[%s1563 + $0x28] sm:$0xf]
    %v1575 = vld [vmem:[%s1563 + $0x2c] sm:$0xf]
    %v1576 = vld [vmem:[%s1563 + $0x30] sm:$0xf]
    %v1577 = vld [vmem:[%s1563 + $0x34] sm:$0xf]
    %v1578 = vld [vmem:[%s1563 + $0x38] sm:$0xf]
    %v1579 = vld [vmem:[%s1563 + $0x3c] sm:$0xf]
    %v1580 = vld [vmem:[%s1563 + $0x40] sm:$0xf]
    %v1581 = vld [vmem:[%s1563 + $0x44] sm:$0xf]
    %v1582 = vld [vmem:[%s1563 + $0x48] sm:$0xf]
    %v1583 = vld [vmem:[%s1563 + $0x4c] sm:$0xf]
    %v1584 = vld [vmem:[%s1563 + $0x50] sm:$0xf]
    %v1585 = vld [vmem:[%s1563 + $0x54] sm:$0xf]
    %v1586 = vld [vmem:[%s1563 + $0x58] sm:$0xf]
    %v1587 = vld [vmem:[%s1563 + $0x5c] sm:$0xf]
    %v1588 = vld [vmem:[%s1563 + $0x60] sm:$0xf]
    %v1589 = vld [vmem:[%s1563 + $0x64] sm:$0xf]
    %v1590 = vld [vmem:[%s1563 + $0x68] sm:$0xf]
    %v1591 = vld [vmem:[%s1563 + $0x6c] sm:$0xf]
    %v1592 = vld [vmem:[%s1563 + $0x70] sm:$0xf]
    %v1593 = vld [vmem:[%s1563 + $0x74] sm:$0xf]
    %v1594 = vld [vmem:[%s1563 + $0x78] sm:$0xf]
    %v1595 = vld [vmem:[%s1563 + $0x7c] sm:$0xf]
    %s1596 = scalar_lea.vmem %s6, 1
    %v1597 = vld [vmem:[%s1596] sm:$0x1]
    %v1599 = vperm.slane %v1597, 0
    %v1633 = vunpack.c.l.b16 %v1564
    %v1634 = vunpack.c.l.b16 %v1565
    %v1635 = vunpack.c.l.b16 %v1566
    %v1636 = vunpack.c.l.b16 %v1567
    %v1637 = vunpack.c.l.b16 %v1568
    %v1638 = vunpack.c.l.b16 %v1569
    %v1639 = vunpack.c.l.b16 %v1570
    %v1640 = vunpack.c.l.b16 %v1571
    %v1641 = vunpack.c.l.b16 %v1572
    %v1642 = vunpack.c.l.b16 %v1573
    %v1643 = vunpack.c.l.b16 %v1574
    %v1644 = vunpack.c.l.b16 %v1575
    %v1645 = vunpack.c.l.b16 %v1576
    %v1646 = vunpack.c.l.b16 %v1577
    %v1647 = vunpack.c.l.b16 %v1578
    %v1648 = vunpack.c.l.b16 %v1579
    %v1649 = vunpack.c.l.b16 %v1580
    %v1650 = vunpack.c.l.b16 %v1581
    %v1651 = vunpack.c.l.b16 %v1582
    %v1652 = vunpack.c.l.b16 %v1583
    %v1653 = vunpack.c.l.b16 %v1584
    %v1654 = vunpack.c.l.b16 %v1585
    %v1655 = vunpack.c.l.b16 %v1586
    %v1656 = vunpack.c.l.b16 %v1587
    %v1657 = vunpack.c.l.b16 %v1588
    %v1658 = vunpack.c.l.b16 %v1589
    %v1659 = vunpack.c.l.b16 %v1590
    %v1660 = vunpack.c.l.b16 %v1591
    %v1661 = vunpack.c.l.b16 %v1592
    %v1662 = vunpack.c.l.b16 %v1593
    %v1663 = vunpack.c.l.b16 %v1594
    %v1664 = vunpack.c.l.b16 %v1595
    %v1665 = vpack.c.b16 %v1634, %v1633
    %v1666 = vpack.c.b16 %v1636, %v1635
    %v1667 = vpack.c.b16 %v1638, %v1637
    %v1668 = vpack.c.b16 %v1640, %v1639
    %v1669 = vpack.c.b16 %v1642, %v1641
    %v1670 = vpack.c.b16 %v1644, %v1643
    %v1671 = vpack.c.b16 %v1646, %v1645
    %v1672 = vpack.c.b16 %v1648, %v1647
    %v1673 = vpack.c.b16 %v1650, %v1649
    %v1674 = vpack.c.b16 %v1652, %v1651
    %v1675 = vpack.c.b16 %v1654, %v1653
    %v1676 = vpack.c.b16 %v1656, %v1655
    %v1677 = vpack.c.b16 %v1658, %v1657
    %v1678 = vpack.c.b16 %v1660, %v1659
    %v1679 = vpack.c.b16 %v1662, %v1661
    %v1680 = vpack.c.b16 %v1664, %v1663
    %1697 = vmatpush.bf16.msra.mxu0 %v1672
    %1698 = vmatpush.bf16.msra.mxu0 %v1671
    %1699 = vmatpush.bf16.msra.mxu0 %v1670
    %1700 = vmatpush.bf16.msra.mxu0 %v1669
    %1701 = vmatpush.bf16.msra.mxu0 %v1668
    %1702 = vmatpush.bf16.msra.mxu0 %v1667
    %1703 = vmatpush.bf16.msra.mxu0 %v1666
    %1704 = vmatpush.bf16.msra.mxu0 %v1665
    %1705 = vmatmul.bf16.gmra.mxu0 %v1402
    %v1706 = vpop.f32.mrf.mxu0
    %v1707 = vadd.f32 %v1599, %v1706
    %v1708 = vpop.f32.mrf.mxu0
    %1709 = vdwg.mxu0
    %1710 = vmatpush.bf16.msra.mxu0 %v1680
    %1711 = vmatpush.bf16.msra.mxu0 %v1679
    %1712 = vmatpush.bf16.msra.mxu0 %v1678
    %1713 = vmatpush.bf16.msra.mxu0 %v1677
    %1714 = vmatpush.bf16.msra.mxu0 %v1676
    %1715 = vmatpush.bf16.msra.mxu0 %v1675
    %1716 = vmatpush.bf16.msra.mxu0 %v1674
    %1717 = vmatpush.bf16.msra.mxu0 %v1673
    %1718 = vmatmul.bf16.gmra.mxu0 %v1403
    %v1719 = vpop.f32.mrf.mxu0
    %v1720 = vadd.f32 %v1707, %v1719
    %v1721 = vpop.f32.mrf.mxu0
    %1722 = vdwg.mxu0
    %1723 = vst.msk [vmem:[%s8 + $0x8] sm:$0xff] %vm799, %v1720
    %s1724 = scalar_lea.vmem %s5, 256
    %v1725 = vld [vmem:[%s1724] sm:$0xf]
    %v1726 = vld [vmem:[%s1724 + $0x4] sm:$0xf]
    %v1727 = vld [vmem:[%s1724 + $0x8] sm:$0xf]
    %v1728 = vld [vmem:[%s1724 + $0xc] sm:$0xf]
    %v1729 = vld [vmem:[%s1724 + $0x10] sm:$0xf]
    %v1730 = vld [vmem:[%s1724 + $0x14] sm:$0xf]
    %v1731 = vld [vmem:[%s1724 + $0x18] sm:$0xf]
    %v1732 = vld [vmem:[%s1724 + $0x1c] sm:$0xf]
    %v1733 = vld [vmem:[%s1724 + $0x20] sm:$0xf]
    %v1734 = vld [vmem:[%s1724 + $0x24] sm:$0xf]
    %v1735 = vld [vmem:[%s1724 + $0x28] sm:$0xf]
    %v1736 = vld [vmem:[%s1724 + $0x2c] sm:$0xf]
    %v1737 = vld [vmem:[%s1724 + $0x30] sm:$0xf]
    %v1738 = vld [vmem:[%s1724 + $0x34] sm:$0xf]
    %v1739 = vld [vmem:[%s1724 + $0x38] sm:$0xf]
    %v1740 = vld [vmem:[%s1724 + $0x3c] sm:$0xf]
    %v1741 = vld [vmem:[%s1724 + $0x40] sm:$0xf]
    %v1742 = vld [vmem:[%s1724 + $0x44] sm:$0xf]
    %v1743 = vld [vmem:[%s1724 + $0x48] sm:$0xf]
    %v1744 = vld [vmem:[%s1724 + $0x4c] sm:$0xf]
    %v1745 = vld [vmem:[%s1724 + $0x50] sm:$0xf]
    %v1746 = vld [vmem:[%s1724 + $0x54] sm:$0xf]
    %v1747 = vld [vmem:[%s1724 + $0x58] sm:$0xf]
    %v1748 = vld [vmem:[%s1724 + $0x5c] sm:$0xf]
    %v1749 = vld [vmem:[%s1724 + $0x60] sm:$0xf]
    %v1750 = vld [vmem:[%s1724 + $0x64] sm:$0xf]
    %v1751 = vld [vmem:[%s1724 + $0x68] sm:$0xf]
    %v1752 = vld [vmem:[%s1724 + $0x6c] sm:$0xf]
    %v1753 = vld [vmem:[%s1724 + $0x70] sm:$0xf]
    %v1754 = vld [vmem:[%s1724 + $0x74] sm:$0xf]
    %v1755 = vld [vmem:[%s1724 + $0x78] sm:$0xf]
    %v1756 = vld [vmem:[%s1724 + $0x7c] sm:$0xf]
    %s1757 = scalar_lea.vmem %s6, 2
    %v1758 = vld [vmem:[%s1757] sm:$0x1]
    %v1760 = vperm.slane %v1758, 0
    %v1794 = vunpack.c.l.b16 %v1725
    %v1795 = vunpack.c.l.b16 %v1726
    %v1796 = vunpack.c.l.b16 %v1727
    %v1797 = vunpack.c.l.b16 %v1728
    %v1798 = vunpack.c.l.b16 %v1729
    %v1799 = vunpack.c.l.b16 %v1730
    %v1800 = vunpack.c.l.b16 %v1731
    %v1801 = vunpack.c.l.b16 %v1732
    %v1802 = vunpack.c.l.b16 %v1733
    %v1803 = vunpack.c.l.b16 %v1734
    %v1804 = vunpack.c.l.b16 %v1735
    %v1805 = vunpack.c.l.b16 %v1736
    %v1806 = vunpack.c.l.b16 %v1737
    %v1807 = vunpack.c.l.b16 %v1738
    %v1808 = vunpack.c.l.b16 %v1739
    %v1809 = vunpack.c.l.b16 %v1740
    %v1810 = vunpack.c.l.b16 %v1741
    %v1811 = vunpack.c.l.b16 %v1742
    %v1812 = vunpack.c.l.b16 %v1743
    %v1813 = vunpack.c.l.b16 %v1744
    %v1814 = vunpack.c.l.b16 %v1745
    %v1815 = vunpack.c.l.b16 %v1746
    %v1816 = vunpack.c.l.b16 %v1747
    %v1817 = vunpack.c.l.b16 %v1748
    %v1818 = vunpack.c.l.b16 %v1749
    %v1819 = vunpack.c.l.b16 %v1750
    %v1820 = vunpack.c.l.b16 %v1751
    %v1821 = vunpack.c.l.b16 %v1752
    %v1822 = vunpack.c.l.b16 %v1753
    %v1823 = vunpack.c.l.b16 %v1754
    %v1824 = vunpack.c.l.b16 %v1755
    %v1825 = vunpack.c.l.b16 %v1756
    %v1826 = vpack.c.b16 %v1795, %v1794
    %v1827 = vpack.c.b16 %v1797, %v1796
    %v1828 = vpack.c.b16 %v1799, %v1798
    %v1829 = vpack.c.b16 %v1801, %v1800
    %v1830 = vpack.c.b16 %v1803, %v1802
    %v1831 = vpack.c.b16 %v1805, %v1804
    %v1832 = vpack.c.b16 %v1807, %v1806
    %v1833 = vpack.c.b16 %v1809, %v1808
    %v1834 = vpack.c.b16 %v1811, %v1810
    %v1835 = vpack.c.b16 %v1813, %v1812
    %v1836 = vpack.c.b16 %v1815, %v1814
    %v1837 = vpack.c.b16 %v1817, %v1816
    %v1838 = vpack.c.b16 %v1819, %v1818
    %v1839 = vpack.c.b16 %v1821, %v1820
    %v1840 = vpack.c.b16 %v1823, %v1822
    %v1841 = vpack.c.b16 %v1825, %v1824
    %1858 = vmatpush.bf16.msra.mxu0 %v1833
    %1859 = vmatpush.bf16.msra.mxu0 %v1832
    %1860 = vmatpush.bf16.msra.mxu0 %v1831
    %1861 = vmatpush.bf16.msra.mxu0 %v1830
    %1862 = vmatpush.bf16.msra.mxu0 %v1829
    %1863 = vmatpush.bf16.msra.mxu0 %v1828
    %1864 = vmatpush.bf16.msra.mxu0 %v1827
    %1865 = vmatpush.bf16.msra.mxu0 %v1826
    %1866 = vmatmul.bf16.gmra.mxu0 %v1402
    %v1867 = vpop.f32.mrf.mxu0
    %v1868 = vadd.f32 %v1760, %v1867
    %v1869 = vpop.f32.mrf.mxu0
    %1870 = vdwg.mxu0
    %1871 = vmatpush.bf16.msra.mxu0 %v1841
    %1872 = vmatpush.bf16.msra.mxu0 %v1840
    %1873 = vmatpush.bf16.msra.mxu0 %v1839
    %1874 = vmatpush.bf16.msra.mxu0 %v1838
    %1875 = vmatpush.bf16.msra.mxu0 %v1837
    %1876 = vmatpush.bf16.msra.mxu0 %v1836
    %1877 = vmatpush.bf16.msra.mxu0 %v1835
    %1878 = vmatpush.bf16.msra.mxu0 %v1834
    %1879 = vmatmul.bf16.gmra.mxu0 %v1403
    %v1880 = vpop.f32.mrf.mxu0
    %v1881 = vadd.f32 %v1868, %v1880
    %v1882 = vpop.f32.mrf.mxu0
    %1883 = vdwg.mxu0
    %1884 = vst.msk [vmem:[%s8 + $0x10] sm:$0xff] %vm799, %v1881
    %s1885 = scalar_lea.vmem %s5, 384
    %v1886 = vld [vmem:[%s1885] sm:$0xf]
    %v1887 = vld [vmem:[%s1885 + $0x4] sm:$0xf]
    %v1888 = vld [vmem:[%s1885 + $0x8] sm:$0xf]
    %v1889 = vld [vmem:[%s1885 + $0xc] sm:$0xf]
    %v1890 = vld [vmem:[%s1885 + $0x10] sm:$0xf]
    %v1891 = vld [vmem:[%s1885 + $0x14] sm:$0xf]
    %v1892 = vld [vmem:[%s1885 + $0x18] sm:$0xf]
    %v1893 = vld [vmem:[%s1885 + $0x1c] sm:$0xf]
    %v1894 = vld [vmem:[%s1885 + $0x20] sm:$0xf]
    %v1895 = vld [vmem:[%s1885 + $0x24] sm:$0xf]
    %v1896 = vld [vmem:[%s1885 + $0x28] sm:$0xf]
    %v1897 = vld [vmem:[%s1885 + $0x2c] sm:$0xf]
    %v1898 = vld [vmem:[%s1885 + $0x30] sm:$0xf]
    %v1899 = vld [vmem:[%s1885 + $0x34] sm:$0xf]
    %v1900 = vld [vmem:[%s1885 + $0x38] sm:$0xf]
    %v1901 = vld [vmem:[%s1885 + $0x3c] sm:$0xf]
    %v1902 = vld [vmem:[%s1885 + $0x40] sm:$0xf]
    %v1903 = vld [vmem:[%s1885 + $0x44] sm:$0xf]
    %v1904 = vld [vmem:[%s1885 + $0x48] sm:$0xf]
    %v1905 = vld [vmem:[%s1885 + $0x4c] sm:$0xf]
    %v1906 = vld [vmem:[%s1885 + $0x50] sm:$0xf]
    %v1907 = vld [vmem:[%s1885 + $0x54] sm:$0xf]
    %v1908 = vld [vmem:[%s1885 + $0x58] sm:$0xf]
    %v1909 = vld [vmem:[%s1885 + $0x5c] sm:$0xf]
    %v1910 = vld [vmem:[%s1885 + $0x60] sm:$0xf]
    %v1911 = vld [vmem:[%s1885 + $0x64] sm:$0xf]
    %v1912 = vld [vmem:[%s1885 + $0x68] sm:$0xf]
    %v1913 = vld [vmem:[%s1885 + $0x6c] sm:$0xf]
    %v1914 = vld [vmem:[%s1885 + $0x70] sm:$0xf]
    %v1915 = vld [vmem:[%s1885 + $0x74] sm:$0xf]
    %v1916 = vld [vmem:[%s1885 + $0x78] sm:$0xf]
    %v1917 = vld [vmem:[%s1885 + $0x7c] sm:$0xf]
    %s1918 = scalar_lea.vmem %s6, 3
    %v1919 = vld [vmem:[%s1918] sm:$0x1]
    %v1921 = vperm.slane %v1919, 0
    %v1955 = vunpack.c.l.b16 %v1886
    %v1956 = vunpack.c.l.b16 %v1887
    %v1957 = vunpack.c.l.b16 %v1888
    %v1958 = vunpack.c.l.b16 %v1889
    %v1959 = vunpack.c.l.b16 %v1890
    %v1960 = vunpack.c.l.b16 %v1891
    %v1961 = vunpack.c.l.b16 %v1892
    %v1962 = vunpack.c.l.b16 %v1893
    %v1963 = vunpack.c.l.b16 %v1894
    %v1964 = vunpack.c.l.b16 %v1895
    %v1965 = vunpack.c.l.b16 %v1896
    %v1966 = vunpack.c.l.b16 %v1897
    %v1967 = vunpack.c.l.b16 %v1898
    %v1968 = vunpack.c.l.b16 %v1899
    %v1969 = vunpack.c.l.b16 %v1900
    %v1970 = vunpack.c.l.b16 %v1901
    %v1971 = vunpack.c.l.b16 %v1902
    %v1972 = vunpack.c.l.b16 %v1903
    %v1973 = vunpack.c.l.b16 %v1904
    %v1974 = vunpack.c.l.b16 %v1905
    %v1975 = vunpack.c.l.b16 %v1906
    %v1976 = vunpack.c.l.b16 %v1907
    %v1977 = vunpack.c.l.b16 %v1908
    %v1978 = vunpack.c.l.b16 %v1909
    %v1979 = vunpack.c.l.b16 %v1910
    %v1980 = vunpack.c.l.b16 %v1911
    %v1981 = vunpack.c.l.b16 %v1912
    %v1982 = vunpack.c.l.b16 %v1913
    %v1983 = vunpack.c.l.b16 %v1914
    %v1984 = vunpack.c.l.b16 %v1915
    %v1985 = vunpack.c.l.b16 %v1916
    %v1986 = vunpack.c.l.b16 %v1917
    %v1987 = vpack.c.b16 %v1956, %v1955
    %v1988 = vpack.c.b16 %v1958, %v1957
    %v1989 = vpack.c.b16 %v1960, %v1959
    %v1990 = vpack.c.b16 %v1962, %v1961
    %v1991 = vpack.c.b16 %v1964, %v1963
    %v1992 = vpack.c.b16 %v1966, %v1965
    %v1993 = vpack.c.b16 %v1968, %v1967
    %v1994 = vpack.c.b16 %v1970, %v1969
    %v1995 = vpack.c.b16 %v1972, %v1971
    %v1996 = vpack.c.b16 %v1974, %v1973
    %v1997 = vpack.c.b16 %v1976, %v1975
    %v1998 = vpack.c.b16 %v1978, %v1977
    %v1999 = vpack.c.b16 %v1980, %v1979
    %v2000 = vpack.c.b16 %v1982, %v1981
    %v2001 = vpack.c.b16 %v1984, %v1983
    %v2002 = vpack.c.b16 %v1986, %v1985
    %2019 = vmatpush.bf16.msra.mxu0 %v1994
    %2020 = vmatpush.bf16.msra.mxu0 %v1993
    %2021 = vmatpush.bf16.msra.mxu0 %v1992
    %2022 = vmatpush.bf16.msra.mxu0 %v1991
    %2023 = vmatpush.bf16.msra.mxu0 %v1990
    %2024 = vmatpush.bf16.msra.mxu0 %v1989
    %2025 = vmatpush.bf16.msra.mxu0 %v1988
    %2026 = vmatpush.bf16.msra.mxu0 %v1987
    %2027 = vmatmul.bf16.gmra.mxu0 %v1402
    %v2028 = vpop.f32.mrf.mxu0
    %v2029 = vadd.f32 %v1921, %v2028
    %v2030 = vpop.f32.mrf.mxu0
    %2031 = vdwg.mxu0
    %2032 = vmatpush.bf16.msra.mxu0 %v2002
    %2033 = vmatpush.bf16.msra.mxu0 %v2001
    %2034 = vmatpush.bf16.msra.mxu0 %v2000
    %2035 = vmatpush.bf16.msra.mxu0 %v1999
    %2036 = vmatpush.bf16.msra.mxu0 %v1998
    %2037 = vmatpush.bf16.msra.mxu0 %v1997
    %2038 = vmatpush.bf16.msra.mxu0 %v1996
    %2039 = vmatpush.bf16.msra.mxu0 %v1995
    %2040 = vmatmul.bf16.gmra.mxu0 %v1403
    %v2041 = vpop.f32.mrf.mxu0
    %v2042 = vadd.f32 %v2029, %v2041
    %v2043 = vpop.f32.mrf.mxu0
    %2044 = vdwg.mxu0
    %2045 = vst.msk [vmem:[%s8 + $0x18] sm:$0xff] %vm799, %v2042
    // Predicated region
    $region34: #{dual_cross_attention_forward.4} parent=1 // pred_check
      _
    $region35: #{dual_cross_attention_forward.4} parent=1 // pred_check_branch
      %2047 = sbr.rel (0) target = $region37
    $region36: #{dual_cross_attention_forward.4} parent=1 // pred_region
      _
    $region37: #{dual_cross_attention_forward.4} parent=1 // pred_fallthru
      _
    // Predicated region
    $region38: #{dual_cross_attention_forward.4} parent=1 // pred_check
      _
    $region39: #{dual_cross_attention_forward.4} parent=1 // pred_check_branch
      %2049 = sbr.rel (0) target = $region41
    $region40: #{dual_cross_attention_forward.4} parent=1 // pred_region
      _
    $region41: #{dual_cross_attention_forward.4} parent=1 // pred_fallthru
      _
    // Predicated region
    $region42: #{dual_cross_attention_forward.4} parent=1 // pred_check
      _
    $region43: #{dual_cross_attention_forward.4} parent=1 // pred_check_branch
      %2051 = sbr.rel (0) target = $region45
    $region44: #{dual_cross_attention_forward.4} parent=1 // pred_region
      _
    $region45: #{dual_cross_attention_forward.4} parent=1 // pred_fallthru
      _
    // Predicated region
    $region46: #{dual_cross_attention_forward.4} parent=1 // pred_check
      _
    $region47: #{dual_cross_attention_forward.4} parent=1 // pred_check_branch
      %2053 = sbr.rel (0) target = $region49
    $region48: #{dual_cross_attention_forward.4} parent=1 // pred_region
      _
    $region49: #{dual_cross_attention_forward.4} parent=1 // pred_fallthru
      _
    %2054 = vsyncpa [#allocation3], 1

// kernel: dual_cross_attention_forward.7
$region0: #{dual_cross_attention_forward.7}
  #allocation0 [shape = 'u32[]', space=smem, size = 0x4, offset = 0x4, fixed_abs, tag = 'smem constant byte address 0x4 - core index']
  #allocation1 [shape = 'u32[72,128]{1,0:T(1,128)}', space=vmem, size = 0x9000, scoped, tag = 'internal scratch']
  %s0 = inlined_call_operand.vmem [shape: f32[64,2048], index: 0, kind: input, shape index: {}]
  %s1 = inlined_call_operand.vmem [shape: f32[32,64], index: 1, kind: input, shape index: {}]
  %s2 = inlined_call_operand.vmem [shape: f32[32,1], index: 2, kind: input, shape index: {}]
  %s3 = inlined_call_operand.vmem [shape: f32[64,32], index: 3, kind: input, shape index: {}]
  %s4 = inlined_call_operand.vmem [shape: f32[64,1], index: 4, kind: input, shape index: {}]
  %s5 = inlined_call_operand.vmem [shape: f32[64,1], index: 5, kind: input, shape index: {}]
  %s6 = inlined_call_operand.vmem [shape: f32[64,1], index: 6, kind: input, shape index: {}]
  %s7 = inlined_call_operand.vmem [shape: f32[64,2048], index: 7, kind: output, shape index: {}]
  %s8 = sld [smem:[#allocation0]]
  $region103: #{dual_cross_attention_forward.7} parent=0
    _
  %s10 = ssub.s32 1, %s8
  %s11 = scalar_select 0, %s10, %s8
  $region1: #{dual_cross_attention_forward.7} parent=0
    #allocation2 [shape = 'u8[524288]{0}', space=vmem, size = 0x80000, scoped, tag = 'input window, operand 0']
    #allocation3 [shape = 'u8[524288]{0}', space=vmem, size = 0x80000, scoped, tag = 'output window, operand 0']
    loop: start=0, step=1, limit=4
    $region2: #{dual_cross_attention_forward.7} parent=1 // loop_pre_header
      _
    $region3: #{dual_cross_attention_forward.7} parent=1 // loop_header
      %s13 = sphi 0, %s17
      %p14 = scmp.ge.s32.totalorder %s13, 4
      %s23 = sphi 0, %s25
      %s26 = sphi 0, %s23
      %s27 = sphi 0, %s26
      %s43 = sphi 0, %s27
      %s47 = sphi 0, %s47
      %s49 = sphi 0, %s47
      %s50 = sphi 0, %s49
      %s64 = sphi 0, %s50
      %s68 = sphi 0, %s68
      %s70 = sphi 0, %s68
      %s71 = sphi 0, %s70
      %s85 = sphi 0, %s71
      %s89 = sphi 0, %s89
      %s91 = sphi 0, %s89
      %s92 = sphi 0, %s91
      %s106 = sphi 0, %s92
      %s110 = sphi 0, %s110
      %s112 = sphi 0, %s110
      %s113 = sphi 0, %s112
      %s127 = sphi 0, %s113
      %s131 = sphi 0, %s131
      %s133 = sphi 0, %s131
      %s134 = sphi 0, %s133
      %s148 = sphi 0, %s134
      %s152 = sphi 0, %s152
      %s154 = sphi 0, %s152
      %s155 = sphi 0, %s154
      %s169 = sphi 0, %s155
      %s175 = sphi 0, %s177
      %s178 = sphi 0, %s175
      %s179 = sphi 0, %s178
      %s195 = sphi 0, %s179
    $region4: #{dual_cross_attention_forward.7} parent=1 // loop_header_branch
      %16 = sbr.rel (%p14) target = $region8
    $region5: #{dual_cross_attention_forward.7} parent=1 // loop_body
      %s18 = ssub.s32 %s13, 1
      %s19 = ssub.s32 %s13, 2
      %s20 = sadd.s32 %s13, 1
      %s21 = ssub.s32 %s13, %s20
      %p22 = scmp.eq.s32.totalorder %s21, 0
      %s24 = sadd.s32 %s23, 1
      %s25 = scalar_select %p22, %s23, %s24
      %p28 = pneg %p22
      %p29 = scmp.eq.s32.totalorder %s13, 1
      %p30 = por %p28, %p29
      %p31 = scmp.ne.s32.totalorder %s23, %s26
      %p32 = scmp.eq.s32.totalorder %s13, 0
      %p33 = por %p31, %p32
      %p34 = scmp.ne.s32.totalorder %s23, %s26
      %p35 = scmp.eq.s32.totalorder %s18, 1
      %p36 = por %p34, %p35
      %p37 = scmp.ne.s32.totalorder %s26, %s27
      %p38 = scmp.eq.s32.totalorder %s18, 0
      %p39 = por %p37, %p38
      %p40 = scmp.ne.s32.totalorder %s26, %s27
      %p41 = scmp.eq.s32.totalorder %s19, 1
      %p42 = por %p40, %p41
      %p44 = scmp.ne.s32.totalorder %s27, %s43
      %p45 = scmp.eq.s32.totalorder %s19, 0
      %p46 = por %p44, %p45
      %s48 = sadd.s32 %s47, 1
      %p51 = scmp.eq.s32.totalorder %s13, 1
      %p52 = scmp.ne.s32.totalorder %s47, %s49
      %p53 = scmp.eq.s32.totalorder %s13, 0
      %p54 = por %p52, %p53
      %p55 = scmp.ne.s32.totalorder %s47, %s49
      %p56 = scmp.eq.s32.totalorder %s18, 1
      %p57 = por %p55, %p56
      %p58 = scmp.ne.s32.totalorder %s49, %s50
      %p59 = scmp.eq.s32.totalorder %s18, 0
      %p60 = por %p58, %p59
      %p61 = scmp.ne.s32.totalorder %s49, %s50
      %p62 = scmp.eq.s32.totalorder %s19, 1
      %p63 = por %p61, %p62
      %p65 = scmp.ne.s32.totalorder %s50, %s64
      %p66 = scmp.eq.s32.totalorder %s19, 0
      %p67 = por %p65, %p66
      %s69 = sadd.s32 %s68, 1
      %p72 = scmp.eq.s32.totalorder %s13, 1
      %p73 = scmp.ne.s32.totalorder %s68, %s70
      %p74 = scmp.eq.s32.totalorder %s13, 0
      %p75 = por %p73, %p74
      %p76 = scmp.ne.s32.totalorder %s68, %s70
      %p77 = scmp.eq.s32.totalorder %s18, 1
      %p78 = por %p76, %p77
      %p79 = scmp.ne.s32.totalorder %s70, %s71
      %p80 = scmp.eq.s32.totalorder %s18, 0
      %p81 = por %p79, %p80
      %p82 = scmp.ne.s32.totalorder %s70, %s71
      %p83 = scmp.eq.s32.totalorder %s19, 1
      %p84 = por %p82, %p83
      %p86 = scmp.ne.s32.totalorder %s71, %s85
      %p87 = scmp.eq.s32.totalorder %s19, 0
      %p88 = por %p86, %p87
      %s90 = sadd.s32 %s89, 1
      %p93 = scmp.eq.s32.totalorder %s13, 1
      %p94 = scmp.ne.s32.totalorder %s89, %s91
      %p95 = scmp.eq.s32.totalorder %s13, 0
      %p96 = por %p94, %p95
      %p97 = scmp.ne.s32.totalorder %s89, %s91
      %p98 = scmp.eq.s32.totalorder %s18, 1
      %p99 = por %p97, %p98
      %p100 = scmp.ne.s32.totalorder %s91, %s92
      %p101 = scmp.eq.s32.totalorder %s18, 0
      %p102 = por %p100, %p101
      %p103 = scmp.ne.s32.totalorder %s91, %s92
      %p104 = scmp.eq.s32.totalorder %s19, 1
      %p105 = por %p103, %p104
      %p107 = scmp.ne.s32.totalorder %s92, %s106
      %p108 = scmp.eq.s32.totalorder %s19, 0
      %p109 = por %p107, %p108
      %s111 = sadd.s32 %s110, 1
      %p114 = scmp.eq.s32.totalorder %s13, 1
      %p115 = scmp.ne.s32.totalorder %s110, %s112
      %p116 = scmp.eq.s32.totalorder %s13, 0
      %p117 = por %p115, %p116
      %p118 = scmp.ne.s32.totalorder %s110, %s112
      %p119 = scmp.eq.s32.totalorder %s18, 1
      %p120 = por %p118, %p119
      %p121 = scmp.ne.s32.totalorder %s112, %s113
      %p122 = scmp.eq.s32.totalorder %s18, 0
      %p123 = por %p121, %p122
      %p124 = scmp.ne.s32.totalorder %s112, %s113
      %p125 = scmp.eq.s32.totalorder %s19, 1
      %p126 = por %p124, %p125
      %p128 = scmp.ne.s32.totalorder %s113, %s127
      %p129 = scmp.eq.s32.totalorder %s19, 0
      %p130 = por %p128, %p129
      %s132 = sadd.s32 %s131, 1
      %p135 = scmp.eq.s32.totalorder %s13, 1
      %p136 = scmp.ne.s32.totalorder %s131, %s133
      %p137 = scmp.eq.s32.totalorder %s13, 0
      %p138 = por %p136, %p137
      %p139 = scmp.ne.s32.totalorder %s131, %s133
      %p140 = scmp.eq.s32.totalorder %s18, 1
      %p141 = por %p139, %p140
      %p142 = scmp.ne.s32.totalorder %s133, %s134
      %p143 = scmp.eq.s32.totalorder %s18, 0
      %p144 = por %p142, %p143
      %p145 = scmp.ne.s32.totalorder %s133, %s134
      %p146 = scmp.eq.s32.totalorder %s19, 1
      %p147 = por %p145, %p146
      %p149 = scmp.ne.s32.totalorder %s134, %s148
      %p150 = scmp.eq.s32.totalorder %s19, 0
      %p151 = por %p149, %p150
      %s153 = sadd.s32 %s152, 1
      %p156 = scmp.eq.s32.totalorder %s13, 1
      %p157 = scmp.ne.s32.totalorder %s152, %s154
      %p158 = scmp.eq.s32.totalorder %s13, 0
      %p159 = por %p157, %p158
      %p160 = scmp.ne.s32.totalorder %s152, %s154
      %p161 = scmp.eq.s32.totalorder %s18, 1
      %p162 = por %p160, %p161
      %p163 = scmp.ne.s32.totalorder %s154, %s155
      %p164 = scmp.eq.s32.totalorder %s18, 0
      %p165 = por %p163, %p164
      %p166 = scmp.ne.s32.totalorder %s154, %s155
      %p167 = scmp.eq.s32.totalorder %s19, 1
      %p168 = por %p166, %p167
      %p170 = scmp.ne.s32.totalorder %s155, %s169
      %p171 = scmp.eq.s32.totalorder %s19, 0
      %p172 = por %p170, %p171
      %s173 = ssub.s32 %s13, %s20
      %p174 = scmp.eq.s32.totalorder %s173, 0
      %s176 = sadd.s32 %s175, 1
      %s177 = scalar_select %p174, %s175, %s176
      %p180 = pneg %p174
      %p181 = scmp.eq.s32.totalorder %s13, 1
      %p182 = por %p180, %p181
      %p183 = scmp.ne.s32.totalorder %s175, %s178
      %p184 = scmp.eq.s32.totalorder %s13, 0
      %p185 = por %p183, %p184
      %p186 = scmp.ne.s32.totalorder %s175, %s178
      %p187 = scmp.eq.s32.totalorder %s18, 1
      %p188 = por %p186, %p187
      %p189 = scmp.ne.s32.totalorder %s178, %s179
      %p190 = scmp.eq.s32.totalorder %s18, 0
      %p191 = por %p189, %p190
      %p192 = scmp.ne.s32.totalorder %s178, %s179
      %p193 = scmp.eq.s32.totalorder %s19, 1
      %p194 = por %p192, %p193
      %p196 = scmp.ne.s32.totalorder %s179, %s195
      %p197 = scmp.eq.s32.totalorder %s19, 0
      %p198 = por %p196, %p197
      %p199 = scmp.le.s32.totalorder 1, %s13
      %p200 = scmp.lt.s32.totalorder %s13, 3
      %p201 = pnand %p199, %p200
      %p202 = pneg %p201
      // Predicated region
      $region9: #{dual_cross_attention_forward.7} parent=5 // pred_check
        _
      $region10: #{dual_cross_attention_forward.7} parent=5 // pred_check_branch
        %204 = sbr.rel (%p201) target = $region12
      $region11: #{dual_cross_attention_forward.7} parent=5 // pred_region
        %s205 = ssub.s32 %s13, 1
        // Predicated region
        $region13: #{dual_cross_attention_forward.7} parent=11 // pred_check
          %p206 = pneg %p60
        $region14: #{dual_cross_attention_forward.7} parent=11 // pred_check_branch
          %208 = sbr.rel (%p206) target = $region16
        $region15: #{dual_cross_attention_forward.7} parent=11 // pred_region
          _
        $region16: #{dual_cross_attention_forward.7} parent=11 // pred_fallthru
          _
        // Predicated region
        $region17: #{dual_cross_attention_forward.7} parent=11 // pred_check
          %p209 = pneg %p81
        $region18: #{dual_cross_attention_forward.7} parent=11 // pred_check_branch
          %211 = sbr.rel (%p209) target = $region20
        $region19: #{dual_cross_attention_forward.7} parent=11 // pred_region
          _
        $region20: #{dual_cross_attention_forward.7} parent=11 // pred_fallthru
          _
        // Predicated region
        $region21: #{dual_cross_attention_forward.7} parent=11 // pred_check
          %p212 = pneg %p102
        $region22: #{dual_cross_attention_forward.7} parent=11 // pred_check_branch
          %214 = sbr.rel (%p212) target = $region24
        $region23: #{dual_cross_attention_forward.7} parent=11 // pred_region
          _
        $region24: #{dual_cross_attention_forward.7} parent=11 // pred_fallthru
          _
        // Predicated region
        $region25: #{dual_cross_attention_forward.7} parent=11 // pred_check
          %p215 = pneg %p123
        $region26: #{dual_cross_attention_forward.7} parent=11 // pred_check_branch
          %217 = sbr.rel (%p215) target = $region28
        $region27: #{dual_cross_attention_forward.7} parent=11 // pred_region
          _
        $region28: #{dual_cross_attention_forward.7} parent=11 // pred_fallthru
          _
        // Predicated region
        $region29: #{dual_cross_attention_forward.7} parent=11 // pred_check
          %p218 = pneg %p144
        $region30: #{dual_cross_attention_forward.7} parent=11 // pred_check_branch
          %220 = sbr.rel (%p218) target = $region32
        $region31: #{dual_cross_attention_forward.7} parent=11 // pred_region
          _
        $region32: #{dual_cross_attention_forward.7} parent=11 // pred_fallthru
          _
        // Predicated region
        $region33: #{dual_cross_attention_forward.7} parent=11 // pred_check
          %p221 = pneg %p165
        $region34: #{dual_cross_attention_forward.7} parent=11 // pred_check_branch
          %223 = sbr.rel (%p221) target = $region36
        $region35: #{dual_cross_attention_forward.7} parent=11 // pred_region
          _
        $region36: #{dual_cross_attention_forward.7} parent=11 // pred_fallthru
          _
      $region12: #{dual_cross_attention_forward.7} parent=5 // pred_fallthru
        _
      %p224 = scmp.lt.s32.totalorder %s13, 2
      // Predicated region
      $region37: #{dual_cross_attention_forward.7} parent=5 // pred_check
        %p225 = pneg %p224
      $region38: #{dual_cross_attention_forward.7} parent=5 // pred_check_branch
        %227 = sbr.rel (%p225) target = $region40
      $region39: #{dual_cross_attention_forward.7} parent=5 // pred_region
        // Predicated region
        $region41: #{dual_cross_attention_forward.7} parent=39 // pred_check
          %p228 = pneg %p33
        $region42: #{dual_cross_attention_forward.7} parent=39 // pred_check_branch
          %230 = sbr.rel (%p228) target = $region44
        $region43: #{dual_cross_attention_forward.7} parent=39 // pred_region
          %s231 = sand.u32 %s23, 1
          %s232 = sand.u32 %s23, 1
          %s233 = smul.addr %s232, 512
          %s234 = scalar_lea.vmem [#allocation2], %s233
          %s235 = smul.u32 8, %s13
          %s236 = smul.addr %s235, 8
          %s237 = scalar_lea.vmem %s0, %s236
          // Predicated region
          $region45: #{dual_cross_attention_forward.7} parent=43 // pred_check
            _
          $region46: #{dual_cross_attention_forward.7} parent=43 // pred_check_branch
            %239 = sbr.rel (0) target = $region48
          $region47: #{dual_cross_attention_forward.7} parent=43 // pred_region
            // Predicated region
            $region49: #{dual_cross_attention_forward.7} parent=47 // pred_check
              _
            $region50: #{dual_cross_attention_forward.7} parent=47 // pred_check_branch
              %241 = sbr.rel (0) target = $region52
            $region51: #{dual_cross_attention_forward.7} parent=47 // pred_region
              loop: start=0, step=1, limit=1
              $region53: #{dual_cross_attention_forward.7} parent=51 // loop_pre_header
                _
              $region54: #{dual_cross_attention_forward.7} parent=51 // loop_header
                %s243 = sphi 0, %s247
                %p244 = scmp.ge.s32.totalorder %s243, 1
                %s248 = sphi %s237, %s237
                %s249 = sphi %s234, %s234
              $region55: #{dual_cross_attention_forward.7} parent=51 // loop_header_branch
                %246 = sbr.rel (%p244) target = $region59
              $region56: #{dual_cross_attention_forward.7} parent=51 // loop_body
                %v250 = vld [vmem:[%s248] sm:$0xff]
                %251 = vst [vmem:[%s249] sm:$0xff] %v250
                %v252 = vld [vmem:[%s248 + $0x8] sm:$0xff]
                %253 = vst [vmem:[%s249 + $0x8] sm:$0xff] %v252
                %v254 = vld [vmem:[%s248 + $0x10] sm:$0xff]
                %255 = vst [vmem:[%s249 + $0x10] sm:$0xff] %v254
                %v256 = vld [vmem:[%s248 + $0x18] sm:$0xff]
                %257 = vst [vmem:[%s249 + $0x18] sm:$0xff] %v256
                %v258 = vld [vmem:[%s248 + $0x20] sm:$0xff]
                %259 = vst [vmem:[%s249 + $0x20] sm:$0xff] %v258
                %v260 = vld [vmem:[%s248 + $0x28] sm:$0xff]
                %261 = vst [vmem:[%s249 + $0x28] sm:$0xff] %v260
                %v262 = vld [vmem:[%s248 + $0x30] sm:$0xff]
                %263 = vst [vmem:[%s249 + $0x30] sm:$0xff] %v262
                %v264 = vld [vmem:[%s248 + $0x38] sm:$0xff]
                %265 = vst [vmem:[%s249 + $0x38] sm:$0xff] %v264
                %v266 = vld [vmem:[%s248 + $0x80] sm:$0xff]
                %267 = vst [vmem:[%s249 + $0x40] sm:$0xff] %v266
                %v268 = vld [vmem:[%s248 + $0x88] sm:$0xff]
                %269 = vst [vmem:[%s249 + $0x48] sm:$0xff] %v268
                %v270 = vld [vmem:[%s248 + $0x90] sm:$0xff]
                %271 = vst [vmem:[%s249 + $0x50] sm:$0xff] %v270
                %v272 = vld [vmem:[%s248 + $0x98] sm:$0xff]
                %273 = vst [vmem:[%s249 + $0x58] sm:$0xff] %v272
                %v274 = vld [vmem:[%s248 + $0xa0] sm:$0xff]
                %275 = vst [vmem:[%s249 + $0x60] sm:$0xff] %v274
                %v276 = vld [vmem:[%s248 + $0xa8] sm:$0xff]
                %277 = vst [vmem:[%s249 + $0x68] sm:$0xff] %v276
                %v278 = vld [vmem:[%s248 + $0xb0] sm:$0xff]
                %279 = vst [vmem:[%s249 + $0x70] sm:$0xff] %v278
                %v280 = vld [vmem:[%s248 + $0xb8] sm:$0xff]
                %281 = vst [vmem:[%s249 + $0x78] sm:$0xff] %v280
                %v282 = vld [vmem:[%s248 + $0x100] sm:$0xff]
                %283 = vst [vmem:[%s249 + $0x80] sm:$0xff] %v282
                %v284 = vld [vmem:[%s248 + $0x108] sm:$0xff]
                %285 = vst [vmem:[%s249 + $0x88] sm:$0xff] %v284
                %v286 = vld [vmem:[%s248 + $0x110] sm:$0xff]
                %287 = vst [vmem:[%s249 + $0x90] sm:$0xff] %v286
                %v288 = vld [vmem:[%s248 + $0x118] sm:$0xff]
                %289 = vst [vmem:[%s249 + $0x98] sm:$0xff] %v288
                %v290 = vld [vmem:[%s248 + $0x120] sm:$0xff]
                %291 = vst [vmem:[%s249 + $0xa0] sm:$0xff] %v290
                %v292 = vld [vmem:[%s248 + $0x128] sm:$0xff]
                %293 = vst [vmem:[%s249 + $0xa8] sm:$0xff] %v292
                %v294 = vld [vmem:[%s248 + $0x130] sm:$0xff]
                %295 = vst [vmem:[%s249 + $0xb0] sm:$0xff] %v294
                %v296 = vld [vmem:[%s248 + $0x138] sm:$0xff]
                %297 = vst [vmem:[%s249 + $0xb8] sm:$0xff] %v296
                %v298 = vld [vmem:[%s248 + $0x180] sm:$0xff]
                %299 = vst [vmem:[%s249 + $0xc0] sm:$0xff] %v298
                %v300 = vld [vmem:[%s248 + $0x188] sm:$0xff]
                %301 = vst [vmem:[%s249 + $0xc8] sm:$0xff] %v300
                %v302 = vld [vmem:[%s248 + $0x190] sm:$0xff]
                %303 = vst [vmem:[%s249 + $0xd0] sm:$0xff] %v302
                %v304 = vld [vmem:[%s248 + $0x198] sm:$0xff]
                %305 = vst [vmem:[%s249 + $0xd8] sm:$0xff] %v304
                %v306 = vld [vmem:[%s248 + $0x1a0] sm:$0xff]
                %307 = vst [vmem:[%s249 + $0xe0] sm:$0xff] %v306
                %v308 = vld [vmem:[%s248 + $0x1a8] sm:$0xff]
                %309 = vst [vmem:[%s249 + $0xe8] sm:$0xff] %v308
                %v310 = vld [vmem:[%s248 + $0x1b0] sm:$0xff]
                %311 = vst [vmem:[%s249 + $0xf0] sm:$0xff] %v310
                %v312 = vld [vmem:[%s248 + $0x1b8] sm:$0xff]
                %313 = vst [vmem:[%s249 + $0xf8] sm:$0xff] %v312
                %v314 = vld [vmem:[%s248 + $0x200] sm:$0xff]
                %315 = vst [vmem:[%s249 + $0x100] sm:$0xff] %v314
                %v316 = vld [vmem:[%s248 + $0x208] sm:$0xff]
                %317 = vst [vmem:[%s249 + $0x108] sm:$0xff] %v316
                %v318 = vld [vmem:[%s248 + $0x210] sm:$0xff]
                %319 = vst [vmem:[%s249 + $0x110] sm:$0xff] %v318
                %v320 = vld [vmem:[%s248 + $0x218] sm:$0xff]
                %321 = vst [vmem:[%s249 + $0x118] sm:$0xff] %v320
                %v322 = vld [vmem:[%s248 + $0x220] sm:$0xff]
                %323 = vst [vmem:[%s249 + $0x120] sm:$0xff] %v322
                %v324 = vld [vmem:[%s248 + $0x228] sm:$0xff]
                %325 = vst [vmem:[%s249 + $0x128] sm:$0xff] %v324
                %v326 = vld [vmem:[%s248 + $0x230] sm:$0xff]
                %327 = vst [vmem:[%s249 + $0x130] sm:$0xff] %v326
                %v328 = vld [vmem:[%s248 + $0x238] sm:$0xff]
                %329 = vst [vmem:[%s249 + $0x138] sm:$0xff] %v328
                %v330 = vld [vmem:[%s248 + $0x280] sm:$0xff]
                %331 = vst [vmem:[%s249 + $0x140] sm:$0xff] %v330
                %v332 = vld [vmem:[%s248 + $0x288] sm:$0xff]
                %333 = vst [vmem:[%s249 + $0x148] sm:$0xff] %v332
                %v334 = vld [vmem:[%s248 + $0x290] sm:$0xff]
                %335 = vst [vmem:[%s249 + $0x150] sm:$0xff] %v334
                %v336 = vld [vmem:[%s248 + $0x298] sm:$0xff]
                %337 = vst [vmem:[%s249 + $0x158] sm:$0xff] %v336
                %v338 = vld [vmem:[%s248 + $0x2a0] sm:$0xff]
                %339 = vst [vmem:[%s249 + $0x160] sm:$0xff] %v338
                %v340 = vld [vmem:[%s248 + $0x2a8] sm:$0xff]
                %341 = vst [vmem:[%s249 + $0x168] sm:$0xff] %v340
                %v342 = vld [vmem:[%s248 + $0x2b0] sm:$0xff]
                %343 = vst [vmem:[%s249 + $0x170] sm:$0xff] %v342
                %v344 = vld [vmem:[%s248 + $0x2b8] sm:$0xff]
                %345 = vst [vmem:[%s249 + $0x178] sm:$0xff] %v344
                %v346 = vld [vmem:[%s248 + $0x300] sm:$0xff]
                %347 = vst [vmem:[%s249 + $0x180] sm:$0xff] %v346
                %v348 = vld [vmem:[%s248 + $0x308] sm:$0xff]
                %349 = vst [vmem:[%s249 + $0x188] sm:$0xff] %v348
                %v350 = vld [vmem:[%s248 + $0x310] sm:$0xff]
                %351 = vst [vmem:[%s249 + $0x190] sm:$0xff] %v350
                %v352 = vld [vmem:[%s248 + $0x318] sm:$0xff]
                %353 = vst [vmem:[%s249 + $0x198] sm:$0xff] %v352
                %v354 = vld [vmem:[%s248 + $0x320] sm:$0xff]
                %355 = vst [vmem:[%s249 + $0x1a0] sm:$0xff] %v354
                %v356 = vld [vmem:[%s248 + $0x328] sm:$0xff]
                %357 = vst [vmem:[%s249 + $0x1a8] sm:$0xff] %v356
                %v358 = vld [vmem:[%s248 + $0x330] sm:$0xff]
                %359 = vst [vmem:[%s249 + $0x1b0] sm:$0xff] %v358
                %v360 = vld [vmem:[%s248 + $0x338] sm:$0xff]
                %361 = vst [vmem:[%s249 + $0x1b8] sm:$0xff] %v360
                %v362 = vld [vmem:[%s248 + $0x380] sm:$0xff]
                %363 = vst [vmem:[%s249 + $0x1c0] sm:$0xff] %v362
                %v364 = vld [vmem:[%s248 + $0x388] sm:$0xff]
                %365 = vst [vmem:[%s249 + $0x1c8] sm:$0xff] %v364
                %v366 = vld [vmem:[%s248 + $0x390] sm:$0xff]
                %367 = vst [vmem:[%s249 + $0x1d0] sm:$0xff] %v366
                %v368 = vld [vmem:[%s248 + $0x398] sm:$0xff]
                %369 = vst [vmem:[%s249 + $0x1d8] sm:$0xff] %v368
                %v370 = vld [vmem:[%s248 + $0x3a0] sm:$0xff]
                %371 = vst [vmem:[%s249 + $0x1e0] sm:$0xff] %v370
                %v372 = vld [vmem:[%s248 + $0x3a8] sm:$0xff]
                %373 = vst [vmem:[%s249 + $0x1e8] sm:$0xff] %v372
                %v374 = vld [vmem:[%s248 + $0x3b0] sm:$0xff]
                %375 = vst [vmem:[%s249 + $0x1f0] sm:$0xff] %v374
                %v376 = vld [vmem:[%s248 + $0x3b8] sm:$0xff]
                %377 = vst [vmem:[%s249 + $0x1f8] sm:$0xff] %v376
              $region57: #{dual_cross_attention_forward.7} parent=51 // loop_footer
                %s247 = sadd.s32 1, %s243
              $region58: #{dual_cross_attention_forward.7} parent=51 // loop_footer_branch
                %242 = sbr.rel target = $region54
              $region59: #{dual_cross_attention_forward.7} parent=51 // loop_exit
                _
            $region52: #{dual_cross_attention_forward.7} parent=47 // pred_fallthru
              _
            // Predicated region
            $region60: #{dual_cross_attention_forward.7} parent=47 // pred_check
              _
            $region61: #{dual_cross_attention_forward.7} parent=47 // pred_check_branch
              %379 = sbr.rel target = $region63
            $region62: #{dual_cross_attention_forward.7} parent=47 // pred_region
              _
            $region63: #{dual_cross_attention_forward.7} parent=47 // pred_fallthru
              _
          $region48: #{dual_cross_attention_forward.7} parent=43 // pred_fallthru
            _
          %380 = vnop
        $region44: #{dual_cross_attention_forward.7} parent=39 // pred_fallthru
          _
      $region40: #{dual_cross_attention_forward.7} parent=5 // pred_fallthru
        _
      %p381 = scmp.le.s32.totalorder 1, %s13
      %p382 = scmp.lt.s32.totalorder %s13, 3
      %p383 = pnand %p381, %p382
      %p384 = pneg %p383
      // Predicated region
      $region64: #{dual_cross_attention_forward.7} parent=5 // pred_check
        _
      $region65: #{dual_cross_attention_forward.7} parent=5 // pred_check_branch
        %386 = sbr.rel (%p383) target = $region67
      $region66: #{dual_cross_attention_forward.7} parent=5 // pred_region
        %s387 = ssub.s32 %s13, 1
        %s388 = sand.u32 %s26, 1
        %s389 = sand.u32 %s26, 1
        %s390 = smul.addr %s389, 512
        %s391 = scalar_lea.vmem [#allocation2], %s390
        // Predicated region
        $region68: #{dual_cross_attention_forward.7} parent=66 // pred_check
          %p392 = pneg %p39
        $region69: #{dual_cross_attention_forward.7} parent=66 // pred_check_branch
          %394 = sbr.rel (%p392) target = $region71
        $region70: #{dual_cross_attention_forward.7} parent=66 // pred_region
          _
        $region71: #{dual_cross_attention_forward.7} parent=66 // pred_fallthru
          _
        %s395 = sand.u32 %s26, 1
        %s396 = sand.u32 %s26, 1
        %s397 = smul.addr %s396, 512
        %s398 = scalar_lea.vmem [#allocation2], %s397
        %p399 = pneg %p39
        %p400 = pneg %p36
        %p401 = pneg %p60
        %p402 = pneg %p57
        %p403 = pneg %p81
        %p404 = pneg %p78
        %p405 = pneg %p102
        %p406 = pneg %p99
        %p407 = pneg %p123
        %p408 = pneg %p120
        %p409 = pneg %p144
        %p410 = pneg %p141
        %p411 = pneg %p165
        %p412 = pneg %p162
        %p413 = pneg %p191
        %p414 = pneg %p188
        %s415 = sand.u32 %s178, 1
        %s416 = sand.u32 %s178, 1
        %s417 = smul.addr %s416, 512
        %s418 = scalar_lea.vmem [#allocation3], %s417
        %s419 = smul.u32 8, %s18
        %s420 = smul.u32 8, %s18
        %v422 = vld [vmem:[%s391] sm:$0xff]
        %v423 = vld [vmem:[%s391 + $0x8] sm:$0xff]
        %v424 = vld [vmem:[%s391 + $0x10] sm:$0xff]
        %v425 = vld [vmem:[%s391 + $0x18] sm:$0xff]
        %v426 = vld [vmem:[%s391 + $0x20] sm:$0xff]
        %v427 = vld [vmem:[%s391 + $0x28] sm:$0xff]
        %v428 = vld [vmem:[%s391 + $0x30] sm:$0xff]
        %v429 = vld [vmem:[%s391 + $0x38] sm:$0xff]
        %v430 = vld [vmem:[%s391 + $0x40] sm:$0xff]
        %v431 = vld [vmem:[%s391 + $0x48] sm:$0xff]
        %v432 = vld [vmem:[%s391 + $0x50] sm:$0xff]
        %v433 = vld [vmem:[%s391 + $0x58] sm:$0xff]
        %v434 = vld [vmem:[%s391 + $0x60] sm:$0xff]
        %v435 = vld [vmem:[%s391 + $0x68] sm:$0xff]
        %v436 = vld [vmem:[%s391 + $0x70] sm:$0xff]
        %v437 = vld [vmem:[%s391 + $0x78] sm:$0xff]
        %v438 = vld [vmem:[%s391 + $0x80] sm:$0xff]
        %v439 = vld [vmem:[%s391 + $0x88] sm:$0xff]
        %v440 = vld [vmem:[%s391 + $0x90] sm:$0xff]
        %v441 = vld [vmem:[%s391 + $0x98] sm:$0xff]
        %v442 = vld [vmem:[%s391 + $0xa0] sm:$0xff]
        %v443 = vld [vmem:[%s391 + $0xa8] sm:$0xff]
        %v444 = vld [vmem:[%s391 + $0xb0] sm:$0xff]
        %v445 = vld [vmem:[%s391 + $0xb8] sm:$0xff]
        %v446 = vld [vmem:[%s391 + $0xc0] sm:$0xff]
        %v447 = vld [vmem:[%s391 + $0xc8] sm:$0xff]
        %v448 = vld [vmem:[%s391 + $0xd0] sm:$0xff]
        %v449 = vld [vmem:[%s391 + $0xd8] sm:$0xff]
        %v450 = vld [vmem:[%s391 + $0xe0] sm:$0xff]
        %v451 = vld [vmem:[%s391 + $0xe8] sm:$0xff]
        %v452 = vld [vmem:[%s391 + $0xf0] sm:$0xff]
        %v453 = vld [vmem:[%s391 + $0xf8] sm:$0xff]
        %v454 = vld [vmem:[%s391 + $0x100] sm:$0xff]
        %v455 = vld [vmem:[%s391 + $0x108] sm:$0xff]
        %v456 = vld [vmem:[%s391 + $0x110] sm:$0xff]
        %v457 = vld [vmem:[%s391 + $0x118] sm:$0xff]
        %v458 = vld [vmem:[%s391 + $0x120] sm:$0xff]
        %v459 = vld [vmem:[%s391 + $0x128] sm:$0xff]
        %v460 = vld [vmem:[%s391 + $0x130] sm:$0xff]
        %v461 = vld [vmem:[%s391 + $0x138] sm:$0xff]
        %v462 = vld [vmem:[%s391 + $0x140] sm:$0xff]
        %v463 = vld [vmem:[%s391 + $0x148] sm:$0xff]
        %v464 = vld [vmem:[%s391 + $0x150] sm:$0xff]
        %v465 = vld [vmem:[%s391 + $0x158] sm:$0xff]
        %v466 = vld [vmem:[%s391 + $0x160] sm:$0xff]
        %v467 = vld [vmem:[%s391 + $0x168] sm:$0xff]
        %v468 = vld [vmem:[%s391 + $0x170] sm:$0xff]
        %v469 = vld [vmem:[%s391 + $0x178] sm:$0xff]
        %v470 = vld [vmem:[%s391 + $0x180] sm:$0xff]
        %v471 = vld [vmem:[%s391 + $0x188] sm:$0xff]
        %v472 = vld [vmem:[%s391 + $0x190] sm:$0xff]
        %v473 = vld [vmem:[%s391 + $0x198] sm:$0xff]
        %v474 = vld [vmem:[%s391 + $0x1a0] sm:$0xff]
        %v475 = vld [vmem:[%s391 + $0x1a8] sm:$0xff]
        %v476 = vld [vmem:[%s391 + $0x1b0] sm:$0xff]
        %v477 = vld [vmem:[%s391 + $0x1b8] sm:$0xff]
        %v478 = vld [vmem:[%s391 + $0x1c0] sm:$0xff]
        %v479 = vld [vmem:[%s391 + $0x1c8] sm:$0xff]
        %v480 = vld [vmem:[%s391 + $0x1d0] sm:$0xff]
        %v481 = vld [vmem:[%s391 + $0x1d8] sm:$0xff]
        %v482 = vld [vmem:[%s391 + $0x1e0] sm:$0xff]
        %v483 = vld [vmem:[%s391 + $0x1e8] sm:$0xff]
        %v484 = vld [vmem:[%s391 + $0x1f0] sm:$0xff]
        %v485 = vld [vmem:[%s391 + $0x1f8] sm:$0xff]
        %v486 = vpack.c.bf16 %v430, %v422
        %v487 = vpack.c.bf16 %v431, %v423
        %v488 = vpack.c.bf16 %v432, %v424
        %v489 = vpack.c.bf16 %v433, %v425
        %v490 = vpack.c.bf16 %v434, %v426
        %v491 = vpack.c.bf16 %v435, %v427
        %v492 = vpack.c.bf16 %v436, %v428
        %v493 = vpack.c.bf16 %v437, %v429
        %v494 = vpack.c.bf16 %v446, %v438
        %v495 = vpack.c.bf16 %v447, %v439
        %v496 = vpack.c.bf16 %v448, %v440
        %v497 = vpack.c.bf16 %v449, %v441
        %v498 = vpack.c.bf16 %v450, %v442
        %v499 = vpack.c.bf16 %v451, %v443
        %v500 = vpack.c.bf16 %v452, %v444
        %v501 = vpack.c.bf16 %v453, %v445
        %v502 = vpack.c.bf16 %v462, %v454
        %v503 = vpack.c.bf16 %v463, %v455
        %v504 = vpack.c.bf16 %v464, %v456
        %v505 = vpack.c.bf16 %v465, %v457
        %v506 = vpack.c.bf16 %v466, %v458
        %v507 = vpack.c.bf16 %v467, %v459
        %v508 = vpack.c.bf16 %v468, %v460
        %v509 = vpack.c.bf16 %v469, %v461
        %v510 = vpack.c.bf16 %v478, %v470
        %v511 = vpack.c.bf16 %v479, %v471
        %v512 = vpack.c.bf16 %v480, %v472
        %v513 = vpack.c.bf16 %v481, %v473
        %v514 = vpack.c.bf16 %v482, %v474
        %v515 = vpack.c.bf16 %v483, %v475
        %v516 = vpack.c.bf16 %v484, %v476
        %v517 = vpack.c.bf16 %v485, %v477
        %v518 = vld [vmem:[%s1] sm:$0xff]
        %v519 = vld [vmem:[%s1 + $0x8] sm:$0xff]
        %v520 = vld [vmem:[%s1 + $0x10] sm:$0xff]
        %v521 = vld [vmem:[%s1 + $0x18] sm:$0xff]
        %v522 = vpack.c.bf16 %v519, %v518
        %v523 = vpack.c.bf16 %v521, %v520
        %v524 = vld [vmem:[%s2] sm:$0xff]
        %v525 = vld [vmem:[%s2 + $0x8] sm:$0xff]
        %v526 = vld [vmem:[%s2 + $0x10] sm:$0xff]
        %v527 = vld [vmem:[%s2 + $0x18] sm:$0xff]
        %529 = vset.pattern.permute.xlu0 0
        %530 = vperm.xlu0 %529, %v524
        %v531 = vpop.permute.xlu0 %530
        %534 = vset.pattern.permute.xlu0 0
        %535 = vperm.xlu0 %534, %v525
        %v536 = vpop.permute.xlu0 %535
        %539 = vset.pattern.permute.xlu0 0
        %540 = vperm.xlu0 %539, %v526
        %v541 = vpop.permute.xlu0 %540
        %544 = vset.pattern.permute.xlu0 0
        %545 = vperm.xlu0 %544, %v527
        %v546 = vpop.permute.xlu0 %545
        %vm548 = vcmask 523264
        %v550 = vsel %vm548, %v522, 0
        %v553 = vsel %vm548, %v523, 0
        %555 = vmatpush.bf16.msra.mxu0 0
        %556 = vmatpush.bf16.msra.mxu0 0
        %557 = vmatpush.bf16.msra.mxu0 0
        %558 = vmatpush.bf16.msra.mxu0 0
        %559 = vmatpush.bf16.msra.mxu0 %v510
        %560 = vmatpush.bf16.msra.mxu0 %v502
        %561 = vmatpush.bf16.msra.mxu0 %v494
        %562 = vmatpush.bf16.msra.mxu0 %v486
        %563 = vmatmul.bf16.gmra.mxu0 %v550
        %v564 = vpop.f32.mrf.mxu0
        %v565 = vadd.f32 %v531, %v564
        %v566 = vpop.f32.mrf.mxu0
        %v567 = vadd.f32 %v536, %v566
        %568 = vmatmul.bf16.gmra.mxu0 %v553
        %v569 = vpop.f32.mrf.mxu0
        %v570 = vadd.f32 %v541, %v569
        %v571 = vpop.f32.mrf.mxu0
        %v572 = vadd.f32 %v546, %v571
        %573 = vdwg.mxu0
        %574 = vmatpush.bf16.msra.mxu0 0
        %575 = vmatpush.bf16.msra.mxu0 0
        %576 = vmatpush.bf16.msra.mxu0 0
        %577 = vmatpush.bf16.msra.mxu0 0
        %578 = vmatpush.bf16.msra.mxu0 %v511
        %579 = vmatpush.bf16.msra.mxu0 %v503
        %580 = vmatpush.bf16.msra.mxu0 %v495
        %581 = vmatpush.bf16.msra.mxu0 %v487
        %582 = vmatmul.bf16.gmra.mxu0 %v550
        %v583 = vpop.f32.mrf.mxu0
        %v584 = vadd.f32 %v531, %v583
        %v585 = vpop.f32.mrf.mxu0
        %v586 = vadd.f32 %v536, %v585
        %587 = vmatmul.bf16.gmra.mxu0 %v553
        %v588 = vpop.f32.mrf.mxu0
        %v589 = vadd.f32 %v541, %v588
        %v590 = vpop.f32.mrf.mxu0
        %v591 = vadd.f32 %v546, %v590
        %592 = vdwg.mxu0
        %593 = vmatpush.bf16.msra.mxu0 0
        %594 = vmatpush.bf16.msra.mxu0 0
        %595 = vmatpush.bf16.msra.mxu0 0
        %596 = vmatpush.bf16.msra.mxu0 0
        %597 = vmatpush.bf16.msra.mxu0 %v512
        %598 = vmatpush.bf16.msra.mxu0 %v504
        %599 = vmatpush.bf16.msra.mxu0 %v496
        %600 = vmatpush.bf16.msra.mxu0 %v488
        %601 = vmatmul.bf16.gmra.mxu0 %v550
        %v602 = vpop.f32.mrf.mxu0
        %v603 = vadd.f32 %v531, %v602
        %v604 = vpop.f32.mrf.mxu0
        %v605 = vadd.f32 %v536, %v604
        %606 = vmatmul.bf16.gmra.mxu0 %v553
        %v607 = vpop.f32.mrf.mxu0
        %v608 = vadd.f32 %v541, %v607
        %v609 = vpop.f32.mrf.mxu0
        %v610 = vadd.f32 %v546, %v609
        %611 = vdwg.mxu0
        %612 = vmatpush.bf16.msra.mxu0 0
        %613 = vmatpush.bf16.msra.mxu0 0
        %614 = vmatpush.bf16.msra.mxu0 0
        %615 = vmatpush.bf16.msra.mxu0 0
        %616 = vmatpush.bf16.msra.mxu0 %v513
        %617 = vmatpush.bf16.msra.mxu0 %v505
        %618 = vmatpush.bf16.msra.mxu0 %v497
        %619 = vmatpush.bf16.msra.mxu0 %v489
        %620 = vmatmul.bf16.gmra.mxu0 %v550
        %v621 = vpop.f32.mrf.mxu0
        %v622 = vadd.f32 %v531, %v621
        %v623 = vpop.f32.mrf.mxu0
        %v624 = vadd.f32 %v536, %v623
        %625 = vmatmul.bf16.gmra.mxu0 %v553
        %v626 = vpop.f32.mrf.mxu0
        %v627 = vadd.f32 %v541, %v626
        %v628 = vpop.f32.mrf.mxu0
        %v629 = vadd.f32 %v546, %v628
        %630 = vdwg.mxu0
        %631 = vmatpush.bf16.msra.mxu0 0
        %632 = vmatpush.bf16.msra.mxu0 0
        %633 = vmatpush.bf16.msra.mxu0 0
        %634 = vmatpush.bf16.msra.mxu0 0
        %635 = vmatpush.bf16.msra.mxu0 %v514
        %636 = vmatpush.bf16.msra.mxu0 %v506
        %637 = vmatpush.bf16.msra.mxu0 %v498
        %638 = vmatpush.bf16.msra.mxu0 %v490
        %639 = vmatmul.bf16.gmra.mxu0 %v550
        %v640 = vpop.f32.mrf.mxu0
        %v641 = vadd.f32 %v531, %v640
        %v642 = vpop.f32.mrf.mxu0
        %v643 = vadd.f32 %v536, %v642
        %644 = vmatmul.bf16.gmra.mxu0 %v553
        %v645 = vpop.f32.mrf.mxu0
        %v646 = vadd.f32 %v541, %v645
        %v647 = vpop.f32.mrf.mxu0
        %v648 = vadd.f32 %v546, %v647
        %649 = vdwg.mxu0
        %650 = vmatpush.bf16.msra.mxu0 0
        %651 = vmatpush.bf16.msra.mxu0 0
        %652 = vmatpush.bf16.msra.mxu0 0
        %653 = vmatpush.bf16.msra.mxu0 0
        %654 = vmatpush.bf16.msra.mxu0 %v515
        %655 = vmatpush.bf16.msra.mxu0 %v507
        %656 = vmatpush.bf16.msra.mxu0 %v499
        %657 = vmatpush.bf16.msra.mxu0 %v491
        %658 = vmatmul.bf16.gmra.mxu0 %v550
        %v659 = vpop.f32.mrf.mxu0
        %v660 = vadd.f32 %v531, %v659
        %v661 = vpop.f32.mrf.mxu0
        %v662 = vadd.f32 %v536, %v661
        %663 = vmatmul.bf16.gmra.mxu0 %v553
        %v664 = vpop.f32.mrf.mxu0
        %v665 = vadd.f32 %v541, %v664
        %v666 = vpop.f32.mrf.mxu0
        %v667 = vadd.f32 %v546, %v666
        %668 = vdwg.mxu0
        %669 = vmatpush.bf16.msra.mxu0 0
        %670 = vmatpush.bf16.msra.mxu0 0
        %671 = vmatpush.bf16.msra.mxu0 0
        %672 = vmatpush.bf16.msra.mxu0 0
        %673 = vmatpush.bf16.msra.mxu0 %v516
        %674 = vmatpush.bf16.msra.mxu0 %v508
        %675 = vmatpush.bf16.msra.mxu0 %v500
        %676 = vmatpush.bf16.msra.mxu0 %v492
        %677 = vmatmul.bf16.gmra.mxu0 %v550
        %v678 = vpop.f32.mrf.mxu0
        %v679 = vadd.f32 %v531, %v678
        %v680 = vpop.f32.mrf.mxu0
        %v681 = vadd.f32 %v536, %v680
        %682 = vmatmul.bf16.gmra.mxu0 %v553
        %v683 = vpop.f32.mrf.mxu0
        %v684 = vadd.f32 %v541, %v683
        %v685 = vpop.f32.mrf.mxu0
        %v686 = vadd.f32 %v546, %v685
        %687 = vdwg.mxu0
        %688 = vmatpush.bf16.msra.mxu0 0
        %689 = vmatpush.bf16.msra.mxu0 0
        %690 = vmatpush.bf16.msra.mxu0 0
        %691 = vmatpush.bf16.msra.mxu0 0
        %692 = vmatpush.bf16.msra.mxu0 %v517
        %693 = vmatpush.bf16.msra.mxu0 %v509
        %694 = vmatpush.bf16.msra.mxu0 %v501
        %695 = vmatpush.bf16.msra.mxu0 %v493
        %696 = vmatmul.bf16.gmra.mxu0 %v550
        %v697 = vpop.f32.mrf.mxu0
        %v698 = vadd.f32 %v531, %v697
        %v699 = vpop.f32.mrf.mxu0
        %v700 = vadd.f32 %v536, %v699
        %701 = vmatmul.bf16.gmra.mxu0 %v553
        %v702 = vpop.f32.mrf.mxu0
        %v703 = vadd.f32 %v541, %v702
        %v704 = vpop.f32.mrf.mxu0
        %v705 = vadd.f32 %v546, %v704
        %706 = vdwg.mxu0
        %v707 = vrot.slane %v565, 4
        %v708 = vmax.f32 %v565, %v707
        %v709 = vrot.slane %v708, 2
        %v710 = vmax.f32 %v708, %v709
        %v711 = vrot.slane %v710, 1
        %v712 = vmax.f32 %v710, %v711
        %v713 = vrot.slane %v584, 4
        %v714 = vmax.f32 %v584, %v713
        %v715 = vrot.slane %v714, 2
        %v716 = vmax.f32 %v714, %v715
        %v717 = vrot.slane %v716, 1
        %v718 = vmax.f32 %v716, %v717
        %v719 = vrot.slane %v603, 4
        %v720 = vmax.f32 %v603, %v719
        %v721 = vrot.slane %v720, 2
        %v722 = vmax.f32 %v720, %v721
        %v723 = vrot.slane %v722, 1
        %v724 = vmax.f32 %v722, %v723
        %v725 = vrot.slane %v622, 4
        %v726 = vmax.f32 %v622, %v725
        %v727 = vrot.slane %v726, 2
        %v728 = vmax.f32 %v726, %v727
        %v729 = vrot.slane %v728, 1
        %v730 = vmax.f32 %v728, %v729
        %v731 = vrot.slane %v641, 4
        %v732 = vmax.f32 %v641, %v731
        %v733 = vrot.slane %v732, 2
        %v734 = vmax.f32 %v732, %v733
        %v735 = vrot.slane %v734, 1
        %v736 = vmax.f32 %v734, %v735
        %v737 = vrot.slane %v660, 4
        %v738 = vmax.f32 %v660, %v737
        %v739 = vrot.slane %v738, 2
        %v740 = vmax.f32 %v738, %v739
        %v741 = vrot.slane %v740, 1
        %v742 = vmax.f32 %v740, %v741
        %v743 = vrot.slane %v679, 4
        %v744 = vmax.f32 %v679, %v743
        %v745 = vrot.slane %v744, 2
        %v746 = vmax.f32 %v744, %v745
        %v747 = vrot.slane %v746, 1
        %v748 = vmax.f32 %v746, %v747
        %v749 = vrot.slane %v698, 4
        %v750 = vmax.f32 %v698, %v749
        %v751 = vrot.slane %v750, 2
        %v752 = vmax.f32 %v750, %v751
        %v753 = vrot.slane %v752, 1
        %v754 = vmax.f32 %v752, %v753
        %v755 = vsub.f32 %v565, %v712
        %v756 = vsub.f32 %v584, %v718
        %v757 = vsub.f32 %v603, %v724
        %v758 = vsub.f32 %v622, %v730
        %v759 = vsub.f32 %v641, %v736
        %v760 = vsub.f32 %v660, %v742
        %v761 = vsub.f32 %v679, %v748
        %v762 = vsub.f32 %v698, %v754
        %v763 = vmul.f32 %v755, 1.442695
        %v764 = vpow.pop %v763
        %v765 = vmul.f32 %v756, 1.442695
        %v766 = vpow.pop %v765
        %v767 = vmul.f32 %v757, 1.442695
        %v768 = vpow.pop %v767
        %v769 = vmul.f32 %v758, 1.442695
        %v770 = vpow.pop %v769
        %v771 = vmul.f32 %v759, 1.442695
        %v772 = vpow.pop %v771
        %v773 = vmul.f32 %v760, 1.442695
        %v774 = vpow.pop %v773
        %v775 = vmul.f32 %v761, 1.442695
        %v776 = vpow.pop %v775
        %v777 = vmul.f32 %v762, 1.442695
        %v778 = vpow.pop %v777
        %v779 = vrot.slane %v764, 4
        %v780 = vadd.f32 %v764, %v779
        %v781 = vrot.slane %v780, 2
        %v782 = vadd.f32 %v780, %v781
        %v783 = vrot.slane %v782, 1
        %v784 = vadd.f32 %v782, %v783
        %v785 = vrot.slane %v766, 4
        %v786 = vadd.f32 %v766, %v785
        %v787 = vrot.slane %v786, 2
        %v788 = vadd.f32 %v786, %v787
        %v789 = vrot.slane %v788, 1
        %v790 = vadd.f32 %v788, %v789
        %v791 = vrot.slane %v768, 4
        %v792 = vadd.f32 %v768, %v791
        %v793 = vrot.slane %v792, 2
        %v794 = vadd.f32 %v792, %v793
        %v795 = vrot.slane %v794, 1
        %v796 = vadd.f32 %v794, %v795
        %v797 = vrot.slane %v770, 4
        %v798 = vadd.f32 %v770, %v797
        %v799 = vrot.slane %v798, 2
        %v800 = vadd.f32 %v798, %v799
        %v801 = vrot.slane %v800, 1
        %v802 = vadd.f32 %v800, %v801
        %v803 = vrot.slane %v772, 4
        %v804 = vadd.f32 %v772, %v803
        %v805 = vrot.slane %v804, 2
        %v806 = vadd.f32 %v804, %v805
        %v807 = vrot.slane %v806, 1
        %v808 = vadd.f32 %v806, %v807
        %v809 = vrot.slane %v774, 4
        %v810 = vadd.f32 %v774, %v809
        %v811 = vrot.slane %v810, 2
        %v812 = vadd.f32 %v810, %v811
        %v813 = vrot.slane %v812, 1
        %v814 = vadd.f32 %v812, %v813
        %v815 = vrot.slane %v776, 4
        %v816 = vadd.f32 %v776, %v815
        %v817 = vrot.slane %v816, 2
        %v818 = vadd.f32 %v816, %v817
        %v819 = vrot.slane %v818, 1
        %v820 = vadd.f32 %v818, %v819
        %v821 = vrot.slane %v778, 4
        %v822 = vadd.f32 %v778, %v821
        %v823 = vrot.slane %v822, 2
        %v824 = vadd.f32 %v822, %v823
        %v825 = vrot.slane %v824, 1
        %v826 = vadd.f32 %v824, %v825
        %v827 = vrcp.pop %v784
        %v828 = vmul.f32 %v784, %v827
        %v829 = vsub.f32 1.0, %v828
        %v830 = vmul.f32 %v827, %v829
        %v831 = vadd.f32 %v827, %v830
        %vm832 = vweird.f32 %v784
        %vm833 = vweird.f32 %v827
        %vm834 = vmor %vm832, %vm833
        %v835 = vsel %vm834, %v827, %v831
        %v836 = vand.u32 2147483647, %v784
        %vm837 = vcmp.eq.f32.partialorder %v836, 8.507059e+37
        %v838 = vand.u32 %v784, 2147483648
        %v839 = vor.u32 1.1754944e-38, %v838
        %v840 = vsel %vm837, %v839, %v835
        %v841 = vmul.f32 %v764, %v840
        %v842 = vrcp.pop %v790
        %v843 = vmul.f32 %v790, %v842
        %v844 = vsub.f32 1.0, %v843
        %v845 = vmul.f32 %v842, %v844
        %v846 = vadd.f32 %v842, %v845
        %vm847 = vweird.f32 %v790
        %vm848 = vweird.f32 %v842
        %vm849 = vmor %vm847, %vm848
        %v850 = vsel %vm849, %v842, %v846
        %v851 = vand.u32 2147483647, %v790
        %vm852 = vcmp.eq.f32.partialorder %v851, 8.507059e+37
        %v853 = vand.u32 %v790, 2147483648
        %v854 = vor.u32 1.1754944e-38, %v853
        %v855 = vsel %vm852, %v854, %v850
        %v856 = vmul.f32 %v766, %v855
        %v857 = vrcp.pop %v796
        %v858 = vmul.f32 %v796, %v857
        %v859 = vsub.f32 1.0, %v858
        %v860 = vmul.f32 %v857, %v859
        %v861 = vadd.f32 %v857, %v860
        %vm862 = vweird.f32 %v796
        %vm863 = vweird.f32 %v857
        %vm864 = vmor %vm862, %vm863
        %v865 = vsel %vm864, %v857, %v861
        %v866 = vand.u32 2147483647, %v796
        %vm867 = vcmp.eq.f32.partialorder %v866, 8.507059e+37
        %v868 = vand.u32 %v796, 2147483648
        %v869 = vor.u32 1.1754944e-38, %v868
        %v870 = vsel %vm867, %v869, %v865
        %v871 = vmul.f32 %v768, %v870
        %v872 = vrcp.pop %v802
        %v873 = vmul.f32 %v802, %v872
        %v874 = vsub.f32 1.0, %v873
        %v875 = vmul.f32 %v872, %v874
        %v876 = vadd.f32 %v872, %v875
        %vm877 = vweird.f32 %v802
        %vm878 = vweird.f32 %v872
        %vm879 = vmor %vm877, %vm878
        %v880 = vsel %vm879, %v872, %v876
        %v881 = vand.u32 2147483647, %v802
        %vm882 = vcmp.eq.f32.partialorder %v881, 8.507059e+37
        %v883 = vand.u32 %v802, 2147483648
        %v884 = vor.u32 1.1754944e-38, %v883
        %v885 = vsel %vm882, %v884, %v880
        %v886 = vmul.f32 %v770, %v885
        %v887 = vrcp.pop %v808
        %v888 = vmul.f32 %v808, %v887
        %v889 = vsub.f32 1.0, %v888
        %v890 = vmul.f32 %v887, %v889
        %v891 = vadd.f32 %v887, %v890
        %vm892 = vweird.f32 %v808
        %vm893 = vweird.f32 %v887
        %vm894 = vmor %vm892, %vm893
        %v895 = vsel %vm894, %v887, %v891
        %v896 = vand.u32 2147483647, %v808
        %vm897 = vcmp.eq.f32.partialorder %v896, 8.507059e+37
        %v898 = vand.u32 %v808, 2147483648
        %v899 = vor.u32 1.1754944e-38, %v898
        %v900 = vsel %vm897, %v899, %v895
        %v901 = vmul.f32 %v772, %v900
        %v902 = vrcp.pop %v814
        %v903 = vmul.f32 %v814, %v902
        %v904 = vsub.f32 1.0, %v903
        %v905 = vmul.f32 %v902, %v904
        %v906 = vadd.f32 %v902, %v905
        %vm907 = vweird.f32 %v814
        %vm908 = vweird.f32 %v902
        %vm909 = vmor %vm907, %vm908
        %v910 = vsel %vm909, %v902, %v906
        %v911 = vand.u32 2147483647, %v814
        %vm912 = vcmp.eq.f32.partialorder %v911, 8.507059e+37
        %v913 = vand.u32 %v814, 2147483648
        %v914 = vor.u32 1.1754944e-38, %v913
        %v915 = vsel %vm912, %v914, %v910
        %v916 = vmul.f32 %v774, %v915
        %v917 = vrcp.pop %v820
        %v918 = vmul.f32 %v820, %v917
        %v919 = vsub.f32 1.0, %v918
        %v920 = vmul.f32 %v917, %v919
        %v921 = vadd.f32 %v917, %v920
        %vm922 = vweird.f32 %v820
        %vm923 = vweird.f32 %v917
        %vm924 = vmor %vm922, %vm923
        %v925 = vsel %vm924, %v917, %v921
        %v926 = vand.u32 2147483647, %v820
        %vm927 = vcmp.eq.f32.partialorder %v926, 8.507059e+37
        %v928 = vand.u32 %v820, 2147483648
        %v929 = vor.u32 1.1754944e-38, %v928
        %v930 = vsel %vm927, %v929, %v925
        %v931 = vmul.f32 %v776, %v930
        %v932 = vrcp.pop %v826
        %v933 = vmul.f32 %v826, %v932
        %v934 = vsub.f32 1.0, %v933
        %v935 = vmul.f32 %v932, %v934
        %v936 = vadd.f32 %v932, %v935
        %vm937 = vweird.f32 %v826
        %vm938 = vweird.f32 %v932
        %vm939 = vmor %vm937, %vm938
        %v940 = vsel %vm939, %v932, %v936
        %v941 = vand.u32 2147483647, %v826
        %vm942 = vcmp.eq.f32.partialorder %v941, 8.507059e+37
        %v943 = vand.u32 %v826, 2147483648
        %v944 = vor.u32 1.1754944e-38, %v943
        %v945 = vsel %vm942, %v944, %v940
        %v946 = vmul.f32 %v778, %v945
        %v947 = vrot.slane %v567, 4
        %v948 = vmax.f32 %v567, %v947
        %v949 = vrot.slane %v948, 2
        %v950 = vmax.f32 %v948, %v949
        %v951 = vrot.slane %v950, 1
        %v952 = vmax.f32 %v950, %v951
        %v953 = vrot.slane %v586, 4
        %v954 = vmax.f32 %v586, %v953
        %v955 = vrot.slane %v954, 2
        %v956 = vmax.f32 %v954, %v955
        %v957 = vrot.slane %v956, 1
        %v958 = vmax.f32 %v956, %v957
        %v959 = vrot.slane %v605, 4
        %v960 = vmax.f32 %v605, %v959
        %v961 = vrot.slane %v960, 2
        %v962 = vmax.f32 %v960, %v961
        %v963 = vrot.slane %v962, 1
        %v964 = vmax.f32 %v962, %v963
        %v965 = vrot.slane %v624, 4
        %v966 = vmax.f32 %v624, %v965
        %v967 = vrot.slane %v966, 2
        %v968 = vmax.f32 %v966, %v967
        %v969 = vrot.slane %v968, 1
        %v970 = vmax.f32 %v968, %v969
        %v971 = vrot.slane %v643, 4
        %v972 = vmax.f32 %v643, %v971
        %v973 = vrot.slane %v972, 2
        %v974 = vmax.f32 %v972, %v973
        %v975 = vrot.slane %v974, 1
        %v976 = vmax.f32 %v974, %v975
        %v977 = vrot.slane %v662, 4
        %v978 = vmax.f32 %v662, %v977
        %v979 = vrot.slane %v978, 2
        %v980 = vmax.f32 %v978, %v979
        %v981 = vrot.slane %v980, 1
        %v982 = vmax.f32 %v980, %v981
        %v983 = vrot.slane %v681, 4
        %v984 = vmax.f32 %v681, %v983
        %v985 = vrot.slane %v984, 2
        %v986 = vmax.f32 %v984, %v985
        %v987 = vrot.slane %v986, 1
        %v988 = vmax.f32 %v986, %v987
        %v989 = vrot.slane %v700, 4
        %v990 = vmax.f32 %v700, %v989
        %v991 = vrot.slane %v990, 2
        %v992 = vmax.f32 %v990, %v991
        %v993 = vrot.slane %v992, 1
        %v994 = vmax.f32 %v992, %v993
        %v995 = vsub.f32 %v567, %v952
        %v996 = vsub.f32 %v586, %v958
        %v997 = vsub.f32 %v605, %v964
        %v998 = vsub.f32 %v624, %v970
        %v999 = vsub.f32 %v643, %v976
        %v1000 = vsub.f32 %v662, %v982
        %v1001 = vsub.f32 %v681, %v988
        %v1002 = vsub.f32 %v700, %v994
        %v1003 = vmul.f32 %v995, 1.442695
        %v1004 = vpow.pop %v1003
        %v1005 = vmul.f32 %v996, 1.442695
        %v1006 = vpow.pop %v1005
        %v1007 = vmul.f32 %v997, 1.442695
        %v1008 = vpow.pop %v1007
        %v1009 = vmul.f32 %v998, 1.442695
        %v1010 = vpow.pop %v1009
        %v1011 = vmul.f32 %v999, 1.442695
        %v1012 = vpow.pop %v1011
        %v1013 = vmul.f32 %v1000, 1.442695
        %v1014 = vpow.pop %v1013
        %v1015 = vmul.f32 %v1001, 1.442695
        %v1016 = vpow.pop %v1015
        %v1017 = vmul.f32 %v1002, 1.442695
        %v1018 = vpow.pop %v1017
        %v1019 = vrot.slane %v1004, 4
        %v1020 = vadd.f32 %v1004, %v1019
        %v1021 = vrot.slane %v1020, 2
        %v1022 = vadd.f32 %v1020, %v1021
        %v1023 = vrot.slane %v1022, 1
        %v1024 = vadd.f32 %v1022, %v1023
        %v1025 = vrot.slane %v1006, 4
        %v1026 = vadd.f32 %v1006, %v1025
        %v1027 = vrot.slane %v1026, 2
        %v1028 = vadd.f32 %v1026, %v1027
        %v1029 = vrot.slane %v1028, 1
        %v1030 = vadd.f32 %v1028, %v1029
        %v1031 = vrot.slane %v1008, 4
        %v1032 = vadd.f32 %v1008, %v1031
        %v1033 = vrot.slane %v1032, 2
        %v1034 = vadd.f32 %v1032, %v1033
        %v1035 = vrot.slane %v1034, 1
        %v1036 = vadd.f32 %v1034, %v1035
        %v1037 = vrot.slane %v1010, 4
        %v1038 = vadd.f32 %v1010, %v1037
        %v1039 = vrot.slane %v1038, 2
        %v1040 = vadd.f32 %v1038, %v1039
        %v1041 = vrot.slane %v1040, 1
        %v1042 = vadd.f32 %v1040, %v1041
        %v1043 = vrot.slane %v1012, 4
        %v1044 = vadd.f32 %v1012, %v1043
        %v1045 = vrot.slane %v1044, 2
        %v1046 = vadd.f32 %v1044, %v1045
        %v1047 = vrot.slane %v1046, 1
        %v1048 = vadd.f32 %v1046, %v1047
        %v1049 = vrot.slane %v1014, 4
        %v1050 = vadd.f32 %v1014, %v1049
        %v1051 = vrot.slane %v1050, 2
        %v1052 = vadd.f32 %v1050, %v1051
        %v1053 = vrot.slane %v1052, 1
        %v1054 = vadd.f32 %v1052, %v1053
        %v1055 = vrot.slane %v1016, 4
        %v1056 = vadd.f32 %v1016, %v1055
        %v1057 = vrot.slane %v1056, 2
        %v1058 = vadd.f32 %v1056, %v1057
        %v1059 = vrot.slane %v1058, 1
        %v1060 = vadd.f32 %v1058, %v1059
        %v1061 = vrot.slane %v1018, 4
        %v1062 = vadd.f32 %v1018, %v1061
        %v1063 = vrot.slane %v1062, 2
        %v1064 = vadd.f32 %v1062, %v1063
        %v1065 = vrot.slane %v1064, 1
        %v1066 = vadd.f32 %v1064, %v1065
        %v1067 = vrcp.pop %v1024
        %v1068 = vmul.f32 %v1024, %v1067
        %v1069 = vsub.f32 1.0, %v1068
        %v1070 = vmul.f32 %v1067, %v1069
        %v1071 = vadd.f32 %v1067, %v1070
        %vm1072 = vweird.f32 %v1024
        %vm1073 = vweird.f32 %v1067
        %vm1074 = vmor %vm1072, %vm1073
        %v1075 = vsel %vm1074, %v1067, %v1071
        %v1076 = vand.u32 2147483647, %v1024
        %vm1077 = vcmp.eq.f32.partialorder %v1076, 8.507059e+37
        %v1078 = vand.u32 %v1024, 2147483648
        %v1079 = vor.u32 1.1754944e-38, %v1078
        %v1080 = vsel %vm1077, %v1079, %v1075
        %v1081 = vmul.f32 %v1004, %v1080
        %v1082 = vrcp.pop %v1030
        %v1083 = vmul.f32 %v1030, %v1082
        %v1084 = vsub.f32 1.0, %v1083
        %v1085 = vmul.f32 %v1082, %v1084
        %v1086 = vadd.f32 %v1082, %v1085
        %vm1087 = vweird.f32 %v1030
        %vm1088 = vweird.f32 %v1082
        %vm1089 = vmor %vm1087, %vm1088
        %v1090 = vsel %vm1089, %v1082, %v1086
        %v1091 = vand.u32 2147483647, %v1030
        %vm1092 = vcmp.eq.f32.partialorder %v1091, 8.507059e+37
        %v1093 = vand.u32 %v1030, 2147483648
        %v1094 = vor.u32 1.1754944e-38, %v1093
        %v1095 = vsel %vm1092, %v1094, %v1090
        %v1096 = vmul.f32 %v1006, %v1095
        %v1097 = vrcp.pop %v1036
        %v1098 = vmul.f32 %v1036, %v1097
        %v1099 = vsub.f32 1.0, %v1098
        %v1100 = vmul.f32 %v1097, %v1099
        %v1101 = vadd.f32 %v1097, %v1100
        %vm1102 = vweird.f32 %v1036
        %vm1103 = vweird.f32 %v1097
        %vm1104 = vmor %vm1102, %vm1103
        %v1105 = vsel %vm1104, %v1097, %v1101
        %v1106 = vand.u32 2147483647, %v1036
        %vm1107 = vcmp.eq.f32.partialorder %v1106, 8.507059e+37
        %v1108 = vand.u32 %v1036, 2147483648
        %v1109 = vor.u32 1.1754944e-38, %v1108
        %v1110 = vsel %vm1107, %v1109, %v1105
        %v1111 = vmul.f32 %v1008, %v1110
        %v1112 = vrcp.pop %v1042
        %v1113 = vmul.f32 %v1042, %v1112
        %v1114 = vsub.f32 1.0, %v1113
        %v1115 = vmul.f32 %v1112, %v1114
        %v1116 = vadd.f32 %v1112, %v1115
        %vm1117 = vweird.f32 %v1042
        %vm1118 = vweird.f32 %v1112
        %vm1119 = vmor %vm1117, %vm1118
        %v1120 = vsel %vm1119, %v1112, %v1116
        %v1121 = vand.u32 2147483647, %v1042
        %vm1122 = vcmp.eq.f32.partialorder %v1121, 8.507059e+37
        %v1123 = vand.u32 %v1042, 2147483648
        %v1124 = vor.u32 1.1754944e-38, %v1123
        %v1125 = vsel %vm1122, %v1124, %v1120
        %v1126 = vmul.f32 %v1010, %v1125
        %v1127 = vrcp.pop %v1048
        %v1128 = vmul.f32 %v1048, %v1127
        %v1129 = vsub.f32 1.0, %v1128
        %v1130 = vmul.f32 %v1127, %v1129
        %v1131 = vadd.f32 %v1127, %v1130
        %vm1132 = vweird.f32 %v1048
        %vm1133 = vweird.f32 %v1127
        %vm1134 = vmor %vm1132, %vm1133
        %v1135 = vsel %vm1134, %v1127, %v1131
        %v1136 = vand.u32 2147483647, %v1048
        %vm1137 = vcmp.eq.f32.partialorder %v1136, 8.507059e+37
        %v1138 = vand.u32 %v1048, 2147483648
        %v1139 = vor.u32 1.1754944e-38, %v1138
        %v1140 = vsel %vm1137, %v1139, %v1135
        %v1141 = vmul.f32 %v1012, %v1140
        %v1142 = vrcp.pop %v1054
        %v1143 = vmul.f32 %v1054, %v1142
        %v1144 = vsub.f32 1.0, %v1143
        %v1145 = vmul.f32 %v1142, %v1144
        %v1146 = vadd.f32 %v1142, %v1145
        %vm1147 = vweird.f32 %v1054
        %vm1148 = vweird.f32 %v1142
        %vm1149 = vmor %vm1147, %vm1148
        %v1150 = vsel %vm1149, %v1142, %v1146
        %v1151 = vand.u32 2147483647, %v1054
        %vm1152 = vcmp.eq.f32.partialorder %v1151, 8.507059e+37
        %v1153 = vand.u32 %v1054, 2147483648
        %v1154 = vor.u32 1.1754944e-38, %v1153
        %v1155 = vsel %vm1152, %v1154, %v1150
        %v1156 = vmul.f32 %v1014, %v1155
        %v1157 = vrcp.pop %v1060
        %v1158 = vmul.f32 %v1060, %v1157
        %v1159 = vsub.f32 1.0, %v1158
        %v1160 = vmul.f32 %v1157, %v1159
        %v1161 = vadd.f32 %v1157, %v1160
        %vm1162 = vweird.f32 %v1060
        %vm1163 = vweird.f32 %v1157
        %vm1164 = vmor %vm1162, %vm1163
        %v1165 = vsel %vm1164, %v1157, %v1161
        %v1166 = vand.u32 2147483647, %v1060
        %vm1167 = vcmp.eq.f32.partialorder %v1166, 8.507059e+37
        %v1168 = vand.u32 %v1060, 2147483648
        %v1169 = vor.u32 1.1754944e-38, %v1168
        %v1170 = vsel %vm1167, %v1169, %v1165
        %v1171 = vmul.f32 %v1016, %v1170
        %v1172 = vrcp.pop %v1066
        %v1173 = vmul.f32 %v1066, %v1172
        %v1174 = vsub.f32 1.0, %v1173
        %v1175 = vmul.f32 %v1172, %v1174
        %v1176 = vadd.f32 %v1172, %v1175
        %vm1177 = vweird.f32 %v1066
        %vm1178 = vweird.f32 %v1172
        %vm1179 = vmor %vm1177, %vm1178
        %v1180 = vsel %vm1179, %v1172, %v1176
        %v1181 = vand.u32 2147483647, %v1066
        %vm1182 = vcmp.eq.f32.partialorder %v1181, 8.507059e+37
        %v1183 = vand.u32 %v1066, 2147483648
        %v1184 = vor.u32 1.1754944e-38, %v1183
        %v1185 = vsel %vm1182, %v1184, %v1180
        %v1186 = vmul.f32 %v1018, %v1185
        %v1187 = vrot.slane %v570, 4
        %v1188 = vmax.f32 %v570, %v1187
        %v1189 = vrot.slane %v1188, 2
        %v1190 = vmax.f32 %v1188, %v1189
        %v1191 = vrot.slane %v1190, 1
        %v1192 = vmax.f32 %v1190, %v1191
        %v1193 = vrot.slane %v589, 4
        %v1194 = vmax.f32 %v589, %v1193
        %v1195 = vrot.slane %v1194, 2
        %v1196 = vmax.f32 %v1194, %v1195
        %v1197 = vrot.slane %v1196, 1
        %v1198 = vmax.f32 %v1196, %v1197
        %v1199 = vrot.slane %v608, 4
        %v1200 = vmax.f32 %v608, %v1199
        %v1201 = vrot.slane %v1200, 2
        %v1202 = vmax.f32 %v1200, %v1201
        %v1203 = vrot.slane %v1202, 1
        %v1204 = vmax.f32 %v1202, %v1203
        %v1205 = vrot.slane %v627, 4
        %v1206 = vmax.f32 %v627, %v1205
        %v1207 = vrot.slane %v1206, 2
        %v1208 = vmax.f32 %v1206, %v1207
        %v1209 = vrot.slane %v1208, 1
        %v1210 = vmax.f32 %v1208, %v1209
        %v1211 = vrot.slane %v646, 4
        %v1212 = vmax.f32 %v646, %v1211
        %v1213 = vrot.slane %v1212, 2
        %v1214 = vmax.f32 %v1212, %v1213
        %v1215 = vrot.slane %v1214, 1
        %v1216 = vmax.f32 %v1214, %v1215
        %v1217 = vrot.slane %v665, 4
        %v1218 = vmax.f32 %v665, %v1217
        %v1219 = vrot.slane %v1218, 2
        %v1220 = vmax.f32 %v1218, %v1219
        %v1221 = vrot.slane %v1220, 1
        %v1222 = vmax.f32 %v1220, %v1221
        %v1223 = vrot.slane %v684, 4
        %v1224 = vmax.f32 %v684, %v1223
        %v1225 = vrot.slane %v1224, 2
        %v1226 = vmax.f32 %v1224, %v1225
        %v1227 = vrot.slane %v1226, 1
        %v1228 = vmax.f32 %v1226, %v1227
        %v1229 = vrot.slane %v703, 4
        %v1230 = vmax.f32 %v703, %v1229
        %v1231 = vrot.slane %v1230, 2
        %v1232 = vmax.f32 %v1230, %v1231
        %v1233 = vrot.slane %v1232, 1
        %v1234 = vmax.f32 %v1232, %v1233
        %v1235 = vsub.f32 %v570, %v1192
        %v1236 = vsub.f32 %v589, %v1198
        %v1237 = vsub.f32 %v608, %v1204
        %v1238 = vsub.f32 %v627, %v1210
        %v1239 = vsub.f32 %v646, %v1216
        %v1240 = vsub.f32 %v665, %v1222
        %v1241 = vsub.f32 %v684, %v1228
        %v1242 = vsub.f32 %v703, %v1234
        %v1243 = vmul.f32 %v1235, 1.442695
        %v1244 = vpow.pop %v1243
        %v1245 = vmul.f32 %v1236, 1.442695
        %v1246 = vpow.pop %v1245
        %v1247 = vmul.f32 %v1237, 1.442695
        %v1248 = vpow.pop %v1247
        %v1249 = vmul.f32 %v1238, 1.442695
        %v1250 = vpow.pop %v1249
        %v1251 = vmul.f32 %v1239, 1.442695
        %v1252 = vpow.pop %v1251
        %v1253 = vmul.f32 %v1240, 1.442695
        %v1254 = vpow.pop %v1253
        %v1255 = vmul.f32 %v1241, 1.442695
        %v1256 = vpow.pop %v1255
        %v1257 = vmul.f32 %v1242, 1.442695
        %v1258 = vpow.pop %v1257
        %v1259 = vrot.slane %v1244, 4
        %v1260 = vadd.f32 %v1244, %v1259
        %v1261 = vrot.slane %v1260, 2
        %v1262 = vadd.f32 %v1260, %v1261
        %v1263 = vrot.slane %v1262, 1
        %v1264 = vadd.f32 %v1262, %v1263
        %v1265 = vrot.slane %v1246, 4
        %v1266 = vadd.f32 %v1246, %v1265
        %v1267 = vrot.slane %v1266, 2
        %v1268 = vadd.f32 %v1266, %v1267
        %v1269 = vrot.slane %v1268, 1
        %v1270 = vadd.f32 %v1268, %v1269
        %v1271 = vrot.slane %v1248, 4
        %v1272 = vadd.f32 %v1248, %v1271
        %v1273 = vrot.slane %v1272, 2
        %v1274 = vadd.f32 %v1272, %v1273
        %v1275 = vrot.slane %v1274, 1
        %v1276 = vadd.f32 %v1274, %v1275
        %v1277 = vrot.slane %v1250, 4
        %v1278 = vadd.f32 %v1250, %v1277
        %v1279 = vrot.slane %v1278, 2
        %v1280 = vadd.f32 %v1278, %v1279
        %v1281 = vrot.slane %v1280, 1
        %v1282 = vadd.f32 %v1280, %v1281
        %v1283 = vrot.slane %v1252, 4
        %v1284 = vadd.f32 %v1252, %v1283
        %v1285 = vrot.slane %v1284, 2
        %v1286 = vadd.f32 %v1284, %v1285
        %v1287 = vrot.slane %v1286, 1
        %v1288 = vadd.f32 %v1286, %v1287
        %v1289 = vrot.slane %v1254, 4
        %v1290 = vadd.f32 %v1254, %v1289
        %v1291 = vrot.slane %v1290, 2
        %v1292 = vadd.f32 %v1290, %v1291
        %v1293 = vrot.slane %v1292, 1
        %v1294 = vadd.f32 %v1292, %v1293
        %v1295 = vrot.slane %v1256, 4
        %v1296 = vadd.f32 %v1256, %v1295
        %v1297 = vrot.slane %v1296, 2
        %v1298 = vadd.f32 %v1296, %v1297
        %v1299 = vrot.slane %v1298, 1
        %v1300 = vadd.f32 %v1298, %v1299
        %v1301 = vrot.slane %v1258, 4
        %v1302 = vadd.f32 %v1258, %v1301
        %v1303 = vrot.slane %v1302, 2
        %v1304 = vadd.f32 %v1302, %v1303
        %v1305 = vrot.slane %v1304, 1
        %v1306 = vadd.f32 %v1304, %v1305
        %v1307 = vrcp.pop %v1264
        %v1308 = vmul.f32 %v1264, %v1307
        %v1309 = vsub.f32 1.0, %v1308
        %v1310 = vmul.f32 %v1307, %v1309
        %v1311 = vadd.f32 %v1307, %v1310
        %vm1312 = vweird.f32 %v1264
        %vm1313 = vweird.f32 %v1307
        %vm1314 = vmor %vm1312, %vm1313
        %v1315 = vsel %vm1314, %v1307, %v1311
        %v1316 = vand.u32 2147483647, %v1264
        %vm1317 = vcmp.eq.f32.partialorder %v1316, 8.507059e+37
        %v1318 = vand.u32 %v1264, 2147483648
        %v1319 = vor.u32 1.1754944e-38, %v1318
        %v1320 = vsel %vm1317, %v1319, %v1315
        %v1321 = vmul.f32 %v1244, %v1320
        %v1322 = vrcp.pop %v1270
        %v1323 = vmul.f32 %v1270, %v1322
        %v1324 = vsub.f32 1.0, %v1323
        %v1325 = vmul.f32 %v1322, %v1324
        %v1326 = vadd.f32 %v1322, %v1325
        %vm1327 = vweird.f32 %v1270
        %vm1328 = vweird.f32 %v1322
        %vm1329 = vmor %vm1327, %vm1328
        %v1330 = vsel %vm1329, %v1322, %v1326
        %v1331 = vand.u32 2147483647, %v1270
        %vm1332 = vcmp.eq.f32.partialorder %v1331, 8.507059e+37
        %v1333 = vand.u32 %v1270, 2147483648
        %v1334 = vor.u32 1.1754944e-38, %v1333
        %v1335 = vsel %vm1332, %v1334, %v1330
        %v1336 = vmul.f32 %v1246, %v1335
        %v1337 = vrcp.pop %v1276
        %v1338 = vmul.f32 %v1276, %v1337
        %v1339 = vsub.f32 1.0, %v1338
        %v1340 = vmul.f32 %v1337, %v1339
        %v1341 = vadd.f32 %v1337, %v1340
        %vm1342 = vweird.f32 %v1276
        %vm1343 = vweird.f32 %v1337
        %vm1344 = vmor %vm1342, %vm1343
        %v1345 = vsel %vm1344, %v1337, %v1341
        %v1346 = vand.u32 2147483647, %v1276
        %vm1347 = vcmp.eq.f32.partialorder %v1346, 8.507059e+37
        %v1348 = vand.u32 %v1276, 2147483648
        %v1349 = vor.u32 1.1754944e-38, %v1348
        %v1350 = vsel %vm1347, %v1349, %v1345
        %v1351 = vmul.f32 %v1248, %v1350
        %v1352 = vrcp.pop %v1282
        %v1353 = vmul.f32 %v1282, %v1352
        %v1354 = vsub.f32 1.0, %v1353
        %v1355 = vmul.f32 %v1352, %v1354
        %v1356 = vadd.f32 %v1352, %v1355
        %vm1357 = vweird.f32 %v1282
        %vm1358 = vweird.f32 %v1352
        %vm1359 = vmor %vm1357, %vm1358
        %v1360 = vsel %vm1359, %v1352, %v1356
        %v1361 = vand.u32 2147483647, %v1282
        %vm1362 = vcmp.eq.f32.partialorder %v1361, 8.507059e+37
        %v1363 = vand.u32 %v1282, 2147483648
        %v1364 = vor.u32 1.1754944e-38, %v1363
        %v1365 = vsel %vm1362, %v1364, %v1360
        %v1366 = vmul.f32 %v1250, %v1365
        %v1367 = vrcp.pop %v1288
        %v1368 = vmul.f32 %v1288, %v1367
        %v1369 = vsub.f32 1.0, %v1368
        %v1370 = vmul.f32 %v1367, %v1369
        %v1371 = vadd.f32 %v1367, %v1370
        %vm1372 = vweird.f32 %v1288
        %vm1373 = vweird.f32 %v1367
        %vm1374 = vmor %vm1372, %vm1373
        %v1375 = vsel %vm1374, %v1367, %v1371
        %v1376 = vand.u32 2147483647, %v1288
        %vm1377 = vcmp.eq.f32.partialorder %v1376, 8.507059e+37
        %v1378 = vand.u32 %v1288, 2147483648
        %v1379 = vor.u32 1.1754944e-38, %v1378
        %v1380 = vsel %vm1377, %v1379, %v1375
        %v1381 = vmul.f32 %v1252, %v1380
        %v1382 = vrcp.pop %v1294
        %v1383 = vmul.f32 %v1294, %v1382
        %v1384 = vsub.f32 1.0, %v1383
        %v1385 = vmul.f32 %v1382, %v1384
        %v1386 = vadd.f32 %v1382, %v1385
        %vm1387 = vweird.f32 %v1294
        %vm1388 = vweird.f32 %v1382
        %vm1389 = vmor %vm1387, %vm1388
        %v1390 = vsel %vm1389, %v1382, %v1386
        %v1391 = vand.u32 2147483647, %v1294
        %vm1392 = vcmp.eq.f32.partialorder %v1391, 8.507059e+37
        %v1393 = vand.u32 %v1294, 2147483648
        %v1394 = vor.u32 1.1754944e-38, %v1393
        %v1395 = vsel %vm1392, %v1394, %v1390
        %v1396 = vmul.f32 %v1254, %v1395
        %v1397 = vrcp.pop %v1300
        %v1398 = vmul.f32 %v1300, %v1397
        %v1399 = vsub.f32 1.0, %v1398
        %v1400 = vmul.f32 %v1397, %v1399
        %v1401 = vadd.f32 %v1397, %v1400
        %vm1402 = vweird.f32 %v1300
        %vm1403 = vweird.f32 %v1397
        %vm1404 = vmor %vm1402, %vm1403
        %v1405 = vsel %vm1404, %v1397, %v1401
        %v1406 = vand.u32 2147483647, %v1300
        %vm1407 = vcmp.eq.f32.partialorder %v1406, 8.507059e+37
        %v1408 = vand.u32 %v1300, 2147483648
        %v1409 = vor.u32 1.1754944e-38, %v1408
        %v1410 = vsel %vm1407, %v1409, %v1405
        %v1411 = vmul.f32 %v1256, %v1410
        %v1412 = vrcp.pop %v1306
        %v1413 = vmul.f32 %v1306, %v1412
        %v1414 = vsub.f32 1.0, %v1413
        %v1415 = vmul.f32 %v1412, %v1414
        %v1416 = vadd.f32 %v1412, %v1415
        %vm1417 = vweird.f32 %v1306
        %vm1418 = vweird.f32 %v1412
        %vm1419 = vmor %vm1417, %vm1418
        %v1420 = vsel %vm1419, %v1412, %v1416
        %v1421 = vand.u32 2147483647, %v1306
        %vm1422 = vcmp.eq.f32.partialorder %v1421, 8.507059e+37
        %v1423 = vand.u32 %v1306, 2147483648
        %v1424 = vor.u32 1.1754944e-38, %v1423
        %v1425 = vsel %vm1422, %v1424, %v1420
        %v1426 = vmul.f32 %v1258, %v1425
        %v1427 = vrot.slane %v572, 4
        %v1428 = vmax.f32 %v572, %v1427
        %v1429 = vrot.slane %v1428, 2
        %v1430 = vmax.f32 %v1428, %v1429
        %v1431 = vrot.slane %v1430, 1
        %v1432 = vmax.f32 %v1430, %v1431
        %v1433 = vrot.slane %v591, 4
        %v1434 = vmax.f32 %v591, %v1433
        %v1435 = vrot.slane %v1434, 2
        %v1436 = vmax.f32 %v1434, %v1435
        %v1437 = vrot.slane %v1436, 1
        %v1438 = vmax.f32 %v1436, %v1437
        %v1439 = vrot.slane %v610, 4
        %v1440 = vmax.f32 %v610, %v1439
        %v1441 = vrot.slane %v1440, 2
        %v1442 = vmax.f32 %v1440, %v1441
        %v1443 = vrot.slane %v1442, 1
        %v1444 = vmax.f32 %v1442, %v1443
        %v1445 = vrot.slane %v629, 4
        %v1446 = vmax.f32 %v629, %v1445
        %v1447 = vrot.slane %v1446, 2
        %v1448 = vmax.f32 %v1446, %v1447
        %v1449 = vrot.slane %v1448, 1
        %v1450 = vmax.f32 %v1448, %v1449
        %v1451 = vrot.slane %v648, 4
        %v1452 = vmax.f32 %v648, %v1451
        %v1453 = vrot.slane %v1452, 2
        %v1454 = vmax.f32 %v1452, %v1453
        %v1455 = vrot.slane %v1454, 1
        %v1456 = vmax.f32 %v1454, %v1455
        %v1457 = vrot.slane %v667, 4
        %v1458 = vmax.f32 %v667, %v1457
        %v1459 = vrot.slane %v1458, 2
        %v1460 = vmax.f32 %v1458, %v1459
        %v1461 = vrot.slane %v1460, 1
        %v1462 = vmax.f32 %v1460, %v1461
        %v1463 = vrot.slane %v686, 4
        %v1464 = vmax.f32 %v686, %v1463
        %v1465 = vrot.slane %v1464, 2
        %v1466 = vmax.f32 %v1464, %v1465
        %v1467 = vrot.slane %v1466, 1
        %v1468 = vmax.f32 %v1466, %v1467
        %v1469 = vrot.slane %v705, 4
        %v1470 = vmax.f32 %v705, %v1469
        %v1471 = vrot.slane %v1470, 2
        %v1472 = vmax.f32 %v1470, %v1471
        %v1473 = vrot.slane %v1472, 1
        %v1474 = vmax.f32 %v1472, %v1473
        %v1475 = vsub.f32 %v572, %v1432
        %v1476 = vsub.f32 %v591, %v1438
        %v1477 = vsub.f32 %v610, %v1444
        %v1478 = vsub.f32 %v629, %v1450
        %v1479 = vsub.f32 %v648, %v1456
        %v1480 = vsub.f32 %v667, %v1462
        %v1481 = vsub.f32 %v686, %v1468
        %v1482 = vsub.f32 %v705, %v1474
        %v1483 = vmul.f32 %v1475, 1.442695
        %v1484 = vpow.pop %v1483
        %v1485 = vmul.f32 %v1476, 1.442695
        %v1486 = vpow.pop %v1485
        %v1487 = vmul.f32 %v1477, 1.442695
        %v1488 = vpow.pop %v1487
        %v1489 = vmul.f32 %v1478, 1.442695
        %v1490 = vpow.pop %v1489
        %v1491 = vmul.f32 %v1479, 1.442695
        %v1492 = vpow.pop %v1491
        %v1493 = vmul.f32 %v1480, 1.442695
        %v1494 = vpow.pop %v1493
        %v1495 = vmul.f32 %v1481, 1.442695
        %v1496 = vpow.pop %v1495
        %v1497 = vmul.f32 %v1482, 1.442695
        %v1498 = vpow.pop %v1497
        %v1499 = vrot.slane %v1484, 4
        %v1500 = vadd.f32 %v1484, %v1499
        %v1501 = vrot.slane %v1500, 2
        %v1502 = vadd.f32 %v1500, %v1501
        %v1503 = vrot.slane %v1502, 1
        %v1504 = vadd.f32 %v1502, %v1503
        %v1505 = vrot.slane %v1486, 4
        %v1506 = vadd.f32 %v1486, %v1505
        %v1507 = vrot.slane %v1506, 2
        %v1508 = vadd.f32 %v1506, %v1507
        %v1509 = vrot.slane %v1508, 1
        %v1510 = vadd.f32 %v1508, %v1509
        %v1511 = vrot.slane %v1488, 4
        %v1512 = vadd.f32 %v1488, %v1511
        %v1513 = vrot.slane %v1512, 2
        %v1514 = vadd.f32 %v1512, %v1513
        %v1515 = vrot.slane %v1514, 1
        %v1516 = vadd.f32 %v1514, %v1515
        %v1517 = vrot.slane %v1490, 4
        %v1518 = vadd.f32 %v1490, %v1517
        %v1519 = vrot.slane %v1518, 2
        %v1520 = vadd.f32 %v1518, %v1519
        %v1521 = vrot.slane %v1520, 1
        %v1522 = vadd.f32 %v1520, %v1521
        %v1523 = vrot.slane %v1492, 4
        %v1524 = vadd.f32 %v1492, %v1523
        %v1525 = vrot.slane %v1524, 2
        %v1526 = vadd.f32 %v1524, %v1525
        %v1527 = vrot.slane %v1526, 1
        %v1528 = vadd.f32 %v1526, %v1527
        %v1529 = vrot.slane %v1494, 4
        %v1530 = vadd.f32 %v1494, %v1529
        %v1531 = vrot.slane %v1530, 2
        %v1532 = vadd.f32 %v1530, %v1531
        %v1533 = vrot.slane %v1532, 1
        %v1534 = vadd.f32 %v1532, %v1533
        %v1535 = vrot.slane %v1496, 4
        %v1536 = vadd.f32 %v1496, %v1535
        %v1537 = vrot.slane %v1536, 2
        %v1538 = vadd.f32 %v1536, %v1537
        %v1539 = vrot.slane %v1538, 1
        %v1540 = vadd.f32 %v1538, %v1539
        %v1541 = vrot.slane %v1498, 4
        %v1542 = vadd.f32 %v1498, %v1541
        %v1543 = vrot.slane %v1542, 2
        %v1544 = vadd.f32 %v1542, %v1543
        %v1545 = vrot.slane %v1544, 1
        %v1546 = vadd.f32 %v1544, %v1545
        %v1547 = vrcp.pop %v1504
        %v1548 = vmul.f32 %v1504, %v1547
        %v1549 = vsub.f32 1.0, %v1548
        %v1550 = vmul.f32 %v1547, %v1549
        %v1551 = vadd.f32 %v1547, %v1550
        %vm1552 = vweird.f32 %v1504
        %vm1553 = vweird.f32 %v1547
        %vm1554 = vmor %vm1552, %vm1553
        %v1555 = vsel %vm1554, %v1547, %v1551
        %v1556 = vand.u32 2147483647, %v1504
        %vm1557 = vcmp.eq.f32.partialorder %v1556, 8.507059e+37
        %v1558 = vand.u32 %v1504, 2147483648
        %v1559 = vor.u32 1.1754944e-38, %v1558
        %v1560 = vsel %vm1557, %v1559, %v1555
        %v1561 = vmul.f32 %v1484, %v1560
        %v1562 = vrcp.pop %v1510
        %v1563 = vmul.f32 %v1510, %v1562
        %v1564 = vsub.f32 1.0, %v1563
        %v1565 = vmul.f32 %v1562, %v1564
        %v1566 = vadd.f32 %v1562, %v1565
        %vm1567 = vweird.f32 %v1510
        %vm1568 = vweird.f32 %v1562
        %vm1569 = vmor %vm1567, %vm1568
        %v1570 = vsel %vm1569, %v1562, %v1566
        %v1571 = vand.u32 2147483647, %v1510
        %vm1572 = vcmp.eq.f32.partialorder %v1571, 8.507059e+37
        %v1573 = vand.u32 %v1510, 2147483648
        %v1574 = vor.u32 1.1754944e-38, %v1573
        %v1575 = vsel %vm1572, %v1574, %v1570
        %v1576 = vmul.f32 %v1486, %v1575
        %v1577 = vrcp.pop %v1516
        %v1578 = vmul.f32 %v1516, %v1577
        %v1579 = vsub.f32 1.0, %v1578
        %v1580 = vmul.f32 %v1577, %v1579
        %v1581 = vadd.f32 %v1577, %v1580
        %vm1582 = vweird.f32 %v1516
        %vm1583 = vweird.f32 %v1577
        %vm1584 = vmor %vm1582, %vm1583
        %v1585 = vsel %vm1584, %v1577, %v1581
        %v1586 = vand.u32 2147483647, %v1516
        %vm1587 = vcmp.eq.f32.partialorder %v1586, 8.507059e+37
        %v1588 = vand.u32 %v1516, 2147483648
        %v1589 = vor.u32 1.1754944e-38, %v1588
        %v1590 = vsel %vm1587, %v1589, %v1585
        %v1591 = vmul.f32 %v1488, %v1590
        %v1592 = vrcp.pop %v1522
        %v1593 = vmul.f32 %v1522, %v1592
        %v1594 = vsub.f32 1.0, %v1593
        %v1595 = vmul.f32 %v1592, %v1594
        %v1596 = vadd.f32 %v1592, %v1595
        %vm1597 = vweird.f32 %v1522
        %vm1598 = vweird.f32 %v1592
        %vm1599 = vmor %vm1597, %vm1598
        %v1600 = vsel %vm1599, %v1592, %v1596
        %v1601 = vand.u32 2147483647, %v1522
        %vm1602 = vcmp.eq.f32.partialorder %v1601, 8.507059e+37
        %v1603 = vand.u32 %v1522, 2147483648
        %v1604 = vor.u32 1.1754944e-38, %v1603
        %v1605 = vsel %vm1602, %v1604, %v1600
        %v1606 = vmul.f32 %v1490, %v1605
        %v1607 = vrcp.pop %v1528
        %v1608 = vmul.f32 %v1528, %v1607
        %v1609 = vsub.f32 1.0, %v1608
        %v1610 = vmul.f32 %v1607, %v1609
        %v1611 = vadd.f32 %v1607, %v1610
        %vm1612 = vweird.f32 %v1528
        %vm1613 = vweird.f32 %v1607
        %vm1614 = vmor %vm1612, %vm1613
        %v1615 = vsel %vm1614, %v1607, %v1611
        %v1616 = vand.u32 2147483647, %v1528
        %vm1617 = vcmp.eq.f32.partialorder %v1616, 8.507059e+37
        %v1618 = vand.u32 %v1528, 2147483648
        %v1619 = vor.u32 1.1754944e-38, %v1618
        %v1620 = vsel %vm1617, %v1619, %v1615
        %v1621 = vmul.f32 %v1492, %v1620
        %v1622 = vrcp.pop %v1534
        %v1623 = vmul.f32 %v1534, %v1622
        %v1624 = vsub.f32 1.0, %v1623
        %v1625 = vmul.f32 %v1622, %v1624
        %v1626 = vadd.f32 %v1622, %v1625
        %vm1627 = vweird.f32 %v1534
        %vm1628 = vweird.f32 %v1622
        %vm1629 = vmor %vm1627, %vm1628
        %v1630 = vsel %vm1629, %v1622, %v1626
        %v1631 = vand.u32 2147483647, %v1534
        %vm1632 = vcmp.eq.f32.partialorder %v1631, 8.507059e+37
        %v1633 = vand.u32 %v1534, 2147483648
        %v1634 = vor.u32 1.1754944e-38, %v1633
        %v1635 = vsel %vm1632, %v1634, %v1630
        %v1636 = vmul.f32 %v1494, %v1635
        %v1637 = vrcp.pop %v1540
        %v1638 = vmul.f32 %v1540, %v1637
        %v1639 = vsub.f32 1.0, %v1638
        %v1640 = vmul.f32 %v1637, %v1639
        %v1641 = vadd.f32 %v1637, %v1640
        %vm1642 = vweird.f32 %v1540
        %vm1643 = vweird.f32 %v1637
        %vm1644 = vmor %vm1642, %vm1643
        %v1645 = vsel %vm1644, %v1637, %v1641
        %v1646 = vand.u32 2147483647, %v1540
        %vm1647 = vcmp.eq.f32.partialorder %v1646, 8.507059e+37
        %v1648 = vand.u32 %v1540, 2147483648
        %v1649 = vor.u32 1.1754944e-38, %v1648
        %v1650 = vsel %vm1647, %v1649, %v1645
        %v1651 = vmul.f32 %v1496, %v1650
        %v1652 = vrcp.pop %v1546
        %v1653 = vmul.f32 %v1546, %v1652
        %v1654 = vsub.f32 1.0, %v1653
        %v1655 = vmul.f32 %v1652, %v1654
        %v1656 = vadd.f32 %v1652, %v1655
        %vm1657 = vweird.f32 %v1546
        %vm1658 = vweird.f32 %v1652
        %vm1659 = vmor %vm1657, %vm1658
        %v1660 = vsel %vm1659, %v1652, %v1656
        %v1661 = vand.u32 2147483647, %v1546
        %vm1662 = vcmp.eq.f32.partialorder %v1661, 8.507059e+37
        %v1663 = vand.u32 %v1546, 2147483648
        %v1664 = vor.u32 1.1754944e-38, %v1663
        %v1665 = vsel %vm1662, %v1664, %v1660
        %v1666 = vmul.f32 %v1498, %v1665
        %v1667 = vpack.c.bf16 %v1081, %v841
        %v1668 = vpack.c.bf16 %v1096, %v856
        %v1669 = vpack.c.bf16 %v1111, %v871
        %v1670 = vpack.c.bf16 %v1126, %v886
        %v1671 = vpack.c.bf16 %v1141, %v901
        %v1672 = vpack.c.bf16 %v1156, %v916
        %v1673 = vpack.c.bf16 %v1171, %v931
        %v1674 = vpack.c.bf16 %v1186, %v946
        %v1675 = vpack.c.bf16 %v1561, %v1321
        %v1676 = vpack.c.bf16 %v1576, %v1336
        %v1677 = vpack.c.bf16 %v1591, %v1351
        %v1678 = vpack.c.bf16 %v1606, %v1366
        %v1679 = vpack.c.bf16 %v1621, %v1381
        %v1680 = vpack.c.bf16 %v1636, %v1396
        %v1681 = vpack.c.bf16 %v1651, %v1411
        %v1682 = vpack.c.bf16 %v1666, %v1426
        %v1683 = vld [vmem:[%s3] sm:$0xff]
        %v1684 = vld [vmem:[%s3 + $0x8] sm:$0xff]
        %v1685 = vld [vmem:[%s3 + $0x10] sm:$0xff]
        %v1686 = vld [vmem:[%s3 + $0x18] sm:$0xff]
        %v1687 = vld [vmem:[%s3 + $0x20] sm:$0xff]
        %v1688 = vld [vmem:[%s3 + $0x28] sm:$0xff]
        %v1689 = vld [vmem:[%s3 + $0x30] sm:$0xff]
        %v1690 = vld [vmem:[%s3 + $0x38] sm:$0xff]
        %v1691 = vpack.c.bf16 %v1684, %v1683
        %v1692 = vpack.c.bf16 %v1686, %v1685
        %v1693 = vpack.c.bf16 %v1688, %v1687
        %v1694 = vpack.c.bf16 %v1690, %v1689
        %v1695 = vld [vmem:[%s4] sm:$0xff]
        %v1696 = vld [vmem:[%s4 + $0x8] sm:$0xff]
        %v1697 = vld [vmem:[%s4 + $0x10] sm:$0xff]
        %v1698 = vld [vmem:[%s4 + $0x18] sm:$0xff]
        %v1699 = vld [vmem:[%s4 + $0x20] sm:$0xff]
        %v1700 = vld [vmem:[%s4 + $0x28] sm:$0xff]
        %v1701 = vld [vmem:[%s4 + $0x30] sm:$0xff]
        %v1702 = vld [vmem:[%s4 + $0x38] sm:$0xff]
        %1704 = vset.pattern.permute.xlu0 0
        %1705 = vperm.xlu0 %1704, %v1695
        %v1706 = vpop.permute.xlu0 %1705
        %1709 = vset.pattern.permute.xlu0 0
        %1710 = vperm.xlu0 %1709, %v1696
        %v1711 = vpop.permute.xlu0 %1710
        %1714 = vset.pattern.permute.xlu0 0
        %1715 = vperm.xlu0 %1714, %v1697
        %v1716 = vpop.permute.xlu0 %1715
        %1719 = vset.pattern.permute.xlu0 0
        %1720 = vperm.xlu0 %1719, %v1698
        %v1721 = vpop.permute.xlu0 %1720
        %1724 = vset.pattern.permute.xlu0 0
        %1725 = vperm.xlu0 %1724, %v1699
        %v1726 = vpop.permute.xlu0 %1725
        %1729 = vset.pattern.permute.xlu0 0
        %1730 = vperm.xlu0 %1729, %v1700
        %v1731 = vpop.permute.xlu0 %1730
        %1734 = vset.pattern.permute.xlu0 0
        %1735 = vperm.xlu0 %1734, %v1701
        %v1736 = vpop.permute.xlu0 %1735
        %1739 = vset.pattern.permute.xlu0 0
        %1740 = vperm.xlu0 %1739, %v1702
        %v1741 = vpop.permute.xlu0 %1740
        %vm1743 = vcmask 261120
        %v1745 = vsel %vm1743, %v1691, 0
        %v1748 = vsel %vm1743, %v1692, 0
        %v1751 = vsel %vm1743, %v1693, 0
        %v1754 = vsel %vm1743, %v1694, 0
        %1756 = vmatpush.bf16.msra.mxu0 0
        %1757 = vmatpush.bf16.msra.mxu0 0
        %1758 = vmatpush.bf16.msra.mxu0 0
        %1759 = vmatpush.bf16.msra.mxu0 0
        %1760 = vmatpush.bf16.msra.mxu0 0
        %1761 = vmatpush.bf16.msra.mxu0 0
        %1762 = vmatpush.bf16.msra.mxu0 %v1675
        %1763 = vmatpush.bf16.msra.mxu0 %v1667
        %1764 = vmatmul.bf16.gmra.mxu0 %v1745
        %v1765 = vpop.f32.mrf.mxu0
        %v1766 = vadd.f32 %v1706, %v1765
        %v1767 = vpop.f32.mrf.mxu0
        %v1768 = vadd.f32 %v1711, %v1767
        %1769 = vmatmul.bf16.gmra.mxu0 %v1748
        %v1770 = vpop.f32.mrf.mxu0
        %v1771 = vadd.f32 %v1716, %v1770
        %v1772 = vpop.f32.mrf.mxu0
        %v1773 = vadd.f32 %v1721, %v1772
        %1774 = vmatmul.bf16.gmra.mxu0 %v1751
        %v1775 = vpop.f32.mrf.mxu0
        %v1776 = vadd.f32 %v1726, %v1775
        %v1777 = vpop.f32.mrf.mxu0
        %v1778 = vadd.f32 %v1731, %v1777
        %1779 = vmatmul.bf16.gmra.mxu0 %v1754
        %v1780 = vpop.f32.mrf.mxu0
        %v1781 = vadd.f32 %v1736, %v1780
        %v1782 = vpop.f32.mrf.mxu0
        %v1783 = vadd.f32 %v1741, %v1782
        %1784 = vdwg.mxu0
        %1785 = vmatpush.bf16.msra.mxu0 0
        %1786 = vmatpush.bf16.msra.mxu0 0
        %1787 = vmatpush.bf16.msra.mxu0 0
        %1788 = vmatpush.bf16.msra.mxu0 0
        %1789 = vmatpush.bf16.msra.mxu0 0
        %1790 = vmatpush.bf16.msra.mxu0 0
        %1791 = vmatpush.bf16.msra.mxu0 %v1676
        %1792 = vmatpush.bf16.msra.mxu0 %v1668
        %1793 = vmatmul.bf16.gmra.mxu0 %v1745
        %v1794 = vpop.f32.mrf.mxu0
        %v1795 = vadd.f32 %v1706, %v1794
        %v1796 = vpop.f32.mrf.mxu0
        %v1797 = vadd.f32 %v1711, %v1796
        %1798 = vmatmul.bf16.gmra.mxu0 %v1748
        %v1799 = vpop.f32.mrf.mxu0
        %v1800 = vadd.f32 %v1716, %v1799
        %v1801 = vpop.f32.mrf.mxu0
        %v1802 = vadd.f32 %v1721, %v1801
        %1803 = vmatmul.bf16.gmra.mxu0 %v1751
        %v1804 = vpop.f32.mrf.mxu0
        %v1805 = vadd.f32 %v1726, %v1804
        %v1806 = vpop.f32.mrf.mxu0
        %v1807 = vadd.f32 %v1731, %v1806
        %1808 = vmatmul.bf16.gmra.mxu0 %v1754
        %v1809 = vpop.f32.mrf.mxu0
        %v1810 = vadd.f32 %v1736, %v1809
        %v1811 = vpop.f32.mrf.mxu0
        %v1812 = vadd.f32 %v1741, %v1811
        %1813 = vdwg.mxu0
        %1814 = vmatpush.bf16.msra.mxu0 0
        %1815 = vmatpush.bf16.msra.mxu0 0
        %1816 = vmatpush.bf16.msra.mxu0 0
        %1817 = vmatpush.bf16.msra.mxu0 0
        %1818 = vmatpush.bf16.msra.mxu0 0
        %1819 = vmatpush.bf16.msra.mxu0 0
        %1820 = vmatpush.bf16.msra.mxu0 %v1677
        %1821 = vmatpush.bf16.msra.mxu0 %v1669
        %1822 = vmatmul.bf16.gmra.mxu0 %v1745
        %v1823 = vpop.f32.mrf.mxu0
        %v1824 = vadd.f32 %v1706, %v1823
        %v1825 = vpop.f32.mrf.mxu0
        %v1826 = vadd.f32 %v1711, %v1825
        %1827 = vmatmul.bf16.gmra.mxu0 %v1748
        %v1828 = vpop.f32.mrf.mxu0
        %v1829 = vadd.f32 %v1716, %v1828
        %v1830 = vpop.f32.mrf.mxu0
        %v1831 = vadd.f32 %v1721, %v1830
        %1832 = vmatmul.bf16.gmra.mxu0 %v1751
        %v1833 = vpop.f32.mrf.mxu0
        %v1834 = vadd.f32 %v1726, %v1833
        %v1835 = vpop.f32.mrf.mxu0
        %v1836 = vadd.f32 %v1731, %v1835
        %1837 = vmatmul.bf16.gmra.mxu0 %v1754
        %v1838 = vpop.f32.mrf.mxu0
        %v1839 = vadd.f32 %v1736, %v1838
        %v1840 = vpop.f32.mrf.mxu0
        %v1841 = vadd.f32 %v1741, %v1840
        %1842 = vdwg.mxu0
        %1843 = vmatpush.bf16.msra.mxu0 0
        %1844 = vmatpush.bf16.msra.mxu0 0
        %1845 = vmatpush.bf16.msra.mxu0 0
        %1846 = vmatpush.bf16.msra.mxu0 0
        %1847 = vmatpush.bf16.msra.mxu0 0
        %1848 = vmatpush.bf16.msra.mxu0 0
        %1849 = vmatpush.bf16.msra.mxu0 %v1678
        %1850 = vmatpush.bf16.msra.mxu0 %v1670
        %1851 = vmatmul.bf16.gmra.mxu0 %v1745
        %v1852 = vpop.f32.mrf.mxu0
        %v1853 = vadd.f32 %v1706, %v1852
        %v1854 = vpop.f32.mrf.mxu0
        %v1855 = vadd.f32 %v1711, %v1854
        %1856 = vmatmul.bf16.gmra.mxu0 %v1748
        %v1857 = vpop.f32.mrf.mxu0
        %v1858 = vadd.f32 %v1716, %v1857
        %v1859 = vpop.f32.mrf.mxu0
        %v1860 = vadd.f32 %v1721, %v1859
        %1861 = vmatmul.bf16.gmra.mxu0 %v1751
        %v1862 = vpop.f32.mrf.mxu0
        %v1863 = vadd.f32 %v1726, %v1862
        %v1864 = vpop.f32.mrf.mxu0
        %v1865 = vadd.f32 %v1731, %v1864
        %1866 = vmatmul.bf16.gmra.mxu0 %v1754
        %v1867 = vpop.f32.mrf.mxu0
        %v1868 = vadd.f32 %v1736, %v1867
        %v1869 = vpop.f32.mrf.mxu0
        %v1870 = vadd.f32 %v1741, %v1869
        %1871 = vdwg.mxu0
        %1872 = vmatpush.bf16.msra.mxu0 0
        %1873 = vmatpush.bf16.msra.mxu0 0
        %1874 = vmatpush.bf16.msra.mxu0 0
        %1875 = vmatpush.bf16.msra.mxu0 0
        %1876 = vmatpush.bf16.msra.mxu0 0
        %1877 = vmatpush.bf16.msra.mxu0 0
        %1878 = vmatpush.bf16.msra.mxu0 %v1679
        %1879 = vmatpush.bf16.msra.mxu0 %v1671
        %1880 = vmatmul.bf16.gmra.mxu0 %v1745
        %v1881 = vpop.f32.mrf.mxu0
        %v1882 = vadd.f32 %v1706, %v1881
        %v1883 = vpop.f32.mrf.mxu0
        %v1884 = vadd.f32 %v1711, %v1883
        %1885 = vmatmul.bf16.gmra.mxu0 %v1748
        %v1886 = vpop.f32.mrf.mxu0
        %v1887 = vadd.f32 %v1716, %v1886
        %v1888 = vpop.f32.mrf.mxu0
        %v1889 = vadd.f32 %v1721, %v1888
        %1890 = vmatmul.bf16.gmra.mxu0 %v1751
        %v1891 = vpop.f32.mrf.mxu0
        %v1892 = vadd.f32 %v1726, %v1891
        %v1893 = vpop.f32.mrf.mxu0
        %v1894 = vadd.f32 %v1731, %v1893
        %1895 = vmatmul.bf16.gmra.mxu0 %v1754
        %v1896 = vpop.f32.mrf.mxu0
        %v1897 = vadd.f32 %v1736, %v1896
        %v1898 = vpop.f32.mrf.mxu0
        %v1899 = vadd.f32 %v1741, %v1898
        %1900 = vdwg.mxu0
        %1901 = vmatpush.bf16.msra.mxu0 0
        %1902 = vmatpush.bf16.msra.mxu0 0
        %1903 = vmatpush.bf16.msra.mxu0 0
        %1904 = vmatpush.bf16.msra.mxu0 0
        %1905 = vmatpush.bf16.msra.mxu0 0
        %1906 = vmatpush.bf16.msra.mxu0 0
        %1907 = vmatpush.bf16.msra.mxu0 %v1680
        %1908 = vmatpush.bf16.msra.mxu0 %v1672
        %1909 = vmatmul.bf16.gmra.mxu0 %v1745
        %v1910 = vpop.f32.mrf.mxu0
        %v1911 = vadd.f32 %v1706, %v1910
        %v1912 = vpop.f32.mrf.mxu0
        %v1913 = vadd.f32 %v1711, %v1912
        %1914 = vmatmul.bf16.gmra.mxu0 %v1748
        %v1915 = vpop.f32.mrf.mxu0
        %v1916 = vadd.f32 %v1716, %v1915
        %v1917 = vpop.f32.mrf.mxu0
        %v1918 = vadd.f32 %v1721, %v1917
        %1919 = vmatmul.bf16.gmra.mxu0 %v1751
        %v1920 = vpop.f32.mrf.mxu0
        %v1921 = vadd.f32 %v1726, %v1920
        %v1922 = vpop.f32.mrf.mxu0
        %v1923 = vadd.f32 %v1731, %v1922
        %1924 = vmatmul.bf16.gmra.mxu0 %v1754
        %v1925 = vpop.f32.mrf.mxu0
        %v1926 = vadd.f32 %v1736, %v1925
        %v1927 = vpop.f32.mrf.mxu0
        %v1928 = vadd.f32 %v1741, %v1927
        %1929 = vdwg.mxu0
        %1930 = vmatpush.bf16.msra.mxu0 0
        %1931 = vmatpush.bf16.msra.mxu0 0
        %1932 = vmatpush.bf16.msra.mxu0 0
        %1933 = vmatpush.bf16.msra.mxu0 0
        %1934 = vmatpush.bf16.msra.mxu0 0
        %1935 = vmatpush.bf16.msra.mxu0 0
        %1936 = vmatpush.bf16.msra.mxu0 %v1681
        %1937 = vmatpush.bf16.msra.mxu0 %v1673
        %1938 = vmatmul.bf16.gmra.mxu0 %v1745
        %v1939 = vpop.f32.mrf.mxu0
        %v1940 = vadd.f32 %v1706, %v1939
        %v1941 = vpop.f32.mrf.mxu0
        %v1942 = vadd.f32 %v1711, %v1941
        %1943 = vmatmul.bf16.gmra.mxu0 %v1748
        %v1944 = vpop.f32.mrf.mxu0
        %v1945 = vadd.f32 %v1716, %v1944
        %v1946 = vpop.f32.mrf.mxu0
        %v1947 = vadd.f32 %v1721, %v1946
        %1948 = vmatmul.bf16.gmra.mxu0 %v1751
        %v1949 = vpop.f32.mrf.mxu0
        %v1950 = vadd.f32 %v1726, %v1949
        %v1951 = vpop.f32.mrf.mxu0
        %v1952 = vadd.f32 %v1731, %v1951
        %1953 = vmatmul.bf16.gmra.mxu0 %v1754
        %v1954 = vpop.f32.mrf.mxu0
        %v1955 = vadd.f32 %v1736, %v1954
        %v1956 = vpop.f32.mrf.mxu0
        %v1957 = vadd.f32 %v1741, %v1956
        %1958 = vdwg.mxu0
        %1959 = vmatpush.bf16.msra.mxu0 0
        %1960 = vmatpush.bf16.msra.mxu0 0
        %1961 = vmatpush.bf16.msra.mxu0 0
        %1962 = vmatpush.bf16.msra.mxu0 0
        %1963 = vmatpush.bf16.msra.mxu0 0
        %1964 = vmatpush.bf16.msra.mxu0 0
        %1965 = vmatpush.bf16.msra.mxu0 %v1682
        %1966 = vmatpush.bf16.msra.mxu0 %v1674
        %1967 = vmatmul.bf16.gmra.mxu0 %v1745
        %v1968 = vpop.f32.mrf.mxu0
        %v1969 = vadd.f32 %v1706, %v1968
        %v1970 = vpop.f32.mrf.mxu0
        %v1971 = vadd.f32 %v1711, %v1970
        %1972 = vmatmul.bf16.gmra.mxu0 %v1748
        %v1973 = vpop.f32.mrf.mxu0
        %v1974 = vadd.f32 %v1716, %v1973
        %v1975 = vpop.f32.mrf.mxu0
        %v1976 = vadd.f32 %v1721, %v1975
        %1977 = vmatmul.bf16.gmra.mxu0 %v1751
        %v1978 = vpop.f32.mrf.mxu0
        %v1979 = vadd.f32 %v1726, %v1978
        %v1980 = vpop.f32.mrf.mxu0
        %v1981 = vadd.f32 %v1731, %v1980
        %1982 = vmatmul.bf16.gmra.mxu0 %v1754
        %v1983 = vpop.f32.mrf.mxu0
        %v1984 = vadd.f32 %v1736, %v1983
        %v1985 = vpop.f32.mrf.mxu0
        %v1986 = vadd.f32 %v1741, %v1985
        %1987 = vdwg.mxu0
        %v1988 = vadd.f32 %v422, %v1766
        %v1989 = vadd.f32 %v423, %v1795
        %v1990 = vadd.f32 %v424, %v1824
        %v1991 = vadd.f32 %v425, %v1853
        %v1992 = vadd.f32 %v426, %v1882
        %v1993 = vadd.f32 %v427, %v1911
        %v1994 = vadd.f32 %v428, %v1940
        %v1995 = vadd.f32 %v429, %v1969
        %v1996 = vadd.f32 %v430, %v1768
        %v1997 = vadd.f32 %v431, %v1797
        %v1998 = vadd.f32 %v432, %v1826
        %v1999 = vadd.f32 %v433, %v1855
        %v2000 = vadd.f32 %v434, %v1884
        %v2001 = vadd.f32 %v435, %v1913
        %v2002 = vadd.f32 %v436, %v1942
        %v2003 = vadd.f32 %v437, %v1971
        %v2004 = vadd.f32 %v438, %v1771
        %v2005 = vadd.f32 %v439, %v1800
        %v2006 = vadd.f32 %v440, %v1829
        %v2007 = vadd.f32 %v441, %v1858
        %v2008 = vadd.f32 %v442, %v1887
        %v2009 = vadd.f32 %v443, %v1916
        %v2010 = vadd.f32 %v444, %v1945
        %v2011 = vadd.f32 %v445, %v1974
        %v2012 = vadd.f32 %v446, %v1773
        %v2013 = vadd.f32 %v447, %v1802
        %v2014 = vadd.f32 %v448, %v1831
        %v2015 = vadd.f32 %v449, %v1860
        %v2016 = vadd.f32 %v450, %v1889
        %v2017 = vadd.f32 %v451, %v1918
        %v2018 = vadd.f32 %v452, %v1947
        %v2019 = vadd.f32 %v453, %v1976
        %v2020 = vadd.f32 %v454, %v1776
        %v2021 = vadd.f32 %v455, %v1805
        %v2022 = vadd.f32 %v456, %v1834
        %v2023 = vadd.f32 %v457, %v1863
        %v2024 = vadd.f32 %v458, %v1892
        %v2025 = vadd.f32 %v459, %v1921
        %v2026 = vadd.f32 %v460, %v1950
        %v2027 = vadd.f32 %v461, %v1979
        %v2028 = vadd.f32 %v462, %v1778
        %v2029 = vadd.f32 %v463, %v1807
        %v2030 = vadd.f32 %v464, %v1836
        %v2031 = vadd.f32 %v465, %v1865
        %v2032 = vadd.f32 %v466, %v1894
        %v2033 = vadd.f32 %v467, %v1923
        %v2034 = vadd.f32 %v468, %v1952
        %v2035 = vadd.f32 %v469, %v1981
        %v2036 = vadd.f32 %v470, %v1781
        %v2037 = vadd.f32 %v471, %v1810
        %v2038 = vadd.f32 %v472, %v1839
        %v2039 = vadd.f32 %v473, %v1868
        %v2040 = vadd.f32 %v474, %v1897
        %v2041 = vadd.f32 %v475, %v1926
        %v2042 = vadd.f32 %v476, %v1955
        %v2043 = vadd.f32 %v477, %v1984
        %v2044 = vadd.f32 %v478, %v1783
        %v2045 = vadd.f32 %v479, %v1812
        %v2046 = vadd.f32 %v480, %v1841
        %v2047 = vadd.f32 %v481, %v1870
        %v2048 = vadd.f32 %v482, %v1899
        %v2049 = vadd.f32 %v483, %v1928
        %v2050 = vadd.f32 %v484, %v1957
        %v2051 = vadd.f32 %v485, %v1986
        %v2052 = vadd.f32 %v1988, %v1996
        %v2053 = vadd.f32 %v2052, %v2004
        %v2054 = vadd.f32 %v2053, %v2012
        %v2055 = vadd.f32 %v2054, %v2020
        %v2056 = vadd.f32 %v2055, %v2028
        %v2057 = vadd.f32 %v2056, %v2036
        %v2058 = vadd.f32 %v2057, %v2044
        %v2059 = vrot.slane %v2058, 4
        %v2060 = vadd.f32 %v2058, %v2059
        %v2061 = vrot.slane %v2060, 2
        %v2062 = vadd.f32 %v2060, %v2061
        %v2063 = vrot.slane %v2062, 1
        %v2064 = vadd.f32 %v2062, %v2063
        %v2065 = vadd.f32 %v1989, %v1997
        %v2066 = vadd.f32 %v2065, %v2005
        %v2067 = vadd.f32 %v2066, %v2013
        %v2068 = vadd.f32 %v2067, %v2021
        %v2069 = vadd.f32 %v2068, %v2029
        %v2070 = vadd.f32 %v2069, %v2037
        %v2071 = vadd.f32 %v2070, %v2045
        %v2072 = vrot.slane %v2071, 4
        %v2073 = vadd.f32 %v2071, %v2072
        %v2074 = vrot.slane %v2073, 2
        %v2075 = vadd.f32 %v2073, %v2074
        %v2076 = vrot.slane %v2075, 1
        %v2077 = vadd.f32 %v2075, %v2076
        %v2078 = vadd.f32 %v1990, %v1998
        %v2079 = vadd.f32 %v2078, %v2006
        %v2080 = vadd.f32 %v2079, %v2014
        %v2081 = vadd.f32 %v2080, %v2022
        %v2082 = vadd.f32 %v2081, %v2030
        %v2083 = vadd.f32 %v2082, %v2038
        %v2084 = vadd.f32 %v2083, %v2046
        %v2085 = vrot.slane %v2084, 4
        %v2086 = vadd.f32 %v2084, %v2085
        %v2087 = vrot.slane %v2086, 2
        %v2088 = vadd.f32 %v2086, %v2087
        %v2089 = vrot.slane %v2088, 1
        %v2090 = vadd.f32 %v2088, %v2089
        %v2091 = vadd.f32 %v1991, %v1999
        %v2092 = vadd.f32 %v2091, %v2007
        %v2093 = vadd.f32 %v2092, %v2015
        %v2094 = vadd.f32 %v2093, %v2023
        %v2095 = vadd.f32 %v2094, %v2031
        %v2096 = vadd.f32 %v2095, %v2039
        %v2097 = vadd.f32 %v2096, %v2047
        %v2098 = vrot.slane %v2097, 4
        %v2099 = vadd.f32 %v2097, %v2098
        %v2100 = vrot.slane %v2099, 2
        %v2101 = vadd.f32 %v2099, %v2100
        %v2102 = vrot.slane %v2101, 1
        %v2103 = vadd.f32 %v2101, %v2102
        %v2104 = vadd.f32 %v1992, %v2000
        %v2105 = vadd.f32 %v2104, %v2008
        %v2106 = vadd.f32 %v2105, %v2016
        %v2107 = vadd.f32 %v2106, %v2024
        %v2108 = vadd.f32 %v2107, %v2032
        %v2109 = vadd.f32 %v2108, %v2040
        %v2110 = vadd.f32 %v2109, %v2048
        %v2111 = vrot.slane %v2110, 4
        %v2112 = vadd.f32 %v2110, %v2111
        %v2113 = vrot.slane %v2112, 2
        %v2114 = vadd.f32 %v2112, %v2113
        %v2115 = vrot.slane %v2114, 1
        %v2116 = vadd.f32 %v2114, %v2115
        %v2117 = vadd.f32 %v1993, %v2001
        %v2118 = vadd.f32 %v2117, %v2009
        %v2119 = vadd.f32 %v2118, %v2017
        %v2120 = vadd.f32 %v2119, %v2025
        %v2121 = vadd.f32 %v2120, %v2033
        %v2122 = vadd.f32 %v2121, %v2041
        %v2123 = vadd.f32 %v2122, %v2049
        %v2124 = vrot.slane %v2123, 4
        %v2125 = vadd.f32 %v2123, %v2124
        %v2126 = vrot.slane %v2125, 2
        %v2127 = vadd.f32 %v2125, %v2126
        %v2128 = vrot.slane %v2127, 1
        %v2129 = vadd.f32 %v2127, %v2128
        %v2130 = vadd.f32 %v1994, %v2002
        %v2131 = vadd.f32 %v2130, %v2010
        %v2132 = vadd.f32 %v2131, %v2018
        %v2133 = vadd.f32 %v2132, %v2026
        %v2134 = vadd.f32 %v2133, %v2034
        %v2135 = vadd.f32 %v2134, %v2042
        %v2136 = vadd.f32 %v2135, %v2050
        %v2137 = vrot.slane %v2136, 4
        %v2138 = vadd.f32 %v2136, %v2137
        %v2139 = vrot.slane %v2138, 2
        %v2140 = vadd.f32 %v2138, %v2139
        %v2141 = vrot.slane %v2140, 1
        %v2142 = vadd.f32 %v2140, %v2141
        %v2143 = vadd.f32 %v1995, %v2003
        %v2144 = vadd.f32 %v2143, %v2011
        %v2145 = vadd.f32 %v2144, %v2019
        %v2146 = vadd.f32 %v2145, %v2027
        %v2147 = vadd.f32 %v2146, %v2035
        %v2148 = vadd.f32 %v2147, %v2043
        %v2149 = vadd.f32 %v2148, %v2051
        %v2150 = vrot.slane %v2149, 4
        %v2151 = vadd.f32 %v2149, %v2150
        %v2152 = vrot.slane %v2151, 2
        %v2153 = vadd.f32 %v2151, %v2152
        %v2154 = vrot.slane %v2153, 1
        %v2155 = vadd.f32 %v2153, %v2154
        %v2156 = vrcp.pop 64.0
        %v2157 = vmul.f32 64.0, %v2156
        %v2158 = vsub.f32 1.0, %v2157
        %v2159 = vmul.f32 %v2156, %v2158
        %v2160 = vadd.f32 %v2156, %v2159
        %vm2161 = vweird.f32 %v2156
        %v2162 = vsel %vm2161, %v2156, %v2160
        %v2163 = vmul.f32 %v2064, %v2162
        %v2164 = vmul.f32 %v2077, %v2162
        %v2165 = vmul.f32 %v2090, %v2162
        %v2166 = vmul.f32 %v2103, %v2162
        %v2167 = vmul.f32 %v2116, %v2162
        %v2168 = vmul.f32 %v2129, %v2162
        %v2169 = vmul.f32 %v2142, %v2162
        %v2170 = vmul.f32 %v2155, %v2162
        %v2171 = vsub.f32 %v1988, %v2163
        %v2172 = vsub.f32 %v1989, %v2164
        %v2173 = vsub.f32 %v1990, %v2165
        %v2174 = vsub.f32 %v1991, %v2166
        %v2175 = vsub.f32 %v1992, %v2167
        %v2176 = vsub.f32 %v1993, %v2168
        %v2177 = vsub.f32 %v1994, %v2169
        %v2178 = vsub.f32 %v1995, %v2170
        %v2179 = vsub.f32 %v1996, %v2163
        %v2180 = vsub.f32 %v1997, %v2164
        %v2181 = vsub.f32 %v1998, %v2165
        %v2182 = vsub.f32 %v1999, %v2166
        %v2183 = vsub.f32 %v2000, %v2167
        %v2184 = vsub.f32 %v2001, %v2168
        %v2185 = vsub.f32 %v2002, %v2169
        %v2186 = vsub.f32 %v2003, %v2170
        %v2187 = vsub.f32 %v2004, %v2163
        %v2188 = vsub.f32 %v2005, %v2164
        %v2189 = vsub.f32 %v2006, %v2165
        %v2190 = vsub.f32 %v2007, %v2166
        %v2191 = vsub.f32 %v2008, %v2167
        %v2192 = vsub.f32 %v2009, %v2168
        %v2193 = vsub.f32 %v2010, %v2169
        %v2194 = vsub.f32 %v2011, %v2170
        %v2195 = vsub.f32 %v2012, %v2163
        %v2196 = vsub.f32 %v2013, %v2164
        %v2197 = vsub.f32 %v2014, %v2165
        %v2198 = vsub.f32 %v2015, %v2166
        %v2199 = vsub.f32 %v2016, %v2167
        %v2200 = vsub.f32 %v2017, %v2168
        %v2201 = vsub.f32 %v2018, %v2169
        %v2202 = vsub.f32 %v2019, %v2170
        %v2203 = vsub.f32 %v2020, %v2163
        %v2204 = vsub.f32 %v2021, %v2164
        %v2205 = vsub.f32 %v2022, %v2165
        %v2206 = vsub.f32 %v2023, %v2166
        %v2207 = vsub.f32 %v2024, %v2167
        %v2208 = vsub.f32 %v2025, %v2168
        %v2209 = vsub.f32 %v2026, %v2169
        %v2210 = vsub.f32 %v2027, %v2170
        %v2211 = vsub.f32 %v2028, %v2163
        %v2212 = vsub.f32 %v2029, %v2164
        %v2213 = vsub.f32 %v2030, %v2165
        %v2214 = vsub.f32 %v2031, %v2166
        %v2215 = vsub.f32 %v2032, %v2167
        %v2216 = vsub.f32 %v2033, %v2168
        %v2217 = vsub.f32 %v2034, %v2169
        %v2218 = vsub.f32 %v2035, %v2170
        %v2219 = vsub.f32 %v2036, %v2163
        %v2220 = vsub.f32 %v2037, %v2164
        %v2221 = vsub.f32 %v2038, %v2165
        %v2222 = vsub.f32 %v2039, %v2166
        %v2223 = vsub.f32 %v2040, %v2167
        %v2224 = vsub.f32 %v2041, %v2168
        %v2225 = vsub.f32 %v2042, %v2169
        %v2226 = vsub.f32 %v2043, %v2170
        %v2227 = vsub.f32 %v2044, %v2163
        %v2228 = vsub.f32 %v2045, %v2164
        %v2229 = vsub.f32 %v2046, %v2165
        %v2230 = vsub.f32 %v2047, %v2166
        %v2231 = vsub.f32 %v2048, %v2167
        %v2232 = vsub.f32 %v2049, %v2168
        %v2233 = vsub.f32 %v2050, %v2169
        %v2234 = vsub.f32 %v2051, %v2170
        %v2235 = vmul.f32 %v2171, %v2171
        %v2236 = vmul.f32 %v2172, %v2172
        %v2237 = vmul.f32 %v2173, %v2173
        %v2238 = vmul.f32 %v2174, %v2174
        %v2239 = vmul.f32 %v2175, %v2175
        %v2240 = vmul.f32 %v2176, %v2176
        %v2241 = vmul.f32 %v2177, %v2177
        %v2242 = vmul.f32 %v2178, %v2178
        %v2243 = vmul.f32 %v2179, %v2179
        %v2244 = vmul.f32 %v2180, %v2180
        %v2245 = vmul.f32 %v2181, %v2181
        %v2246 = vmul.f32 %v2182, %v2182
        %v2247 = vmul.f32 %v2183, %v2183
        %v2248 = vmul.f32 %v2184, %v2184
        %v2249 = vmul.f32 %v2185, %v2185
        %v2250 = vmul.f32 %v2186, %v2186
        %v2251 = vmul.f32 %v2187, %v2187
        %v2252 = vmul.f32 %v2188, %v2188
        %v2253 = vmul.f32 %v2189, %v2189
        %v2254 = vmul.f32 %v2190, %v2190
        %v2255 = vmul.f32 %v2191, %v2191
        %v2256 = vmul.f32 %v2192, %v2192
        %v2257 = vmul.f32 %v2193, %v2193
        %v2258 = vmul.f32 %v2194, %v2194
        %v2259 = vmul.f32 %v2195, %v2195
        %v2260 = vmul.f32 %v2196, %v2196
        %v2261 = vmul.f32 %v2197, %v2197
        %v2262 = vmul.f32 %v2198, %v2198
        %v2263 = vmul.f32 %v2199, %v2199
        %v2264 = vmul.f32 %v2200, %v2200
        %v2265 = vmul.f32 %v2201, %v2201
        %v2266 = vmul.f32 %v2202, %v2202
        %v2267 = vmul.f32 %v2203, %v2203
        %v2268 = vmul.f32 %v2204, %v2204
        %v2269 = vmul.f32 %v2205, %v2205
        %v2270 = vmul.f32 %v2206, %v2206
        %v2271 = vmul.f32 %v2207, %v2207
        %v2272 = vmul.f32 %v2208, %v2208
        %v2273 = vmul.f32 %v2209, %v2209
        %v2274 = vmul.f32 %v2210, %v2210
        %v2275 = vmul.f32 %v2211, %v2211
        %v2276 = vmul.f32 %v2212, %v2212
        %v2277 = vmul.f32 %v2213, %v2213
        %v2278 = vmul.f32 %v2214, %v2214
        %v2279 = vmul.f32 %v2215, %v2215
        %v2280 = vmul.f32 %v2216, %v2216
        %v2281 = vmul.f32 %v2217, %v2217
        %v2282 = vmul.f32 %v2218, %v2218
        %v2283 = vmul.f32 %v2219, %v2219
        %v2284 = vmul.f32 %v2220, %v2220
        %v2285 = vmul.f32 %v2221, %v2221
        %v2286 = vmul.f32 %v2222, %v2222
        %v2287 = vmul.f32 %v2223, %v2223
        %v2288 = vmul.f32 %v2224, %v2224
        %v2289 = vmul.f32 %v2225, %v2225
        %v2290 = vmul.f32 %v2226, %v2226
        %v2291 = vmul.f32 %v2227, %v2227
        %v2292 = vmul.f32 %v2228, %v2228
        %v2293 = vmul.f32 %v2229, %v2229
        %v2294 = vmul.f32 %v2230, %v2230
        %v2295 = vmul.f32 %v2231, %v2231
        %v2296 = vmul.f32 %v2232, %v2232
        %v2297 = vmul.f32 %v2233, %v2233
        %v2298 = vmul.f32 %v2234, %v2234
        %v2299 = vadd.f32 %v2235, %v2243
        %v2300 = vadd.f32 %v2299, %v2251
        %v2301 = vadd.f32 %v2300, %v2259
        %v2302 = vadd.f32 %v2301, %v2267
        %v2303 = vadd.f32 %v2302, %v2275
        %v2304 = vadd.f32 %v2303, %v2283
        %v2305 = vadd.f32 %v2304, %v2291
        %v2306 = vrot.slane %v2305, 4
        %v2307 = vadd.f32 %v2305, %v2306
        %v2308 = vrot.slane %v2307, 2
        %v2309 = vadd.f32 %v2307, %v2308
        %v2310 = vrot.slane %v2309, 1
        %v2311 = vadd.f32 %v2309, %v2310
        %v2312 = vadd.f32 %v2236, %v2244
        %v2313 = vadd.f32 %v2312, %v2252
        %v2314 = vadd.f32 %v2313, %v2260
        %v2315 = vadd.f32 %v2314, %v2268
        %v2316 = vadd.f32 %v2315, %v2276
        %v2317 = vadd.f32 %v2316, %v2284
        %v2318 = vadd.f32 %v2317, %v2292
        %v2319 = vrot.slane %v2318, 4
        %v2320 = vadd.f32 %v2318, %v2319
        %v2321 = vrot.slane %v2320, 2
        %v2322 = vadd.f32 %v2320, %v2321
        %v2323 = vrot.slane %v2322, 1
        %v2324 = vadd.f32 %v2322, %v2323
        %v2325 = vadd.f32 %v2237, %v2245
        %v2326 = vadd.f32 %v2325, %v2253
        %v2327 = vadd.f32 %v2326, %v2261
        %v2328 = vadd.f32 %v2327, %v2269
        %v2329 = vadd.f32 %v2328, %v2277
        %v2330 = vadd.f32 %v2329, %v2285
        %v2331 = vadd.f32 %v2330, %v2293
        %v2332 = vrot.slane %v2331, 4
        %v2333 = vadd.f32 %v2331, %v2332
        %v2334 = vrot.slane %v2333, 2
        %v2335 = vadd.f32 %v2333, %v2334
        %v2336 = vrot.slane %v2335, 1
        %v2337 = vadd.f32 %v2335, %v2336
        %v2338 = vadd.f32 %v2238, %v2246
        %v2339 = vadd.f32 %v2338, %v2254
        %v2340 = vadd.f32 %v2339, %v2262
        %v2341 = vadd.f32 %v2340, %v2270
        %v2342 = vadd.f32 %v2341, %v2278
        %v2343 = vadd.f32 %v2342, %v2286
        %v2344 = vadd.f32 %v2343, %v2294
        %v2345 = vrot.slane %v2344, 4
        %v2346 = vadd.f32 %v2344, %v2345
        %v2347 = vrot.slane %v2346, 2
        %v2348 = vadd.f32 %v2346, %v2347
        %v2349 = vrot.slane %v2348, 1
        %v2350 = vadd.f32 %v2348, %v2349
        %v2351 = vadd.f32 %v2239, %v2247
        %v2352 = vadd.f32 %v2351, %v2255
        %v2353 = vadd.f32 %v2352, %v2263
        %v2354 = vadd.f32 %v2353, %v2271
        %v2355 = vadd.f32 %v2354, %v2279
        %v2356 = vadd.f32 %v2355, %v2287
        %v2357 = vadd.f32 %v2356, %v2295
        %v2358 = vrot.slane %v2357, 4
        %v2359 = vadd.f32 %v2357, %v2358
        %v2360 = vrot.slane %v2359, 2
        %v2361 = vadd.f32 %v2359, %v2360
        %v2362 = vrot.slane %v2361, 1
        %v2363 = vadd.f32 %v2361, %v2362
        %v2364 = vadd.f32 %v2240, %v2248
        %v2365 = vadd.f32 %v2364, %v2256
        %v2366 = vadd.f32 %v2365, %v2264
        %v2367 = vadd.f32 %v2366, %v2272
        %v2368 = vadd.f32 %v2367, %v2280
        %v2369 = vadd.f32 %v2368, %v2288
        %v2370 = vadd.f32 %v2369, %v2296
        %v2371 = vrot.slane %v2370, 4
        %v2372 = vadd.f32 %v2370, %v2371
        %v2373 = vrot.slane %v2372, 2
        %v2374 = vadd.f32 %v2372, %v2373
        %v2375 = vrot.slane %v2374, 1
        %v2376 = vadd.f32 %v2374, %v2375
        %v2377 = vadd.f32 %v2241, %v2249
        %v2378 = vadd.f32 %v2377, %v2257
        %v2379 = vadd.f32 %v2378, %v2265
        %v2380 = vadd.f32 %v2379, %v2273
        %v2381 = vadd.f32 %v2380, %v2281
        %v2382 = vadd.f32 %v2381, %v2289
        %v2383 = vadd.f32 %v2382, %v2297
        %v2384 = vrot.slane %v2383, 4
        %v2385 = vadd.f32 %v2383, %v2384
        %v2386 = vrot.slane %v2385, 2
        %v2387 = vadd.f32 %v2385, %v2386
        %v2388 = vrot.slane %v2387, 1
        %v2389 = vadd.f32 %v2387, %v2388
        %v2390 = vadd.f32 %v2242, %v2250
        %v2391 = vadd.f32 %v2390, %v2258
        %v2392 = vadd.f32 %v2391, %v2266
        %v2393 = vadd.f32 %v2392, %v2274
        %v2394 = vadd.f32 %v2393, %v2282
        %v2395 = vadd.f32 %v2394, %v2290
        %v2396 = vadd.f32 %v2395, %v2298
        %v2397 = vrot.slane %v2396, 4
        %v2398 = vadd.f32 %v2396, %v2397
        %v2399 = vrot.slane %v2398, 2
        %v2400 = vadd.f32 %v2398, %v2399
        %v2401 = vrot.slane %v2400, 1
        %v2402 = vadd.f32 %v2400, %v2401
        %v2403 = vmul.f32 %v2311, %v2162
        %v2404 = vmul.f32 %v2324, %v2162
        %v2405 = vmul.f32 %v2337, %v2162
        %v2406 = vmul.f32 %v2350, %v2162
        %v2407 = vmul.f32 %v2363, %v2162
        %v2408 = vmul.f32 %v2376, %v2162
        %v2409 = vmul.f32 %v2389, %v2162
        %v2410 = vmul.f32 %v2402, %v2162
        %v2411 = vadd.f32 %v2403, 1e-05
        %v2412 = vadd.f32 %v2404, 1e-05
        %v2413 = vadd.f32 %v2405, 1e-05
        %v2414 = vadd.f32 %v2406, 1e-05
        %v2415 = vadd.f32 %v2407, 1e-05
        %v2416 = vadd.f32 %v2408, 1e-05
        %v2417 = vadd.f32 %v2409, 1e-05
        %v2418 = vadd.f32 %v2410, 1e-05
        %v2419 = vrsqrt.pop %v2411
        %v2420 = vmul.f32 %v2419, %v2411
        %v2421 = vmul.f32 %v2420, %v2419
        %v2422 = vmul.f32 0.5, %v2421
        %v2423 = vsub.f32 1.5, %v2422
        %v2424 = vmul.f32 %v2419, %v2423
        %vm2425 = vweird.f32 %v2411
        %vm2426 = vweird.f32 %v2419
        %vm2427 = vmor %vm2425, %vm2426
        %v2428 = vsel %vm2427, %v2419, %v2424
        %v2429 = vrsqrt.pop %v2412
        %v2430 = vmul.f32 %v2429, %v2412
        %v2431 = vmul.f32 %v2430, %v2429
        %v2432 = vmul.f32 0.5, %v2431
        %v2433 = vsub.f32 1.5, %v2432
        %v2434 = vmul.f32 %v2429, %v2433
        %vm2435 = vweird.f32 %v2412
        %vm2436 = vweird.f32 %v2429
        %vm2437 = vmor %vm2435, %vm2436
        %v2438 = vsel %vm2437, %v2429, %v2434
        %v2439 = vrsqrt.pop %v2413
        %v2440 = vmul.f32 %v2439, %v2413
        %v2441 = vmul.f32 %v2440, %v2439
        %v2442 = vmul.f32 0.5, %v2441
        %v2443 = vsub.f32 1.5, %v2442
        %v2444 = vmul.f32 %v2439, %v2443
        %vm2445 = vweird.f32 %v2413
        %vm2446 = vweird.f32 %v2439
        %vm2447 = vmor %vm2445, %vm2446
        %v2448 = vsel %vm2447, %v2439, %v2444
        %v2449 = vrsqrt.pop %v2414
        %v2450 = vmul.f32 %v2449, %v2414
        %v2451 = vmul.f32 %v2450, %v2449
        %v2452 = vmul.f32 0.5, %v2451
        %v2453 = vsub.f32 1.5, %v2452
        %v2454 = vmul.f32 %v2449, %v2453
        %vm2455 = vweird.f32 %v2414
        %vm2456 = vweird.f32 %v2449
        %vm2457 = vmor %vm2455, %vm2456
        %v2458 = vsel %vm2457, %v2449, %v2454
        %v2459 = vrsqrt.pop %v2415
        %v2460 = vmul.f32 %v2459, %v2415
        %v2461 = vmul.f32 %v2460, %v2459
        %v2462 = vmul.f32 0.5, %v2461
        %v2463 = vsub.f32 1.5, %v2462
        %v2464 = vmul.f32 %v2459, %v2463
        %vm2465 = vweird.f32 %v2415
        %vm2466 = vweird.f32 %v2459
        %vm2467 = vmor %vm2465, %vm2466
        %v2468 = vsel %vm2467, %v2459, %v2464
        %v2469 = vrsqrt.pop %v2416
        %v2470 = vmul.f32 %v2469, %v2416
        %v2471 = vmul.f32 %v2470, %v2469
        %v2472 = vmul.f32 0.5, %v2471
        %v2473 = vsub.f32 1.5, %v2472
        %v2474 = vmul.f32 %v2469, %v2473
        %vm2475 = vweird.f32 %v2416
        %vm2476 = vweird.f32 %v2469
        %vm2477 = vmor %vm2475, %vm2476
        %v2478 = vsel %vm2477, %v2469, %v2474
        %v2479 = vrsqrt.pop %v2417
        %v2480 = vmul.f32 %v2479, %v2417
        %v2481 = vmul.f32 %v2480, %v2479
        %v2482 = vmul.f32 0.5, %v2481
        %v2483 = vsub.f32 1.5, %v2482
        %v2484 = vmul.f32 %v2479, %v2483
        %vm2485 = vweird.f32 %v2417
        %vm2486 = vweird.f32 %v2479
        %vm2487 = vmor %vm2485, %vm2486
        %v2488 = vsel %vm2487, %v2479, %v2484
        %v2489 = vrsqrt.pop %v2418
        %v2490 = vmul.f32 %v2489, %v2418
        %v2491 = vmul.f32 %v2490, %v2489
        %v2492 = vmul.f32 0.5, %v2491
        %v2493 = vsub.f32 1.5, %v2492
        %v2494 = vmul.f32 %v2489, %v2493
        %vm2495 = vweird.f32 %v2418
        %vm2496 = vweird.f32 %v2489
        %vm2497 = vmor %vm2495, %vm2496
        %v2498 = vsel %vm2497, %v2489, %v2494
        %v2499 = vmul.f32 %v2171, %v2428
        %v2500 = vmul.f32 %v2172, %v2438
        %v2501 = vmul.f32 %v2173, %v2448
        %v2502 = vmul.f32 %v2174, %v2458
        %v2503 = vmul.f32 %v2175, %v2468
        %v2504 = vmul.f32 %v2176, %v2478
        %v2505 = vmul.f32 %v2177, %v2488
        %v2506 = vmul.f32 %v2178, %v2498
        %v2507 = vmul.f32 %v2179, %v2428
        %v2508 = vmul.f32 %v2180, %v2438
        %v2509 = vmul.f32 %v2181, %v2448
        %v2510 = vmul.f32 %v2182, %v2458
        %v2511 = vmul.f32 %v2183, %v2468
        %v2512 = vmul.f32 %v2184, %v2478
        %v2513 = vmul.f32 %v2185, %v2488
        %v2514 = vmul.f32 %v2186, %v2498
        %v2515 = vmul.f32 %v2187, %v2428
        %v2516 = vmul.f32 %v2188, %v2438
        %v2517 = vmul.f32 %v2189, %v2448
        %v2518 = vmul.f32 %v2190, %v2458
        %v2519 = vmul.f32 %v2191, %v2468
        %v2520 = vmul.f32 %v2192, %v2478
        %v2521 = vmul.f32 %v2193, %v2488
        %v2522 = vmul.f32 %v2194, %v2498
        %v2523 = vmul.f32 %v2195, %v2428
        %v2524 = vmul.f32 %v2196, %v2438
        %v2525 = vmul.f32 %v2197, %v2448
        %v2526 = vmul.f32 %v2198, %v2458
        %v2527 = vmul.f32 %v2199, %v2468
        %v2528 = vmul.f32 %v2200, %v2478
        %v2529 = vmul.f32 %v2201, %v2488
        %v2530 = vmul.f32 %v2202, %v2498
        %v2531 = vmul.f32 %v2203, %v2428
        %v2532 = vmul.f32 %v2204, %v2438
        %v2533 = vmul.f32 %v2205, %v2448
        %v2534 = vmul.f32 %v2206, %v2458
        %v2535 = vmul.f32 %v2207, %v2468
        %v2536 = vmul.f32 %v2208, %v2478
        %v2537 = vmul.f32 %v2209, %v2488
        %v2538 = vmul.f32 %v2210, %v2498
        %v2539 = vmul.f32 %v2211, %v2428
        %v2540 = vmul.f32 %v2212, %v2438
        %v2541 = vmul.f32 %v2213, %v2448
        %v2542 = vmul.f32 %v2214, %v2458
        %v2543 = vmul.f32 %v2215, %v2468
        %v2544 = vmul.f32 %v2216, %v2478
        %v2545 = vmul.f32 %v2217, %v2488
        %v2546 = vmul.f32 %v2218, %v2498
        %v2547 = vmul.f32 %v2219, %v2428
        %v2548 = vmul.f32 %v2220, %v2438
        %v2549 = vmul.f32 %v2221, %v2448
        %v2550 = vmul.f32 %v2222, %v2458
        %v2551 = vmul.f32 %v2223, %v2468
        %v2552 = vmul.f32 %v2224, %v2478
        %v2553 = vmul.f32 %v2225, %v2488
        %v2554 = vmul.f32 %v2226, %v2498
        %v2555 = vmul.f32 %v2227, %v2428
        %v2556 = vmul.f32 %v2228, %v2438
        %v2557 = vmul.f32 %v2229, %v2448
        %v2558 = vmul.f32 %v2230, %v2458
        %v2559 = vmul.f32 %v2231, %v2468
        %v2560 = vmul.f32 %v2232, %v2478
        %v2561 = vmul.f32 %v2233, %v2488
        %v2562 = vmul.f32 %v2234, %v2498
        %v2563 = vld [vmem:[%s5] sm:$0xff]
        %v2564 = vld [vmem:[%s5 + $0x8] sm:$0xff]
        %v2565 = vld [vmem:[%s5 + $0x10] sm:$0xff]
        %v2566 = vld [vmem:[%s5 + $0x18] sm:$0xff]
        %v2567 = vld [vmem:[%s5 + $0x20] sm:$0xff]
        %v2568 = vld [vmem:[%s5 + $0x28] sm:$0xff]
        %v2569 = vld [vmem:[%s5 + $0x30] sm:$0xff]
        %v2570 = vld [vmem:[%s5 + $0x38] sm:$0xff]
        %2572 = vset.pattern.permute.xlu0 0
        %2573 = vperm.xlu0 %2572, %v2563
        %v2574 = vpop.permute.xlu0 %2573
        %2577 = vset.pattern.permute.xlu0 0
        %2578 = vperm.xlu0 %2577, %v2564
        %v2579 = vpop.permute.xlu0 %2578
        %2582 = vset.pattern.permute.xlu0 0
        %2583 = vperm.xlu0 %2582, %v2565
        %v2584 = vpop.permute.xlu0 %2583
        %2587 = vset.pattern.permute.xlu0 0
        %2588 = vperm.xlu0 %2587, %v2566
        %v2589 = vpop.permute.xlu0 %2588
        %2592 = vset.pattern.permute.xlu0 0
        %2593 = vperm.xlu0 %2592, %v2567
        %v2594 = vpop.permute.xlu0 %2593
        %2597 = vset.pattern.permute.xlu0 0
        %2598 = vperm.xlu0 %2597, %v2568
        %v2599 = vpop.permute.xlu0 %2598
        %2602 = vset.pattern.permute.xlu0 0
        %2603 = vperm.xlu0 %2602, %v2569
        %v2604 = vpop.permute.xlu0 %2603
        %2607 = vset.pattern.permute.xlu0 0
        %2608 = vperm.xlu0 %2607, %v2570
        %v2609 = vpop.permute.xlu0 %2608
        %v2611 = vmul.f32 %v2499, %v2574
        %v2612 = vmul.f32 %v2500, %v2574
        %v2613 = vmul.f32 %v2501, %v2574
        %v2614 = vmul.f32 %v2502, %v2574
        %v2615 = vmul.f32 %v2503, %v2574
        %v2616 = vmul.f32 %v2504, %v2574
        %v2617 = vmul.f32 %v2505, %v2574
        %v2618 = vmul.f32 %v2506, %v2574
        %v2619 = vmul.f32 %v2507, %v2579
        %v2620 = vmul.f32 %v2508, %v2579
        %v2621 = vmul.f32 %v2509, %v2579
        %v2622 = vmul.f32 %v2510, %v2579
        %v2623 = vmul.f32 %v2511, %v2579
        %v2624 = vmul.f32 %v2512, %v2579
        %v2625 = vmul.f32 %v2513, %v2579
        %v2626 = vmul.f32 %v2514, %v2579
        %v2627 = vmul.f32 %v2515, %v2584
        %v2628 = vmul.f32 %v2516, %v2584
        %v2629 = vmul.f32 %v2517, %v2584
        %v2630 = vmul.f32 %v2518, %v2584
        %v2631 = vmul.f32 %v2519, %v2584
        %v2632 = vmul.f32 %v2520, %v2584
        %v2633 = vmul.f32 %v2521, %v2584
        %v2634 = vmul.f32 %v2522, %v2584
        %v2635 = vmul.f32 %v2523, %v2589
        %v2636 = vmul.f32 %v2524, %v2589
        %v2637 = vmul.f32 %v2525, %v2589
        %v2638 = vmul.f32 %v2526, %v2589
        %v2639 = vmul.f32 %v2527, %v2589
        %v2640 = vmul.f32 %v2528, %v2589
        %v2641 = vmul.f32 %v2529, %v2589
        %v2642 = vmul.f32 %v2530, %v2589
        %v2643 = vmul.f32 %v2531, %v2594
        %v2644 = vmul.f32 %v2532, %v2594
        %v2645 = vmul.f32 %v2533, %v2594
        %v2646 = vmul.f32 %v2534, %v2594
        %v2647 = vmul.f32 %v2535, %v2594
        %v2648 = vmul.f32 %v2536, %v2594
        %v2649 = vmul.f32 %v2537, %v2594
        %v2650 = vmul.f32 %v2538, %v2594
        %v2651 = vmul.f32 %v2539, %v2599
        %v2652 = vmul.f32 %v2540, %v2599
        %v2653 = vmul.f32 %v2541, %v2599
        %v2654 = vmul.f32 %v2542, %v2599
        %v2655 = vmul.f32 %v2543, %v2599
        %v2656 = vmul.f32 %v2544, %v2599
        %v2657 = vmul.f32 %v2545, %v2599
        %v2658 = vmul.f32 %v2546, %v2599
        %v2659 = vmul.f32 %v2547, %v2604
        %v2660 = vmul.f32 %v2548, %v2604
        %v2661 = vmul.f32 %v2549, %v2604
        %v2662 = vmul.f32 %v2550, %v2604
        %v2663 = vmul.f32 %v2551, %v2604
        %v2664 = vmul.f32 %v2552, %v2604
        %v2665 = vmul.f32 %v2553, %v2604
        %v2666 = vmul.f32 %v2554, %v2604
        %v2667 = vmul.f32 %v2555, %v2609
        %v2668 = vmul.f32 %v2556, %v2609
        %v2669 = vmul.f32 %v2557, %v2609
        %v2670 = vmul.f32 %v2558, %v2609
        %v2671 = vmul.f32 %v2559, %v2609
        %v2672 = vmul.f32 %v2560, %v2609
        %v2673 = vmul.f32 %v2561, %v2609
        %v2674 = vmul.f32 %v2562, %v2609
        %v2675 = vld [vmem:[%s6] sm:$0xff]
        %v2676 = vld [vmem:[%s6 + $0x8] sm:$0xff]
        %v2677 = vld [vmem:[%s6 + $0x10] sm:$0xff]
        %v2678 = vld [vmem:[%s6 + $0x18] sm:$0xff]
        %v2679 = vld [vmem:[%s6 + $0x20] sm:$0xff]
        %v2680 = vld [vmem:[%s6 + $0x28] sm:$0xff]
        %v2681 = vld [vmem:[%s6 + $0x30] sm:$0xff]
        %v2682 = vld [vmem:[%s6 + $0x38] sm:$0xff]
        %2684 = vset.pattern.permute.xlu0 0
        %2685 = vperm.xlu0 %2684, %v2675
        %v2686 = vpop.permute.xlu0 %2685
        %2689 = vset.pattern.permute.xlu0 0
        %2690 = vperm.xlu0 %2689, %v2676
        %v2691 = vpop.permute.xlu0 %2690
        %2694 = vset.pattern.permute.xlu0 0
        %2695 = vperm.xlu0 %2694, %v2677
        %v2696 = vpop.permute.xlu0 %2695
        %2699 = vset.pattern.permute.xlu0 0
        %2700 = vperm.xlu0 %2699, %v2678
        %v2701 = vpop.permute.xlu0 %2700
        %2704 = vset.pattern.permute.xlu0 0
        %2705 = vperm.xlu0 %2704, %v2679
        %v2706 = vpop.permute.xlu0 %2705
        %2709 = vset.pattern.permute.xlu0 0
        %2710 = vperm.xlu0 %2709, %v2680
        %v2711 = vpop.permute.xlu0 %2710
        %2714 = vset.pattern.permute.xlu0 0
        %2715 = vperm.xlu0 %2714, %v2681
        %v2716 = vpop.permute.xlu0 %2715
        %2719 = vset.pattern.permute.xlu0 0
        %2720 = vperm.xlu0 %2719, %v2682
        %v2721 = vpop.permute.xlu0 %2720
        %v2723 = vadd.f32 %v2611, %v2686
        %v2724 = vadd.f32 %v2612, %v2686
        %v2725 = vadd.f32 %v2613, %v2686
        %v2726 = vadd.f32 %v2614, %v2686
        %v2727 = vadd.f32 %v2615, %v2686
        %v2728 = vadd.f32 %v2616, %v2686
        %v2729 = vadd.f32 %v2617, %v2686
        %v2730 = vadd.f32 %v2618, %v2686
        %v2731 = vadd.f32 %v2619, %v2691
        %v2732 = vadd.f32 %v2620, %v2691
        %v2733 = vadd.f32 %v2621, %v2691
        %v2734 = vadd.f32 %v2622, %v2691
        %v2735 = vadd.f32 %v2623, %v2691
        %v2736 = vadd.f32 %v2624, %v2691
        %v2737 = vadd.f32 %v2625, %v2691
        %v2738 = vadd.f32 %v2626, %v2691
        %v2739 = vadd.f32 %v2627, %v2696
        %v2740 = vadd.f32 %v2628, %v2696
        %v2741 = vadd.f32 %v2629, %v2696
        %v2742 = vadd.f32 %v2630, %v2696
        %v2743 = vadd.f32 %v2631, %v2696
        %v2744 = vadd.f32 %v2632, %v2696
        %v2745 = vadd.f32 %v2633, %v2696
        %v2746 = vadd.f32 %v2634, %v2696
        %v2747 = vadd.f32 %v2635, %v2701
        %v2748 = vadd.f32 %v2636, %v2701
        %v2749 = vadd.f32 %v2637, %v2701
        %v2750 = vadd.f32 %v2638, %v2701
        %v2751 = vadd.f32 %v2639, %v2701
        %v2752 = vadd.f32 %v2640, %v2701
        %v2753 = vadd.f32 %v2641, %v2701
        %v2754 = vadd.f32 %v2642, %v2701
        %v2755 = vadd.f32 %v2643, %v2706
        %v2756 = vadd.f32 %v2644, %v2706
        %v2757 = vadd.f32 %v2645, %v2706
        %v2758 = vadd.f32 %v2646, %v2706
        %v2759 = vadd.f32 %v2647, %v2706
        %v2760 = vadd.f32 %v2648, %v2706
        %v2761 = vadd.f32 %v2649, %v2706
        %v2762 = vadd.f32 %v2650, %v2706
        %v2763 = vadd.f32 %v2651, %v2711
        %v2764 = vadd.f32 %v2652, %v2711
        %v2765 = vadd.f32 %v2653, %v2711
        %v2766 = vadd.f32 %v2654, %v2711
        %v2767 = vadd.f32 %v2655, %v2711
        %v2768 = vadd.f32 %v2656, %v2711
        %v2769 = vadd.f32 %v2657, %v2711
        %v2770 = vadd.f32 %v2658, %v2711
        %v2771 = vadd.f32 %v2659, %v2716
        %v2772 = vadd.f32 %v2660, %v2716
        %v2773 = vadd.f32 %v2661, %v2716
        %v2774 = vadd.f32 %v2662, %v2716
        %v2775 = vadd.f32 %v2663, %v2716
        %v2776 = vadd.f32 %v2664, %v2716
        %v2777 = vadd.f32 %v2665, %v2716
        %v2778 = vadd.f32 %v2666, %v2716
        %v2779 = vadd.f32 %v2667, %v2721
        %v2780 = vadd.f32 %v2668, %v2721
        %v2781 = vadd.f32 %v2669, %v2721
        %v2782 = vadd.f32 %v2670, %v2721
        %v2783 = vadd.f32 %v2671, %v2721
        %v2784 = vadd.f32 %v2672, %v2721
        %v2785 = vadd.f32 %v2673, %v2721
        %v2786 = vadd.f32 %v2674, %v2721
        %2787 = vst [vmem:[%s418] sm:$0xff] %v2723
        %2788 = vst [vmem:[%s418 + $0x8] sm:$0xff] %v2724
        %2789 = vst [vmem:[%s418 + $0x10] sm:$0xff] %v2725
        %2790 = vst [vmem:[%s418 + $0x18] sm:$0xff] %v2726
        %2791 = vst [vmem:[%s418 + $0x20] sm:$0xff] %v2727
        %2792 = vst [vmem:[%s418 + $0x28] sm:$0xff] %v2728
        %2793 = vst [vmem:[%s418 + $0x30] sm:$0xff] %v2729
        %2794 = vst [vmem:[%s418 + $0x38] sm:$0xff] %v2730
        %2795 = vst [vmem:[%s418 + $0x40] sm:$0xff] %v2731
        %2796 = vst [vmem:[%s418 + $0x48] sm:$0xff] %v2732
        %2797 = vst [vmem:[%s418 + $0x50] sm:$0xff] %v2733
        %2798 = vst [vmem:[%s418 + $0x58] sm:$0xff] %v2734
        %2799 = vst [vmem:[%s418 + $0x60] sm:$0xff] %v2735
        %2800 = vst [vmem:[%s418 + $0x68] sm:$0xff] %v2736
        %2801 = vst [vmem:[%s418 + $0x70] sm:$0xff] %v2737
        %2802 = vst [vmem:[%s418 + $0x78] sm:$0xff] %v2738
        %2803 = vst [vmem:[%s418 + $0x80] sm:$0xff] %v2739
        %2804 = vst [vmem:[%s418 + $0x88] sm:$0xff] %v2740
        %2805 = vst [vmem:[%s418 + $0x90] sm:$0xff] %v2741
        %2806 = vst [vmem:[%s418 + $0x98] sm:$0xff] %v2742
        %2807 = vst [vmem:[%s418 + $0xa0] sm:$0xff] %v2743
        %2808 = vst [vmem:[%s418 + $0xa8] sm:$0xff] %v2744
        %2809 = vst [vmem:[%s418 + $0xb0] sm:$0xff] %v2745
        %2810 = vst [vmem:[%s418 + $0xb8] sm:$0xff] %v2746
        %2811 = vst [vmem:[%s418 + $0xc0] sm:$0xff] %v2747
        %2812 = vst [vmem:[%s418 + $0xc8] sm:$0xff] %v2748
        %2813 = vst [vmem:[%s418 + $0xd0] sm:$0xff] %v2749
        %2814 = vst [vmem:[%s418 + $0xd8] sm:$0xff] %v2750
        %2815 = vst [vmem:[%s418 + $0xe0] sm:$0xff] %v2751
        %2816 = vst [vmem:[%s418 + $0xe8] sm:$0xff] %v2752
        %2817 = vst [vmem:[%s418 + $0xf0] sm:$0xff] %v2753
        %2818 = vst [vmem:[%s418 + $0xf8] sm:$0xff] %v2754
        %2819 = vst [vmem:[%s418 + $0x100] sm:$0xff] %v2755
        %2820 = vst [vmem:[%s418 + $0x108] sm:$0xff] %v2756
        %2821 = vst [vmem:[%s418 + $0x110] sm:$0xff] %v2757
        %2822 = vst [vmem:[%s418 + $0x118] sm:$0xff] %v2758
        %2823 = vst [vmem:[%s418 + $0x120] sm:$0xff] %v2759
        %2824 = vst [vmem:[%s418 + $0x128] sm:$0xff] %v2760
        %2825 = vst [vmem:[%s418 + $0x130] sm:$0xff] %v2761
        %2826 = vst [vmem:[%s418 + $0x138] sm:$0xff] %v2762
        %2827 = vst [vmem:[%s418 + $0x140] sm:$0xff] %v2763
        %2828 = vst [vmem:[%s418 + $0x148] sm:$0xff] %v2764
        %2829 = vst [vmem:[%s418 + $0x150] sm:$0xff] %v2765
        %2830 = vst [vmem:[%s418 + $0x158] sm:$0xff] %v2766
        %2831 = vst [vmem:[%s418 + $0x160] sm:$0xff] %v2767
        %2832 = vst [vmem:[%s418 + $0x168] sm:$0xff] %v2768
        %2833 = vst [vmem:[%s418 + $0x170] sm:$0xff] %v2769
        %2834 = vst [vmem:[%s418 + $0x178] sm:$0xff] %v2770
        %2835 = vst [vmem:[%s418 + $0x180] sm:$0xff] %v2771
        %2836 = vst [vmem:[%s418 + $0x188] sm:$0xff] %v2772
        %2837 = vst [vmem:[%s418 + $0x190] sm:$0xff] %v2773
        %2838 = vst [vmem:[%s418 + $0x198] sm:$0xff] %v2774
        %2839 = vst [vmem:[%s418 + $0x1a0] sm:$0xff] %v2775
        %2840 = vst [vmem:[%s418 + $0x1a8] sm:$0xff] %v2776
        %2841 = vst [vmem:[%s418 + $0x1b0] sm:$0xff] %v2777
        %2842 = vst [vmem:[%s418 + $0x1b8] sm:$0xff] %v2778
        %2843 = vst [vmem:[%s418 + $0x1c0] sm:$0xff] %v2779
        %2844 = vst [vmem:[%s418 + $0x1c8] sm:$0xff] %v2780
        %2845 = vst [vmem:[%s418 + $0x1d0] sm:$0xff] %v2781
        %2846 = vst [vmem:[%s418 + $0x1d8] sm:$0xff] %v2782
        %2847 = vst [vmem:[%s418 + $0x1e0] sm:$0xff] %v2783
        %2848 = vst [vmem:[%s418 + $0x1e8] sm:$0xff] %v2784
        %2849 = vst [vmem:[%s418 + $0x1f0] sm:$0xff] %v2785
        %2850 = vst [vmem:[%s418 + $0x1f8] sm:$0xff] %v2786
        %s2851 = sand.u32 %s178, 1
        %s2852 = sand.u32 %s178, 1
        %s2853 = smul.addr %s2852, 512
        %s2854 = scalar_lea.vmem [#allocation3], %s2853
        // Predicated region
        $region72: #{dual_cross_attention_forward.7} parent=66 // pred_check
          %p2855 = pneg %p188
        $region73: #{dual_cross_attention_forward.7} parent=66 // pred_check_branch
          %2857 = sbr.rel (%p2855) target = $region75
        $region74: #{dual_cross_attention_forward.7} parent=66 // pred_region
          %s2858 = smul.u32 8, %s18
          %s2859 = smul.addr %s2858, 8
          %s2860 = scalar_lea.vmem %s7, %s2859
          // Predicated region
          $region76: #{dual_cross_attention_forward.7} parent=74 // pred_check
            _
          $region77: #{dual_cross_attention_forward.7} parent=74 // pred_check_branch
            %2862 = sbr.rel (0) target = $region79
          $region78: #{dual_cross_attention_forward.7} parent=74 // pred_region
            // Predicated region
            $region80: #{dual_cross_attention_forward.7} parent=78 // pred_check
              _
            $region81: #{dual_cross_attention_forward.7} parent=78 // pred_check_branch
              %2864 = sbr.rel (0) target = $region83
            $region82: #{dual_cross_attention_forward.7} parent=78 // pred_region
              loop: start=0, step=1, limit=1
              $region84: #{dual_cross_attention_forward.7} parent=82 // loop_pre_header
                _
              $region85: #{dual_cross_attention_forward.7} parent=82 // loop_header
                %s2866 = sphi 0, %s2870
                %p2867 = scmp.ge.s32.totalorder %s2866, 1
                %s2871 = sphi %s2854, %s2854
                %s2872 = sphi %s2860, %s2860
              $region86: #{dual_cross_attention_forward.7} parent=82 // loop_header_branch
                %2869 = sbr.rel (%p2867) target = $region90
              $region87: #{dual_cross_attention_forward.7} parent=82 // loop_body
                %v2873 = vld [vmem:[%s2871] sm:$0xff]
                %2874 = vst [vmem:[%s2872] sm:$0xff] %v2873
                %v2875 = vld [vmem:[%s2871 + $0x8] sm:$0xff]
                %2876 = vst [vmem:[%s2872 + $0x8] sm:$0xff] %v2875
                %v2877 = vld [vmem:[%s2871 + $0x10] sm:$0xff]
                %2878 = vst [vmem:[%s2872 + $0x10] sm:$0xff] %v2877
                %v2879 = vld [vmem:[%s2871 + $0x18] sm:$0xff]
                %2880 = vst [vmem:[%s2872 + $0x18] sm:$0xff] %v2879
                %v2881 = vld [vmem:[%s2871 + $0x20] sm:$0xff]
                %2882 = vst [vmem:[%s2872 + $0x20] sm:$0xff] %v2881
                %v2883 = vld [vmem:[%s2871 + $0x28] sm:$0xff]
                %2884 = vst [vmem:[%s2872 + $0x28] sm:$0xff] %v2883
                %v2885 = vld [vmem:[%s2871 + $0x30] sm:$0xff]
                %2886 = vst [vmem:[%s2872 + $0x30] sm:$0xff] %v2885
                %v2887 = vld [vmem:[%s2871 + $0x38] sm:$0xff]
                %2888 = vst [vmem:[%s2872 + $0x38] sm:$0xff] %v2887
                %v2889 = vld [vmem:[%s2871 + $0x40] sm:$0xff]
                %2890 = vst [vmem:[%s2872 + $0x80] sm:$0xff] %v2889
                %v2891 = vld [vmem:[%s2871 + $0x48] sm:$0xff]
                %2892 = vst [vmem:[%s2872 + $0x88] sm:$0xff] %v2891
                %v2893 = vld [vmem:[%s2871 + $0x50] sm:$0xff]
                %2894 = vst [vmem:[%s2872 + $0x90] sm:$0xff] %v2893
                %v2895 = vld [vmem:[%s2871 + $0x58] sm:$0xff]
                %2896 = vst [vmem:[%s2872 + $0x98] sm:$0xff] %v2895
                %v2897 = vld [vmem:[%s2871 + $0x60] sm:$0xff]
                %2898 = vst [vmem:[%s2872 + $0xa0] sm:$0xff] %v2897
                %v2899 = vld [vmem:[%s2871 + $0x68] sm:$0xff]
                %2900 = vst [vmem:[%s2872 + $0xa8] sm:$0xff] %v2899
                %v2901 = vld [vmem:[%s2871 + $0x70] sm:$0xff]
                %2902 = vst [vmem:[%s2872 + $0xb0] sm:$0xff] %v2901
                %v2903 = vld [vmem:[%s2871 + $0x78] sm:$0xff]
                %2904 = vst [vmem:[%s2872 + $0xb8] sm:$0xff] %v2903
                %v2905 = vld [vmem:[%s2871 + $0x80] sm:$0xff]
                %2906 = vst [vmem:[%s2872 + $0x100] sm:$0xff] %v2905
                %v2907 = vld [vmem:[%s2871 + $0x88] sm:$0xff]
                %2908 = vst [vmem:[%s2872 + $0x108] sm:$0xff] %v2907
                %v2909 = vld [vmem:[%s2871 + $0x90] sm:$0xff]
                %2910 = vst [vmem:[%s2872 + $0x110] sm:$0xff] %v2909
                %v2911 = vld [vmem:[%s2871 + $0x98] sm:$0xff]
                %2912 = vst [vmem:[%s2872 + $0x118] sm:$0xff] %v2911
                %v2913 = vld [vmem:[%s2871 + $0xa0] sm:$0xff]
                %2914 = vst [vmem:[%s2872 + $0x120] sm:$0xff] %v2913
                %v2915 = vld [vmem:[%s2871 + $0xa8] sm:$0xff]
                %2916 = vst [vmem:[%s2872 + $0x128] sm:$0xff] %v2915
                %v2917 = vld [vmem:[%s2871 + $0xb0] sm:$0xff]
                %2918 = vst [vmem:[%s2872 + $0x130] sm:$0xff] %v2917
                %v2919 = vld [vmem:[%s2871 + $0xb8] sm:$0xff]
                %2920 = vst [vmem:[%s2872 + $0x138] sm:$0xff] %v2919
                %v2921 = vld [vmem:[%s2871 + $0xc0] sm:$0xff]
                %2922 = vst [vmem:[%s2872 + $0x180] sm:$0xff] %v2921
                %v2923 = vld [vmem:[%s2871 + $0xc8] sm:$0xff]
                %2924 = vst [vmem:[%s2872 + $0x188] sm:$0xff] %v2923
                %v2925 = vld [vmem:[%s2871 + $0xd0] sm:$0xff]
                %2926 = vst [vmem:[%s2872 + $0x190] sm:$0xff] %v2925
                %v2927 = vld [vmem:[%s2871 + $0xd8] sm:$0xff]
                %2928 = vst [vmem:[%s2872 + $0x198] sm:$0xff] %v2927
                %v2929 = vld [vmem:[%s2871 + $0xe0] sm:$0xff]
                %2930 = vst [vmem:[%s2872 + $0x1a0] sm:$0xff] %v2929
                %v2931 = vld [vmem:[%s2871 + $0xe8] sm:$0xff]
                %2932 = vst [vmem:[%s2872 + $0x1a8] sm:$0xff] %v2931
                %v2933 = vld [vmem:[%s2871 + $0xf0] sm:$0xff]
                %2934 = vst [vmem:[%s2872 + $0x1b0] sm:$0xff] %v2933
                %v2935 = vld [vmem:[%s2871 + $0xf8] sm:$0xff]
                %2936 = vst [vmem:[%s2872 + $0x1b8] sm:$0xff] %v2935
                %v2937 = vld [vmem:[%s2871 + $0x100] sm:$0xff]
                %2938 = vst [vmem:[%s2872 + $0x200] sm:$0xff] %v2937
                %v2939 = vld [vmem:[%s2871 + $0x108] sm:$0xff]
                %2940 = vst [vmem:[%s2872 + $0x208] sm:$0xff] %v2939
                %v2941 = vld [vmem:[%s2871 + $0x110] sm:$0xff]
                %2942 = vst [vmem:[%s2872 + $0x210] sm:$0xff] %v2941
                %v2943 = vld [vmem:[%s2871 + $0x118] sm:$0xff]
                %2944 = vst [vmem:[%s2872 + $0x218] sm:$0xff] %v2943
                %v2945 = vld [vmem:[%s2871 + $0x120] sm:$0xff]
                %2946 = vst [vmem:[%s2872 + $0x220] sm:$0xff] %v2945
                %v2947 = vld [vmem:[%s2871 + $0x128] sm:$0xff]
                %2948 = vst [vmem:[%s2872 + $0x228] sm:$0xff] %v2947
                %v2949 = vld [vmem:[%s2871 + $0x130] sm:$0xff]
                %2950 = vst [vmem:[%s2872 + $0x230] sm:$0xff] %v2949
                %v2951 = vld [vmem:[%s2871 + $0x138] sm:$0xff]
                %2952 = vst [vmem:[%s2872 + $0x238] sm:$0xff] %v2951
                %v2953 = vld [vmem:[%s2871 + $0x140] sm:$0xff]
                %2954 = vst [vmem:[%s2872 + $0x280] sm:$0xff] %v2953
                %v2955 = vld [vmem:[%s2871 + $0x148] sm:$0xff]
                %2956 = vst [vmem:[%s2872 + $0x288] sm:$0xff] %v2955
                %v2957 = vld [vmem:[%s2871 + $0x150] sm:$0xff]
                %2958 = vst [vmem:[%s2872 + $0x290] sm:$0xff] %v2957
                %v2959 = vld [vmem:[%s2871 + $0x158] sm:$0xff]
                %2960 = vst [vmem:[%s2872 + $0x298] sm:$0xff] %v2959
                %v2961 = vld [vmem:[%s2871 + $0x160] sm:$0xff]
                %2962 = vst [vmem:[%s2872 + $0x2a0] sm:$0xff] %v2961
                %v2963 = vld [vmem:[%s2871 + $0x168] sm:$0xff]
                %2964 = vst [vmem:[%s2872 + $0x2a8] sm:$0xff] %v2963
                %v2965 = vld [vmem:[%s2871 + $0x170] sm:$0xff]
                %2966 = vst [vmem:[%s2872 + $0x2b0] sm:$0xff] %v2965
                %v2967 = vld [vmem:[%s2871 + $0x178] sm:$0xff]
                %2968 = vst [vmem:[%s2872 + $0x2b8] sm:$0xff] %v2967
                %v2969 = vld [vmem:[%s2871 + $0x180] sm:$0xff]
                %2970 = vst [vmem:[%s2872 + $0x300] sm:$0xff] %v2969
                %v2971 = vld [vmem:[%s2871 + $0x188] sm:$0xff]
                %2972 = vst [vmem:[%s2872 + $0x308] sm:$0xff] %v2971
                %v2973 = vld [vmem:[%s2871 + $0x190] sm:$0xff]
                %2974 = vst [vmem:[%s2872 + $0x310] sm:$0xff] %v2973
                %v2975 = vld [vmem:[%s2871 + $0x198] sm:$0xff]
                %2976 = vst [vmem:[%s2872 + $0x318] sm:$0xff] %v2975
                %v2977 = vld [vmem:[%s2871 + $0x1a0] sm:$0xff]
                %2978 = vst [vmem:[%s2872 + $0x320] sm:$0xff] %v2977
                %v2979 = vld [vmem:[%s2871 + $0x1a8] sm:$0xff]
                %2980 = vst [vmem:[%s2872 + $0x328] sm:$0xff] %v2979
                %v2981 = vld [vmem:[%s2871 + $0x1b0] sm:$0xff]
                %2982 = vst [vmem:[%s2872 + $0x330] sm:$0xff] %v2981
                %v2983 = vld [vmem:[%s2871 + $0x1b8] sm:$0xff]
                %2984 = vst [vmem:[%s2872 + $0x338] sm:$0xff] %v2983
                %v2985 = vld [vmem:[%s2871 + $0x1c0] sm:$0xff]
                %2986 = vst [vmem:[%s2872 + $0x380] sm:$0xff] %v2985
                %v2987 = vld [vmem:[%s2871 + $0x1c8] sm:$0xff]
                %2988 = vst [vmem:[%s2872 + $0x388] sm:$0xff] %v2987
                %v2989 = vld [vmem:[%s2871 + $0x1d0] sm:$0xff]
                %2990 = vst [vmem:[%s2872 + $0x390] sm:$0xff] %v2989
                %v2991 = vld [vmem:[%s2871 + $0x1d8] sm:$0xff]
                %2992 = vst [vmem:[%s2872 + $0x398] sm:$0xff] %v2991
                %v2993 = vld [vmem:[%s2871 + $0x1e0] sm:$0xff]
                %2994 = vst [vmem:[%s2872 + $0x3a0] sm:$0xff] %v2993
                %v2995 = vld [vmem:[%s2871 + $0x1e8] sm:$0xff]
                %2996 = vst [vmem:[%s2872 + $0x3a8] sm:$0xff] %v2995
                %v2997 = vld [vmem:[%s2871 + $0x1f0] sm:$0xff]
                %2998 = vst [vmem:[%s2872 + $0x3b0] sm:$0xff] %v2997
                %v2999 = vld [vmem:[%s2871 + $0x1f8] sm:$0xff]
                %3000 = vst [vmem:[%s2872 + $0x3b8] sm:$0xff] %v2999
              $region88: #{dual_cross_attention_forward.7} parent=82 // loop_footer
                %s2870 = sadd.s32 1, %s2866
              $region89: #{dual_cross_attention_forward.7} parent=82 // loop_footer_branch
                %2865 = sbr.rel target = $region85
              $region90: #{dual_cross_attention_forward.7} parent=82 // loop_exit
                _
            $region83: #{dual_cross_attention_forward.7} parent=78 // pred_fallthru
              _
            // Predicated region
            $region91: #{dual_cross_attention_forward.7} parent=78 // pred_check
              _
            $region92: #{dual_cross_attention_forward.7} parent=78 // pred_check_branch
              %3002 = sbr.rel target = $region94
            $region93: #{dual_cross_attention_forward.7} parent=78 // pred_region
              _
            $region94: #{dual_cross_attention_forward.7} parent=78 // pred_fallthru
              _
          $region79: #{dual_cross_attention_forward.7} parent=74 // pred_fallthru
            _
          %3003 = vnop
        $region75: #{dual_cross_attention_forward.7} parent=66 // pred_fallthru
          _
      $region67: #{dual_cross_attention_forward.7} parent=5 // pred_fallthru
        _
      %p3004 = scmp.le.s32.totalorder 2, %s13
      // Predicated region
      $region95: #{dual_cross_attention_forward.7} parent=5 // pred_check
        %p3005 = pneg %p3004
      $region96: #{dual_cross_attention_forward.7} parent=5 // pred_check_branch
        %3007 = sbr.rel (%p3005) target = $region98
      $region97: #{dual_cross_attention_forward.7} parent=5 // pred_region
        %s3008 = ssub.s32 %s13, 2
        // Predicated region
        $region99: #{dual_cross_attention_forward.7} parent=97 // pred_check
          %p3009 = pneg %p194
        $region100: #{dual_cross_attention_forward.7} parent=97 // pred_check_branch
          %3011 = sbr.rel (%p3009) target = $region102
        $region101: #{dual_cross_attention_forward.7} parent=97 // pred_region
          %s3012 = sand.u32 %s179, 1
          %s3013 = sand.u32 %s179, 1
          %s3014 = smul.addr %s3013, 512
          %s3015 = scalar_lea.vmem [#allocation3], %s3014
        $region102: #{dual_cross_attention_forward.7} parent=97 // pred_fallthru
          _
      $region98: #{dual_cross_attention_forward.7} parent=5 // pred_fallthru
        _
    $region6: #{dual_cross_attention_forward.7} parent=1 // loop_footer
      %s17 = sadd.s32 1, %s13
    $region7: #{dual_cross_attention_forward.7} parent=1 // loop_footer_branch
      %12 = sbr.rel target = $region3
    $region8: #{dual_cross_attention_forward.7} parent=1 // loop_exit
      _

// kernel: dual_cross_attention_forward.6
$region0: #{dual_cross_attention_forward.6}
  #allocation0 [shape = 'u32[]', space=smem, size = 0x4, offset = 0x4, fixed_abs, tag = 'smem constant byte address 0x4 - core index']
  #allocation1 [shape = 'u32[72,128]{1,0:T(1,128)}', space=vmem, size = 0x9000, scoped, tag = 'internal scratch']
  %s0 = inlined_call_operand.vmem [shape: f32[8,256], index: 0, kind: input, shape index: {}]
  %s1 = inlined_call_operand.vmem [shape: f32[64,1], index: 1, kind: input, shape index: {}]
  %s2 = inlined_call_operand.vmem [shape: f32[64,1], index: 2, kind: input, shape index: {}]
  %s3 = inlined_call_operand.vmem [shape: f32[64,64], index: 3, kind: input, shape index: {}]
  %s4 = inlined_call_operand.vmem [shape: bf16[4,64,256], index: 4, kind: input, shape index: {}]
  %s5 = inlined_call_operand.vmem [shape: f32[1,256], index: 5, kind: input, shape index: {}]
  %s6 = inlined_call_operand.vmem [shape: f32[1,256], index: 6, kind: input, shape index: {}]
  %s7 = inlined_call_operand.vmem [shape: f32[1,256], index: 7, kind: input, shape index: {}]
  %s8 = inlined_call_operand.vmem [shape: bf16[256,1024], index: 8, kind: input, shape index: {}]
  %s9 = inlined_call_operand.vmem [shape: f32[1,1024], index: 9, kind: input, shape index: {}]
  %s10 = inlined_call_operand.vmem [shape: bf16[1024,256], index: 10, kind: input, shape index: {}]
  %s11 = inlined_call_operand.vmem [shape: f32[1,256], index: 11, kind: input, shape index: {}]
  %s12 = inlined_call_operand.vmem [shape: bf16[256,64], index: 12, kind: input, shape index: {}]
  %s13 = inlined_call_operand.vmem [shape: f32[1,64], index: 13, kind: input, shape index: {}]
  %s14 = inlined_call_operand.vmem [shape: bf16[256,64], index: 14, kind: input, shape index: {}]
  %s15 = inlined_call_operand.vmem [shape: f32[1,64], index: 15, kind: input, shape index: {}]
  %s16 = inlined_call_operand.vmem [shape: bf16[64,64], index: 16, kind: input, shape index: {}]
  %s17 = inlined_call_operand.vmem [shape: f32[1,64], index: 17, kind: input, shape index: {}]
  %s18 = inlined_call_operand.vmem [shape: bf16[64,64], index: 18, kind: input, shape index: {}]
  %s19 = inlined_call_operand.vmem [shape: f32[32,64], index: 19, kind: output, shape index: {0}]
  %s20 = inlined_call_operand.vmem [shape: f32[32,1], index: 20, kind: output, shape index: {1}]
  %s21 = inlined_call_operand.vmem [shape: f32[64,32], index: 21, kind: output, shape index: {2}]
  %22 = xla_tuple %s19, %s20, %s21
  %s23 = sld [smem:[#allocation0]]
  $region102: #{dual_cross_attention_forward.6} parent=0
    _
  %s25 = ssub.s32 1, %s23
  %s26 = scalar_select 0, %s25, %s23
  // Predicated region
  $region2: #{dual_cross_attention_forward.6} parent=0 // pred_check
    _
  $region3: #{dual_cross_attention_forward.6} parent=0 // pred_check_branch
    %28 = sbr.rel (0) target = $region5
  $region4: #{dual_cross_attention_forward.6} parent=0 // pred_region
    _
  $region5: #{dual_cross_attention_forward.6} parent=0 // pred_fallthru
    _
  // Predicated region
  $region6: #{dual_cross_attention_forward.6} parent=0 // pred_check
    _
  $region7: #{dual_cross_attention_forward.6} parent=0 // pred_check_branch
    %30 = sbr.rel (0) target = $region9
  $region8: #{dual_cross_attention_forward.6} parent=0 // pred_region
    _
  $region9: #{dual_cross_attention_forward.6} parent=0 // pred_fallthru
    _
  // Predicated region
  $region10: #{dual_cross_attention_forward.6} parent=0 // pred_check
    _
  $region11: #{dual_cross_attention_forward.6} parent=0 // pred_check_branch
    %32 = sbr.rel (0) target = $region13
  $region12: #{dual_cross_attention_forward.6} parent=0 // pred_region
    _
  $region13: #{dual_cross_attention_forward.6} parent=0 // pred_fallthru
    _
  // Predicated region
  $region14: #{dual_cross_attention_forward.6} parent=0 // pred_check
    _
  $region15: #{dual_cross_attention_forward.6} parent=0 // pred_check_branch
    %34 = sbr.rel (0) target = $region17
  $region16: #{dual_cross_attention_forward.6} parent=0 // pred_region
    _
  $region17: #{dual_cross_attention_forward.6} parent=0 // pred_fallthru
    _
  // Predicated region
  $region18: #{dual_cross_attention_forward.6} parent=0 // pred_check
    _
  $region19: #{dual_cross_attention_forward.6} parent=0 // pred_check_branch
    %36 = sbr.rel (0) target = $region21
  $region20: #{dual_cross_attention_forward.6} parent=0 // pred_region
    _
  $region21: #{dual_cross_attention_forward.6} parent=0 // pred_fallthru
    _
  // Predicated region
  $region22: #{dual_cross_attention_forward.6} parent=0 // pred_check
    _
  $region23: #{dual_cross_attention_forward.6} parent=0 // pred_check_branch
    %38 = sbr.rel (0) target = $region25
  $region24: #{dual_cross_attention_forward.6} parent=0 // pred_region
    _
  $region25: #{dual_cross_attention_forward.6} parent=0 // pred_fallthru
    _
  // Predicated region
  $region26: #{dual_cross_attention_forward.6} parent=0 // pred_check
    _
  $region27: #{dual_cross_attention_forward.6} parent=0 // pred_check_branch
    %40 = sbr.rel (0) target = $region29
  $region28: #{dual_cross_attention_forward.6} parent=0 // pred_region
    _
  $region29: #{dual_cross_attention_forward.6} parent=0 // pred_fallthru
    _
  // Predicated region
  $region30: #{dual_cross_attention_forward.6} parent=0 // pred_check
    _
  $region31: #{dual_cross_attention_forward.6} parent=0 // pred_check_branch
    %42 = sbr.rel (0) target = $region33
  $region32: #{dual_cross_attention_forward.6} parent=0 // pred_region
    _
  $region33: #{dual_cross_attention_forward.6} parent=0 // pred_fallthru
    _
  // Predicated region
  $region34: #{dual_cross_attention_forward.6} parent=0 // pred_check
    _
  $region35: #{dual_cross_attention_forward.6} parent=0 // pred_check_branch
    %44 = sbr.rel (0) target = $region37
  $region36: #{dual_cross_attention_forward.6} parent=0 // pred_region
    _
  $region37: #{dual_cross_attention_forward.6} parent=0 // pred_fallthru
    _
  // Predicated region
  $region38: #{dual_cross_attention_forward.6} parent=0 // pred_check
    _
  $region39: #{dual_cross_attention_forward.6} parent=0 // pred_check_branch
    %46 = sbr.rel (0) target = $region41
  $region40: #{dual_cross_attention_forward.6} parent=0 // pred_region
    _
  $region41: #{dual_cross_attention_forward.6} parent=0 // pred_fallthru
    _
  // Predicated region
  $region42: #{dual_cross_attention_forward.6} parent=0 // pred_check
    _
  $region43: #{dual_cross_attention_forward.6} parent=0 // pred_check_branch
    %48 = sbr.rel (0) target = $region45
  $region44: #{dual_cross_attention_forward.6} parent=0 // pred_region
    _
  $region45: #{dual_cross_attention_forward.6} parent=0 // pred_fallthru
    _
  // Predicated region
  $region46: #{dual_cross_attention_forward.6} parent=0 // pred_check
    _
  $region47: #{dual_cross_attention_forward.6} parent=0 // pred_check_branch
    %50 = sbr.rel (0) target = $region49
  $region48: #{dual_cross_attention_forward.6} parent=0 // pred_region
    _
  $region49: #{dual_cross_attention_forward.6} parent=0 // pred_fallthru
    _
  // Predicated region
  $region50: #{dual_cross_attention_forward.6} parent=0 // pred_check
    _
  $region51: #{dual_cross_attention_forward.6} parent=0 // pred_check_branch
    %52 = sbr.rel (0) target = $region53
  $region52: #{dual_cross_attention_forward.6} parent=0 // pred_region
    _
  $region53: #{dual_cross_attention_forward.6} parent=0 // pred_fallthru
    _
  // Predicated region
  $region54: #{dual_cross_attention_forward.6} parent=0 // pred_check
    _
  $region55: #{dual_cross_attention_forward.6} parent=0 // pred_check_branch
    %54 = sbr.rel (0) target = $region57
  $region56: #{dual_cross_attention_forward.6} parent=0 // pred_region
    _
  $region57: #{dual_cross_attention_forward.6} parent=0 // pred_fallthru
    _
  // Predicated region
  $region58: #{dual_cross_attention_forward.6} parent=0 // pred_check
    _
  $region59: #{dual_cross_attention_forward.6} parent=0 // pred_check_branch
    %56 = sbr.rel (0) target = $region61
  $region60: #{dual_cross_attention_forward.6} parent=0 // pred_region
    _
  $region61: #{dual_cross_attention_forward.6} parent=0 // pred_fallthru
    _
  // Predicated region
  $region62: #{dual_cross_attention_forward.6} parent=0 // pred_check
    _
  $region63: #{dual_cross_attention_forward.6} parent=0 // pred_check_branch
    %58 = sbr.rel (0) target = $region65
  $region64: #{dual_cross_attention_forward.6} parent=0 // pred_region
    _
  $region65: #{dual_cross_attention_forward.6} parent=0 // pred_fallthru
    _
  // Predicated region
  $region66: #{dual_cross_attention_forward.6} parent=0 // pred_check
    _
  $region67: #{dual_cross_attention_forward.6} parent=0 // pred_check_branch
    %60 = sbr.rel (0) target = $region69
  $region68: #{dual_cross_attention_forward.6} parent=0 // pred_region
    _
  $region69: #{dual_cross_attention_forward.6} parent=0 // pred_fallthru
    _
  // Predicated region
  $region70: #{dual_cross_attention_forward.6} parent=0 // pred_check
    _
  $region71: #{dual_cross_attention_forward.6} parent=0 // pred_check_branch
    %62 = sbr.rel (0) target = $region73
  $region72: #{dual_cross_attention_forward.6} parent=0 // pred_region
    _
  $region73: #{dual_cross_attention_forward.6} parent=0 // pred_fallthru
    _
  // Predicated region
  $region74: #{dual_cross_attention_forward.6} parent=0 // pred_check
    _
  $region75: #{dual_cross_attention_forward.6} parent=0 // pred_check_branch
    %64 = sbr.rel (0) target = $region77
  $region76: #{dual_cross_attention_forward.6} parent=0 // pred_region
    _
  $region77: #{dual_cross_attention_forward.6} parent=0 // pred_fallthru
    _
  %v66 = vld [vmem:[%s1] sm:$0xff]
  %v67 = vld [vmem:[%s1 + $0x8] sm:$0xff]
  %v68 = vld [vmem:[%s1 + $0x10] sm:$0xff]
  %v69 = vld [vmem:[%s1 + $0x18] sm:$0xff]
  %v70 = vld [vmem:[%s1 + $0x20] sm:$0xff]
  %v71 = vld [vmem:[%s1 + $0x28] sm:$0xff]
  %v72 = vld [vmem:[%s1 + $0x30] sm:$0xff]
  %v73 = vld [vmem:[%s1 + $0x38] sm:$0xff]
  %v74 = vld [vmem:[%s2] sm:$0xff]
  %v75 = vld [vmem:[%s2 + $0x8] sm:$0xff]
  %v76 = vld [vmem:[%s2 + $0x10] sm:$0xff]
  %v77 = vld [vmem:[%s2 + $0x18] sm:$0xff]
  %v78 = vld [vmem:[%s2 + $0x20] sm:$0xff]
  %v79 = vld [vmem:[%s2 + $0x28] sm:$0xff]
  %v80 = vld [vmem:[%s2 + $0x30] sm:$0xff]
  %v81 = vld [vmem:[%s2 + $0x38] sm:$0xff]
  %v82 = vld [vmem:[%s3] sm:$0xff]
  %v83 = vld [vmem:[%s3 + $0x8] sm:$0xff]
  %v84 = vld [vmem:[%s3 + $0x10] sm:$0xff]
  %v85 = vld [vmem:[%s3 + $0x18] sm:$0xff]
  %v86 = vld [vmem:[%s3 + $0x20] sm:$0xff]
  %v87 = vld [vmem:[%s3 + $0x28] sm:$0xff]
  %v88 = vld [vmem:[%s3 + $0x30] sm:$0xff]
  %v89 = vld [vmem:[%s3 + $0x38] sm:$0xff]
  %v90 = vmax.f32 %v66, %v70
  %v91 = vmax.f32 %v67, %v71
  %v92 = vmax.f32 %v68, %v72
  %v93 = vmax.f32 %v69, %v73
  %v94 = vsub.f32 %v66, %v90
  %v95 = vsub.f32 %v67, %v91
  %v96 = vsub.f32 %v68, %v92
  %v97 = vsub.f32 %v69, %v93
  %v98 = vmul.f32 %v94, 1.442695
  %v99 = vpow.pop %v98
  %v100 = vmul.f32 %v95, 1.442695
  %v101 = vpow.pop %v100
  %v102 = vmul.f32 %v96, 1.442695
  %v103 = vpow.pop %v102
  %v104 = vmul.f32 %v97, 1.442695
  %v105 = vpow.pop %v104
  %v106 = vsub.f32 %v70, %v90
  %v107 = vsub.f32 %v71, %v91
  %v108 = vsub.f32 %v72, %v92
  %v109 = vsub.f32 %v73, %v93
  %v110 = vmul.f32 %v106, 1.442695
  %v111 = vpow.pop %v110
  %v112 = vmul.f32 %v107, 1.442695
  %v113 = vpow.pop %v112
  %v114 = vmul.f32 %v108, 1.442695
  %v115 = vpow.pop %v114
  %v116 = vmul.f32 %v109, 1.442695
  %v117 = vpow.pop %v116
  %v118 = vmul.f32 %v99, %v74
  %v119 = vmul.f32 %v101, %v75
  %v120 = vmul.f32 %v103, %v76
  %v121 = vmul.f32 %v105, %v77
  %v122 = vmul.f32 %v111, %v78
  %v123 = vmul.f32 %v113, %v79
  %v124 = vmul.f32 %v115, %v80
  %v125 = vmul.f32 %v117, %v81
  %v126 = vadd.f32 %v118, %v122
  %v127 = vadd.f32 %v119, %v123
  %v128 = vadd.f32 %v120, %v124
  %v129 = vadd.f32 %v121, %v125
  %131 = vset.pattern.permute.xlu0 0
  %132 = vperm.xlu0 %131, %v99
  %v133 = vpop.permute.xlu0 %132
  %136 = vset.pattern.permute.xlu0 0
  %137 = vperm.xlu0 %136, %v101
  %v138 = vpop.permute.xlu0 %137
  %141 = vset.pattern.permute.xlu0 0
  %142 = vperm.xlu0 %141, %v103
  %v143 = vpop.permute.xlu0 %142
  %146 = vset.pattern.permute.xlu0 0
  %147 = vperm.xlu0 %146, %v105
  %v148 = vpop.permute.xlu0 %147
  %v150 = vmul.f32 %v133, %v82
  %v151 = vmul.f32 %v138, %v83
  %v152 = vmul.f32 %v143, %v84
  %v153 = vmul.f32 %v148, %v85
  %155 = vset.pattern.permute.xlu0 0
  %156 = vperm.xlu0 %155, %v111
  %v157 = vpop.permute.xlu0 %156
  %160 = vset.pattern.permute.xlu0 0
  %161 = vperm.xlu0 %160, %v113
  %v162 = vpop.permute.xlu0 %161
  %165 = vset.pattern.permute.xlu0 0
  %166 = vperm.xlu0 %165, %v115
  %v167 = vpop.permute.xlu0 %166
  %170 = vset.pattern.permute.xlu0 0
  %171 = vperm.xlu0 %170, %v117
  %v172 = vpop.permute.xlu0 %171
  %v174 = vmul.f32 %v157, %v86
  %v175 = vmul.f32 %v162, %v87
  %v176 = vmul.f32 %v167, %v88
  %v177 = vmul.f32 %v172, %v89
  %v178 = vadd.f32 %v150, %v174
  %v179 = vadd.f32 %v151, %v175
  %v180 = vadd.f32 %v152, %v176
  %v181 = vadd.f32 %v153, %v177
  %183 = vset.pattern.permute.xlu0 0
  %184 = vperm.xlu0 %183, %v126
  %v185 = vpop.permute.xlu0 %184
  %188 = vset.pattern.permute.xlu0 0
  %189 = vperm.xlu0 %188, %v127
  %v190 = vpop.permute.xlu0 %189
  %193 = vset.pattern.permute.xlu0 0
  %194 = vperm.xlu0 %193, %v128
  %v195 = vpop.permute.xlu0 %194
  %198 = vset.pattern.permute.xlu0 0
  %199 = vperm.xlu0 %198, %v129
  %v200 = vpop.permute.xlu0 %199
  %v202 = vrcp.pop %v185
  %v203 = vmul.f32 %v185, %v202
  %v204 = vsub.f32 1.0, %v203
  %v205 = vmul.f32 %v202, %v204
  %v206 = vadd.f32 %v202, %v205
  %vm207 = vweird.f32 %v185
  %vm208 = vweird.f32 %v202
  %vm209 = vmor %vm207, %vm208
  %v210 = vsel %vm209, %v202, %v206
  %v211 = vand.u32 2147483647, %v185
  %vm212 = vcmp.eq.f32.partialorder %v211, 8.507059e+37
  %v213 = vand.u32 %v185, 2147483648
  %v214 = vor.u32 1.1754944e-38, %v213
  %v215 = vsel %vm212, %v214, %v210
  %v216 = vmul.f32 %v178, %v215
  %v217 = vrcp.pop %v190
  %v218 = vmul.f32 %v190, %v217
  %v219 = vsub.f32 1.0, %v218
  %v220 = vmul.f32 %v217, %v219
  %v221 = vadd.f32 %v217, %v220
  %vm222 = vweird.f32 %v190
  %vm223 = vweird.f32 %v217
  %vm224 = vmor %vm222, %vm223
  %v225 = vsel %vm224, %v217, %v221
  %v226 = vand.u32 2147483647, %v190
  %vm227 = vcmp.eq.f32.partialorder %v226, 8.507059e+37
  %v228 = vand.u32 %v190, 2147483648
  %v229 = vor.u32 1.1754944e-38, %v228
  %v230 = vsel %vm227, %v229, %v225
  %v231 = vmul.f32 %v179, %v230
  %v232 = vrcp.pop %v195
  %v233 = vmul.f32 %v195, %v232
  %v234 = vsub.f32 1.0, %v233
  %v235 = vmul.f32 %v232, %v234
  %v236 = vadd.f32 %v232, %v235
  %vm237 = vweird.f32 %v195
  %vm238 = vweird.f32 %v232
  %vm239 = vmor %vm237, %vm238
  %v240 = vsel %vm239, %v232, %v236
  %v241 = vand.u32 2147483647, %v195
  %vm242 = vcmp.eq.f32.partialorder %v241, 8.507059e+37
  %v243 = vand.u32 %v195, 2147483648
  %v244 = vor.u32 1.1754944e-38, %v243
  %v245 = vsel %vm242, %v244, %v240
  %v246 = vmul.f32 %v180, %v245
  %v247 = vrcp.pop %v200
  %v248 = vmul.f32 %v200, %v247
  %v249 = vsub.f32 1.0, %v248
  %v250 = vmul.f32 %v247, %v249
  %v251 = vadd.f32 %v247, %v250
  %vm252 = vweird.f32 %v200
  %vm253 = vweird.f32 %v247
  %vm254 = vmor %vm252, %vm253
  %v255 = vsel %vm254, %v247, %v251
  %v256 = vand.u32 2147483647, %v200
  %vm257 = vcmp.eq.f32.partialorder %v256, 8.507059e+37
  %v258 = vand.u32 %v200, 2147483648
  %v259 = vor.u32 1.1754944e-38, %v258
  %v260 = vsel %vm257, %v259, %v255
  %v261 = vmul.f32 %v181, %v260
  %v262 = vld [vmem:[%s0] sm:$0xff]
  %v263 = vld [vmem:[%s0 + $0x8] sm:$0xff]
  %v264 = vpack.c.bf16 %v216, %v216
  %v265 = vld [vmem:[%s4] sm:$0xff]
  %v266 = vld [vmem:[%s4 + $0x8] sm:$0xff]
  %v267 = vld [vmem:[%s4 + $0x10] sm:$0xff]
  %v268 = vld [vmem:[%s4 + $0x18] sm:$0xff]
  %v269 = vld [vmem:[%s4 + $0x20] sm:$0xff]
  %v270 = vld [vmem:[%s4 + $0x28] sm:$0xff]
  %v271 = vld [vmem:[%s4 + $0x30] sm:$0xff]
  %v272 = vld [vmem:[%s4 + $0x38] sm:$0xff]
  %v273 = vpack.c.bf16 %v231, %v231
  %s274 = scalar_lea.vmem %s4, 64
  %v275 = vld [vmem:[%s274] sm:$0xff]
  %v276 = vld [vmem:[%s274 + $0x8] sm:$0xff]
  %v277 = vld [vmem:[%s274 + $0x10] sm:$0xff]
  %v278 = vld [vmem:[%s274 + $0x18] sm:$0xff]
  %v279 = vld [vmem:[%s274 + $0x20] sm:$0xff]
  %v280 = vld [vmem:[%s274 + $0x28] sm:$0xff]
  %v281 = vld [vmem:[%s274 + $0x30] sm:$0xff]
  %v282 = vld [vmem:[%s274 + $0x38] sm:$0xff]
  %v291 = vunpack.c.l.b16 %v275
  %v292 = vunpack.c.h.b16 %v275
  %v293 = vunpack.c.l.b16 %v276
  %v294 = vunpack.c.h.b16 %v276
  %v295 = vunpack.c.l.b16 %v277
  %v296 = vunpack.c.h.b16 %v277
  %v297 = vunpack.c.l.b16 %v278
  %v298 = vunpack.c.h.b16 %v278
  %v299 = vunpack.c.l.b16 %v279
  %v300 = vunpack.c.h.b16 %v279
  %v301 = vunpack.c.l.b16 %v280
  %v302 = vunpack.c.h.b16 %v280
  %v303 = vunpack.c.l.b16 %v281
  %v304 = vunpack.c.h.b16 %v281
  %v305 = vunpack.c.l.b16 %v282
  %v306 = vunpack.c.h.b16 %v282
  %v307 = vpack.c.b16 %v293, %v291
  %v308 = vpack.c.b16 %v294, %v292
  %v309 = vpack.c.b16 %v297, %v295
  %v310 = vpack.c.b16 %v298, %v296
  %v311 = vpack.c.b16 %v301, %v299
  %v312 = vpack.c.b16 %v302, %v300
  %v313 = vpack.c.b16 %v305, %v303
  %v314 = vpack.c.b16 %v306, %v304
  %vm323 = vcmask 523264
  %v325 = vsel %vm323, %v273, 0
  %327 = vmatpush.bf16.msra.mxu0 0
  %328 = vmatpush.bf16.msra.mxu0 0
  %329 = vmatpush.bf16.msra.mxu0 0
  %330 = vmatpush.bf16.msra.mxu0 0
  %331 = vmatpush.bf16.msra.mxu0 %v313
  %332 = vmatpush.bf16.msra.mxu0 %v311
  %333 = vmatpush.bf16.msra.mxu0 %v309
  %334 = vmatpush.bf16.msra.mxu0 %v307
  %335 = vmatmul.bf16.gmra.mxu0 %v325
  %v336 = vpop.f32.mrf.mxu0
  %v337 = vadd.f32 0.0, %v336
  %v338 = vpop.f32.mrf.mxu0
  %339 = vdwg.mxu0
  %340 = vmatpush.bf16.msra.mxu0 0
  %341 = vmatpush.bf16.msra.mxu0 0
  %342 = vmatpush.bf16.msra.mxu0 0
  %343 = vmatpush.bf16.msra.mxu0 0
  %344 = vmatpush.bf16.msra.mxu0 %v314
  %345 = vmatpush.bf16.msra.mxu0 %v312
  %346 = vmatpush.bf16.msra.mxu0 %v310
  %347 = vmatpush.bf16.msra.mxu0 %v308
  %348 = vmatmul.bf16.gmra.mxu0 %v325
  %v349 = vpop.f32.mrf.mxu0
  %v350 = vadd.f32 0.0, %v349
  %v351 = vpop.f32.mrf.mxu0
  %352 = vdwg.mxu0
  %v361 = vunpack.c.l.b16 %v265
  %v362 = vunpack.c.h.b16 %v265
  %v363 = vunpack.c.l.b16 %v266
  %v364 = vunpack.c.h.b16 %v266
  %v365 = vunpack.c.l.b16 %v267
  %v366 = vunpack.c.h.b16 %v267
  %v367 = vunpack.c.l.b16 %v268
  %v368 = vunpack.c.h.b16 %v268
  %v369 = vunpack.c.l.b16 %v269
  %v370 = vunpack.c.h.b16 %v269
  %v371 = vunpack.c.l.b16 %v270
  %v372 = vunpack.c.h.b16 %v270
  %v373 = vunpack.c.l.b16 %v271
  %v374 = vunpack.c.h.b16 %v271
  %v375 = vunpack.c.l.b16 %v272
  %v376 = vunpack.c.h.b16 %v272
  %v377 = vpack.c.b16 %v363, %v361
  %v378 = vpack.c.b16 %v364, %v362
  %v379 = vpack.c.b16 %v367, %v365
  %v380 = vpack.c.b16 %v368, %v366
  %v381 = vpack.c.b16 %v371, %v369
  %v382 = vpack.c.b16 %v372, %v370
  %v383 = vpack.c.b16 %v375, %v373
  %v384 = vpack.c.b16 %v376, %v374
  %v394 = vsel %vm323, %v264, 0
  %396 = vmatpush.bf16.msra.mxu0 0
  %397 = vmatpush.bf16.msra.mxu0 0
  %398 = vmatpush.bf16.msra.mxu0 0
  %399 = vmatpush.bf16.msra.mxu0 0
  %400 = vmatpush.bf16.msra.mxu0 %v383
  %401 = vmatpush.bf16.msra.mxu0 %v381
  %402 = vmatpush.bf16.msra.mxu0 %v379
  %403 = vmatpush.bf16.msra.mxu0 %v377
  %404 = vmatmul.bf16.gmra.mxu0 %v394
  %v405 = vpop.f32.mrf.mxu0
  %v406 = vadd.f32 %v337, %v405
  %v407 = vpop.f32.mrf.mxu0
  %408 = vdwg.mxu0
  %409 = vmatpush.bf16.msra.mxu0 0
  %410 = vmatpush.bf16.msra.mxu0 0
  %411 = vmatpush.bf16.msra.mxu0 0
  %412 = vmatpush.bf16.msra.mxu0 0
  %413 = vmatpush.bf16.msra.mxu0 %v384
  %414 = vmatpush.bf16.msra.mxu0 %v382
  %415 = vmatpush.bf16.msra.mxu0 %v380
  %416 = vmatpush.bf16.msra.mxu0 %v378
  %417 = vmatmul.bf16.gmra.mxu0 %v394
  %v418 = vpop.f32.mrf.mxu0
  %v419 = vadd.f32 %v350, %v418
  %v420 = vpop.f32.mrf.mxu0
  %421 = vdwg.mxu0
  %v422 = vpack.c.bf16 %v246, %v246
  %s423 = scalar_lea.vmem %s4, 128
  %v424 = vld [vmem:[%s423] sm:$0xff]
  %v425 = vld [vmem:[%s423 + $0x8] sm:$0xff]
  %v426 = vld [vmem:[%s423 + $0x10] sm:$0xff]
  %v427 = vld [vmem:[%s423 + $0x18] sm:$0xff]
  %v428 = vld [vmem:[%s423 + $0x20] sm:$0xff]
  %v429 = vld [vmem:[%s423 + $0x28] sm:$0xff]
  %v430 = vld [vmem:[%s423 + $0x30] sm:$0xff]
  %v431 = vld [vmem:[%s423 + $0x38] sm:$0xff]
  %v440 = vunpack.c.l.b16 %v424
  %v441 = vunpack.c.h.b16 %v424
  %v442 = vunpack.c.l.b16 %v425
  %v443 = vunpack.c.h.b16 %v425
  %v444 = vunpack.c.l.b16 %v426
  %v445 = vunpack.c.h.b16 %v426
  %v446 = vunpack.c.l.b16 %v427
  %v447 = vunpack.c.h.b16 %v427
  %v448 = vunpack.c.l.b16 %v428
  %v449 = vunpack.c.h.b16 %v428
  %v450 = vunpack.c.l.b16 %v429
  %v451 = vunpack.c.h.b16 %v429
  %v452 = vunpack.c.l.b16 %v430
  %v453 = vunpack.c.h.b16 %v430
  %v454 = vunpack.c.l.b16 %v431
  %v455 = vunpack.c.h.b16 %v431
  %v456 = vpack.c.b16 %v442, %v440
  %v457 = vpack.c.b16 %v443, %v441
  %v458 = vpack.c.b16 %v446, %v444
  %v459 = vpack.c.b16 %v447, %v445
  %v460 = vpack.c.b16 %v450, %v448
  %v461 = vpack.c.b16 %v451, %v449
  %v462 = vpack.c.b16 %v454, %v452
  %v463 = vpack.c.b16 %v455, %v453
  %v473 = vsel %vm323, %v422, 0
  %475 = vmatpush.bf16.msra.mxu0 0
  %476 = vmatpush.bf16.msra.mxu0 0
  %477 = vmatpush.bf16.msra.mxu0 0
  %478 = vmatpush.bf16.msra.mxu0 0
  %479 = vmatpush.bf16.msra.mxu0 %v462
  %480 = vmatpush.bf16.msra.mxu0 %v460
  %481 = vmatpush.bf16.msra.mxu0 %v458
  %482 = vmatpush.bf16.msra.mxu0 %v456
  %483 = vmatmul.bf16.gmra.mxu0 %v473
  %v484 = vpop.f32.mrf.mxu0
  %v485 = vadd.f32 0.0, %v484
  %v486 = vpop.f32.mrf.mxu0
  %487 = vdwg.mxu0
  %488 = vmatpush.bf16.msra.mxu0 0
  %489 = vmatpush.bf16.msra.mxu0 0
  %490 = vmatpush.bf16.msra.mxu0 0
  %491 = vmatpush.bf16.msra.mxu0 0
  %492 = vmatpush.bf16.msra.mxu0 %v463
  %493 = vmatpush.bf16.msra.mxu0 %v461
  %494 = vmatpush.bf16.msra.mxu0 %v459
  %495 = vmatpush.bf16.msra.mxu0 %v457
  %496 = vmatmul.bf16.gmra.mxu0 %v473
  %v497 = vpop.f32.mrf.mxu0
  %v498 = vadd.f32 0.0, %v497
  %v499 = vpop.f32.mrf.mxu0
  %500 = vdwg.mxu0
  %v501 = vadd.f32 %v406, %v485
  %v502 = vadd.f32 %v419, %v498
  %v503 = vpack.c.bf16 %v261, %v261
  %s504 = scalar_lea.vmem %s4, 192
  %v505 = vld [vmem:[%s504] sm:$0xff]
  %v506 = vld [vmem:[%s504 + $0x8] sm:$0xff]
  %v507 = vld [vmem:[%s504 + $0x10] sm:$0xff]
  %v508 = vld [vmem:[%s504 + $0x18] sm:$0xff]
  %v509 = vld [vmem:[%s504 + $0x20] sm:$0xff]
  %v510 = vld [vmem:[%s504 + $0x28] sm:$0xff]
  %v511 = vld [vmem:[%s504 + $0x30] sm:$0xff]
  %v512 = vld [vmem:[%s504 + $0x38] sm:$0xff]
  %v521 = vunpack.c.l.b16 %v505
  %v522 = vunpack.c.h.b16 %v505
  %v523 = vunpack.c.l.b16 %v506
  %v524 = vunpack.c.h.b16 %v506
  %v525 = vunpack.c.l.b16 %v507
  %v526 = vunpack.c.h.b16 %v507
  %v527 = vunpack.c.l.b16 %v508
  %v528 = vunpack.c.h.b16 %v508
  %v529 = vunpack.c.l.b16 %v509
  %v530 = vunpack.c.h.b16 %v509
  %v531 = vunpack.c.l.b16 %v510
  %v532 = vunpack.c.h.b16 %v510
  %v533 = vunpack.c.l.b16 %v511
  %v534 = vunpack.c.h.b16 %v511
  %v535 = vunpack.c.l.b16 %v512
  %v536 = vunpack.c.h.b16 %v512
  %v537 = vpack.c.b16 %v523, %v521
  %v538 = vpack.c.b16 %v524, %v522
  %v539 = vpack.c.b16 %v527, %v525
  %v540 = vpack.c.b16 %v528, %v526
  %v541 = vpack.c.b16 %v531, %v529
  %v542 = vpack.c.b16 %v532, %v530
  %v543 = vpack.c.b16 %v535, %v533
  %v544 = vpack.c.b16 %v536, %v534
  %v554 = vsel %vm323, %v503, 0
  %556 = vmatpush.bf16.msra.mxu0 0
  %557 = vmatpush.bf16.msra.mxu0 0
  %558 = vmatpush.bf16.msra.mxu0 0
  %559 = vmatpush.bf16.msra.mxu0 0
  %560 = vmatpush.bf16.msra.mxu0 %v543
  %561 = vmatpush.bf16.msra.mxu0 %v541
  %562 = vmatpush.bf16.msra.mxu0 %v539
  %563 = vmatpush.bf16.msra.mxu0 %v537
  %564 = vmatmul.bf16.gmra.mxu0 %v554
  %v565 = vpop.f32.mrf.mxu0
  %v566 = vadd.f32 0.0, %v565
  %v567 = vpop.f32.mrf.mxu0
  %568 = vdwg.mxu0
  %569 = vmatpush.bf16.msra.mxu0 0
  %570 = vmatpush.bf16.msra.mxu0 0
  %571 = vmatpush.bf16.msra.mxu0 0
  %572 = vmatpush.bf16.msra.mxu0 0
  %573 = vmatpush.bf16.msra.mxu0 %v544
  %574 = vmatpush.bf16.msra.mxu0 %v542
  %575 = vmatpush.bf16.msra.mxu0 %v540
  %576 = vmatpush.bf16.msra.mxu0 %v538
  %577 = vmatmul.bf16.gmra.mxu0 %v554
  %v578 = vpop.f32.mrf.mxu0
  %v579 = vadd.f32 0.0, %v578
  %v580 = vpop.f32.mrf.mxu0
  %581 = vdwg.mxu0
  %v582 = vadd.f32 %v501, %v566
  %v583 = vadd.f32 %v502, %v579
  %v584 = vld [vmem:[%s5] sm:$0x3]
  %v586 = vperm.slane %v584, 0
  %v587 = vperm.slane %v584, 1
  %v590 = vadd.f32 %v582, %v586
  %v591 = vadd.f32 %v583, %v587
  %v592 = vadd.f32 %v262, %v590
  %v593 = vadd.f32 %v263, %v591
  %v594 = vadd.f32 %v592, %v593
  %595 = vadd.xlane.f32.xlu0 %v594
  %v596 = vpop.xlane.xlu0 %595
  %v597 = vrcp.pop 256.0
  %v598 = vmul.f32 256.0, %v597
  %v599 = vsub.f32 1.0, %v598
  %v600 = vmul.f32 %v597, %v599
  %v601 = vadd.f32 %v597, %v600
  %vm602 = vweird.f32 %v597
  %v603 = vsel %vm602, %v597, %v601
  %v604 = vmul.f32 %v596, %v603
  %v605 = vsub.f32 %v592, %v604
  %v606 = vsub.f32 %v593, %v604
  %v607 = vmul.f32 %v605, %v605
  %v608 = vmul.f32 %v606, %v606
  %v609 = vadd.f32 %v607, %v608
  %610 = vadd.xlane.f32.xlu0 %v609
  %v611 = vpop.xlane.xlu0 %610
  %v612 = vmul.f32 %v611, %v603
  %v613 = vadd.f32 %v612, 1e-05
  %v614 = vrsqrt.pop %v613
  %v615 = vmul.f32 %v614, %v613
  %v616 = vmul.f32 %v615, %v614
  %v617 = vmul.f32 0.5, %v616
  %v618 = vsub.f32 1.5, %v617
  %v619 = vmul.f32 %v614, %v618
  %vm620 = vweird.f32 %v613
  %vm621 = vweird.f32 %v614
  %vm622 = vmor %vm620, %vm621
  %v623 = vsel %vm622, %v614, %v619
  %v624 = vmul.f32 %v605, %v623
  %v625 = vmul.f32 %v606, %v623
  %v626 = vld [vmem:[%s6] sm:$0x3]
  %v628 = vperm.slane %v626, 0
  %v629 = vperm.slane %v626, 1
  %v632 = vmul.f32 %v624, %v628
  %v633 = vmul.f32 %v625, %v629
  %v634 = vld [vmem:[%s7] sm:$0x3]
  %v636 = vperm.slane %v634, 0
  %v637 = vperm.slane %v634, 1
  %v640 = vadd.f32 %v632, %v636
  %v641 = vadd.f32 %v633, %v637
  %v642 = vpack.c.bf16 %v640, %v640
  %v643 = vpack.c.bf16 %v641, %v641
  %v644 = vld [vmem:[%s8] sm:$0xff]
  %v645 = vld [vmem:[%s8 + $0x8] sm:$0xff]
  %v646 = vld [vmem:[%s8 + $0x10] sm:$0xff]
  %v647 = vld [vmem:[%s8 + $0x18] sm:$0xff]
  %v648 = vld [vmem:[%s8 + $0x20] sm:$0xff]
  %v649 = vld [vmem:[%s8 + $0x28] sm:$0xff]
  %v650 = vld [vmem:[%s8 + $0x30] sm:$0xff]
  %v651 = vld [vmem:[%s8 + $0x38] sm:$0xff]
  %v652 = vld [vmem:[%s8 + $0x40] sm:$0xff]
  %v653 = vld [vmem:[%s8 + $0x48] sm:$0xff]
  %v654 = vld [vmem:[%s8 + $0x50] sm:$0xff]
  %v655 = vld [vmem:[%s8 + $0x58] sm:$0xff]
  %v656 = vld [vmem:[%s8 + $0x60] sm:$0xff]
  %v657 = vld [vmem:[%s8 + $0x68] sm:$0xff]
  %v658 = vld [vmem:[%s8 + $0x70] sm:$0xff]
  %v659 = vld [vmem:[%s8 + $0x78] sm:$0xff]
  %v660 = vld [vmem:[%s8 + $0x80] sm:$0xff]
  %v661 = vld [vmem:[%s8 + $0x88] sm:$0xff]
  %v662 = vld [vmem:[%s8 + $0x90] sm:$0xff]
  %v663 = vld [vmem:[%s8 + $0x98] sm:$0xff]
  %v664 = vld [vmem:[%s8 + $0xa0] sm:$0xff]
  %v665 = vld [vmem:[%s8 + $0xa8] sm:$0xff]
  %v666 = vld [vmem:[%s8 + $0xb0] sm:$0xff]
  %v667 = vld [vmem:[%s8 + $0xb8] sm:$0xff]
  %v668 = vld [vmem:[%s8 + $0xc0] sm:$0xff]
  %v669 = vld [vmem:[%s8 + $0xc8] sm:$0xff]
  %v670 = vld [vmem:[%s8 + $0xd0] sm:$0xff]
  %v671 = vld [vmem:[%s8 + $0xd8] sm:$0xff]
  %v672 = vld [vmem:[%s8 + $0xe0] sm:$0xff]
  %v673 = vld [vmem:[%s8 + $0xe8] sm:$0xff]
  %v674 = vld [vmem:[%s8 + $0xf0] sm:$0xff]
  %v675 = vld [vmem:[%s8 + $0xf8] sm:$0xff]
  %v676 = vld [vmem:[%s8 + $0x100] sm:$0xff]
  %v677 = vld [vmem:[%s8 + $0x108] sm:$0xff]
  %v678 = vld [vmem:[%s8 + $0x110] sm:$0xff]
  %v679 = vld [vmem:[%s8 + $0x118] sm:$0xff]
  %v680 = vld [vmem:[%s8 + $0x120] sm:$0xff]
  %v681 = vld [vmem:[%s8 + $0x128] sm:$0xff]
  %v682 = vld [vmem:[%s8 + $0x130] sm:$0xff]
  %v683 = vld [vmem:[%s8 + $0x138] sm:$0xff]
  %v684 = vld [vmem:[%s8 + $0x140] sm:$0xff]
  %v685 = vld [vmem:[%s8 + $0x148] sm:$0xff]
  %v686 = vld [vmem:[%s8 + $0x150] sm:$0xff]
  %v687 = vld [vmem:[%s8 + $0x158] sm:$0xff]
  %v688 = vld [vmem:[%s8 + $0x160] sm:$0xff]
  %v689 = vld [vmem:[%s8 + $0x168] sm:$0xff]
  %v690 = vld [vmem:[%s8 + $0x170] sm:$0xff]
  %v691 = vld [vmem:[%s8 + $0x178] sm:$0xff]
  %v692 = vld [vmem:[%s8 + $0x180] sm:$0xff]
  %v693 = vld [vmem:[%s8 + $0x188] sm:$0xff]
  %v694 = vld [vmem:[%s8 + $0x190] sm:$0xff]
  %v695 = vld [vmem:[%s8 + $0x198] sm:$0xff]
  %v696 = vld [vmem:[%s8 + $0x1a0] sm:$0xff]
  %v697 = vld [vmem:[%s8 + $0x1a8] sm:$0xff]
  %v698 = vld [vmem:[%s8 + $0x1b0] sm:$0xff]
  %v699 = vld [vmem:[%s8 + $0x1b8] sm:$0xff]
  %v700 = vld [vmem:[%s8 + $0x1c0] sm:$0xff]
  %v701 = vld [vmem:[%s8 + $0x1c8] sm:$0xff]
  %v702 = vld [vmem:[%s8 + $0x1d0] sm:$0xff]
  %v703 = vld [vmem:[%s8 + $0x1d8] sm:$0xff]
  %v704 = vld [vmem:[%s8 + $0x1e0] sm:$0xff]
  %v705 = vld [vmem:[%s8 + $0x1e8] sm:$0xff]
  %v706 = vld [vmem:[%s8 + $0x1f0] sm:$0xff]
  %v707 = vld [vmem:[%s8 + $0x1f8] sm:$0xff]
  %v708 = vld [vmem:[%s8 + $0x200] sm:$0xff]
  %v709 = vld [vmem:[%s8 + $0x208] sm:$0xff]
  %v710 = vld [vmem:[%s8 + $0x210] sm:$0xff]
  %v711 = vld [vmem:[%s8 + $0x218] sm:$0xff]
  %v712 = vld [vmem:[%s8 + $0x220] sm:$0xff]
  %v713 = vld [vmem:[%s8 + $0x228] sm:$0xff]
  %v714 = vld [vmem:[%s8 + $0x230] sm:$0xff]
  %v715 = vld [vmem:[%s8 + $0x238] sm:$0xff]
  %v716 = vld [vmem:[%s8 + $0x240] sm:$0xff]
  %v717 = vld [vmem:[%s8 + $0x248] sm:$0xff]
  %v718 = vld [vmem:[%s8 + $0x250] sm:$0xff]
  %v719 = vld [vmem:[%s8 + $0x258] sm:$0xff]
  %v720 = vld [vmem:[%s8 + $0x260] sm:$0xff]
  %v721 = vld [vmem:[%s8 + $0x268] sm:$0xff]
  %v722 = vld [vmem:[%s8 + $0x270] sm:$0xff]
  %v723 = vld [vmem:[%s8 + $0x278] sm:$0xff]
  %v724 = vld [vmem:[%s8 + $0x280] sm:$0xff]
  %v725 = vld [vmem:[%s8 + $0x288] sm:$0xff]
  %v726 = vld [vmem:[%s8 + $0x290] sm:$0xff]
  %v727 = vld [vmem:[%s8 + $0x298] sm:$0xff]
  %v728 = vld [vmem:[%s8 + $0x2a0] sm:$0xff]
  %v729 = vld [vmem:[%s8 + $0x2a8] sm:$0xff]
  %v730 = vld [vmem:[%s8 + $0x2b0] sm:$0xff]
  %v731 = vld [vmem:[%s8 + $0x2b8] sm:$0xff]
  %v732 = vld [vmem:[%s8 + $0x2c0] sm:$0xff]
  %v733 = vld [vmem:[%s8 + $0x2c8] sm:$0xff]
  %v734 = vld [vmem:[%s8 + $0x2d0] sm:$0xff]
  %v735 = vld [vmem:[%s8 + $0x2d8] sm:$0xff]
  %v736 = vld [vmem:[%s8 + $0x2e0] sm:$0xff]
  %v737 = vld [vmem:[%s8 + $0x2e8] sm:$0xff]
  %v738 = vld [vmem:[%s8 + $0x2f0] sm:$0xff]
  %v739 = vld [vmem:[%s8 + $0x2f8] sm:$0xff]
  %v740 = vld [vmem:[%s8 + $0x300] sm:$0xff]
  %v741 = vld [vmem:[%s8 + $0x308] sm:$0xff]
  %v742 = vld [vmem:[%s8 + $0x310] sm:$0xff]
  %v743 = vld [vmem:[%s8 + $0x318] sm:$0xff]
  %v744 = vld [vmem:[%s8 + $0x320] sm:$0xff]
  %v745 = vld [vmem:[%s8 + $0x328] sm:$0xff]
  %v746 = vld [vmem:[%s8 + $0x330] sm:$0xff]
  %v747 = vld [vmem:[%s8 + $0x338] sm:$0xff]
  %v748 = vld [vmem:[%s8 + $0x340] sm:$0xff]
  %v749 = vld [vmem:[%s8 + $0x348] sm:$0xff]
  %v750 = vld [vmem:[%s8 + $0x350] sm:$0xff]
  %v751 = vld [vmem:[%s8 + $0x358] sm:$0xff]
  %v752 = vld [vmem:[%s8 + $0x360] sm:$0xff]
  %v753 = vld [vmem:[%s8 + $0x368] sm:$0xff]
  %v754 = vld [vmem:[%s8 + $0x370] sm:$0xff]
  %v755 = vld [vmem:[%s8 + $0x378] sm:$0xff]
  %v756 = vld [vmem:[%s8 + $0x380] sm:$0xff]
  %v757 = vld [vmem:[%s8 + $0x388] sm:$0xff]
  %v758 = vld [vmem:[%s8 + $0x390] sm:$0xff]
  %v759 = vld [vmem:[%s8 + $0x398] sm:$0xff]
  %v760 = vld [vmem:[%s8 + $0x3a0] sm:$0xff]
  %v761 = vld [vmem:[%s8 + $0x3a8] sm:$0xff]
  %v762 = vld [vmem:[%s8 + $0x3b0] sm:$0xff]
  %v763 = vld [vmem:[%s8 + $0x3b8] sm:$0xff]
  %v764 = vld [vmem:[%s8 + $0x3c0] sm:$0xff]
  %v765 = vld [vmem:[%s8 + $0x3c8] sm:$0xff]
  %v766 = vld [vmem:[%s8 + $0x3d0] sm:$0xff]
  %v767 = vld [vmem:[%s8 + $0x3d8] sm:$0xff]
  %v768 = vld [vmem:[%s8 + $0x3e0] sm:$0xff]
  %v769 = vld [vmem:[%s8 + $0x3e8] sm:$0xff]
  %v770 = vld [vmem:[%s8 + $0x3f0] sm:$0xff]
  %v771 = vld [vmem:[%s8 + $0x3f8] sm:$0xff]
  %v772 = vld [vmem:[%s9] sm:$0xff]
  %v774 = vperm.slane %v772, 0
  %v775 = vperm.slane %v772, 1
  %v776 = vperm.slane %v772, 2
  %v777 = vperm.slane %v772, 3
  %v778 = vperm.slane %v772, 4
  %v779 = vperm.slane %v772, 5
  %v780 = vperm.slane %v772, 6
  %v781 = vperm.slane %v772, 7
  %v918 = vunpack.c.l.b16 %v644
  %v919 = vunpack.c.h.b16 %v644
  %v920 = vunpack.c.l.b16 %v645
  %v921 = vunpack.c.h.b16 %v645
  %v922 = vunpack.c.l.b16 %v646
  %v923 = vunpack.c.h.b16 %v646
  %v924 = vunpack.c.l.b16 %v647
  %v925 = vunpack.c.h.b16 %v647
  %v926 = vunpack.c.l.b16 %v648
  %v927 = vunpack.c.h.b16 %v648
  %v928 = vunpack.c.l.b16 %v649
  %v929 = vunpack.c.h.b16 %v649
  %v930 = vunpack.c.l.b16 %v650
  %v931 = vunpack.c.h.b16 %v650
  %v932 = vunpack.c.l.b16 %v651
  %v933 = vunpack.c.h.b16 %v651
  %v934 = vunpack.c.l.b16 %v652
  %v935 = vunpack.c.h.b16 %v652
  %v936 = vunpack.c.l.b16 %v653
  %v937 = vunpack.c.h.b16 %v653
  %v938 = vunpack.c.l.b16 %v654
  %v939 = vunpack.c.h.b16 %v654
  %v940 = vunpack.c.l.b16 %v655
  %v941 = vunpack.c.h.b16 %v655
  %v942 = vunpack.c.l.b16 %v656
  %v943 = vunpack.c.h.b16 %v656
  %v944 = vunpack.c.l.b16 %v657
  %v945 = vunpack.c.h.b16 %v657
  %v946 = vunpack.c.l.b16 %v658
  %v947 = vunpack.c.h.b16 %v658
  %v948 = vunpack.c.l.b16 %v659
  %v949 = vunpack.c.h.b16 %v659
  %v950 = vunpack.c.l.b16 %v660
  %v951 = vunpack.c.h.b16 %v660
  %v952 = vunpack.c.l.b16 %v661
  %v953 = vunpack.c.h.b16 %v661
  %v954 = vunpack.c.l.b16 %v662
  %v955 = vunpack.c.h.b16 %v662
  %v956 = vunpack.c.l.b16 %v663
  %v957 = vunpack.c.h.b16 %v663
  %v958 = vunpack.c.l.b16 %v664
  %v959 = vunpack.c.h.b16 %v664
  %v960 = vunpack.c.l.b16 %v665
  %v961 = vunpack.c.h.b16 %v665
  %v962 = vunpack.c.l.b16 %v666
  %v963 = vunpack.c.h.b16 %v666
  %v964 = vunpack.c.l.b16 %v667
  %v965 = vunpack.c.h.b16 %v667
  %v966 = vunpack.c.l.b16 %v668
  %v967 = vunpack.c.h.b16 %v668
  %v968 = vunpack.c.l.b16 %v669
  %v969 = vunpack.c.h.b16 %v669
  %v970 = vunpack.c.l.b16 %v670
  %v971 = vunpack.c.h.b16 %v670
  %v972 = vunpack.c.l.b16 %v671
  %v973 = vunpack.c.h.b16 %v671
  %v974 = vunpack.c.l.b16 %v672
  %v975 = vunpack.c.h.b16 %v672
  %v976 = vunpack.c.l.b16 %v673
  %v977 = vunpack.c.h.b16 %v673
  %v978 = vunpack.c.l.b16 %v674
  %v979 = vunpack.c.h.b16 %v674
  %v980 = vunpack.c.l.b16 %v675
  %v981 = vunpack.c.h.b16 %v675
  %v982 = vunpack.c.l.b16 %v676
  %v983 = vunpack.c.h.b16 %v676
  %v984 = vunpack.c.l.b16 %v677
  %v985 = vunpack.c.h.b16 %v677
  %v986 = vunpack.c.l.b16 %v678
  %v987 = vunpack.c.h.b16 %v678
  %v988 = vunpack.c.l.b16 %v679
  %v989 = vunpack.c.h.b16 %v679
  %v990 = vunpack.c.l.b16 %v680
  %v991 = vunpack.c.h.b16 %v680
  %v992 = vunpack.c.l.b16 %v681
  %v993 = vunpack.c.h.b16 %v681
  %v994 = vunpack.c.l.b16 %v682
  %v995 = vunpack.c.h.b16 %v682
  %v996 = vunpack.c.l.b16 %v683
  %v997 = vunpack.c.h.b16 %v683
  %v998 = vunpack.c.l.b16 %v684
  %v999 = vunpack.c.h.b16 %v684
  %v1000 = vunpack.c.l.b16 %v685
  %v1001 = vunpack.c.h.b16 %v685
  %v1002 = vunpack.c.l.b16 %v686
  %v1003 = vunpack.c.h.b16 %v686
  %v1004 = vunpack.c.l.b16 %v687
  %v1005 = vunpack.c.h.b16 %v687
  %v1006 = vunpack.c.l.b16 %v688
  %v1007 = vunpack.c.h.b16 %v688
  %v1008 = vunpack.c.l.b16 %v689
  %v1009 = vunpack.c.h.b16 %v689
  %v1010 = vunpack.c.l.b16 %v690
  %v1011 = vunpack.c.h.b16 %v690
  %v1012 = vunpack.c.l.b16 %v691
  %v1013 = vunpack.c.h.b16 %v691
  %v1014 = vunpack.c.l.b16 %v692
  %v1015 = vunpack.c.h.b16 %v692
  %v1016 = vunpack.c.l.b16 %v693
  %v1017 = vunpack.c.h.b16 %v693
  %v1018 = vunpack.c.l.b16 %v694
  %v1019 = vunpack.c.h.b16 %v694
  %v1020 = vunpack.c.l.b16 %v695
  %v1021 = vunpack.c.h.b16 %v695
  %v1022 = vunpack.c.l.b16 %v696
  %v1023 = vunpack.c.h.b16 %v696
  %v1024 = vunpack.c.l.b16 %v697
  %v1025 = vunpack.c.h.b16 %v697
  %v1026 = vunpack.c.l.b16 %v698
  %v1027 = vunpack.c.h.b16 %v698
  %v1028 = vunpack.c.l.b16 %v699
  %v1029 = vunpack.c.h.b16 %v699
  %v1030 = vunpack.c.l.b16 %v700
  %v1031 = vunpack.c.h.b16 %v700
  %v1032 = vunpack.c.l.b16 %v701
  %v1033 = vunpack.c.h.b16 %v701
  %v1034 = vunpack.c.l.b16 %v702
  %v1035 = vunpack.c.h.b16 %v702
  %v1036 = vunpack.c.l.b16 %v703
  %v1037 = vunpack.c.h.b16 %v703
  %v1038 = vunpack.c.l.b16 %v704
  %v1039 = vunpack.c.h.b16 %v704
  %v1040 = vunpack.c.l.b16 %v705
  %v1041 = vunpack.c.h.b16 %v705
  %v1042 = vunpack.c.l.b16 %v706
  %v1043 = vunpack.c.h.b16 %v706
  %v1044 = vunpack.c.l.b16 %v707
  %v1045 = vunpack.c.h.b16 %v707
  %v1046 = vunpack.c.l.b16 %v708
  %v1047 = vunpack.c.h.b16 %v708
  %v1048 = vunpack.c.l.b16 %v709
  %v1049 = vunpack.c.h.b16 %v709
  %v1050 = vunpack.c.l.b16 %v710
  %v1051 = vunpack.c.h.b16 %v710
  %v1052 = vunpack.c.l.b16 %v711
  %v1053 = vunpack.c.h.b16 %v711
  %v1054 = vunpack.c.l.b16 %v712
  %v1055 = vunpack.c.h.b16 %v712
  %v1056 = vunpack.c.l.b16 %v713
  %v1057 = vunpack.c.h.b16 %v713
  %v1058 = vunpack.c.l.b16 %v714
  %v1059 = vunpack.c.h.b16 %v714
  %v1060 = vunpack.c.l.b16 %v715
  %v1061 = vunpack.c.h.b16 %v715
  %v1062 = vunpack.c.l.b16 %v716
  %v1063 = vunpack.c.h.b16 %v716
  %v1064 = vunpack.c.l.b16 %v717
  %v1065 = vunpack.c.h.b16 %v717
  %v1066 = vunpack.c.l.b16 %v718
  %v1067 = vunpack.c.h.b16 %v718
  %v1068 = vunpack.c.l.b16 %v719
  %v1069 = vunpack.c.h.b16 %v719
  %v1070 = vunpack.c.l.b16 %v720
  %v1071 = vunpack.c.h.b16 %v720
  %v1072 = vunpack.c.l.b16 %v721
  %v1073 = vunpack.c.h.b16 %v721
  %v1074 = vunpack.c.l.b16 %v722
  %v1075 = vunpack.c.h.b16 %v722
  %v1076 = vunpack.c.l.b16 %v723
  %v1077 = vunpack.c.h.b16 %v723
  %v1078 = vunpack.c.l.b16 %v724
  %v1079 = vunpack.c.h.b16 %v724
  %v1080 = vunpack.c.l.b16 %v725
  %v1081 = vunpack.c.h.b16 %v725
  %v1082 = vunpack.c.l.b16 %v726
  %v1083 = vunpack.c.h.b16 %v726
  %v1084 = vunpack.c.l.b16 %v727
  %v1085 = vunpack.c.h.b16 %v727
  %v1086 = vunpack.c.l.b16 %v728
  %v1087 = vunpack.c.h.b16 %v728
  %v1088 = vunpack.c.l.b16 %v729
  %v1089 = vunpack.c.h.b16 %v729
  %v1090 = vunpack.c.l.b16 %v730
  %v1091 = vunpack.c.h.b16 %v730
  %v1092 = vunpack.c.l.b16 %v731
  %v1093 = vunpack.c.h.b16 %v731
  %v1094 = vunpack.c.l.b16 %v732
  %v1095 = vunpack.c.h.b16 %v732
  %v1096 = vunpack.c.l.b16 %v733
  %v1097 = vunpack.c.h.b16 %v733
  %v1098 = vunpack.c.l.b16 %v734
  %v1099 = vunpack.c.h.b16 %v734
  %v1100 = vunpack.c.l.b16 %v735
  %v1101 = vunpack.c.h.b16 %v735
  %v1102 = vunpack.c.l.b16 %v736
  %v1103 = vunpack.c.h.b16 %v736
  %v1104 = vunpack.c.l.b16 %v737
  %v1105 = vunpack.c.h.b16 %v737
  %v1106 = vunpack.c.l.b16 %v738
  %v1107 = vunpack.c.h.b16 %v738
  %v1108 = vunpack.c.l.b16 %v739
  %v1109 = vunpack.c.h.b16 %v739
  %v1110 = vunpack.c.l.b16 %v740
  %v1111 = vunpack.c.h.b16 %v740
  %v1112 = vunpack.c.l.b16 %v741
  %v1113 = vunpack.c.h.b16 %v741
  %v1114 = vunpack.c.l.b16 %v742
  %v1115 = vunpack.c.h.b16 %v742
  %v1116 = vunpack.c.l.b16 %v743
  %v1117 = vunpack.c.h.b16 %v743
  %v1118 = vunpack.c.l.b16 %v744
  %v1119 = vunpack.c.h.b16 %v744
  %v1120 = vunpack.c.l.b16 %v745
  %v1121 = vunpack.c.h.b16 %v745
  %v1122 = vunpack.c.l.b16 %v746
  %v1123 = vunpack.c.h.b16 %v746
  %v1124 = vunpack.c.l.b16 %v747
  %v1125 = vunpack.c.h.b16 %v747
  %v1126 = vunpack.c.l.b16 %v748
  %v1127 = vunpack.c.h.b16 %v748
  %v1128 = vunpack.c.l.b16 %v749
  %v1129 = vunpack.c.h.b16 %v749
  %v1130 = vunpack.c.l.b16 %v750
  %v1131 = vunpack.c.h.b16 %v750
  %v1132 = vunpack.c.l.b16 %v751
  %v1133 = vunpack.c.h.b16 %v751
  %v1134 = vunpack.c.l.b16 %v752
  %v1135 = vunpack.c.h.b16 %v752
  %v1136 = vunpack.c.l.b16 %v753
  %v1137 = vunpack.c.h.b16 %v753
  %v1138 = vunpack.c.l.b16 %v754
  %v1139 = vunpack.c.h.b16 %v754
  %v1140 = vunpack.c.l.b16 %v755
  %v1141 = vunpack.c.h.b16 %v755
  %v1142 = vunpack.c.l.b16 %v756
  %v1143 = vunpack.c.h.b16 %v756
  %v1144 = vunpack.c.l.b16 %v757
  %v1145 = vunpack.c.h.b16 %v757
  %v1146 = vunpack.c.l.b16 %v758
  %v1147 = vunpack.c.h.b16 %v758
  %v1148 = vunpack.c.l.b16 %v759
  %v1149 = vunpack.c.h.b16 %v759
  %v1150 = vunpack.c.l.b16 %v760
  %v1151 = vunpack.c.h.b16 %v760
  %v1152 = vunpack.c.l.b16 %v761
  %v1153 = vunpack.c.h.b16 %v761
  %v1154 = vunpack.c.l.b16 %v762
  %v1155 = vunpack.c.h.b16 %v762
  %v1156 = vunpack.c.l.b16 %v763
  %v1157 = vunpack.c.h.b16 %v763
  %v1158 = vunpack.c.l.b16 %v764
  %v1159 = vunpack.c.h.b16 %v764
  %v1160 = vunpack.c.l.b16 %v765
  %v1161 = vunpack.c.h.b16 %v765
  %v1162 = vunpack.c.l.b16 %v766
  %v1163 = vunpack.c.h.b16 %v766
  %v1164 = vunpack.c.l.b16 %v767
  %v1165 = vunpack.c.h.b16 %v767
  %v1166 = vunpack.c.l.b16 %v768
  %v1167 = vunpack.c.h.b16 %v768
  %v1168 = vunpack.c.l.b16 %v769
  %v1169 = vunpack.c.h.b16 %v769
  %v1170 = vunpack.c.l.b16 %v770
  %v1171 = vunpack.c.h.b16 %v770
  %v1172 = vunpack.c.l.b16 %v771
  %v1173 = vunpack.c.h.b16 %v771
  %v1174 = vpack.c.b16 %v926, %v918
  %v1175 = vpack.c.b16 %v927, %v919
  %v1176 = vpack.c.b16 %v928, %v920
  %v1177 = vpack.c.b16 %v929, %v921
  %v1178 = vpack.c.b16 %v930, %v922
  %v1179 = vpack.c.b16 %v931, %v923
  %v1180 = vpack.c.b16 %v932, %v924
  %v1181 = vpack.c.b16 %v933, %v925
  %v1182 = vpack.c.b16 %v942, %v934
  %v1183 = vpack.c.b16 %v943, %v935
  %v1184 = vpack.c.b16 %v944, %v936
  %v1185 = vpack.c.b16 %v945, %v937
  %v1186 = vpack.c.b16 %v946, %v938
  %v1187 = vpack.c.b16 %v947, %v939
  %v1188 = vpack.c.b16 %v948, %v940
  %v1189 = vpack.c.b16 %v949, %v941
  %v1190 = vpack.c.b16 %v958, %v950
  %v1191 = vpack.c.b16 %v959, %v951
  %v1192 = vpack.c.b16 %v960, %v952
  %v1193 = vpack.c.b16 %v961, %v953
  %v1194 = vpack.c.b16 %v962, %v954
  %v1195 = vpack.c.b16 %v963, %v955
  %v1196 = vpack.c.b16 %v964, %v956
  %v1197 = vpack.c.b16 %v965, %v957
  %v1198 = vpack.c.b16 %v974, %v966
  %v1199 = vpack.c.b16 %v975, %v967
  %v1200 = vpack.c.b16 %v976, %v968
  %v1201 = vpack.c.b16 %v977, %v969
  %v1202 = vpack.c.b16 %v978, %v970
  %v1203 = vpack.c.b16 %v979, %v971
  %v1204 = vpack.c.b16 %v980, %v972
  %v1205 = vpack.c.b16 %v981, %v973
  %v1206 = vpack.c.b16 %v990, %v982
  %v1207 = vpack.c.b16 %v991, %v983
  %v1208 = vpack.c.b16 %v992, %v984
  %v1209 = vpack.c.b16 %v993, %v985
  %v1210 = vpack.c.b16 %v994, %v986
  %v1211 = vpack.c.b16 %v995, %v987
  %v1212 = vpack.c.b16 %v996, %v988
  %v1213 = vpack.c.b16 %v997, %v989
  %v1214 = vpack.c.b16 %v1006, %v998
  %v1215 = vpack.c.b16 %v1007, %v999
  %v1216 = vpack.c.b16 %v1008, %v1000
  %v1217 = vpack.c.b16 %v1009, %v1001
  %v1218 = vpack.c.b16 %v1010, %v1002
  %v1219 = vpack.c.b16 %v1011, %v1003
  %v1220 = vpack.c.b16 %v1012, %v1004
  %v1221 = vpack.c.b16 %v1013, %v1005
  %v1222 = vpack.c.b16 %v1022, %v1014
  %v1223 = vpack.c.b16 %v1023, %v1015
  %v1224 = vpack.c.b16 %v1024, %v1016
  %v1225 = vpack.c.b16 %v1025, %v1017
  %v1226 = vpack.c.b16 %v1026, %v1018
  %v1227 = vpack.c.b16 %v1027, %v1019
  %v1228 = vpack.c.b16 %v1028, %v1020
  %v1229 = vpack.c.b16 %v1029, %v1021
  %v1230 = vpack.c.b16 %v1038, %v1030
  %v1231 = vpack.c.b16 %v1039, %v1031
  %v1232 = vpack.c.b16 %v1040, %v1032
  %v1233 = vpack.c.b16 %v1041, %v1033
  %v1234 = vpack.c.b16 %v1042, %v1034
  %v1235 = vpack.c.b16 %v1043, %v1035
  %v1236 = vpack.c.b16 %v1044, %v1036
  %v1237 = vpack.c.b16 %v1045, %v1037
  %v1238 = vpack.c.b16 %v1054, %v1046
  %v1239 = vpack.c.b16 %v1055, %v1047
  %v1240 = vpack.c.b16 %v1056, %v1048
  %v1241 = vpack.c.b16 %v1057, %v1049
  %v1242 = vpack.c.b16 %v1058, %v1050
  %v1243 = vpack.c.b16 %v1059, %v1051
  %v1244 = vpack.c.b16 %v1060, %v1052
  %v1245 = vpack.c.b16 %v1061, %v1053
  %v1246 = vpack.c.b16 %v1070, %v1062
  %v1247 = vpack.c.b16 %v1071, %v1063
  %v1248 = vpack.c.b16 %v1072, %v1064
  %v1249 = vpack.c.b16 %v1073, %v1065
  %v1250 = vpack.c.b16 %v1074, %v1066
  %v1251 = vpack.c.b16 %v1075, %v1067
  %v1252 = vpack.c.b16 %v1076, %v1068
  %v1253 = vpack.c.b16 %v1077, %v1069
  %v1254 = vpack.c.b16 %v1086, %v1078
  %v1255 = vpack.c.b16 %v1087, %v1079
  %v1256 = vpack.c.b16 %v1088, %v1080
  %v1257 = vpack.c.b16 %v1089, %v1081
  %v1258 = vpack.c.b16 %v1090, %v1082
  %v1259 = vpack.c.b16 %v1091, %v1083
  %v1260 = vpack.c.b16 %v1092, %v1084
  %v1261 = vpack.c.b16 %v1093, %v1085
  %v1262 = vpack.c.b16 %v1102, %v1094
  %v1263 = vpack.c.b16 %v1103, %v1095
  %v1264 = vpack.c.b16 %v1104, %v1096
  %v1265 = vpack.c.b16 %v1105, %v1097
  %v1266 = vpack.c.b16 %v1106, %v1098
  %v1267 = vpack.c.b16 %v1107, %v1099
  %v1268 = vpack.c.b16 %v1108, %v1100
  %v1269 = vpack.c.b16 %v1109, %v1101
  %v1270 = vpack.c.b16 %v1118, %v1110
  %v1271 = vpack.c.b16 %v1119, %v1111
  %v1272 = vpack.c.b16 %v1120, %v1112
  %v1273 = vpack.c.b16 %v1121, %v1113
  %v1274 = vpack.c.b16 %v1122, %v1114
  %v1275 = vpack.c.b16 %v1123, %v1115
  %v1276 = vpack.c.b16 %v1124, %v1116
  %v1277 = vpack.c.b16 %v1125, %v1117
  %v1278 = vpack.c.b16 %v1134, %v1126
  %v1279 = vpack.c.b16 %v1135, %v1127
  %v1280 = vpack.c.b16 %v1136, %v1128
  %v1281 = vpack.c.b16 %v1137, %v1129
  %v1282 = vpack.c.b16 %v1138, %v1130
  %v1283 = vpack.c.b16 %v1139, %v1131
  %v1284 = vpack.c.b16 %v1140, %v1132
  %v1285 = vpack.c.b16 %v1141, %v1133
  %v1286 = vpack.c.b16 %v1150, %v1142
  %v1287 = vpack.c.b16 %v1151, %v1143
  %v1288 = vpack.c.b16 %v1152, %v1144
  %v1289 = vpack.c.b16 %v1153, %v1145
  %v1290 = vpack.c.b16 %v1154, %v1146
  %v1291 = vpack.c.b16 %v1155, %v1147
  %v1292 = vpack.c.b16 %v1156, %v1148
  %v1293 = vpack.c.b16 %v1157, %v1149
  %v1294 = vpack.c.b16 %v1166, %v1158
  %v1295 = vpack.c.b16 %v1167, %v1159
  %v1296 = vpack.c.b16 %v1168, %v1160
  %v1297 = vpack.c.b16 %v1169, %v1161
  %v1298 = vpack.c.b16 %v1170, %v1162
  %v1299 = vpack.c.b16 %v1171, %v1163
  %v1300 = vpack.c.b16 %v1172, %v1164
  %v1301 = vpack.c.b16 %v1173, %v1165
  %1430 = vmatpush.bf16.msra.mxu0 %v1230
  %1431 = vmatpush.bf16.msra.mxu0 %v1222
  %1432 = vmatpush.bf16.msra.mxu0 %v1214
  %1433 = vmatpush.bf16.msra.mxu0 %v1206
  %1434 = vmatpush.bf16.msra.mxu0 %v1198
  %1435 = vmatpush.bf16.msra.mxu0 %v1190
  %1436 = vmatpush.bf16.msra.mxu0 %v1182
  %1437 = vmatpush.bf16.msra.mxu0 %v1174
  %1438 = vmatmul.bf16.gmra.mxu0 %v642
  %v1439 = vpop.f32.mrf.mxu0
  %v1440 = vadd.f32 %v774, %v1439
  %v1441 = vpop.f32.mrf.mxu0
  %1442 = vdwg.mxu0
  %1443 = vmatpush.bf16.msra.mxu0 %v1294
  %1444 = vmatpush.bf16.msra.mxu0 %v1286
  %1445 = vmatpush.bf16.msra.mxu0 %v1278
  %1446 = vmatpush.bf16.msra.mxu0 %v1270
  %1447 = vmatpush.bf16.msra.mxu0 %v1262
  %1448 = vmatpush.bf16.msra.mxu0 %v1254
  %1449 = vmatpush.bf16.msra.mxu0 %v1246
  %1450 = vmatpush.bf16.msra.mxu0 %v1238
  %1451 = vmatmul.bf16.gmra.mxu0 %v643
  %v1452 = vpop.f32.mrf.mxu0
  %v1453 = vadd.f32 %v1440, %v1452
  %v1454 = vpop.f32.mrf.mxu0
  %1455 = vdwg.mxu0
  %1456 = vmatpush.bf16.msra.mxu0 %v1231
  %1457 = vmatpush.bf16.msra.mxu0 %v1223
  %1458 = vmatpush.bf16.msra.mxu0 %v1215
  %1459 = vmatpush.bf16.msra.mxu0 %v1207
  %1460 = vmatpush.bf16.msra.mxu0 %v1199
  %1461 = vmatpush.bf16.msra.mxu0 %v1191
  %1462 = vmatpush.bf16.msra.mxu0 %v1183
  %1463 = vmatpush.bf16.msra.mxu0 %v1175
  %1464 = vmatmul.bf16.gmra.mxu0 %v642
  %v1465 = vpop.f32.mrf.mxu0
  %v1466 = vadd.f32 %v775, %v1465
  %v1467 = vpop.f32.mrf.mxu0
  %1468 = vdwg.mxu0
  %1469 = vmatpush.bf16.msra.mxu0 %v1295
  %1470 = vmatpush.bf16.msra.mxu0 %v1287
  %1471 = vmatpush.bf16.msra.mxu0 %v1279
  %1472 = vmatpush.bf16.msra.mxu0 %v1271
  %1473 = vmatpush.bf16.msra.mxu0 %v1263
  %1474 = vmatpush.bf16.msra.mxu0 %v1255
  %1475 = vmatpush.bf16.msra.mxu0 %v1247
  %1476 = vmatpush.bf16.msra.mxu0 %v1239
  %1477 = vmatmul.bf16.gmra.mxu0 %v643
  %v1478 = vpop.f32.mrf.mxu0
  %v1479 = vadd.f32 %v1466, %v1478
  %v1480 = vpop.f32.mrf.mxu0
  %1481 = vdwg.mxu0
  %1482 = vmatpush.bf16.msra.mxu0 %v1232
  %1483 = vmatpush.bf16.msra.mxu0 %v1224
  %1484 = vmatpush.bf16.msra.mxu0 %v1216
  %1485 = vmatpush.bf16.msra.mxu0 %v1208
  %1486 = vmatpush.bf16.msra.mxu0 %v1200
  %1487 = vmatpush.bf16.msra.mxu0 %v1192
  %1488 = vmatpush.bf16.msra.mxu0 %v1184
  %1489 = vmatpush.bf16.msra.mxu0 %v1176
  %1490 = vmatmul.bf16.gmra.mxu0 %v642
  %v1491 = vpop.f32.mrf.mxu0
  %v1492 = vadd.f32 %v776, %v1491
  %v1493 = vpop.f32.mrf.mxu0
  %1494 = vdwg.mxu0
  %1495 = vmatpush.bf16.msra.mxu0 %v1296
  %1496 = vmatpush.bf16.msra.mxu0 %v1288
  %1497 = vmatpush.bf16.msra.mxu0 %v1280
  %1498 = vmatpush.bf16.msra.mxu0 %v1272
  %1499 = vmatpush.bf16.msra.mxu0 %v1264
  %1500 = vmatpush.bf16.msra.mxu0 %v1256
  %1501 = vmatpush.bf16.msra.mxu0 %v1248
  %1502 = vmatpush.bf16.msra.mxu0 %v1240
  %1503 = vmatmul.bf16.gmra.mxu0 %v643
  %v1504 = vpop.f32.mrf.mxu0
  %v1505 = vadd.f32 %v1492, %v1504
  %v1506 = vpop.f32.mrf.mxu0
  %1507 = vdwg.mxu0
  %1508 = vmatpush.bf16.msra.mxu0 %v1233
  %1509 = vmatpush.bf16.msra.mxu0 %v1225
  %1510 = vmatpush.bf16.msra.mxu0 %v1217
  %1511 = vmatpush.bf16.msra.mxu0 %v1209
  %1512 = vmatpush.bf16.msra.mxu0 %v1201
  %1513 = vmatpush.bf16.msra.mxu0 %v1193
  %1514 = vmatpush.bf16.msra.mxu0 %v1185
  %1515 = vmatpush.bf16.msra.mxu0 %v1177
  %1516 = vmatmul.bf16.gmra.mxu0 %v642
  %v1517 = vpop.f32.mrf.mxu0
  %v1518 = vadd.f32 %v777, %v1517
  %v1519 = vpop.f32.mrf.mxu0
  %1520 = vdwg.mxu0
  %1521 = vmatpush.bf16.msra.mxu0 %v1297
  %1522 = vmatpush.bf16.msra.mxu0 %v1289
  %1523 = vmatpush.bf16.msra.mxu0 %v1281
  %1524 = vmatpush.bf16.msra.mxu0 %v1273
  %1525 = vmatpush.bf16.msra.mxu0 %v1265
  %1526 = vmatpush.bf16.msra.mxu0 %v1257
  %1527 = vmatpush.bf16.msra.mxu0 %v1249
  %1528 = vmatpush.bf16.msra.mxu0 %v1241
  %1529 = vmatmul.bf16.gmra.mxu0 %v643
  %v1530 = vpop.f32.mrf.mxu0
  %v1531 = vadd.f32 %v1518, %v1530
  %v1532 = vpop.f32.mrf.mxu0
  %1533 = vdwg.mxu0
  %1534 = vmatpush.bf16.msra.mxu0 %v1234
  %1535 = vmatpush.bf16.msra.mxu0 %v1226
  %1536 = vmatpush.bf16.msra.mxu0 %v1218
  %1537 = vmatpush.bf16.msra.mxu0 %v1210
  %1538 = vmatpush.bf16.msra.mxu0 %v1202
  %1539 = vmatpush.bf16.msra.mxu0 %v1194
  %1540 = vmatpush.bf16.msra.mxu0 %v1186
  %1541 = vmatpush.bf16.msra.mxu0 %v1178
  %1542 = vmatmul.bf16.gmra.mxu0 %v642
  %v1543 = vpop.f32.mrf.mxu0
  %v1544 = vadd.f32 %v778, %v1543
  %v1545 = vpop.f32.mrf.mxu0
  %1546 = vdwg.mxu0
  %1547 = vmatpush.bf16.msra.mxu0 %v1298
  %1548 = vmatpush.bf16.msra.mxu0 %v1290
  %1549 = vmatpush.bf16.msra.mxu0 %v1282
  %1550 = vmatpush.bf16.msra.mxu0 %v1274
  %1551 = vmatpush.bf16.msra.mxu0 %v1266
  %1552 = vmatpush.bf16.msra.mxu0 %v1258
  %1553 = vmatpush.bf16.msra.mxu0 %v1250
  %1554 = vmatpush.bf16.msra.mxu0 %v1242
  %1555 = vmatmul.bf16.gmra.mxu0 %v643
  %v1556 = vpop.f32.mrf.mxu0
  %v1557 = vadd.f32 %v1544, %v1556
  %v1558 = vpop.f32.mrf.mxu0
  %1559 = vdwg.mxu0
  %1560 = vmatpush.bf16.msra.mxu0 %v1235
  %1561 = vmatpush.bf16.msra.mxu0 %v1227
  %1562 = vmatpush.bf16.msra.mxu0 %v1219
  %1563 = vmatpush.bf16.msra.mxu0 %v1211
  %1564 = vmatpush.bf16.msra.mxu0 %v1203
  %1565 = vmatpush.bf16.msra.mxu0 %v1195
  %1566 = vmatpush.bf16.msra.mxu0 %v1187
  %1567 = vmatpush.bf16.msra.mxu0 %v1179
  %1568 = vmatmul.bf16.gmra.mxu0 %v642
  %v1569 = vpop.f32.mrf.mxu0
  %v1570 = vadd.f32 %v779, %v1569
  %v1571 = vpop.f32.mrf.mxu0
  %1572 = vdwg.mxu0
  %1573 = vmatpush.bf16.msra.mxu0 %v1299
  %1574 = vmatpush.bf16.msra.mxu0 %v1291
  %1575 = vmatpush.bf16.msra.mxu0 %v1283
  %1576 = vmatpush.bf16.msra.mxu0 %v1275
  %1577 = vmatpush.bf16.msra.mxu0 %v1267
  %1578 = vmatpush.bf16.msra.mxu0 %v1259
  %1579 = vmatpush.bf16.msra.mxu0 %v1251
  %1580 = vmatpush.bf16.msra.mxu0 %v1243
  %1581 = vmatmul.bf16.gmra.mxu0 %v643
  %v1582 = vpop.f32.mrf.mxu0
  %v1583 = vadd.f32 %v1570, %v1582
  %v1584 = vpop.f32.mrf.mxu0
  %1585 = vdwg.mxu0
  %1586 = vmatpush.bf16.msra.mxu0 %v1236
  %1587 = vmatpush.bf16.msra.mxu0 %v1228
  %1588 = vmatpush.bf16.msra.mxu0 %v1220
  %1589 = vmatpush.bf16.msra.mxu0 %v1212
  %1590 = vmatpush.bf16.msra.mxu0 %v1204
  %1591 = vmatpush.bf16.msra.mxu0 %v1196
  %1592 = vmatpush.bf16.msra.mxu0 %v1188
  %1593 = vmatpush.bf16.msra.mxu0 %v1180
  %1594 = vmatmul.bf16.gmra.mxu0 %v642
  %v1595 = vpop.f32.mrf.mxu0
  %v1596 = vadd.f32 %v780, %v1595
  %v1597 = vpop.f32.mrf.mxu0
  %1598 = vdwg.mxu0
  %1599 = vmatpush.bf16.msra.mxu0 %v1300
  %1600 = vmatpush.bf16.msra.mxu0 %v1292
  %1601 = vmatpush.bf16.msra.mxu0 %v1284
  %1602 = vmatpush.bf16.msra.mxu0 %v1276
  %1603 = vmatpush.bf16.msra.mxu0 %v1268
  %1604 = vmatpush.bf16.msra.mxu0 %v1260
  %1605 = vmatpush.bf16.msra.mxu0 %v1252
  %1606 = vmatpush.bf16.msra.mxu0 %v1244
  %1607 = vmatmul.bf16.gmra.mxu0 %v643
  %v1608 = vpop.f32.mrf.mxu0
  %v1609 = vadd.f32 %v1596, %v1608
  %v1610 = vpop.f32.mrf.mxu0
  %1611 = vdwg.mxu0
  %1612 = vmatpush.bf16.msra.mxu0 %v1237
  %1613 = vmatpush.bf16.msra.mxu0 %v1229
  %1614 = vmatpush.bf16.msra.mxu0 %v1221
  %1615 = vmatpush.bf16.msra.mxu0 %v1213
  %1616 = vmatpush.bf16.msra.mxu0 %v1205
  %1617 = vmatpush.bf16.msra.mxu0 %v1197
  %1618 = vmatpush.bf16.msra.mxu0 %v1189
  %1619 = vmatpush.bf16.msra.mxu0 %v1181
  %1620 = vmatmul.bf16.gmra.mxu0 %v642
  %v1621 = vpop.f32.mrf.mxu0
  %v1622 = vadd.f32 %v781, %v1621
  %v1623 = vpop.f32.mrf.mxu0
  %1624 = vdwg.mxu0
  %1625 = vmatpush.bf16.msra.mxu0 %v1301
  %1626 = vmatpush.bf16.msra.mxu0 %v1293
  %1627 = vmatpush.bf16.msra.mxu0 %v1285
  %1628 = vmatpush.bf16.msra.mxu0 %v1277
  %1629 = vmatpush.bf16.msra.mxu0 %v1269
  %1630 = vmatpush.bf16.msra.mxu0 %v1261
  %1631 = vmatpush.bf16.msra.mxu0 %v1253
  %1632 = vmatpush.bf16.msra.mxu0 %v1245
  %1633 = vmatmul.bf16.gmra.mxu0 %v643
  %v1634 = vpop.f32.mrf.mxu0
  %v1635 = vadd.f32 %v1622, %v1634
  %v1636 = vpop.f32.mrf.mxu0
  %1637 = vdwg.mxu0
  %v1638 = vmax.f32 %v1453, 0.0
  %v1639 = vmax.f32 %v1479, 0.0
  %v1640 = vmax.f32 %v1505, 0.0
  %v1641 = vmax.f32 %v1531, 0.0
  %v1642 = vmax.f32 %v1557, 0.0
  %v1643 = vmax.f32 %v1583, 0.0
  %v1644 = vmax.f32 %v1609, 0.0
  %v1645 = vmax.f32 %v1635, 0.0
  %v1646 = vpack.c.bf16 %v1638, %v1638
  %v1647 = vpack.c.bf16 %v1639, %v1639
  %v1648 = vpack.c.bf16 %v1640, %v1640
  %v1649 = vpack.c.bf16 %v1641, %v1641
  %v1650 = vpack.c.bf16 %v1642, %v1642
  %v1651 = vpack.c.bf16 %v1643, %v1643
  %v1652 = vpack.c.bf16 %v1644, %v1644
  %v1653 = vpack.c.bf16 %v1645, %v1645
  %v1654 = vld [vmem:[%s10] sm:$0xff]
  %v1655 = vld [vmem:[%s10 + $0x8] sm:$0xff]
  %v1656 = vld [vmem:[%s10 + $0x10] sm:$0xff]
  %v1657 = vld [vmem:[%s10 + $0x18] sm:$0xff]
  %v1658 = vld [vmem:[%s10 + $0x20] sm:$0xff]
  %v1659 = vld [vmem:[%s10 + $0x28] sm:$0xff]
  %v1660 = vld [vmem:[%s10 + $0x30] sm:$0xff]
  %v1661 = vld [vmem:[%s10 + $0x38] sm:$0xff]
  %v1662 = vld [vmem:[%s10 + $0x40] sm:$0xff]
  %v1663 = vld [vmem:[%s10 + $0x48] sm:$0xff]
  %v1664 = vld [vmem:[%s10 + $0x50] sm:$0xff]
  %v1665 = vld [vmem:[%s10 + $0x58] sm:$0xff]
  %v1666 = vld [vmem:[%s10 + $0x60] sm:$0xff]
  %v1667 = vld [vmem:[%s10 + $0x68] sm:$0xff]
  %v1668 = vld [vmem:[%s10 + $0x70] sm:$0xff]
  %v1669 = vld [vmem:[%s10 + $0x78] sm:$0xff]
  %v1670 = vld [vmem:[%s10 + $0x80] sm:$0xff]
  %v1671 = vld [vmem:[%s10 + $0x88] sm:$0xff]
  %v1672 = vld [vmem:[%s10 + $0x90] sm:$0xff]
  %v1673 = vld [vmem:[%s10 + $0x98] sm:$0xff]
  %v1674 = vld [vmem:[%s10 + $0xa0] sm:$0xff]
  %v1675 = vld [vmem:[%s10 + $0xa8] sm:$0xff]
  %v1676 = vld [vmem:[%s10 + $0xb0] sm:$0xff]
  %v1677 = vld [vmem:[%s10 + $0xb8] sm:$0xff]
  %v1678 = vld [vmem:[%s10 + $0xc0] sm:$0xff]
  %v1679 = vld [vmem:[%s10 + $0xc8] sm:$0xff]
  %v1680 = vld [vmem:[%s10 + $0xd0] sm:$0xff]
  %v1681 = vld [vmem:[%s10 + $0xd8] sm:$0xff]
  %v1682 = vld [vmem:[%s10 + $0xe0] sm:$0xff]
  %v1683 = vld [vmem:[%s10 + $0xe8] sm:$0xff]
  %v1684 = vld [vmem:[%s10 + $0xf0] sm:$0xff]
  %v1685 = vld [vmem:[%s10 + $0xf8] sm:$0xff]
  %v1686 = vld [vmem:[%s10 + $0x100] sm:$0xff]
  %v1687 = vld [vmem:[%s10 + $0x108] sm:$0xff]
  %v1688 = vld [vmem:[%s10 + $0x110] sm:$0xff]
  %v1689 = vld [vmem:[%s10 + $0x118] sm:$0xff]
  %v1690 = vld [vmem:[%s10 + $0x120] sm:$0xff]
  %v1691 = vld [vmem:[%s10 + $0x128] sm:$0xff]
  %v1692 = vld [vmem:[%s10 + $0x130] sm:$0xff]
  %v1693 = vld [vmem:[%s10 + $0x138] sm:$0xff]
  %v1694 = vld [vmem:[%s10 + $0x140] sm:$0xff]
  %v1695 = vld [vmem:[%s10 + $0x148] sm:$0xff]
  %v1696 = vld [vmem:[%s10 + $0x150] sm:$0xff]
  %v1697 = vld [vmem:[%s10 + $0x158] sm:$0xff]
  %v1698 = vld [vmem:[%s10 + $0x160] sm:$0xff]
  %v1699 = vld [vmem:[%s10 + $0x168] sm:$0xff]
  %v1700 = vld [vmem:[%s10 + $0x170] sm:$0xff]
  %v1701 = vld [vmem:[%s10 + $0x178] sm:$0xff]
  %v1702 = vld [vmem:[%s10 + $0x180] sm:$0xff]
  %v1703 = vld [vmem:[%s10 + $0x188] sm:$0xff]
  %v1704 = vld [vmem:[%s10 + $0x190] sm:$0xff]
  %v1705 = vld [vmem:[%s10 + $0x198] sm:$0xff]
  %v1706 = vld [vmem:[%s10 + $0x1a0] sm:$0xff]
  %v1707 = vld [vmem:[%s10 + $0x1a8] sm:$0xff]
  %v1708 = vld [vmem:[%s10 + $0x1b0] sm:$0xff]
  %v1709 = vld [vmem:[%s10 + $0x1b8] sm:$0xff]
  %v1710 = vld [vmem:[%s10 + $0x1c0] sm:$0xff]
  %v1711 = vld [vmem:[%s10 + $0x1c8] sm:$0xff]
  %v1712 = vld [vmem:[%s10 + $0x1d0] sm:$0xff]
  %v1713 = vld [vmem:[%s10 + $0x1d8] sm:$0xff]
  %v1714 = vld [vmem:[%s10 + $0x1e0] sm:$0xff]
  %v1715 = vld [vmem:[%s10 + $0x1e8] sm:$0xff]
  %v1716 = vld [vmem:[%s10 + $0x1f0] sm:$0xff]
  %v1717 = vld [vmem:[%s10 + $0x1f8] sm:$0xff]
  %v1718 = vld [vmem:[%s10 + $0x200] sm:$0xff]
  %v1719 = vld [vmem:[%s10 + $0x208] sm:$0xff]
  %v1720 = vld [vmem:[%s10 + $0x210] sm:$0xff]
  %v1721 = vld [vmem:[%s10 + $0x218] sm:$0xff]
  %v1722 = vld [vmem:[%s10 + $0x220] sm:$0xff]
  %v1723 = vld [vmem:[%s10 + $0x228] sm:$0xff]
  %v1724 = vld [vmem:[%s10 + $0x230] sm:$0xff]
  %v1725 = vld [vmem:[%s10 + $0x238] sm:$0xff]
  %v1726 = vld [vmem:[%s10 + $0x240] sm:$0xff]
  %v1727 = vld [vmem:[%s10 + $0x248] sm:$0xff]
  %v1728 = vld [vmem:[%s10 + $0x250] sm:$0xff]
  %v1729 = vld [vmem:[%s10 + $0x258] sm:$0xff]
  %v1730 = vld [vmem:[%s10 + $0x260] sm:$0xff]
  %v1731 = vld [vmem:[%s10 + $0x268] sm:$0xff]
  %v1732 = vld [vmem:[%s10 + $0x270] sm:$0xff]
  %v1733 = vld [vmem:[%s10 + $0x278] sm:$0xff]
  %v1734 = vld [vmem:[%s10 + $0x280] sm:$0xff]
  %v1735 = vld [vmem:[%s10 + $0x288] sm:$0xff]
  %v1736 = vld [vmem:[%s10 + $0x290] sm:$0xff]
  %v1737 = vld [vmem:[%s10 + $0x298] sm:$0xff]
  %v1738 = vld [vmem:[%s10 + $0x2a0] sm:$0xff]
  %v1739 = vld [vmem:[%s10 + $0x2a8] sm:$0xff]
  %v1740 = vld [vmem:[%s10 + $0x2b0] sm:$0xff]
  %v1741 = vld [vmem:[%s10 + $0x2b8] sm:$0xff]
  %v1742 = vld [vmem:[%s10 + $0x2c0] sm:$0xff]
  %v1743 = vld [vmem:[%s10 + $0x2c8] sm:$0xff]
  %v1744 = vld [vmem:[%s10 + $0x2d0] sm:$0xff]
  %v1745 = vld [vmem:[%s10 + $0x2d8] sm:$0xff]
  %v1746 = vld [vmem:[%s10 + $0x2e0] sm:$0xff]
  %v1747 = vld [vmem:[%s10 + $0x2e8] sm:$0xff]
  %v1748 = vld [vmem:[%s10 + $0x2f0] sm:$0xff]
  %v1749 = vld [vmem:[%s10 + $0x2f8] sm:$0xff]
  %v1750 = vld [vmem:[%s10 + $0x300] sm:$0xff]
  %v1751 = vld [vmem:[%s10 + $0x308] sm:$0xff]
  %v1752 = vld [vmem:[%s10 + $0x310] sm:$0xff]
  %v1753 = vld [vmem:[%s10 + $0x318] sm:$0xff]
  %v1754 = vld [vmem:[%s10 + $0x320] sm:$0xff]
  %v1755 = vld [vmem:[%s10 + $0x328] sm:$0xff]
  %v1756 = vld [vmem:[%s10 + $0x330] sm:$0xff]
  %v1757 = vld [vmem:[%s10 + $0x338] sm:$0xff]
  %v1758 = vld [vmem:[%s10 + $0x340] sm:$0xff]
  %v1759 = vld [vmem:[%s10 + $0x348] sm:$0xff]
  %v1760 = vld [vmem:[%s10 + $0x350] sm:$0xff]
  %v1761 = vld [vmem:[%s10 + $0x358] sm:$0xff]
  %v1762 = vld [vmem:[%s10 + $0x360] sm:$0xff]
  %v1763 = vld [vmem:[%s10 + $0x368] sm:$0xff]
  %v1764 = vld [vmem:[%s10 + $0x370] sm:$0xff]
  %v1765 = vld [vmem:[%s10 + $0x378] sm:$0xff]
  %v1766 = vld [vmem:[%s10 + $0x380] sm:$0xff]
  %v1767 = vld [vmem:[%s10 + $0x388] sm:$0xff]
  %v1768 = vld [vmem:[%s10 + $0x390] sm:$0xff]
  %v1769 = vld [vmem:[%s10 + $0x398] sm:$0xff]
  %v1770 = vld [vmem:[%s10 + $0x3a0] sm:$0xff]
  %v1771 = vld [vmem:[%s10 + $0x3a8] sm:$0xff]
  %v1772 = vld [vmem:[%s10 + $0x3b0] sm:$0xff]
  %v1773 = vld [vmem:[%s10 + $0x3b8] sm:$0xff]
  %v1774 = vld [vmem:[%s10 + $0x3c0] sm:$0xff]
  %v1775 = vld [vmem:[%s10 + $0x3c8] sm:$0xff]
  %v1776 = vld [vmem:[%s10 + $0x3d0] sm:$0xff]
  %v1777 = vld [vmem:[%s10 + $0x3d8] sm:$0xff]
  %v1778 = vld [vmem:[%s10 + $0x3e0] sm:$0xff]
  %v1779 = vld [vmem:[%s10 + $0x3e8] sm:$0xff]
  %v1780 = vld [vmem:[%s10 + $0x3f0] sm:$0xff]
  %v1781 = vld [vmem:[%s10 + $0x3f8] sm:$0xff]
  %v1782 = vld [vmem:[%s11] sm:$0x3]
  %v1784 = vperm.slane %v1782, 0
  %v1785 = vperm.slane %v1782, 1
  %v1916 = vunpack.c.l.b16 %v1654
  %v1917 = vunpack.c.h.b16 %v1654
  %v1918 = vunpack.c.l.b16 %v1655
  %v1919 = vunpack.c.h.b16 %v1655
  %v1920 = vunpack.c.l.b16 %v1656
  %v1921 = vunpack.c.h.b16 %v1656
  %v1922 = vunpack.c.l.b16 %v1657
  %v1923 = vunpack.c.h.b16 %v1657
  %v1924 = vunpack.c.l.b16 %v1658
  %v1925 = vunpack.c.h.b16 %v1658
  %v1926 = vunpack.c.l.b16 %v1659
  %v1927 = vunpack.c.h.b16 %v1659
  %v1928 = vunpack.c.l.b16 %v1660
  %v1929 = vunpack.c.h.b16 %v1660
  %v1930 = vunpack.c.l.b16 %v1661
  %v1931 = vunpack.c.h.b16 %v1661
  %v1932 = vunpack.c.l.b16 %v1662
  %v1933 = vunpack.c.h.b16 %v1662
  %v1934 = vunpack.c.l.b16 %v1663
  %v1935 = vunpack.c.h.b16 %v1663
  %v1936 = vunpack.c.l.b16 %v1664
  %v1937 = vunpack.c.h.b16 %v1664
  %v1938 = vunpack.c.l.b16 %v1665
  %v1939 = vunpack.c.h.b16 %v1665
  %v1940 = vunpack.c.l.b16 %v1666
  %v1941 = vunpack.c.h.b16 %v1666
  %v1942 = vunpack.c.l.b16 %v1667
  %v1943 = vunpack.c.h.b16 %v1667
  %v1944 = vunpack.c.l.b16 %v1668
  %v1945 = vunpack.c.h.b16 %v1668
  %v1946 = vunpack.c.l.b16 %v1669
  %v1947 = vunpack.c.h.b16 %v1669
  %v1948 = vunpack.c.l.b16 %v1670
  %v1949 = vunpack.c.h.b16 %v1670
  %v1950 = vunpack.c.l.b16 %v1671
  %v1951 = vunpack.c.h.b16 %v1671
  %v1952 = vunpack.c.l.b16 %v1672
  %v1953 = vunpack.c.h.b16 %v1672
  %v1954 = vunpack.c.l.b16 %v1673
  %v1955 = vunpack.c.h.b16 %v1673
  %v1956 = vunpack.c.l.b16 %v1674
  %v1957 = vunpack.c.h.b16 %v1674
  %v1958 = vunpack.c.l.b16 %v1675
  %v1959 = vunpack.c.h.b16 %v1675
  %v1960 = vunpack.c.l.b16 %v1676
  %v1961 = vunpack.c.h.b16 %v1676
  %v1962 = vunpack.c.l.b16 %v1677
  %v1963 = vunpack.c.h.b16 %v1677
  %v1964 = vunpack.c.l.b16 %v1678
  %v1965 = vunpack.c.h.b16 %v1678
  %v1966 = vunpack.c.l.b16 %v1679
  %v1967 = vunpack.c.h.b16 %v1679
  %v1968 = vunpack.c.l.b16 %v1680
  %v1969 = vunpack.c.h.b16 %v1680
  %v1970 = vunpack.c.l.b16 %v1681
  %v1971 = vunpack.c.h.b16 %v1681
  %v1972 = vunpack.c.l.b16 %v1682
  %v1973 = vunpack.c.h.b16 %v1682
  %v1974 = vunpack.c.l.b16 %v1683
  %v1975 = vunpack.c.h.b16 %v1683
  %v1976 = vunpack.c.l.b16 %v1684
  %v1977 = vunpack.c.h.b16 %v1684
  %v1978 = vunpack.c.l.b16 %v1685
  %v1979 = vunpack.c.h.b16 %v1685
  %v1980 = vunpack.c.l.b16 %v1686
  %v1981 = vunpack.c.h.b16 %v1686
  %v1982 = vunpack.c.l.b16 %v1687
  %v1983 = vunpack.c.h.b16 %v1687
  %v1984 = vunpack.c.l.b16 %v1688
  %v1985 = vunpack.c.h.b16 %v1688
  %v1986 = vunpack.c.l.b16 %v1689
  %v1987 = vunpack.c.h.b16 %v1689
  %v1988 = vunpack.c.l.b16 %v1690
  %v1989 = vunpack.c.h.b16 %v1690
  %v1990 = vunpack.c.l.b16 %v1691
  %v1991 = vunpack.c.h.b16 %v1691
  %v1992 = vunpack.c.l.b16 %v1692
  %v1993 = vunpack.c.h.b16 %v1692
  %v1994 = vunpack.c.l.b16 %v1693
  %v1995 = vunpack.c.h.b16 %v1693
  %v1996 = vunpack.c.l.b16 %v1694
  %v1997 = vunpack.c.h.b16 %v1694
  %v1998 = vunpack.c.l.b16 %v1695
  %v1999 = vunpack.c.h.b16 %v1695
  %v2000 = vunpack.c.l.b16 %v1696
  %v2001 = vunpack.c.h.b16 %v1696
  %v2002 = vunpack.c.l.b16 %v1697
  %v2003 = vunpack.c.h.b16 %v1697
  %v2004 = vunpack.c.l.b16 %v1698
  %v2005 = vunpack.c.h.b16 %v1698
  %v2006 = vunpack.c.l.b16 %v1699
  %v2007 = vunpack.c.h.b16 %v1699
  %v2008 = vunpack.c.l.b16 %v1700
  %v2009 = vunpack.c.h.b16 %v1700
  %v2010 = vunpack.c.l.b16 %v1701
  %v2011 = vunpack.c.h.b16 %v1701
  %v2012 = vunpack.c.l.b16 %v1702
  %v2013 = vunpack.c.h.b16 %v1702
  %v2014 = vunpack.c.l.b16 %v1703
  %v2015 = vunpack.c.h.b16 %v1703
  %v2016 = vunpack.c.l.b16 %v1704
  %v2017 = vunpack.c.h.b16 %v1704
  %v2018 = vunpack.c.l.b16 %v1705
  %v2019 = vunpack.c.h.b16 %v1705
  %v2020 = vunpack.c.l.b16 %v1706
  %v2021 = vunpack.c.h.b16 %v1706
  %v2022 = vunpack.c.l.b16 %v1707
  %v2023 = vunpack.c.h.b16 %v1707
  %v2024 = vunpack.c.l.b16 %v1708
  %v2025 = vunpack.c.h.b16 %v1708
  %v2026 = vunpack.c.l.b16 %v1709
  %v2027 = vunpack.c.h.b16 %v1709
  %v2028 = vunpack.c.l.b16 %v1710
  %v2029 = vunpack.c.h.b16 %v1710
  %v2030 = vunpack.c.l.b16 %v1711
  %v2031 = vunpack.c.h.b16 %v1711
  %v2032 = vunpack.c.l.b16 %v1712
  %v2033 = vunpack.c.h.b16 %v1712
  %v2034 = vunpack.c.l.b16 %v1713
  %v2035 = vunpack.c.h.b16 %v1713
  %v2036 = vunpack.c.l.b16 %v1714
  %v2037 = vunpack.c.h.b16 %v1714
  %v2038 = vunpack.c.l.b16 %v1715
  %v2039 = vunpack.c.h.b16 %v1715
  %v2040 = vunpack.c.l.b16 %v1716
  %v2041 = vunpack.c.h.b16 %v1716
  %v2042 = vunpack.c.l.b16 %v1717
  %v2043 = vunpack.c.h.b16 %v1717
  %v2044 = vunpack.c.l.b16 %v1718
  %v2045 = vunpack.c.h.b16 %v1718
  %v2046 = vunpack.c.l.b16 %v1719
  %v2047 = vunpack.c.h.b16 %v1719
  %v2048 = vunpack.c.l.b16 %v1720
  %v2049 = vunpack.c.h.b16 %v1720
  %v2050 = vunpack.c.l.b16 %v1721
  %v2051 = vunpack.c.h.b16 %v1721
  %v2052 = vunpack.c.l.b16 %v1722
  %v2053 = vunpack.c.h.b16 %v1722
  %v2054 = vunpack.c.l.b16 %v1723
  %v2055 = vunpack.c.h.b16 %v1723
  %v2056 = vunpack.c.l.b16 %v1724
  %v2057 = vunpack.c.h.b16 %v1724
  %v2058 = vunpack.c.l.b16 %v1725
  %v2059 = vunpack.c.h.b16 %v1725
  %v2060 = vunpack.c.l.b16 %v1726
  %v2061 = vunpack.c.h.b16 %v1726
  %v2062 = vunpack.c.l.b16 %v1727
  %v2063 = vunpack.c.h.b16 %v1727
  %v2064 = vunpack.c.l.b16 %v1728
  %v2065 = vunpack.c.h.b16 %v1728
  %v2066 = vunpack.c.l.b16 %v1729
  %v2067 = vunpack.c.h.b16 %v1729
  %v2068 = vunpack.c.l.b16 %v1730
  %v2069 = vunpack.c.h.b16 %v1730
  %v2070 = vunpack.c.l.b16 %v1731
  %v2071 = vunpack.c.h.b16 %v1731
  %v2072 = vunpack.c.l.b16 %v1732
  %v2073 = vunpack.c.h.b16 %v1732
  %v2074 = vunpack.c.l.b16 %v1733
  %v2075 = vunpack.c.h.b16 %v1733
  %v2076 = vunpack.c.l.b16 %v1734
  %v2077 = vunpack.c.h.b16 %v1734
  %v2078 = vunpack.c.l.b16 %v1735
  %v2079 = vunpack.c.h.b16 %v1735
  %v2080 = vunpack.c.l.b16 %v1736
  %v2081 = vunpack.c.h.b16 %v1736
  %v2082 = vunpack.c.l.b16 %v1737
  %v2083 = vunpack.c.h.b16 %v1737
  %v2084 = vunpack.c.l.b16 %v1738
  %v2085 = vunpack.c.h.b16 %v1738
  %v2086 = vunpack.c.l.b16 %v1739
  %v2087 = vunpack.c.h.b16 %v1739
  %v2088 = vunpack.c.l.b16 %v1740
  %v2089 = vunpack.c.h.b16 %v1740
  %v2090 = vunpack.c.l.b16 %v1741
  %v2091 = vunpack.c.h.b16 %v1741
  %v2092 = vunpack.c.l.b16 %v1742
  %v2093 = vunpack.c.h.b16 %v1742
  %v2094 = vunpack.c.l.b16 %v1743
  %v2095 = vunpack.c.h.b16 %v1743
  %v2096 = vunpack.c.l.b16 %v1744
  %v2097 = vunpack.c.h.b16 %v1744
  %v2098 = vunpack.c.l.b16 %v1745
  %v2099 = vunpack.c.h.b16 %v1745
  %v2100 = vunpack.c.l.b16 %v1746
  %v2101 = vunpack.c.h.b16 %v1746
  %v2102 = vunpack.c.l.b16 %v1747
  %v2103 = vunpack.c.h.b16 %v1747
  %v2104 = vunpack.c.l.b16 %v1748
  %v2105 = vunpack.c.h.b16 %v1748
  %v2106 = vunpack.c.l.b16 %v1749
  %v2107 = vunpack.c.h.b16 %v1749
  %v2108 = vunpack.c.l.b16 %v1750
  %v2109 = vunpack.c.h.b16 %v1750
  %v2110 = vunpack.c.l.b16 %v1751
  %v2111 = vunpack.c.h.b16 %v1751
  %v2112 = vunpack.c.l.b16 %v1752
  %v2113 = vunpack.c.h.b16 %v1752
  %v2114 = vunpack.c.l.b16 %v1753
  %v2115 = vunpack.c.h.b16 %v1753
  %v2116 = vunpack.c.l.b16 %v1754
  %v2117 = vunpack.c.h.b16 %v1754
  %v2118 = vunpack.c.l.b16 %v1755
  %v2119 = vunpack.c.h.b16 %v1755
  %v2120 = vunpack.c.l.b16 %v1756
  %v2121 = vunpack.c.h.b16 %v1756
  %v2122 = vunpack.c.l.b16 %v1757
  %v2123 = vunpack.c.h.b16 %v1757
  %v2124 = vunpack.c.l.b16 %v1758
  %v2125 = vunpack.c.h.b16 %v1758
  %v2126 = vunpack.c.l.b16 %v1759
  %v2127 = vunpack.c.h.b16 %v1759
  %v2128 = vunpack.c.l.b16 %v1760
  %v2129 = vunpack.c.h.b16 %v1760
  %v2130 = vunpack.c.l.b16 %v1761
  %v2131 = vunpack.c.h.b16 %v1761
  %v2132 = vunpack.c.l.b16 %v1762
  %v2133 = vunpack.c.h.b16 %v1762
  %v2134 = vunpack.c.l.b16 %v1763
  %v2135 = vunpack.c.h.b16 %v1763
  %v2136 = vunpack.c.l.b16 %v1764
  %v2137 = vunpack.c.h.b16 %v1764
  %v2138 = vunpack.c.l.b16 %v1765
  %v2139 = vunpack.c.h.b16 %v1765
  %v2140 = vunpack.c.l.b16 %v1766
  %v2141 = vunpack.c.h.b16 %v1766
  %v2142 = vunpack.c.l.b16 %v1767
  %v2143 = vunpack.c.h.b16 %v1767
  %v2144 = vunpack.c.l.b16 %v1768
  %v2145 = vunpack.c.h.b16 %v1768
  %v2146 = vunpack.c.l.b16 %v1769
  %v2147 = vunpack.c.h.b16 %v1769
  %v2148 = vunpack.c.l.b16 %v1770
  %v2149 = vunpack.c.h.b16 %v1770
  %v2150 = vunpack.c.l.b16 %v1771
  %v2151 = vunpack.c.h.b16 %v1771
  %v2152 = vunpack.c.l.b16 %v1772
  %v2153 = vunpack.c.h.b16 %v1772
  %v2154 = vunpack.c.l.b16 %v1773
  %v2155 = vunpack.c.h.b16 %v1773
  %v2156 = vunpack.c.l.b16 %v1774
  %v2157 = vunpack.c.h.b16 %v1774
  %v2158 = vunpack.c.l.b16 %v1775
  %v2159 = vunpack.c.h.b16 %v1775
  %v2160 = vunpack.c.l.b16 %v1776
  %v2161 = vunpack.c.h.b16 %v1776
  %v2162 = vunpack.c.l.b16 %v1777
  %v2163 = vunpack.c.h.b16 %v1777
  %v2164 = vunpack.c.l.b16 %v1778
  %v2165 = vunpack.c.h.b16 %v1778
  %v2166 = vunpack.c.l.b16 %v1779
  %v2167 = vunpack.c.h.b16 %v1779
  %v2168 = vunpack.c.l.b16 %v1780
  %v2169 = vunpack.c.h.b16 %v1780
  %v2170 = vunpack.c.l.b16 %v1781
  %v2171 = vunpack.c.h.b16 %v1781
  %v2172 = vpack.c.b16 %v1918, %v1916
  %v2173 = vpack.c.b16 %v1919, %v1917
  %v2174 = vpack.c.b16 %v1922, %v1920
  %v2175 = vpack.c.b16 %v1923, %v1921
  %v2176 = vpack.c.b16 %v1926, %v1924
  %v2177 = vpack.c.b16 %v1927, %v1925
  %v2178 = vpack.c.b16 %v1930, %v1928
  %v2179 = vpack.c.b16 %v1931, %v1929
  %v2180 = vpack.c.b16 %v1934, %v1932
  %v2181 = vpack.c.b16 %v1935, %v1933
  %v2182 = vpack.c.b16 %v1938, %v1936
  %v2183 = vpack.c.b16 %v1939, %v1937
  %v2184 = vpack.c.b16 %v1942, %v1940
  %v2185 = vpack.c.b16 %v1943, %v1941
  %v2186 = vpack.c.b16 %v1946, %v1944
  %v2187 = vpack.c.b16 %v1947, %v1945
  %v2188 = vpack.c.b16 %v1950, %v1948
  %v2189 = vpack.c.b16 %v1951, %v1949
  %v2190 = vpack.c.b16 %v1954, %v1952
  %v2191 = vpack.c.b16 %v1955, %v1953
  %v2192 = vpack.c.b16 %v1958, %v1956
  %v2193 = vpack.c.b16 %v1959, %v1957
  %v2194 = vpack.c.b16 %v1962, %v1960
  %v2195 = vpack.c.b16 %v1963, %v1961
  %v2196 = vpack.c.b16 %v1966, %v1964
  %v2197 = vpack.c.b16 %v1967, %v1965
  %v2198 = vpack.c.b16 %v1970, %v1968
  %v2199 = vpack.c.b16 %v1971, %v1969
  %v2200 = vpack.c.b16 %v1974, %v1972
  %v2201 = vpack.c.b16 %v1975, %v1973
  %v2202 = vpack.c.b16 %v1978, %v1976
  %v2203 = vpack.c.b16 %v1979, %v1977
  %v2204 = vpack.c.b16 %v1982, %v1980
  %v2205 = vpack.c.b16 %v1983, %v1981
  %v2206 = vpack.c.b16 %v1986, %v1984
  %v2207 = vpack.c.b16 %v1987, %v1985
  %v2208 = vpack.c.b16 %v1990, %v1988
  %v2209 = vpack.c.b16 %v1991, %v1989
  %v2210 = vpack.c.b16 %v1994, %v1992
  %v2211 = vpack.c.b16 %v1995, %v1993
  %v2212 = vpack.c.b16 %v1998, %v1996
  %v2213 = vpack.c.b16 %v1999, %v1997
  %v2214 = vpack.c.b16 %v2002, %v2000
  %v2215 = vpack.c.b16 %v2003, %v2001
  %v2216 = vpack.c.b16 %v2006, %v2004
  %v2217 = vpack.c.b16 %v2007, %v2005
  %v2218 = vpack.c.b16 %v2010, %v2008
  %v2219 = vpack.c.b16 %v2011, %v2009
  %v2220 = vpack.c.b16 %v2014, %v2012
  %v2221 = vpack.c.b16 %v2015, %v2013
  %v2222 = vpack.c.b16 %v2018, %v2016
  %v2223 = vpack.c.b16 %v2019, %v2017
  %v2224 = vpack.c.b16 %v2022, %v2020
  %v2225 = vpack.c.b16 %v2023, %v2021
  %v2226 = vpack.c.b16 %v2026, %v2024
  %v2227 = vpack.c.b16 %v2027, %v2025
  %v2228 = vpack.c.b16 %v2030, %v2028
  %v2229 = vpack.c.b16 %v2031, %v2029
  %v2230 = vpack.c.b16 %v2034, %v2032
  %v2231 = vpack.c.b16 %v2035, %v2033
  %v2232 = vpack.c.b16 %v2038, %v2036
  %v2233 = vpack.c.b16 %v2039, %v2037
  %v2234 = vpack.c.b16 %v2042, %v2040
  %v2235 = vpack.c.b16 %v2043, %v2041
  %v2236 = vpack.c.b16 %v2046, %v2044
  %v2237 = vpack.c.b16 %v2047, %v2045
  %v2238 = vpack.c.b16 %v2050, %v2048
  %v2239 = vpack.c.b16 %v2051, %v2049
  %v2240 = vpack.c.b16 %v2054, %v2052
  %v2241 = vpack.c.b16 %v2055, %v2053
  %v2242 = vpack.c.b16 %v2058, %v2056
  %v2243 = vpack.c.b16 %v2059, %v2057
  %v2244 = vpack.c.b16 %v2062, %v2060
  %v2245 = vpack.c.b16 %v2063, %v2061
  %v2246 = vpack.c.b16 %v2066, %v2064
  %v2247 = vpack.c.b16 %v2067, %v2065
  %v2248 = vpack.c.b16 %v2070, %v2068
  %v2249 = vpack.c.b16 %v2071, %v2069
  %v2250 = vpack.c.b16 %v2074, %v2072
  %v2251 = vpack.c.b16 %v2075, %v2073
  %v2252 = vpack.c.b16 %v2078, %v2076
  %v2253 = vpack.c.b16 %v2079, %v2077
  %v2254 = vpack.c.b16 %v2082, %v2080
  %v2255 = vpack.c.b16 %v2083, %v2081
  %v2256 = vpack.c.b16 %v2086, %v2084
  %v2257 = vpack.c.b16 %v2087, %v2085
  %v2258 = vpack.c.b16 %v2090, %v2088
  %v2259 = vpack.c.b16 %v2091, %v2089
  %v2260 = vpack.c.b16 %v2094, %v2092
  %v2261 = vpack.c.b16 %v2095, %v2093
  %v2262 = vpack.c.b16 %v2098, %v2096
  %v2263 = vpack.c.b16 %v2099, %v2097
  %v2264 = vpack.c.b16 %v2102, %v2100
  %v2265 = vpack.c.b16 %v2103, %v2101
  %v2266 = vpack.c.b16 %v2106, %v2104
  %v2267 = vpack.c.b16 %v2107, %v2105
  %v2268 = vpack.c.b16 %v2110, %v2108
  %v2269 = vpack.c.b16 %v2111, %v2109
  %v2270 = vpack.c.b16 %v2114, %v2112
  %v2271 = vpack.c.b16 %v2115, %v2113
  %v2272 = vpack.c.b16 %v2118, %v2116
  %v2273 = vpack.c.b16 %v2119, %v2117
  %v2274 = vpack.c.b16 %v2122, %v2120
  %v2275 = vpack.c.b16 %v2123, %v2121
  %v2276 = vpack.c.b16 %v2126, %v2124
  %v2277 = vpack.c.b16 %v2127, %v2125
  %v2278 = vpack.c.b16 %v2130, %v2128
  %v2279 = vpack.c.b16 %v2131, %v2129
  %v2280 = vpack.c.b16 %v2134, %v2132
  %v2281 = vpack.c.b16 %v2135, %v2133
  %v2282 = vpack.c.b16 %v2138, %v2136
  %v2283 = vpack.c.b16 %v2139, %v2137
  %v2284 = vpack.c.b16 %v2142, %v2140
  %v2285 = vpack.c.b16 %v2143, %v2141
  %v2286 = vpack.c.b16 %v2146, %v2144
  %v2287 = vpack.c.b16 %v2147, %v2145
  %v2288 = vpack.c.b16 %v2150, %v2148
  %v2289 = vpack.c.b16 %v2151, %v2149
  %v2290 = vpack.c.b16 %v2154, %v2152
  %v2291 = vpack.c.b16 %v2155, %v2153
  %v2292 = vpack.c.b16 %v2158, %v2156
  %v2293 = vpack.c.b16 %v2159, %v2157
  %v2294 = vpack.c.b16 %v2162, %v2160
  %v2295 = vpack.c.b16 %v2163, %v2161
  %v2296 = vpack.c.b16 %v2166, %v2164
  %v2297 = vpack.c.b16 %v2167, %v2165
  %v2298 = vpack.c.b16 %v2170, %v2168
  %v2299 = vpack.c.b16 %v2171, %v2169
  %2428 = vmatpush.bf16.msra.mxu0 %v2186
  %2429 = vmatpush.bf16.msra.mxu0 %v2184
  %2430 = vmatpush.bf16.msra.mxu0 %v2182
  %2431 = vmatpush.bf16.msra.mxu0 %v2180
  %2432 = vmatpush.bf16.msra.mxu0 %v2178
  %2433 = vmatpush.bf16.msra.mxu0 %v2176
  %2434 = vmatpush.bf16.msra.mxu0 %v2174
  %2435 = vmatpush.bf16.msra.mxu0 %v2172
  %2436 = vmatmul.bf16.gmra.mxu0 %v1646
  %v2437 = vpop.f32.mrf.mxu0
  %v2438 = vadd.f32 %v1784, %v2437
  %v2439 = vpop.f32.mrf.mxu0
  %2440 = vdwg.mxu0
  %2441 = vmatpush.bf16.msra.mxu0 %v2202
  %2442 = vmatpush.bf16.msra.mxu0 %v2200
  %2443 = vmatpush.bf16.msra.mxu0 %v2198
  %2444 = vmatpush.bf16.msra.mxu0 %v2196
  %2445 = vmatpush.bf16.msra.mxu0 %v2194
  %2446 = vmatpush.bf16.msra.mxu0 %v2192
  %2447 = vmatpush.bf16.msra.mxu0 %v2190
  %2448 = vmatpush.bf16.msra.mxu0 %v2188
  %2449 = vmatmul.bf16.gmra.mxu0 %v1647
  %v2450 = vpop.f32.mrf.mxu0
  %v2451 = vadd.f32 %v2438, %v2450
  %v2452 = vpop.f32.mrf.mxu0
  %2453 = vdwg.mxu0
  %2454 = vmatpush.bf16.msra.mxu0 %v2218
  %2455 = vmatpush.bf16.msra.mxu0 %v2216
  %2456 = vmatpush.bf16.msra.mxu0 %v2214
  %2457 = vmatpush.bf16.msra.mxu0 %v2212
  %2458 = vmatpush.bf16.msra.mxu0 %v2210
  %2459 = vmatpush.bf16.msra.mxu0 %v2208
  %2460 = vmatpush.bf16.msra.mxu0 %v2206
  %2461 = vmatpush.bf16.msra.mxu0 %v2204
  %2462 = vmatmul.bf16.gmra.mxu0 %v1648
  %v2463 = vpop.f32.mrf.mxu0
  %v2464 = vadd.f32 %v2451, %v2463
  %v2465 = vpop.f32.mrf.mxu0
  %2466 = vdwg.mxu0
  %2467 = vmatpush.bf16.msra.mxu0 %v2234
  %2468 = vmatpush.bf16.msra.mxu0 %v2232
  %2469 = vmatpush.bf16.msra.mxu0 %v2230
  %2470 = vmatpush.bf16.msra.mxu0 %v2228
  %2471 = vmatpush.bf16.msra.mxu0 %v2226
  %2472 = vmatpush.bf16.msra.mxu0 %v2224
  %2473 = vmatpush.bf16.msra.mxu0 %v2222
  %2474 = vmatpush.bf16.msra.mxu0 %v2220
  %2475 = vmatmul.bf16.gmra.mxu0 %v1649
  %v2476 = vpop.f32.mrf.mxu0
  %v2477 = vadd.f32 %v2464, %v2476
  %v2478 = vpop.f32.mrf.mxu0
  %2479 = vdwg.mxu0
  %2480 = vmatpush.bf16.msra.mxu0 %v2250
  %2481 = vmatpush.bf16.msra.mxu0 %v2248
  %2482 = vmatpush.bf16.msra.mxu0 %v2246
  %2483 = vmatpush.bf16.msra.mxu0 %v2244
  %2484 = vmatpush.bf16.msra.mxu0 %v2242
  %2485 = vmatpush.bf16.msra.mxu0 %v2240
  %2486 = vmatpush.bf16.msra.mxu0 %v2238
  %2487 = vmatpush.bf16.msra.mxu0 %v2236
  %2488 = vmatmul.bf16.gmra.mxu0 %v1650
  %v2489 = vpop.f32.mrf.mxu0
  %v2490 = vadd.f32 %v2477, %v2489
  %v2491 = vpop.f32.mrf.mxu0
  %2492 = vdwg.mxu0
  %2493 = vmatpush.bf16.msra.mxu0 %v2266
  %2494 = vmatpush.bf16.msra.mxu0 %v2264
  %2495 = vmatpush.bf16.msra.mxu0 %v2262
  %2496 = vmatpush.bf16.msra.mxu0 %v2260
  %2497 = vmatpush.bf16.msra.mxu0 %v2258
  %2498 = vmatpush.bf16.msra.mxu0 %v2256
  %2499 = vmatpush.bf16.msra.mxu0 %v2254
  %2500 = vmatpush.bf16.msra.mxu0 %v2252
  %2501 = vmatmul.bf16.gmra.mxu0 %v1651
  %v2502 = vpop.f32.mrf.mxu0
  %v2503 = vadd.f32 %v2490, %v2502
  %v2504 = vpop.f32.mrf.mxu0
  %2505 = vdwg.mxu0
  %2506 = vmatpush.bf16.msra.mxu0 %v2282
  %2507 = vmatpush.bf16.msra.mxu0 %v2280
  %2508 = vmatpush.bf16.msra.mxu0 %v2278
  %2509 = vmatpush.bf16.msra.mxu0 %v2276
  %2510 = vmatpush.bf16.msra.mxu0 %v2274
  %2511 = vmatpush.bf16.msra.mxu0 %v2272
  %2512 = vmatpush.bf16.msra.mxu0 %v2270
  %2513 = vmatpush.bf16.msra.mxu0 %v2268
  %2514 = vmatmul.bf16.gmra.mxu0 %v1652
  %v2515 = vpop.f32.mrf.mxu0
  %v2516 = vadd.f32 %v2503, %v2515
  %v2517 = vpop.f32.mrf.mxu0
  %2518 = vdwg.mxu0
  %2519 = vmatpush.bf16.msra.mxu0 %v2298
  %2520 = vmatpush.bf16.msra.mxu0 %v2296
  %2521 = vmatpush.bf16.msra.mxu0 %v2294
  %2522 = vmatpush.bf16.msra.mxu0 %v2292
  %2523 = vmatpush.bf16.msra.mxu0 %v2290
  %2524 = vmatpush.bf16.msra.mxu0 %v2288
  %2525 = vmatpush.bf16.msra.mxu0 %v2286
  %2526 = vmatpush.bf16.msra.mxu0 %v2284
  %2527 = vmatmul.bf16.gmra.mxu0 %v1653
  %v2528 = vpop.f32.mrf.mxu0
  %v2529 = vadd.f32 %v2516, %v2528
  %v2530 = vpop.f32.mrf.mxu0
  %2531 = vdwg.mxu0
  %2532 = vmatpush.bf16.msra.mxu0 %v2187
  %2533 = vmatpush.bf16.msra.mxu0 %v2185
  %2534 = vmatpush.bf16.msra.mxu0 %v2183
  %2535 = vmatpush.bf16.msra.mxu0 %v2181
  %2536 = vmatpush.bf16.msra.mxu0 %v2179
  %2537 = vmatpush.bf16.msra.mxu0 %v2177
  %2538 = vmatpush.bf16.msra.mxu0 %v2175
  %2539 = vmatpush.bf16.msra.mxu0 %v2173
  %2540 = vmatmul.bf16.gmra.mxu0 %v1646
  %v2541 = vpop.f32.mrf.mxu0
  %v2542 = vadd.f32 %v1785, %v2541
  %v2543 = vpop.f32.mrf.mxu0
  %2544 = vdwg.mxu0
  %2545 = vmatpush.bf16.msra.mxu0 %v2203
  %2546 = vmatpush.bf16.msra.mxu0 %v2201
  %2547 = vmatpush.bf16.msra.mxu0 %v2199
  %2548 = vmatpush.bf16.msra.mxu0 %v2197
  %2549 = vmatpush.bf16.msra.mxu0 %v2195
  %2550 = vmatpush.bf16.msra.mxu0 %v2193
  %2551 = vmatpush.bf16.msra.mxu0 %v2191
  %2552 = vmatpush.bf16.msra.mxu0 %v2189
  %2553 = vmatmul.bf16.gmra.mxu0 %v1647
  %v2554 = vpop.f32.mrf.mxu0
  %v2555 = vadd.f32 %v2542, %v2554
  %v2556 = vpop.f32.mrf.mxu0
  %2557 = vdwg.mxu0
  %2558 = vmatpush.bf16.msra.mxu0 %v2219
  %2559 = vmatpush.bf16.msra.mxu0 %v2217
  %2560 = vmatpush.bf16.msra.mxu0 %v2215
  %2561 = vmatpush.bf16.msra.mxu0 %v2213
  %2562 = vmatpush.bf16.msra.mxu0 %v2211
  %2563 = vmatpush.bf16.msra.mxu0 %v2209
  %2564 = vmatpush.bf16.msra.mxu0 %v2207
  %2565 = vmatpush.bf16.msra.mxu0 %v2205
  %2566 = vmatmul.bf16.gmra.mxu0 %v1648
  %v2567 = vpop.f32.mrf.mxu0
  %v2568 = vadd.f32 %v2555, %v2567
  %v2569 = vpop.f32.mrf.mxu0
  %2570 = vdwg.mxu0
  %2571 = vmatpush.bf16.msra.mxu0 %v2235
  %2572 = vmatpush.bf16.msra.mxu0 %v2233
  %2573 = vmatpush.bf16.msra.mxu0 %v2231
  %2574 = vmatpush.bf16.msra.mxu0 %v2229
  %2575 = vmatpush.bf16.msra.mxu0 %v2227
  %2576 = vmatpush.bf16.msra.mxu0 %v2225
  %2577 = vmatpush.bf16.msra.mxu0 %v2223
  %2578 = vmatpush.bf16.msra.mxu0 %v2221
  %2579 = vmatmul.bf16.gmra.mxu0 %v1649
  %v2580 = vpop.f32.mrf.mxu0
  %v2581 = vadd.f32 %v2568, %v2580
  %v2582 = vpop.f32.mrf.mxu0
  %2583 = vdwg.mxu0
  %2584 = vmatpush.bf16.msra.mxu0 %v2251
  %2585 = vmatpush.bf16.msra.mxu0 %v2249
  %2586 = vmatpush.bf16.msra.mxu0 %v2247
  %2587 = vmatpush.bf16.msra.mxu0 %v2245
  %2588 = vmatpush.bf16.msra.mxu0 %v2243
  %2589 = vmatpush.bf16.msra.mxu0 %v2241
  %2590 = vmatpush.bf16.msra.mxu0 %v2239
  %2591 = vmatpush.bf16.msra.mxu0 %v2237
  %2592 = vmatmul.bf16.gmra.mxu0 %v1650
  %v2593 = vpop.f32.mrf.mxu0
  %v2594 = vadd.f32 %v2581, %v2593
  %v2595 = vpop.f32.mrf.mxu0
  %2596 = vdwg.mxu0
  %2597 = vmatpush.bf16.msra.mxu0 %v2267
  %2598 = vmatpush.bf16.msra.mxu0 %v2265
  %2599 = vmatpush.bf16.msra.mxu0 %v2263
  %2600 = vmatpush.bf16.msra.mxu0 %v2261
  %2601 = vmatpush.bf16.msra.mxu0 %v2259
  %2602 = vmatpush.bf16.msra.mxu0 %v2257
  %2603 = vmatpush.bf16.msra.mxu0 %v2255
  %2604 = vmatpush.bf16.msra.mxu0 %v2253
  %2605 = vmatmul.bf16.gmra.mxu0 %v1651
  %v2606 = vpop.f32.mrf.mxu0
  %v2607 = vadd.f32 %v2594, %v2606
  %v2608 = vpop.f32.mrf.mxu0
  %2609 = vdwg.mxu0
  %2610 = vmatpush.bf16.msra.mxu0 %v2283
  %2611 = vmatpush.bf16.msra.mxu0 %v2281
  %2612 = vmatpush.bf16.msra.mxu0 %v2279
  %2613 = vmatpush.bf16.msra.mxu0 %v2277
  %2614 = vmatpush.bf16.msra.mxu0 %v2275
  %2615 = vmatpush.bf16.msra.mxu0 %v2273
  %2616 = vmatpush.bf16.msra.mxu0 %v2271
  %2617 = vmatpush.bf16.msra.mxu0 %v2269
  %2618 = vmatmul.bf16.gmra.mxu0 %v1652
  %v2619 = vpop.f32.mrf.mxu0
  %v2620 = vadd.f32 %v2607, %v2619
  %v2621 = vpop.f32.mrf.mxu0
  %2622 = vdwg.mxu0
  %2623 = vmatpush.bf16.msra.mxu0 %v2299
  %2624 = vmatpush.bf16.msra.mxu0 %v2297
  %2625 = vmatpush.bf16.msra.mxu0 %v2295
  %2626 = vmatpush.bf16.msra.mxu0 %v2293
  %2627 = vmatpush.bf16.msra.mxu0 %v2291
  %2628 = vmatpush.bf16.msra.mxu0 %v2289
  %2629 = vmatpush.bf16.msra.mxu0 %v2287
  %2630 = vmatpush.bf16.msra.mxu0 %v2285
  %2631 = vmatmul.bf16.gmra.mxu0 %v1653
  %v2632 = vpop.f32.mrf.mxu0
  %v2633 = vadd.f32 %v2620, %v2632
  %v2634 = vpop.f32.mrf.mxu0
  %2635 = vdwg.mxu0
  %v2636 = vpack.c.bf16 %v2529, %v2529
  %v2637 = vpack.c.bf16 %v2633, %v2633
  %v2638 = vld [vmem:[%s12] sm:$0xf]
  %v2639 = vld [vmem:[%s12 + $0x4] sm:$0xf]
  %v2640 = vld [vmem:[%s12 + $0x8] sm:$0xf]
  %v2641 = vld [vmem:[%s12 + $0xc] sm:$0xf]
  %v2642 = vld [vmem:[%s12 + $0x10] sm:$0xf]
  %v2643 = vld [vmem:[%s12 + $0x14] sm:$0xf]
  %v2644 = vld [vmem:[%s12 + $0x18] sm:$0xf]
  %v2645 = vld [vmem:[%s12 + $0x1c] sm:$0xf]
  %v2646 = vld [vmem:[%s12 + $0x20] sm:$0xf]
  %v2647 = vld [vmem:[%s12 + $0x24] sm:$0xf]
  %v2648 = vld [vmem:[%s12 + $0x28] sm:$0xf]
  %v2649 = vld [vmem:[%s12 + $0x2c] sm:$0xf]
  %v2650 = vld [vmem:[%s12 + $0x30] sm:$0xf]
  %v2651 = vld [vmem:[%s12 + $0x34] sm:$0xf]
  %v2652 = vld [vmem:[%s12 + $0x38] sm:$0xf]
  %v2653 = vld [vmem:[%s12 + $0x3c] sm:$0xf]
  %v2654 = vld [vmem:[%s12 + $0x40] sm:$0xf]
  %v2655 = vld [vmem:[%s12 + $0x44] sm:$0xf]
  %v2656 = vld [vmem:[%s12 + $0x48] sm:$0xf]
  %v2657 = vld [vmem:[%s12 + $0x4c] sm:$0xf]
  %v2658 = vld [vmem:[%s12 + $0x50] sm:$0xf]
  %v2659 = vld [vmem:[%s12 + $0x54] sm:$0xf]
  %v2660 = vld [vmem:[%s12 + $0x58] sm:$0xf]
  %v2661 = vld [vmem:[%s12 + $0x5c] sm:$0xf]
  %v2662 = vld [vmem:[%s12 + $0x60] sm:$0xf]
  %v2663 = vld [vmem:[%s12 + $0x64] sm:$0xf]
  %v2664 = vld [vmem:[%s12 + $0x68] sm:$0xf]
  %v2665 = vld [vmem:[%s12 + $0x6c] sm:$0xf]
  %v2666 = vld [vmem:[%s12 + $0x70] sm:$0xf]
  %v2667 = vld [vmem:[%s12 + $0x74] sm:$0xf]
  %v2668 = vld [vmem:[%s12 + $0x78] sm:$0xf]
  %v2669 = vld [vmem:[%s12 + $0x7c] sm:$0xf]
  %v2670 = vld [vmem:[%s13] sm:$0x1]
  %v2672 = vperm.slane %v2670, 0
  %v2706 = vunpack.c.l.b16 %v2638
  %v2707 = vunpack.c.l.b16 %v2639
  %v2708 = vunpack.c.l.b16 %v2640
  %v2709 = vunpack.c.l.b16 %v2641
  %v2710 = vunpack.c.l.b16 %v2642
  %v2711 = vunpack.c.l.b16 %v2643
  %v2712 = vunpack.c.l.b16 %v2644
  %v2713 = vunpack.c.l.b16 %v2645
  %v2714 = vunpack.c.l.b16 %v2646
  %v2715 = vunpack.c.l.b16 %v2647
  %v2716 = vunpack.c.l.b16 %v2648
  %v2717 = vunpack.c.l.b16 %v2649
  %v2718 = vunpack.c.l.b16 %v2650
  %v2719 = vunpack.c.l.b16 %v2651
  %v2720 = vunpack.c.l.b16 %v2652
  %v2721 = vunpack.c.l.b16 %v2653
  %v2722 = vunpack.c.l.b16 %v2654
  %v2723 = vunpack.c.l.b16 %v2655
  %v2724 = vunpack.c.l.b16 %v2656
  %v2725 = vunpack.c.l.b16 %v2657
  %v2726 = vunpack.c.l.b16 %v2658
  %v2727 = vunpack.c.l.b16 %v2659
  %v2728 = vunpack.c.l.b16 %v2660
  %v2729 = vunpack.c.l.b16 %v2661
  %v2730 = vunpack.c.l.b16 %v2662
  %v2731 = vunpack.c.l.b16 %v2663
  %v2732 = vunpack.c.l.b16 %v2664
  %v2733 = vunpack.c.l.b16 %v2665
  %v2734 = vunpack.c.l.b16 %v2666
  %v2735 = vunpack.c.l.b16 %v2667
  %v2736 = vunpack.c.l.b16 %v2668
  %v2737 = vunpack.c.l.b16 %v2669
  %v2738 = vpack.c.b16 %v2707, %v2706
  %v2739 = vpack.c.b16 %v2709, %v2708
  %v2740 = vpack.c.b16 %v2711, %v2710
  %v2741 = vpack.c.b16 %v2713, %v2712
  %v2742 = vpack.c.b16 %v2715, %v2714
  %v2743 = vpack.c.b16 %v2717, %v2716
  %v2744 = vpack.c.b16 %v2719, %v2718
  %v2745 = vpack.c.b16 %v2721, %v2720
  %v2746 = vpack.c.b16 %v2723, %v2722
  %v2747 = vpack.c.b16 %v2725, %v2724
  %v2748 = vpack.c.b16 %v2727, %v2726
  %v2749 = vpack.c.b16 %v2729, %v2728
  %v2750 = vpack.c.b16 %v2731, %v2730
  %v2751 = vpack.c.b16 %v2733, %v2732
  %v2752 = vpack.c.b16 %v2735, %v2734
  %v2753 = vpack.c.b16 %v2737, %v2736
  %2770 = vmatpush.bf16.msra.mxu0 %v2745
  %2771 = vmatpush.bf16.msra.mxu0 %v2744
  %2772 = vmatpush.bf16.msra.mxu0 %v2743
  %2773 = vmatpush.bf16.msra.mxu0 %v2742
  %2774 = vmatpush.bf16.msra.mxu0 %v2741
  %2775 = vmatpush.bf16.msra.mxu0 %v2740
  %2776 = vmatpush.bf16.msra.mxu0 %v2739
  %2777 = vmatpush.bf16.msra.mxu0 %v2738
  %2778 = vmatmul.bf16.gmra.mxu0 %v2636
  %v2779 = vpop.f32.mrf.mxu0
  %v2780 = vadd.f32 %v2672, %v2779
  %v2781 = vpop.f32.mrf.mxu0
  %2782 = vdwg.mxu0
  %2783 = vmatpush.bf16.msra.mxu0 %v2753
  %2784 = vmatpush.bf16.msra.mxu0 %v2752
  %2785 = vmatpush.bf16.msra.mxu0 %v2751
  %2786 = vmatpush.bf16.msra.mxu0 %v2750
  %2787 = vmatpush.bf16.msra.mxu0 %v2749
  %2788 = vmatpush.bf16.msra.mxu0 %v2748
  %2789 = vmatpush.bf16.msra.mxu0 %v2747
  %2790 = vmatpush.bf16.msra.mxu0 %v2746
  %2791 = vmatmul.bf16.gmra.mxu0 %v2637
  %v2792 = vpop.f32.mrf.mxu0
  %v2793 = vadd.f32 %v2780, %v2792
  %v2794 = vpop.f32.mrf.mxu0
  %2795 = vdwg.mxu0
  %v2796 = vld [vmem:[%s14] sm:$0xf]
  %v2797 = vld [vmem:[%s14 + $0x4] sm:$0xf]
  %v2798 = vld [vmem:[%s14 + $0x8] sm:$0xf]
  %v2799 = vld [vmem:[%s14 + $0xc] sm:$0xf]
  %v2800 = vld [vmem:[%s14 + $0x10] sm:$0xf]
  %v2801 = vld [vmem:[%s14 + $0x14] sm:$0xf]
  %v2802 = vld [vmem:[%s14 + $0x18] sm:$0xf]
  %v2803 = vld [vmem:[%s14 + $0x1c] sm:$0xf]
  %v2804 = vld [vmem:[%s14 + $0x20] sm:$0xf]
  %v2805 = vld [vmem:[%s14 + $0x24] sm:$0xf]
  %v2806 = vld [vmem:[%s14 + $0x28] sm:$0xf]
  %v2807 = vld [vmem:[%s14 + $0x2c] sm:$0xf]
  %v2808 = vld [vmem:[%s14 + $0x30] sm:$0xf]
  %v2809 = vld [vmem:[%s14 + $0x34] sm:$0xf]
  %v2810 = vld [vmem:[%s14 + $0x38] sm:$0xf]
  %v2811 = vld [vmem:[%s14 + $0x3c] sm:$0xf]
  %v2812 = vld [vmem:[%s14 + $0x40] sm:$0xf]
  %v2813 = vld [vmem:[%s14 + $0x44] sm:$0xf]
  %v2814 = vld [vmem:[%s14 + $0x48] sm:$0xf]
  %v2815 = vld [vmem:[%s14 + $0x4c] sm:$0xf]
  %v2816 = vld [vmem:[%s14 + $0x50] sm:$0xf]
  %v2817 = vld [vmem:[%s14 + $0x54] sm:$0xf]
  %v2818 = vld [vmem:[%s14 + $0x58] sm:$0xf]
  %v2819 = vld [vmem:[%s14 + $0x5c] sm:$0xf]
  %v2820 = vld [vmem:[%s14 + $0x60] sm:$0xf]
  %v2821 = vld [vmem:[%s14 + $0x64] sm:$0xf]
  %v2822 = vld [vmem:[%s14 + $0x68] sm:$0xf]
  %v2823 = vld [vmem:[%s14 + $0x6c] sm:$0xf]
  %v2824 = vld [vmem:[%s14 + $0x70] sm:$0xf]
  %v2825 = vld [vmem:[%s14 + $0x74] sm:$0xf]
  %v2826 = vld [vmem:[%s14 + $0x78] sm:$0xf]
  %v2827 = vld [vmem:[%s14 + $0x7c] sm:$0xf]
  %v2828 = vld [vmem:[%s15] sm:$0x1]
  %v2830 = vperm.slane %v2828, 0
  %v2864 = vunpack.c.l.b16 %v2796
  %v2865 = vunpack.c.l.b16 %v2797
  %v2866 = vunpack.c.l.b16 %v2798
  %v2867 = vunpack.c.l.b16 %v2799
  %v2868 = vunpack.c.l.b16 %v2800
  %v2869 = vunpack.c.l.b16 %v2801
  %v2870 = vunpack.c.l.b16 %v2802
  %v2871 = vunpack.c.l.b16 %v2803
  %v2872 = vunpack.c.l.b16 %v2804
  %v2873 = vunpack.c.l.b16 %v2805
  %v2874 = vunpack.c.l.b16 %v2806
  %v2875 = vunpack.c.l.b16 %v2807
  %v2876 = vunpack.c.l.b16 %v2808
  %v2877 = vunpack.c.l.b16 %v2809
  %v2878 = vunpack.c.l.b16 %v2810
  %v2879 = vunpack.c.l.b16 %v2811
  %v2880 = vunpack.c.l.b16 %v2812
  %v2881 = vunpack.c.l.b16 %v2813
  %v2882 = vunpack.c.l.b16 %v2814
  %v2883 = vunpack.c.l.b16 %v2815
  %v2884 = vunpack.c.l.b16 %v2816
  %v2885 = vunpack.c.l.b16 %v2817
  %v2886 = vunpack.c.l.b16 %v2818
  %v2887 = vunpack.c.l.b16 %v2819
  %v2888 = vunpack.c.l.b16 %v2820
  %v2889 = vunpack.c.l.b16 %v2821
  %v2890 = vunpack.c.l.b16 %v2822
  %v2891 = vunpack.c.l.b16 %v2823
  %v2892 = vunpack.c.l.b16 %v2824
  %v2893 = vunpack.c.l.b16 %v2825
  %v2894 = vunpack.c.l.b16 %v2826
  %v2895 = vunpack.c.l.b16 %v2827
  %v2896 = vpack.c.b16 %v2865, %v2864
  %v2897 = vpack.c.b16 %v2867, %v2866
  %v2898 = vpack.c.b16 %v2869, %v2868
  %v2899 = vpack.c.b16 %v2871, %v2870
  %v2900 = vpack.c.b16 %v2873, %v2872
  %v2901 = vpack.c.b16 %v2875, %v2874
  %v2902 = vpack.c.b16 %v2877, %v2876
  %v2903 = vpack.c.b16 %v2879, %v2878
  %v2904 = vpack.c.b16 %v2881, %v2880
  %v2905 = vpack.c.b16 %v2883, %v2882
  %v2906 = vpack.c.b16 %v2885, %v2884
  %v2907 = vpack.c.b16 %v2887, %v2886
  %v2908 = vpack.c.b16 %v2889, %v2888
  %v2909 = vpack.c.b16 %v2891, %v2890
  %v2910 = vpack.c.b16 %v2893, %v2892
  %v2911 = vpack.c.b16 %v2895, %v2894
  %2928 = vmatpush.bf16.msra.mxu0 %v2903
  %2929 = vmatpush.bf16.msra.mxu0 %v2902
  %2930 = vmatpush.bf16.msra.mxu0 %v2901
  %2931 = vmatpush.bf16.msra.mxu0 %v2900
  %2932 = vmatpush.bf16.msra.mxu0 %v2899
  %2933 = vmatpush.bf16.msra.mxu0 %v2898
  %2934 = vmatpush.bf16.msra.mxu0 %v2897
  %2935 = vmatpush.bf16.msra.mxu0 %v2896
  %2936 = vmatmul.bf16.gmra.mxu0 %v2636
  %v2937 = vpop.f32.mrf.mxu0
  %v2938 = vadd.f32 %v2830, %v2937
  %v2939 = vpop.f32.mrf.mxu0
  %2940 = vdwg.mxu0
  %2941 = vmatpush.bf16.msra.mxu0 %v2911
  %2942 = vmatpush.bf16.msra.mxu0 %v2910
  %2943 = vmatpush.bf16.msra.mxu0 %v2909
  %2944 = vmatpush.bf16.msra.mxu0 %v2908
  %2945 = vmatpush.bf16.msra.mxu0 %v2907
  %2946 = vmatpush.bf16.msra.mxu0 %v2906
  %2947 = vmatpush.bf16.msra.mxu0 %v2905
  %2948 = vmatpush.bf16.msra.mxu0 %v2904
  %2949 = vmatmul.bf16.gmra.mxu0 %v2637
  %v2950 = vpop.f32.mrf.mxu0
  %v2951 = vadd.f32 %v2938, %v2950
  %v2952 = vpop.f32.mrf.mxu0
  %2953 = vdwg.mxu0
  %v2954 = vpack.c.bf16 %v2793, %v2793
  %v2955 = vld [vmem:[%s16] sm:$0xf]
  %v2956 = vld [vmem:[%s16 + $0x4] sm:$0xf]
  %v2959 = vunpack.c.l.b16 %v2955
  %v2960 = vunpack.c.l.b16 %v2956
  %v2961 = vpack.c.b16 %v2960, %v2959
  %vm2963 = vcmask 130048
  %v2965 = vsel %vm2963, %v2954, 0
  %2967 = vmatpush.bf16.msra.mxu0 0
  %2968 = vmatpush.bf16.msra.mxu0 0
  %2969 = vmatpush.bf16.msra.mxu0 0
  %2970 = vmatpush.bf16.msra.mxu0 0
  %2971 = vmatpush.bf16.msra.mxu0 0
  %2972 = vmatpush.bf16.msra.mxu0 0
  %2973 = vmatpush.bf16.msra.mxu0 0
  %2974 = vmatpush.bf16.msra.mxu0 %v2961
  %2975 = vmatmul.bf16.gmra.mxu0 %v2965
  %v2976 = vpop.f32.mrf.mxu0
  %v2977 = vadd.f32 0.0, %v2976
  %v2978 = vpop.f32.mrf.mxu0
  %2979 = vdwg.mxu0
  %v2980 = vmul.f32 %v2977, 0.25
  %2981 = vst.msk [vmem:[%s19] sm:$0xff] %vm323, %v2980
  %v2982 = vld [vmem:[%s17] sm:$0x1]
  %v2984 = vperm.slane %v2982, 0
  %v2986 = vmul.f32 %v2793, %v2984
  %v2987 = vsel %vm2963, %v2986, 0.0
  %2988 = vadd.xlane.f32.xlu0 %v2987
  %v2989 = vpop.xlane.xlu0 %2988
  %v2990 = vmul.f32 %v2989, 0.25
  %vm2991 = vcmask 7168
  %2992 = vst.msk [vmem:[%s20] sm:$0xff] %vm2991, %v2990
  %v2993 = vld [vmem:[%s18] sm:$0xf]
  %v2994 = vld [vmem:[%s18 + $0x4] sm:$0xf]
  %v2995 = vld [vmem:[%s18 + $0x8] sm:$0xf]
  %v2996 = vld [vmem:[%s18 + $0xc] sm:$0xf]
  %v2997 = vld [vmem:[%s18 + $0x10] sm:$0xf]
  %v2998 = vld [vmem:[%s18 + $0x14] sm:$0xf]
  %v2999 = vld [vmem:[%s18 + $0x18] sm:$0xf]
  %v3000 = vld [vmem:[%s18 + $0x1c] sm:$0xf]
  %v3001 = vpack.c.bf16 %v2951, %v2951
  %v3010 = vunpack.c.l.b16 %v2993
  %v3011 = vunpack.c.l.b16 %v2994
  %v3012 = vunpack.c.l.b16 %v2995
  %v3013 = vunpack.c.l.b16 %v2996
  %v3014 = vunpack.c.l.b16 %v2997
  %v3015 = vunpack.c.l.b16 %v2998
  %v3016 = vunpack.c.l.b16 %v2999
  %v3017 = vunpack.c.l.b16 %v3000
  %v3018 = vpack.c.b16 %v3011, %v3010
  %v3019 = vpack.c.b16 %v3013, %v3012
  %v3020 = vpack.c.b16 %v3015, %v3014
  %v3021 = vpack.c.b16 %v3017, %v3016
  %v3023 = vsel %vm2963, %v3018, 0
  %v3026 = vsel %vm2963, %v3019, 0
  %v3029 = vsel %vm2963, %v3020, 0
  %v3032 = vsel %vm2963, %v3021, 0
  %v3035 = vsel %vm2963, %v3001, 0
  %3037 = vmatpush.bf16.xpose.msra.mxu0 0
  %3038 = vmatpush.bf16.xpose.msra.mxu0 0
  %3039 = vmatpush.bf16.xpose.msra.mxu0 0
  %3040 = vmatpush.bf16.xpose.msra.mxu0 0
  %3041 = vmatpush.bf16.xpose.msra.mxu0 0
  %3042 = vmatpush.bf16.xpose.msra.mxu0 0
  %3043 = vmatpush.bf16.xpose.msra.mxu0 0
  %3044 = vmatpush.bf16.xpose.msra.mxu0 %v3035
  %3045 = vmatmul.bf16.gmra.mxu0 %v3023
  %v3046 = vpop.f32.mrf.mxu0
  %v3047 = vadd.f32 0.0, %v3046
  %v3048 = vpop.f32.mrf.mxu0
  %v3049 = vadd.f32 0.0, %v3048
  %3050 = vmatmul.bf16.gmra.mxu0 %v3026
  %v3051 = vpop.f32.mrf.mxu0
  %v3052 = vadd.f32 0.0, %v3051
  %v3053 = vpop.f32.mrf.mxu0
  %v3054 = vadd.f32 0.0, %v3053
  %3055 = vmatmul.bf16.gmra.mxu0 %v3029
  %v3056 = vpop.f32.mrf.mxu0
  %v3057 = vadd.f32 0.0, %v3056
  %v3058 = vpop.f32.mrf.mxu0
  %v3059 = vadd.f32 0.0, %v3058
  %3060 = vmatmul.bf16.gmra.mxu0 %v3032
  %v3061 = vpop.f32.mrf.mxu0
  %v3062 = vadd.f32 0.0, %v3061
  %v3063 = vpop.f32.mrf.mxu0
  %v3064 = vadd.f32 0.0, %v3063
  %3065 = vdwg.mxu0
  %vm3066 = vcmask 64512
  %3067 = vst.msk [vmem:[%s21] sm:$0xff] %vm3066, %v3047
  %3068 = vst.msk [vmem:[%s21 + $0x8] sm:$0xff] %vm3066, %v3049
  %3069 = vst.msk [vmem:[%s21 + $0x10] sm:$0xff] %vm3066, %v3052
  %3070 = vst.msk [vmem:[%s21 + $0x18] sm:$0xff] %vm3066, %v3054
  %3071 = vst.msk [vmem:[%s21 + $0x20] sm:$0xff] %vm3066, %v3057
  %3072 = vst.msk [vmem:[%s21 + $0x28] sm:$0xff] %vm3066, %v3059
  %3073 = vst.msk [vmem:[%s21 + $0x30] sm:$0xff] %vm3066, %v3062
  %3074 = vst.msk [vmem:[%s21 + $0x38] sm:$0xff] %vm3066, %v3064
  %v3075 = vld [vmem:[%s16 + $0x8] sm:$0xf]
  %v3076 = vld [vmem:[%s16 + $0xc] sm:$0xf]
  %3078 = vrot.lane.b32.xlu0 %v2954, 112
  %v3079 = vpop.permute.xlu0 %3078
  %v3082 = vunpack.c.l.b16 %v3075
  %v3083 = vunpack.c.l.b16 %v3076
  %v3084 = vpack.c.b16 %v3083, %v3082
  %v3087 = vsel %vm2963, %v3079, 0
  %3089 = vmatpush.bf16.msra.mxu0 0
  %3090 = vmatpush.bf16.msra.mxu0 0
  %3091 = vmatpush.bf16.msra.mxu0 0
  %3092 = vmatpush.bf16.msra.mxu0 0
  %3093 = vmatpush.bf16.msra.mxu0 0
  %3094 = vmatpush.bf16.msra.mxu0 0
  %3095 = vmatpush.bf16.msra.mxu0 0
  %3096 = vmatpush.bf16.msra.mxu0 %v3084
  %3097 = vmatmul.bf16.gmra.mxu0 %v3087
  %v3098 = vpop.f32.mrf.mxu0
  %v3099 = vadd.f32 0.0, %v3098
  %v3100 = vpop.f32.mrf.mxu0
  %3101 = vdwg.mxu0
  %v3102 = vmul.f32 %v3099, 0.25
  %3103 = vst.msk [vmem:[%s19 + $0x8] sm:$0xff] %vm323, %v3102
  %v3104 = vld [vmem:[%s17] sm:$0x1]
  %v3106 = vperm.slane %v3104, 0
  %v3108 = vmul.f32 %v2793, %v3106
  %3110 = vrot.lane.b32.xlu0 %v3108, 112
  %v3111 = vpop.permute.xlu0 %3110
  %v3113 = vsel %vm2963, %v3111, 0.0
  %3114 = vadd.xlane.f32.xlu0 %v3113
  %v3115 = vpop.xlane.xlu0 %3114
  %v3116 = vmul.f32 %v3115, 0.25
  %3117 = vst.msk [vmem:[%s20 + $0x8] sm:$0xff] %vm2991, %v3116
  %v3118 = vld [vmem:[%s18] sm:$0xf]
  %v3119 = vld [vmem:[%s18 + $0x4] sm:$0xf]
  %v3120 = vld [vmem:[%s18 + $0x8] sm:$0xf]
  %v3121 = vld [vmem:[%s18 + $0xc] sm:$0xf]
  %v3122 = vld [vmem:[%s18 + $0x10] sm:$0xf]
  %v3123 = vld [vmem:[%s18 + $0x14] sm:$0xf]
  %v3124 = vld [vmem:[%s18 + $0x18] sm:$0xf]
  %v3125 = vld [vmem:[%s18 + $0x1c] sm:$0xf]
  %v3134 = vunpack.c.l.b16 %v3118
  %v3135 = vunpack.c.l.b16 %v3119
  %v3136 = vunpack.c.l.b16 %v3120
  %v3137 = vunpack.c.l.b16 %v3121
  %v3138 = vunpack.c.l.b16 %v3122
  %v3139 = vunpack.c.l.b16 %v3123
  %v3140 = vunpack.c.l.b16 %v3124
  %v3141 = vunpack.c.l.b16 %v3125
  %v3142 = vpack.c.b16 %v3135, %v3134
  %v3143 = vpack.c.b16 %v3137, %v3136
  %v3144 = vpack.c.b16 %v3139, %v3138
  %v3145 = vpack.c.b16 %v3141, %v3140
  %3146 = vrot.lane.b32.xlu0 %v3142, 112
  %v3147 = vpop.permute.xlu0 %3146
  %3148 = vrot.lane.b32.xlu0 %v3143, 112
  %v3149 = vpop.permute.xlu0 %3148
  %3150 = vrot.lane.b32.xlu0 %v3144, 112
  %v3151 = vpop.permute.xlu0 %3150
  %3152 = vrot.lane.b32.xlu0 %v3145, 112
  %v3153 = vpop.permute.xlu0 %3152
  %3155 = vrot.lane.b32.xlu0 %v3001, 112
  %v3156 = vpop.permute.xlu0 %3155
  %v3158 = vsel %vm2963, %v3147, 0
  %v3161 = vsel %vm2963, %v3149, 0
  %v3164 = vsel %vm2963, %v3151, 0
  %v3167 = vsel %vm2963, %v3153, 0
  %v3170 = vsel %vm2963, %v3156, 0
  %3172 = vmatpush.bf16.xpose.msra.mxu0 0
  %3173 = vmatpush.bf16.xpose.msra.mxu0 0
  %3174 = vmatpush.bf16.xpose.msra.mxu0 0
  %3175 = vmatpush.bf16.xpose.msra.mxu0 0
  %3176 = vmatpush.bf16.xpose.msra.mxu0 0
  %3177 = vmatpush.bf16.xpose.msra.mxu0 0
  %3178 = vmatpush.bf16.xpose.msra.mxu0 0
  %3179 = vmatpush.bf16.xpose.msra.mxu0 %v3170
  %3180 = vmatmul.bf16.gmra.mxu0 %v3158
  %v3181 = vpop.f32.mrf.mxu0
  %v3182 = vadd.f32 0.0, %v3181
  %v3183 = vpop.f32.mrf.mxu0
  %v3184 = vadd.f32 0.0, %v3183
  %3185 = vmatmul.bf16.gmra.mxu0 %v3161
  %v3186 = vpop.f32.mrf.mxu0
  %v3187 = vadd.f32 0.0, %v3186
  %v3188 = vpop.f32.mrf.mxu0
  %v3189 = vadd.f32 0.0, %v3188
  %3190 = vmatmul.bf16.gmra.mxu0 %v3164
  %v3191 = vpop.f32.mrf.mxu0
  %v3192 = vadd.f32 0.0, %v3191
  %v3193 = vpop.f32.mrf.mxu0
  %v3194 = vadd.f32 0.0, %v3193
  %3195 = vmatmul.bf16.gmra.mxu0 %v3167
  %v3196 = vpop.f32.mrf.mxu0
  %v3197 = vadd.f32 0.0, %v3196
  %v3198 = vpop.f32.mrf.mxu0
  %v3199 = vadd.f32 0.0, %v3198
  %3200 = vdwg.mxu0
  %3209 = vrot.lane.b32.xlu0 %v3182, 8
  %v3210 = vpop.permute.xlu0 %3209
  %3211 = vrot.lane.b32.xlu0 %v3184, 8
  %v3212 = vpop.permute.xlu0 %3211
  %3213 = vrot.lane.b32.xlu0 %v3187, 8
  %v3214 = vpop.permute.xlu0 %3213
  %3215 = vrot.lane.b32.xlu0 %v3189, 8
  %v3216 = vpop.permute.xlu0 %3215
  %3217 = vrot.lane.b32.xlu0 %v3192, 8
  %v3218 = vpop.permute.xlu0 %3217
  %3219 = vrot.lane.b32.xlu0 %v3194, 8
  %v3220 = vpop.permute.xlu0 %3219
  %3221 = vrot.lane.b32.xlu0 %v3197, 8
  %v3222 = vpop.permute.xlu0 %3221
  %3223 = vrot.lane.b32.xlu0 %v3199, 8
  %v3224 = vpop.permute.xlu0 %3223
  %vm3233 = vcmask 130112
  %3234 = vst.msk [vmem:[%s21] sm:$0xff] %vm3233, %v3210
  %3235 = vst.msk [vmem:[%s21 + $0x8] sm:$0xff] %vm3233, %v3212
  %3236 = vst.msk [vmem:[%s21 + $0x10] sm:$0xff] %vm3233, %v3214
  %3237 = vst.msk [vmem:[%s21 + $0x18] sm:$0xff] %vm3233, %v3216
  %3238 = vst.msk [vmem:[%s21 + $0x20] sm:$0xff] %vm3233, %v3218
  %3239 = vst.msk [vmem:[%s21 + $0x28] sm:$0xff] %vm3233, %v3220
  %3240 = vst.msk [vmem:[%s21 + $0x30] sm:$0xff] %vm3233, %v3222
  %3241 = vst.msk [vmem:[%s21 + $0x38] sm:$0xff] %vm3233, %v3224
  %v3242 = vld [vmem:[%s16 + $0x10] sm:$0xf]
  %v3243 = vld [vmem:[%s16 + $0x14] sm:$0xf]
  %3244 = vrot.lane.b32.xlu0 %v2954, 96
  %v3245 = vpop.permute.xlu0 %3244
  %v3248 = vunpack.c.l.b16 %v3242
  %v3249 = vunpack.c.l.b16 %v3243
  %v3250 = vpack.c.b16 %v3249, %v3248
  %v3253 = vsel %vm2963, %v3245, 0
  %3255 = vmatpush.bf16.msra.mxu0 0
  %3256 = vmatpush.bf16.msra.mxu0 0
  %3257 = vmatpush.bf16.msra.mxu0 0
  %3258 = vmatpush.bf16.msra.mxu0 0
  %3259 = vmatpush.bf16.msra.mxu0 0
  %3260 = vmatpush.bf16.msra.mxu0 0
  %3261 = vmatpush.bf16.msra.mxu0 0
  %3262 = vmatpush.bf16.msra.mxu0 %v3250
  %3263 = vmatmul.bf16.gmra.mxu0 %v3253
  %v3264 = vpop.f32.mrf.mxu0
  %v3265 = vadd.f32 0.0, %v3264
  %v3266 = vpop.f32.mrf.mxu0
  %3267 = vdwg.mxu0
  %v3268 = vmul.f32 %v3265, 0.25
  %3269 = vst.msk [vmem:[%s19 + $0x10] sm:$0xff] %vm323, %v3268
  %v3270 = vld [vmem:[%s17] sm:$0x1]
  %v3272 = vperm.slane %v3270, 0
  %v3274 = vmul.f32 %v2793, %v3272
  %3276 = vrot.lane.b32.xlu0 %v3274, 96
  %v3277 = vpop.permute.xlu0 %3276
  %v3279 = vsel %vm2963, %v3277, 0.0
  %3280 = vadd.xlane.f32.xlu0 %v3279
  %v3281 = vpop.xlane.xlu0 %3280
  %v3282 = vmul.f32 %v3281, 0.25
  %3283 = vst.msk [vmem:[%s20 + $0x10] sm:$0xff] %vm2991, %v3282
  %v3284 = vld [vmem:[%s18] sm:$0xf]
  %v3285 = vld [vmem:[%s18 + $0x4] sm:$0xf]
  %v3286 = vld [vmem:[%s18 + $0x8] sm:$0xf]
  %v3287 = vld [vmem:[%s18 + $0xc] sm:$0xf]
  %v3288 = vld [vmem:[%s18 + $0x10] sm:$0xf]
  %v3289 = vld [vmem:[%s18 + $0x14] sm:$0xf]
  %v3290 = vld [vmem:[%s18 + $0x18] sm:$0xf]
  %v3291 = vld [vmem:[%s18 + $0x1c] sm:$0xf]
  %v3300 = vunpack.c.l.b16 %v3284
  %v3301 = vunpack.c.l.b16 %v3285
  %v3302 = vunpack.c.l.b16 %v3286
  %v3303 = vunpack.c.l.b16 %v3287
  %v3304 = vunpack.c.l.b16 %v3288
  %v3305 = vunpack.c.l.b16 %v3289
  %v3306 = vunpack.c.l.b16 %v3290
  %v3307 = vunpack.c.l.b16 %v3291
  %v3308 = vpack.c.b16 %v3301, %v3300
  %v3309 = vpack.c.b16 %v3303, %v3302
  %v3310 = vpack.c.b16 %v3305, %v3304
  %v3311 = vpack.c.b16 %v3307, %v3306
  %3312 = vrot.lane.b32.xlu0 %v3308, 96
  %v3313 = vpop.permute.xlu0 %3312
  %3314 = vrot.lane.b32.xlu0 %v3309, 96
  %v3315 = vpop.permute.xlu0 %3314
  %3316 = vrot.lane.b32.xlu0 %v3310, 96
  %v3317 = vpop.permute.xlu0 %3316
  %3318 = vrot.lane.b32.xlu0 %v3311, 96
  %v3319 = vpop.permute.xlu0 %3318
  %3320 = vrot.lane.b32.xlu0 %v3001, 96
  %v3321 = vpop.permute.xlu0 %3320
  %v3323 = vsel %vm2963, %v3313, 0
  %v3326 = vsel %vm2963, %v3315, 0
  %v3329 = vsel %vm2963, %v3317, 0
  %v3332 = vsel %vm2963, %v3319, 0
  %v3335 = vsel %vm2963, %v3321, 0
  %3337 = vmatpush.bf16.xpose.msra.mxu0 0
  %3338 = vmatpush.bf16.xpose.msra.mxu0 0
  %3339 = vmatpush.bf16.xpose.msra.mxu0 0
  %3340 = vmatpush.bf16.xpose.msra.mxu0 0
  %3341 = vmatpush.bf16.xpose.msra.mxu0 0
  %3342 = vmatpush.bf16.xpose.msra.mxu0 0
  %3343 = vmatpush.bf16.xpose.msra.mxu0 0
  %3344 = vmatpush.bf16.xpose.msra.mxu0 %v3335
  %3345 = vmatmul.bf16.gmra.mxu0 %v3323
  %v3346 = vpop.f32.mrf.mxu0
  %v3347 = vadd.f32 0.0, %v3346
  %v3348 = vpop.f32.mrf.mxu0
  %v3349 = vadd.f32 0.0, %v3348
  %3350 = vmatmul.bf16.gmra.mxu0 %v3326
  %v3351 = vpop.f32.mrf.mxu0
  %v3352 = vadd.f32 0.0, %v3351
  %v3353 = vpop.f32.mrf.mxu0
  %v3354 = vadd.f32 0.0, %v3353
  %3355 = vmatmul.bf16.gmra.mxu0 %v3329
  %v3356 = vpop.f32.mrf.mxu0
  %v3357 = vadd.f32 0.0, %v3356
  %v3358 = vpop.f32.mrf.mxu0
  %v3359 = vadd.f32 0.0, %v3358
  %3360 = vmatmul.bf16.gmra.mxu0 %v3332
  %v3361 = vpop.f32.mrf.mxu0
  %v3362 = vadd.f32 0.0, %v3361
  %v3363 = vpop.f32.mrf.mxu0
  %v3364 = vadd.f32 0.0, %v3363
  %3365 = vdwg.mxu0
  %3374 = vrot.lane.b32.xlu0 %v3347, 16
  %v3375 = vpop.permute.xlu0 %3374
  %3376 = vrot.lane.b32.xlu0 %v3349, 16
  %v3377 = vpop.permute.xlu0 %3376
  %3378 = vrot.lane.b32.xlu0 %v3352, 16
  %v3379 = vpop.permute.xlu0 %3378
  %3380 = vrot.lane.b32.xlu0 %v3354, 16
  %v3381 = vpop.permute.xlu0 %3380
  %3382 = vrot.lane.b32.xlu0 %v3357, 16
  %v3383 = vpop.permute.xlu0 %3382
  %3384 = vrot.lane.b32.xlu0 %v3359, 16
  %v3385 = vpop.permute.xlu0 %3384
  %3386 = vrot.lane.b32.xlu0 %v3362, 16
  %v3387 = vpop.permute.xlu0 %3386
  %3388 = vrot.lane.b32.xlu0 %v3364, 16
  %v3389 = vpop.permute.xlu0 %3388
  %vm3398 = vcmask 195712
  %3399 = vst.msk [vmem:[%s21] sm:$0xff] %vm3398, %v3375
  %3400 = vst.msk [vmem:[%s21 + $0x8] sm:$0xff] %vm3398, %v3377
  %3401 = vst.msk [vmem:[%s21 + $0x10] sm:$0xff] %vm3398, %v3379
  %3402 = vst.msk [vmem:[%s21 + $0x18] sm:$0xff] %vm3398, %v3381
  %3403 = vst.msk [vmem:[%s21 + $0x20] sm:$0xff] %vm3398, %v3383
  %3404 = vst.msk [vmem:[%s21 + $0x28] sm:$0xff] %vm3398, %v3385
  %3405 = vst.msk [vmem:[%s21 + $0x30] sm:$0xff] %vm3398, %v3387
  %3406 = vst.msk [vmem:[%s21 + $0x38] sm:$0xff] %vm3398, %v3389
  %v3407 = vld [vmem:[%s16 + $0x18] sm:$0xf]
  %v3408 = vld [vmem:[%s16 + $0x1c] sm:$0xf]
  %3409 = vrot.lane.b32.xlu0 %v2954, 80
  %v3410 = vpop.permute.xlu0 %3409
  %v3413 = vunpack.c.l.b16 %v3407
  %v3414 = vunpack.c.l.b16 %v3408
  %v3415 = vpack.c.b16 %v3414, %v3413
  %v3418 = vsel %vm2963, %v3410, 0
  %3420 = vmatpush.bf16.msra.mxu0 0
  %3421 = vmatpush.bf16.msra.mxu0 0
  %3422 = vmatpush.bf16.msra.mxu0 0
  %3423 = vmatpush.bf16.msra.mxu0 0
  %3424 = vmatpush.bf16.msra.mxu0 0
  %3425 = vmatpush.bf16.msra.mxu0 0
  %3426 = vmatpush.bf16.msra.mxu0 0
  %3427 = vmatpush.bf16.msra.mxu0 %v3415
  %3428 = vmatmul.bf16.gmra.mxu0 %v3418
  %v3429 = vpop.f32.mrf.mxu0
  %v3430 = vadd.f32 0.0, %v3429
  %v3431 = vpop.f32.mrf.mxu0
  %3432 = vdwg.mxu0
  %v3433 = vmul.f32 %v3430, 0.25
  %3434 = vst.msk [vmem:[%s19 + $0x18] sm:$0xff] %vm323, %v3433
  %v3435 = vld [vmem:[%s17] sm:$0x1]
  %v3437 = vperm.slane %v3435, 0
  %v3439 = vmul.f32 %v2793, %v3437
  %3441 = vrot.lane.b32.xlu0 %v3439, 80
  %v3442 = vpop.permute.xlu0 %3441
  %v3444 = vsel %vm2963, %v3442, 0.0
  %3445 = vadd.xlane.f32.xlu0 %v3444
  %v3446 = vpop.xlane.xlu0 %3445
  %v3447 = vmul.f32 %v3446, 0.25
  %3448 = vst.msk [vmem:[%s20 + $0x18] sm:$0xff] %vm2991, %v3447
  %v3449 = vld [vmem:[%s18] sm:$0xf]
  %v3450 = vld [vmem:[%s18 + $0x4] sm:$0xf]
  %v3451 = vld [vmem:[%s18 + $0x8] sm:$0xf]
  %v3452 = vld [vmem:[%s18 + $0xc] sm:$0xf]
  %v3453 = vld [vmem:[%s18 + $0x10] sm:$0xf]
  %v3454 = vld [vmem:[%s18 + $0x14] sm:$0xf]
  %v3455 = vld [vmem:[%s18 + $0x18] sm:$0xf]
  %v3456 = vld [vmem:[%s18 + $0x1c] sm:$0xf]
  %v3465 = vunpack.c.l.b16 %v3449
  %v3466 = vunpack.c.l.b16 %v3450
  %v3467 = vunpack.c.l.b16 %v3451
  %v3468 = vunpack.c.l.b16 %v3452
  %v3469 = vunpack.c.l.b16 %v3453
  %v3470 = vunpack.c.l.b16 %v3454
  %v3471 = vunpack.c.l.b16 %v3455
  %v3472 = vunpack.c.l.b16 %v3456
  %v3473 = vpack.c.b16 %v3466, %v3465
  %v3474 = vpack.c.b16 %v3468, %v3467
  %v3475 = vpack.c.b16 %v3470, %v3469
  %v3476 = vpack.c.b16 %v3472, %v3471
  %3477 = vrot.lane.b32.xlu0 %v3473, 80
  %v3478 = vpop.permute.xlu0 %3477
  %3479 = vrot.lane.b32.xlu0 %v3474, 80
  %v3480 = vpop.permute.xlu0 %3479
  %3481 = vrot.lane.b32.xlu0 %v3475, 80
  %v3482 = vpop.permute.xlu0 %3481
  %3483 = vrot.lane.b32.xlu0 %v3476, 80
  %v3484 = vpop.permute.xlu0 %3483
  %3485 = vrot.lane.b32.xlu0 %v3001, 80
  %v3486 = vpop.permute.xlu0 %3485
  %v3488 = vsel %vm2963, %v3478, 0
  %v3491 = vsel %vm2963, %v3480, 0
  %v3494 = vsel %vm2963, %v3482, 0
  %v3497 = vsel %vm2963, %v3484, 0
  %v3500 = vsel %vm2963, %v3486, 0
  %3502 = vmatpush.bf16.xpose.msra.mxu0 0
  %3503 = vmatpush.bf16.xpose.msra.mxu0 0
  %3504 = vmatpush.bf16.xpose.msra.mxu0 0
  %3505 = vmatpush.bf16.xpose.msra.mxu0 0
  %3506 = vmatpush.bf16.xpose.msra.mxu0 0
  %3507 = vmatpush.bf16.xpose.msra.mxu0 0
  %3508 = vmatpush.bf16.xpose.msra.mxu0 0
  %3509 = vmatpush.bf16.xpose.msra.mxu0 %v3500
  %3510 = vmatmul.bf16.gmra.mxu0 %v3488
  %v3511 = vpop.f32.mrf.mxu0
  %v3512 = vadd.f32 0.0, %v3511
  %v3513 = vpop.f32.mrf.mxu0
  %v3514 = vadd.f32 0.0, %v3513
  %3515 = vmatmul.bf16.gmra.mxu0 %v3491
  %v3516 = vpop.f32.mrf.mxu0
  %v3517 = vadd.f32 0.0, %v3516
  %v3518 = vpop.f32.mrf.mxu0
  %v3519 = vadd.f32 0.0, %v3518
  %3520 = vmatmul.bf16.gmra.mxu0 %v3494
  %v3521 = vpop.f32.mrf.mxu0
  %v3522 = vadd.f32 0.0, %v3521
  %v3523 = vpop.f32.mrf.mxu0
  %v3524 = vadd.f32 0.0, %v3523
  %3525 = vmatmul.bf16.gmra.mxu0 %v3497
  %v3526 = vpop.f32.mrf.mxu0
  %v3527 = vadd.f32 0.0, %v3526
  %v3528 = vpop.f32.mrf.mxu0
  %v3529 = vadd.f32 0.0, %v3528
  %3530 = vdwg.mxu0
  %3539 = vrot.lane.b32.xlu0 %v3512, 24
  %v3540 = vpop.permute.xlu0 %3539
  %3541 = vrot.lane.b32.xlu0 %v3514, 24
  %v3542 = vpop.permute.xlu0 %3541
  %3543 = vrot.lane.b32.xlu0 %v3517, 24
  %v3544 = vpop.permute.xlu0 %3543
  %3545 = vrot.lane.b32.xlu0 %v3519, 24
  %v3546 = vpop.permute.xlu0 %3545
  %3547 = vrot.lane.b32.xlu0 %v3522, 24
  %v3548 = vpop.permute.xlu0 %3547
  %3549 = vrot.lane.b32.xlu0 %v3524, 24
  %v3550 = vpop.permute.xlu0 %3549
  %3551 = vrot.lane.b32.xlu0 %v3527, 24
  %v3552 = vpop.permute.xlu0 %3551
  %3553 = vrot.lane.b32.xlu0 %v3529, 24
  %v3554 = vpop.permute.xlu0 %3553
  %vm3563 = vcmask 261312
  %3564 = vst.msk [vmem:[%s21] sm:$0xff] %vm3563, %v3540
  %3565 = vst.msk [vmem:[%s21 + $0x8] sm:$0xff] %vm3563, %v3542
  %3566 = vst.msk [vmem:[%s21 + $0x10] sm:$0xff] %vm3563, %v3544
  %3567 = vst.msk [vmem:[%s21 + $0x18] sm:$0xff] %vm3563, %v3546
  %3568 = vst.msk [vmem:[%s21 + $0x20] sm:$0xff] %vm3563, %v3548
  %3569 = vst.msk [vmem:[%s21 + $0x28] sm:$0xff] %vm3563, %v3550
  %3570 = vst.msk [vmem:[%s21 + $0x30] sm:$0xff] %vm3563, %v3552
  %3571 = vst.msk [vmem:[%s21 + $0x38] sm:$0xff] %vm3563, %v3554
  // Predicated region
  $region78: #{dual_cross_attention_forward.6} parent=0 // pred_check
    _
  $region79: #{dual_cross_attention_forward.6} parent=0 // pred_check_branch
    %3573 = sbr.rel (0) target = $region81
  $region80: #{dual_cross_attention_forward.6} parent=0 // pred_region
    _
  $region81: #{dual_cross_attention_forward.6} parent=0 // pred_fallthru
    _
  // Predicated region
  $region82: #{dual_cross_attention_forward.6} parent=0 // pred_check
    _
  $region83: #{dual_cross_attention_forward.6} parent=0 // pred_check_branch
    %3575 = sbr.rel (0) target = $region85
  $region84: #{dual_cross_attention_forward.6} parent=0 // pred_region
    _
  $region85: #{dual_cross_attention_forward.6} parent=0 // pred_fallthru
    _
  // Predicated region
  $region86: #{dual_cross_attention_forward.6} parent=0 // pred_check
    _
  $region87: #{dual_cross_attention_forward.6} parent=0 // pred_check_branch
    %3577 = sbr.rel (0) target = $region89
  $region88: #{dual_cross_attention_forward.6} parent=0 // pred_region
    _
  $region89: #{dual_cross_attention_forward.6} parent=0 // pred_fallthru
    _
  // Predicated region
  $region90: #{dual_cross_attention_forward.6} parent=0 // pred_check
    _
  $region91: #{dual_cross_attention_forward.6} parent=0 // pred_check_branch
    %3579 = sbr.rel (0) target = $region93
  $region92: #{dual_cross_attention_forward.6} parent=0 // pred_region
    _
  $region93: #{dual_cross_attention_forward.6} parent=0 // pred_fallthru
    _
  // Predicated region
  $region94: #{dual_cross_attention_forward.6} parent=0 // pred_check
    _
  $region95: #{dual_cross_attention_forward.6} parent=0 // pred_check_branch
    %3581 = sbr.rel (0) target = $region97
  $region96: #{dual_cross_attention_forward.6} parent=0 // pred_region
    _
  $region97: #{dual_cross_attention_forward.6} parent=0 // pred_fallthru
    _
  // Predicated region
  $region98: #{dual_cross_attention_forward.6} parent=0 // pred_check
    _
  $region99: #{dual_cross_attention_forward.6} parent=0 // pred_check_branch
    %3583 = sbr.rel (0) target = $region101
  $region100: #{dual_cross_attention_forward.6} parent=0 // pred_region
    _
  $region101: #{dual_cross_attention_forward.6} parent=0 // pred_fallthru
    _

</llo_original>
